<compile_context>
chip_gen: v6e
topology: v6e:2x2x1
jax: 0.10.0
libtpu: 0.0.40
codegen_flags: <defaults>
</compile_context>

<pallas_src>
import functools
import math

import numpy as np
import jax
import jax.numpy as jnp
from jax.experimental import pallas as pl
from jax.experimental.pallas import tpu as pltpu

# ----------------------- hyper-parameters (small, deterministic) -----------------------
BATCH = 2
WINDOW = 8             # T
HORIZON = 3
NUM_NODES = 8          # N
INPUT_DIM = (2, 2)
N_CATEGORIES = sum(INPUT_DIM)        # C = 4
EMBED_DIM = 32                       # D
HEADS = 4
HEAD_DIM = EMBED_DIM // HEADS        # dh = 8
SPATIAL_LAYERS = 2
TEMPORAL_LAYERS = 2
HYPER_NUM = 8

CD = N_CATEGORIES * EMBED_DIM        # 128  activation lanes per row (c, d)
CH = N_CATEGORIES * HEADS            # 16   score lanes per source category (i, h)
PRODL = N_CATEGORIES * CD            # 512  product lanes (i, j, h, d)
SL = N_CATEGORIES * CH               # 64   score lanes (j, i, h)
BM = BATCH * NUM_NODES * WINDOW      # 128  activation rows (b, n, t)
BHT = BATCH * HYPER_NUM * WINDOW     # 128  hyper-node rows (b, m, t)
BN = BATCH * NUM_NODES               # 16   output rows (b, n)
OUT_W = 128                          # lane-dense padded output width

# ----------------------- row offsets inside the packed "mats" slab -----------------------
R_MIX = 0                   # (BM,  128) kron(I_B, adj.T x I_T)
R_HEB = R_MIX + BM          # (BHT, 128) kron(I_B, hyper_adj x I_T)
R_RET = R_HEB + BHT         # (BM,  128) kron(I_B, hyper_adj.T x I_T)
R_SHIFT = R_RET + BM        # (BM,  128) previous-timestep shift
R_RED = R_SHIFT + BM        # (512, 128) reduce-over-source-category matmul
R_MEAN = R_RED + PRODL      # (BN,  128) mean over time
R_WOUT = R_MEAN + BN        # (128, 128) output Linear (with `* w` folded in), lane-padded
R_BOUT = R_WOUT + CD        # (8,   128) output bias (row 0 valid), lane-padded
MATS_ROWS = R_BOUT + 8      # 1176


# =============================== static constant matrices ===============================

def _build_static():
    C, D, H, dh, T = N_CATEGORIES, EMBED_DIM, HEADS, HEAD_DIM, WINDOW
    scale = 1.0 / math.sqrt(dh)
    # product lane L = i*CD + j*D + h*dh + d   (i = target cat, j = source cat)
    # score   lane S = j*CH + i*H + h          (softmax is over contiguous j blocks)
    seg = np.zeros((PRODL, SL), np.float32)     # sum over d (scale folded in)
    expd = np.zeros((SL, PRODL), np.float32)    # broadcast score back over d
    red = np.zeros((PRODL, CD), np.float32)     # sum over source j -> output lanes (i, h, d)
    for i in range(C):
        for j in range(C):
            for h in range(H):
                s_lane = j * CH + i * H + h
                for d in range(dh):
                    p_lane = i * CD + j * D + h * dh + d
                    seg[p_lane, s_lane] = scale
                    expd[s_lane, p_lane] = 1.0
                    red[p_lane, i * D + h * dh + d] = 1.0
    # shift: row (b, n, t) <- row (b, n, t-1); zero row at t == 0 (masked later).
    shift = np.zeros((BM, BM), np.float32)
    for r in range(BM):
        if r % T != 0:
            shift[r, r - 1] = 1.0
    # mean over time as a matmul: (B*N, B*N*T)
    mean = np.zeros((BN, BM), np.float32)
    for bn in range(BN):
        mean[bn, bn * T:(bn + 1) * T] = 1.0 / T
    return seg, expd, red, shift, mean


_SEG_NP, _EXP_NP, _RED_NP, _SHIFT_NP, _MEAN_NP = _build_static()


# =============================== the fused Pallas kernel ===============================

def _stshn_kernel(x_ref, aw_ref, mats_ref, seg_ref, exp_ref, o_ref):
    f32 = jnp.float32
    C = N_CATEGORIES

    seg = seg_ref[...]                                   # (PRODL, SL)
    expd = exp_ref[...]                                  # (SL, PRODL)
    mix = mats_ref[R_MIX:R_MIX + BM, :]                  # (BM, BM)
    heb = mats_ref[R_HEB:R_HEB + BHT, :]                 # (BHT, BM)
    ret = mats_ref[R_RET:R_RET + BM, :]                  # (BM, BHT)
    shift = mats_ref[R_SHIFT:R_SHIFT + BM, :]            # (BM, BM)
    red = mats_ref[R_RED:R_RED + PRODL, :]               # (PRODL, CD)
    mean = mats_ref[R_MEAN:R_MEAN + BN, :]               # (BN, BM)
    wout = mats_ref[R_WOUT:R_WOUT + CD, :]               # (CD, OUT_W)  (* w folded in)
    bout = mats_ref[R_BOUT:R_BOUT + 1, :]                # (1, OUT_W)

    def leaky(v):
        return jnp.where(v >= 0, v, 0.01 * v)            # F.leaky_relu default slope

    def attend(qt, k, v):
        # qt : (BM, PRODL) lanes (i, j, h, d)  (q already broadcast over source j via weight)
        # k,v: (BM, CD)    lanes (j, h, d)
        kt = jnp.concatenate([k] * C, axis=1)             # broadcast over target i -> (BM, PRODL)
        vt = jnp.concatenate([v] * C, axis=1)
        s = jnp.dot(qt * kt, seg, preferred_element_type=f32)   # (BM, SL) lanes (j, i, h)
        m = s[:, 0:CH]
        for j in range(1, C):
            m = jnp.maximum(m, s[:, j * CH:(j + 1) * CH])
        e = jnp.exp(s - jnp.concatenate([m] * C, axis=1))        # single 64-lane exp
        den = e[:, 0:CH]
        for j in range(1, C):
            den = den + e[:, j * CH:(j + 1) * CH]
        p = e * jnp.concatenate([1.0 / den] * C, axis=1)          # softmax over source j
        a = jnp.dot(p, expd, preferred_element_type=f32)          # (BM, PRODL)
        return jnp.dot(a * vt, red, preferred_element_type=f32)   # (BM, CD), summed over j

    x = x_ref[...]                                        # (BM, CD) initial embedding
    embed = x
    embeds = x

    # ----------------------------- spatial layers -----------------------------
    for _ in range(SPATIAL_LAYERS):
        qkv = jnp.dot(embed, aw_ref[0:CD, :], preferred_element_type=f32)   # (BM, PRODL + 2*CD)
        att = attend(qkv[:, :PRODL], qkv[:, PRODL:PRODL + CD], qkv[:, PRODL + CD:])
        sp = leaky(jnp.dot(mix, att, preferred_element_type=f32))
        he = leaky(jnp.dot(heb, sp, preferred_element_type=f32))
        hg = leaky(jnp.dot(ret, he, preferred_element_type=f32))
        embed = hg + sp
        embeds = embeds + embed
    embed = embeds * (1.0 / SPATIAL_LAYERS)

    # ----------------------------- temporal layers -----------------------------
    t_idx = jax.lax.broadcasted_iota(jnp.int32, (BM, CD), 0) % WINDOW
    is_t0 = t_idx == 0
    embeds = embed
    for _ in range(TEMPORAL_LAYERS):
        prev = jnp.dot(shift, embed, preferred_element_type=f32)    # x[t-1] (zero rows at t == 0)
        qt = jnp.dot(embed, aw_ref[CD:2 * CD, 0:PRODL], preferred_element_type=f32)
        kv = jnp.dot(prev, aw_ref[CD:2 * CD, PRODL:], preferred_element_type=f32)
        h = attend(qt, kv[:, :CD], kv[:, CD:])
        embed = leaky(jnp.where(is_t0, embed, h))   # torch.cat([x[:,:,[0]], h]) then leaky_relu
        embeds = embeds + embed
    embed = embeds * (1.0 / TEMPORAL_LAYERS)

    # ----------------------------- output head (lane-dense store) -----------------------------
    em = jnp.dot(mean, embed, preferred_element_type=f32)            # (BN, CD) mean over time
    o_ref[...] = (jnp.dot(em, wout, preferred_element_type=f32) + bout).astype(o_ref.dtype)


# =============================== one-time weight preprocessing ===============================

def prepare(params):
    """Hoisted out of the per-call hot path: call once, reuse the returned arrays."""
    C, T, B = N_CATEGORIES, WINDOW, BATCH
    f32 = jnp.float32
    eye_c = jnp.eye(C, dtype=f32)
    eye_t = jnp.eye(T, dtype=f32)
    eye_b = jnp.eye(B, dtype=f32)

    def w_full(w_small):                       # shared Linear tiled over heads: (D, D)
        return jnp.tile(w_small, (1, HEADS))

    def q_tiled(w_small):                      # (CD, PRODL): broadcast-over-source-j folded in
        return jnp.kron(eye_c, jnp.tile(w_full(w_small), (1, C)))

    def kv_big(w_small):                       # (CD, CD): block-diag per-category projection
        return jnp.kron(eye_c, w_full(w_small))

    ws = jnp.concatenate([q_tiled(params["sQ"]), kv_big(params["sK"]), kv_big(params["sV"])], axis=1)
    wt = jnp.concatenate([q_tiled(params["tQ"]), kv_big(params["tK"]), kv_big(params["tV"])], axis=1)
    attn_w = jnp.concatenate([ws, wt], axis=0)                        # (2*CD, PRODL + 2*CD) = (256, 768)

    mix = jnp.kron(eye_b, jnp.kron(params["adj"].T, eye_t))           # (BM, BM)
    heb = jnp.kron(eye_b, jnp.kron(params["hyper_adj"], eye_t))       # (BHT, BM)
    ret = jnp.kron(eye_b, jnp.kron(params["hyper_adj"].T, eye_t))     # (BM, BHT)

    wout_big = jnp.kron(eye_c, params["wout"])                        # (CD, C*HORIZON)
    wout_pad = jnp.zeros((CD, OUT_W), f32).at[:, :C * HORIZON].set(wout_big)
    wout_folded = params["w"].reshape(CD, 1) * wout_pad               # fold the `* w` scaling in
    bout_pad = jnp.zeros((8, OUT_W), f32).at[0, :C * HORIZON].set(jnp.tile(params["bout"][0], C))

    mats = jnp.concatenate(
        [mix, heb, ret, jnp.asarray(_SHIFT_NP), jnp.asarray(_RED_NP),
         jnp.asarray(_MEAN_NP), wout_folded, bout_pad], axis=0)
    assert mats.shape == (MATS_ROWS, 128), mats.shape

    return {
        "cat_emb": params["cat_emb"],
        "attn_w": attn_w,
        "mats": mats,
        "seg": jnp.asarray(_SEG_NP),
        "expd": jnp.asarray(_EXP_NP),
    }


# =============================== wrapper / forward ===============================

def stshn_forward(inp, prep):
    B, N, C = BATCH, NUM_NODES, N_CATEGORIES

    # tiny per-call input prep: drop time feats, (B,T,N,C) -> (B,N,T,C), embed, flatten rows
    x = inp[..., :C]
    x = jnp.transpose(x, (0, 2, 1, 3))
    x0 = (x[..., None] * prep["cat_emb"][None, None, None]).reshape(BM, CD)

    out = pl.pallas_call(
        _stshn_kernel,
        out_shape=jax.ShapeDtypeStruct((BN, OUT_W), jnp.float32),
        grid=(1,),
        in_specs=[
            pl.BlockSpec((BM, CD), lambda i: (0, 0)),
            pl.BlockSpec(prep["attn_w"].shape, lambda i: (0, 0)),
            pl.BlockSpec(prep["mats"].shape, lambda i: (0, 0)),
            pl.BlockSpec(prep["seg"].shape, lambda i: (0, 0)),
            pl.BlockSpec(prep["expd"].shape, lambda i: (0, 0)),
        ],
        out_specs=pl.BlockSpec((BN, OUT_W), lambda i: (0, 0)),
        compiler_params=pltpu.CompilerParams(dimension_semantics=("arbitrary",)),
    )(x0, prep["attn_w"], prep["mats"], prep["seg"], prep["expd"])

    y = out[:, :C * HORIZON].reshape(B, N, C, HORIZON)
    return jnp.transpose(y, (0, 3, 1, 2))                              # (B, horizon, N, C)


# =============================== parameters ===============================

def init_params(key):
    C, D, dh = N_CATEGORIES, EMBED_DIM, HEAD_DIM
    ks = jax.random.split(key, 12)

    def head_linear(k):
        # one Linear(D, D//heads, bias=False) shared by every head (ModuleList([m] * heads))
        return jax.random.uniform(k, (D, dh), jnp.float32, -1.0, 1.0) / math.sqrt(D)

    return {
        "cat_emb": jax.random.normal(ks[0], (C, D), jnp.float32),
        "adj": jax.random.uniform(ks[1], (NUM_NODES, NUM_NODES), jnp.float32),
        "hyper_adj": jax.random.normal(ks[2], (HYPER_NUM, NUM_NODES), jnp.float32) * 0.5,
        "sQ": head_linear(ks[3]),
        "sK": head_linear(ks[4]),
        "sV": head_linear(ks[5]),
        "tQ": head_linear(ks[6]),
        "tK": head_linear(ks[7]),
        "tV": head_linear(ks[8]),
        "w": jax.random.normal(ks[9], (C, D), jnp.float32),
        "wout": jax.random.uniform(ks[10], (D, HORIZON), jnp.float32, -1.0, 1.0) / math.sqrt(D),
        "bout": jax.random.uniform(ks[11], (1, HORIZON), jnp.float32, -1.0, 1.0) / math.sqrt(D),
    }


# =============================== main ===============================

if __name__ == "__main__":
    key = jax.random.PRNGKey(0)
    pkey, xkey = jax.random.split(key)
    params = init_params(pkey)

    prep = prepare(params)   # one-time weight preprocessing (not in the per-call path)

    inp = jax.random.normal(xkey, (BATCH, WINDOW, NUM_NODES, N_CATEGORIES + 2), jnp.float32)

    fwd = jax.jit(functools.partial(stshn_forward, prep=prep))
    y = jax.block_until_ready(fwd(inp))

    assert y.shape == (BATCH, HORIZON, NUM_NODES, N_CATEGORIES), y.shape
    assert bool(jnp.all(jnp.isfinite(y)))
    print("KERNEL_OK")
</pallas_src>

<mosaic_0001>
module attributes {stable_mosaic.version = 11 : i64} {
  func.func @_stshn_kernel(%arg0: i32, %arg1: memref<128x128xf32, #tpu.memory_space<vmem>>, %arg2: memref<256x768xf32, #tpu.memory_space<vmem>>, %arg3: memref<1176x128xf32, #tpu.memory_space<vmem>>, %arg4: memref<512x64xf32, #tpu.memory_space<vmem>>, %arg5: memref<64x512xf32, #tpu.memory_space<vmem>>, %arg6: memref<16x128xf32, #tpu.memory_space<vmem>>) attributes {dimension_semantics = [#tpu.dimension_semantics<arbitrary>], iteration_bounds = array<i64: 1>, scalar_prefetch = 0 : i64, scratch_operands = 0 : i64, tpu.core_type = #tpu.core_type<tc>, window_params = [{pipeline_mode = #tpu.pipeline_mode<synchronous>, transform_indices = @transform_0, window_bounds = array<i64: 128, 128>}, {pipeline_mode = #tpu.pipeline_mode<synchronous>, transform_indices = @transform_1, window_bounds = array<i64: 256, 768>}, {pipeline_mode = #tpu.pipeline_mode<synchronous>, transform_indices = @transform_2, window_bounds = array<i64: 1176, 128>}, {pipeline_mode = #tpu.pipeline_mode<synchronous>, transform_indices = @transform_3, window_bounds = array<i64: 512, 64>}, {pipeline_mode = #tpu.pipeline_mode<synchronous>, transform_indices = @transform_4, window_bounds = array<i64: 64, 512>}, {pipeline_mode = #tpu.pipeline_mode<synchronous>, transform_indices = @transform_5, window_bounds = array<i64: 16, 128>}]} {
    %c0 = arith.constant 0 : index
    %c0_0 = arith.constant 0 : index
    %0 = vector.load %arg4[%c0, %c0_0] : memref<512x64xf32, #tpu.memory_space<vmem>>, vector<512x64xf32>
    %c0_1 = arith.constant 0 : index
    %c0_2 = arith.constant 0 : index
    %1 = vector.load %arg5[%c0_1, %c0_2] : memref<64x512xf32, #tpu.memory_space<vmem>>, vector<64x512xf32>
    %c0_3 = arith.constant 0 : index
    %c0_4 = arith.constant 0 : index
    %2 = vector.load %arg3[%c0_3, %c0_4] : memref<1176x128xf32, #tpu.memory_space<vmem>>, vector<128x128xf32>
    %c128 = arith.constant 128 : index
    %c0_5 = arith.constant 0 : index
    %3 = vector.load %arg3[%c128, %c0_5] : memref<1176x128xf32, #tpu.memory_space<vmem>>, vector<128x128xf32>
    %c256 = arith.constant 256 : index
    %c0_6 = arith.constant 0 : index
    %4 = vector.load %arg3[%c256, %c0_6] : memref<1176x128xf32, #tpu.memory_space<vmem>>, vector<128x128xf32>
    %c384 = arith.constant 384 : index
    %c0_7 = arith.constant 0 : index
    %5 = vector.load %arg3[%c384, %c0_7] : memref<1176x128xf32, #tpu.memory_space<vmem>>, vector<128x128xf32>
    %c512 = arith.constant 512 : index
    %c0_8 = arith.constant 0 : index
    %6 = vector.load %arg3[%c512, %c0_8] : memref<1176x128xf32, #tpu.memory_space<vmem>>, vector<512x128xf32>
    %c1024 = arith.constant 1024 : index
    %c0_9 = arith.constant 0 : index
    %7 = vector.load %arg3[%c1024, %c0_9] : memref<1176x128xf32, #tpu.memory_space<vmem>>, vector<16x128xf32>
    %c1040 = arith.constant 1040 : index
    %c0_10 = arith.constant 0 : index
    %8 = vector.load %arg3[%c1040, %c0_10] : memref<1176x128xf32, #tpu.memory_space<vmem>>, vector<128x128xf32>
    %c1168 = arith.constant 1168 : index
    %c0_11 = arith.constant 0 : index
    %9 = vector.load %arg3[%c1168, %c0_11] : memref<1176x128xf32, #tpu.memory_space<vmem>>, vector<1x128xf32>
    %c0_12 = arith.constant 0 : index
    %c0_13 = arith.constant 0 : index
    %10 = vector.load %arg1[%c0_12, %c0_13] : memref<128x128xf32, #tpu.memory_space<vmem>>, vector<128x128xf32>
    %c0_14 = arith.constant 0 : index
    %c0_15 = arith.constant 0 : index
    %11 = vector.load %arg2[%c0_14, %c0_15] : memref<256x768xf32, #tpu.memory_space<vmem>>, vector<128x768xf32>
    %cst = arith.constant dense<0.000000e+00> : vector<128x768xf32>
    %12 = tpu.matmul %10, %11, %cst {dimension_numbers = #tpu.dot_dimension_numbers<[1], [0], [0], [1], [0, 0, 1, 1], [], []>} : vector<128x128xf32>, vector<128x768xf32>, vector<128x768xf32> -> vector<128x768xf32>
    %13 = vector.extract_strided_slice %12 {offsets = [0, 0], sizes = [128, 512], strides = [1, 1]} : vector<128x768xf32> to vector<128x512xf32>
    %14 = vector.extract_strided_slice %12 {offsets = [0, 512], sizes = [128, 128], strides = [1, 1]} : vector<128x768xf32> to vector<128x128xf32>
    %15 = vector.extract_strided_slice %12 {offsets = [0, 640], sizes = [128, 128], strides = [1, 1]} : vector<128x768xf32> to vector<128x128xf32>
    %16 = tpu.concatenate %14, %14, %14, %14 in 1 : vector<128x128xf32>, vector<128x128xf32>, vector<128x128xf32>, vector<128x128xf32> -> vector<128x512xf32>
    %17 = tpu.concatenate %15, %15, %15, %15 in 1 : vector<128x128xf32>, vector<128x128xf32>, vector<128x128xf32>, vector<128x128xf32> -> vector<128x512xf32>
    %18 = arith.mulf %13, %16 : vector<128x512xf32>
    %cst_16 = arith.constant dense<0.000000e+00> : vector<128x64xf32>
    %19 = tpu.matmul %18, %0, %cst_16 {dimension_numbers = #tpu.dot_dimension_numbers<[1], [0], [0], [1], [0, 0, 1, 1], [], []>} : vector<128x512xf32>, vector<512x64xf32>, vector<128x64xf32> -> vector<128x64xf32>
    %20 = vector.extract_strided_slice %19 {offsets = [0, 0], sizes = [128, 16], strides = [1, 1]} : vector<128x64xf32> to vector<128x16xf32>
    %21 = vector.extract_strided_slice %19 {offsets = [0, 16], sizes = [128, 16], strides = [1, 1]} : vector<128x64xf32> to vector<128x16xf32>
    %22 = arith.maximumf %20, %21 : vector<128x16xf32>
    %23 = vector.extract_strided_slice %19 {offsets = [0, 32], sizes = [128, 16], strides = [1, 1]} : vector<128x64xf32> to vector<128x16xf32>
    %24 = arith.maximumf %22, %23 : vector<128x16xf32>
    %25 = vector.extract_strided_slice %19 {offsets = [0, 48], sizes = [128, 16], strides = [1, 1]} : vector<128x64xf32> to vector<128x16xf32>
    %26 = arith.maximumf %24, %25 : vector<128x16xf32>
    %27 = tpu.concatenate %26, %26, %26, %26 in 1 : vector<128x16xf32>, vector<128x16xf32>, vector<128x16xf32>, vector<128x16xf32> -> vector<128x64xf32>
    %28 = arith.subf %19, %27 : vector<128x64xf32>
    %29 = math.exp %28 : vector<128x64xf32>
    %30 = vector.extract_strided_slice %29 {offsets = [0, 0], sizes = [128, 16], strides = [1, 1]} : vector<128x64xf32> to vector<128x16xf32>
    %31 = vector.extract_strided_slice %29 {offsets = [0, 16], sizes = [128, 16], strides = [1, 1]} : vector<128x64xf32> to vector<128x16xf32>
    %32 = arith.addf %30, %31 : vector<128x16xf32>
    %33 = vector.extract_strided_slice %29 {offsets = [0, 32], sizes = [128, 16], strides = [1, 1]} : vector<128x64xf32> to vector<128x16xf32>
    %34 = arith.addf %32, %33 : vector<128x16xf32>
    %35 = vector.extract_strided_slice %29 {offsets = [0, 48], sizes = [128, 16], strides = [1, 1]} : vector<128x64xf32> to vector<128x16xf32>
    %36 = arith.addf %34, %35 : vector<128x16xf32>
    %cst_17 = arith.constant 1.000000e+00 : f32
    %37 = vector.broadcast %cst_17 : f32 to vector<128x16xf32>
    %38 = arith.divf %37, %36 : vector<128x16xf32>
    %39 = tpu.concatenate %38, %38, %38, %38 in 1 : vector<128x16xf32>, vector<128x16xf32>, vector<128x16xf32>, vector<128x16xf32> -> vector<128x64xf32>
    %40 = arith.mulf %29, %39 : vector<128x64xf32>
    %cst_18 = arith.constant dense<0.000000e+00> : vector<128x512xf32>
    %41 = tpu.matmul %40, %1, %cst_18 {dimension_numbers = #tpu.dot_dimension_numbers<[1], [0], [0], [1], [0, 0, 1, 1], [], []>} : vector<128x64xf32>, vector<64x512xf32>, vector<128x512xf32> -> vector<128x512xf32>
    %42 = arith.mulf %41, %17 : vector<128x512xf32>
    %cst_19 = arith.constant dense<0.000000e+00> : vector<128x128xf32>
    %43 = tpu.matmul %42, %6, %cst_19 {dimension_numbers = #tpu.dot_dimension_numbers<[1], [0], [0], [1], [0, 0, 1, 1], [], []>} : vector<128x512xf32>, vector<512x128xf32>, vector<128x128xf32> -> vector<128x128xf32>
    %cst_20 = arith.constant dense<0.000000e+00> : vector<128x128xf32>
    %44 = tpu.matmul %2, %43, %cst_20 {dimension_numbers = #tpu.dot_dimension_numbers<[1], [0], [0], [1], [0, 0, 1, 1], [], []>} : vector<128x128xf32>, vector<128x128xf32>, vector<128x128xf32> -> vector<128x128xf32>
    %cst_21 = arith.constant 0.000000e+00 : f32
    %45 = vector.broadcast %cst_21 : f32 to vector<128x128xf32>
    %46 = arith.cmpf oge, %44, %45 : vector<128x128xf32>
    %cst_22 = arith.constant 0.00999999977 : f32
    %47 = vector.broadcast %cst_22 : f32 to vector<128x128xf32>
    %48 = arith.mulf %47, %44 : vector<128x128xf32>
    %49 = arith.select %46, %44, %48 : vector<128x128xi1>, vector<128x128xf32>
    %cst_23 = arith.constant dense<0.000000e+00> : vector<128x128xf32>
    %50 = tpu.matmul %3, %49, %cst_23 {dimension_numbers = #tpu.dot_dimension_numbers<[1], [0], [0], [1], [0, 0, 1, 1], [], []>} : vector<128x128xf32>, vector<128x128xf32>, vector<128x128xf32> -> vector<128x128xf32>
    %cst_24 = arith.constant 0.000000e+00 : f32
    %51 = vector.broadcast %cst_24 : f32 to vector<128x128xf32>
    %52 = arith.cmpf oge, %50, %51 : vector<128x128xf32>
    %cst_25 = arith.constant 0.00999999977 : f32
    %53 = vector.broadcast %cst_25 : f32 to vector<128x128xf32>
    %54 = arith.mulf %53, %50 : vector<128x128xf32>
    %55 = arith.select %52, %50, %54 : vector<128x128xi1>, vector<128x128xf32>
    %cst_26 = arith.constant dense<0.000000e+00> : vector<128x128xf32>
    %56 = tpu.matmul %4, %55, %cst_26 {dimension_numbers = #tpu.dot_dimension_numbers<[1], [0], [0], [1], [0, 0, 1, 1], [], []>} : vector<128x128xf32>, vector<128x128xf32>, vector<128x128xf32> -> vector<128x128xf32>
    %cst_27 = arith.constant 0.000000e+00 : f32
    %57 = vector.broadcast %cst_27 : f32 to vector<128x128xf32>
    %58 = arith.cmpf oge, %56, %57 : vector<128x128xf32>
    %cst_28 = arith.constant 0.00999999977 : f32
    %59 = vector.broadcast %cst_28 : f32 to vector<128x128xf32>
    %60 = arith.mulf %59, %56 : vector<128x128xf32>
    %61 = arith.select %58, %56, %60 : vector<128x128xi1>, vector<128x128xf32>
    %62 = arith.addf %61, %49 : vector<128x128xf32>
    %63 = arith.addf %10, %62 : vector<128x128xf32>
    %c0_29 = arith.constant 0 : index
    %c0_30 = arith.constant 0 : index
    %64 = vector.load %arg2[%c0_29, %c0_30] : memref<256x768xf32, #tpu.memory_space<vmem>>, vector<128x768xf32>
    %cst_31 = arith.constant dense<0.000000e+00> : vector<128x768xf32>
    %65 = tpu.matmul %62, %64, %cst_31 {dimension_numbers = #tpu.dot_dimension_numbers<[1], [0], [0], [1], [0, 0, 1, 1], [], []>} : vector<128x128xf32>, vector<128x768xf32>, vector<128x768xf32> -> vector<128x768xf32>
    %66 = vector.extract_strided_slice %65 {offsets = [0, 0], sizes = [128, 512], strides = [1, 1]} : vector<128x768xf32> to vector<128x512xf32>
    %67 = vector.extract_strided_slice %65 {offsets = [0, 512], sizes = [128, 128], strides = [1, 1]} : vector<128x768xf32> to vector<128x128xf32>
    %68 = vector.extract_strided_slice %65 {offsets = [0, 640], sizes = [128, 128], strides = [1, 1]} : vector<128x768xf32> to vector<128x128xf32>
    %69 = tpu.concatenate %67, %67, %67, %67 in 1 : vector<128x128xf32>, vector<128x128xf32>, vector<128x128xf32>, vector<128x128xf32> -> vector<128x512xf32>
    %70 = tpu.concatenate %68, %68, %68, %68 in 1 : vector<128x128xf32>, vector<128x128xf32>, vector<128x128xf32>, vector<128x128xf32> -> vector<128x512xf32>
    %71 = arith.mulf %66, %69 : vector<128x512xf32>
    %cst_32 = arith.constant dense<0.000000e+00> : vector<128x64xf32>
    %72 = tpu.matmul %71, %0, %cst_32 {dimension_numbers = #tpu.dot_dimension_numbers<[1], [0], [0], [1], [0, 0, 1, 1], [], []>} : vector<128x512xf32>, vector<512x64xf32>, vector<128x64xf32> -> vector<128x64xf32>
    %73 = vector.extract_strided_slice %72 {offsets = [0, 0], sizes = [128, 16], strides = [1, 1]} : vector<128x64xf32> to vector<128x16xf32>
    %74 = vector.extract_strided_slice %72 {offsets = [0, 16], sizes = [128, 16], strides = [1, 1]} : vector<128x64xf32> to vector<128x16xf32>
    %75 = arith.maximumf %73, %74 : vector<128x16xf32>
    %76 = vector.extract_strided_slice %72 {offsets = [0, 32], sizes = [128, 16], strides = [1, 1]} : vector<128x64xf32> to vector<128x16xf32>
    %77 = arith.maximumf %75, %76 : vector<128x16xf32>
    %78 = vector.extract_strided_slice %72 {offsets = [0, 48], sizes = [128, 16], strides = [1, 1]} : vector<128x64xf32> to vector<128x16xf32>
    %79 = arith.maximumf %77, %78 : vector<128x16xf32>
    %80 = tpu.concatenate %79, %79, %79, %79 in 1 : vector<128x16xf32>, vector<128x16xf32>, vector<128x16xf32>, vector<128x16xf32> -> vector<128x64xf32>
    %81 = arith.subf %72, %80 : vector<128x64xf32>
    %82 = math.exp %81 : vector<128x64xf32>
    %83 = vector.extract_strided_slice %82 {offsets = [0, 0], sizes = [128, 16], strides = [1, 1]} : vector<128x64xf32> to vector<128x16xf32>
    %84 = vector.extract_strided_slice %82 {offsets = [0, 16], sizes = [128, 16], strides = [1, 1]} : vector<128x64xf32> to vector<128x16xf32>
    %85 = arith.addf %83, %84 : vector<128x16xf32>
    %86 = vector.extract_strided_slice %82 {offsets = [0, 32], sizes = [128, 16], strides = [1, 1]} : vector<128x64xf32> to vector<128x16xf32>
    %87 = arith.addf %85, %86 : vector<128x16xf32>
    %88 = vector.extract_strided_slice %82 {offsets = [0, 48], sizes = [128, 16], strides = [1, 1]} : vector<128x64xf32> to vector<128x16xf32>
    %89 = arith.addf %87, %88 : vector<128x16xf32>
    %cst_33 = arith.constant 1.000000e+00 : f32
    %90 = vector.broadcast %cst_33 : f32 to vector<128x16xf32>
    %91 = arith.divf %90, %89 : vector<128x16xf32>
    %92 = tpu.concatenate %91, %91, %91, %91 in 1 : vector<128x16xf32>, vector<128x16xf32>, vector<128x16xf32>, vector<128x16xf32> -> vector<128x64xf32>
    %93 = arith.mulf %82, %92 : vector<128x64xf32>
    %cst_34 = arith.constant dense<0.000000e+00> : vector<128x512xf32>
    %94 = tpu.matmul %93, %1, %cst_34 {dimension_numbers = #tpu.dot_dimension_numbers<[1], [0], [0], [1], [0, 0, 1, 1], [], []>} : vector<128x64xf32>, vector<64x512xf32>, vector<128x512xf32> -> vector<128x512xf32>
    %95 = arith.mulf %94, %70 : vector<128x512xf32>
    %cst_35 = arith.constant dense<0.000000e+00> : vector<128x128xf32>
    %96 = tpu.matmul %95, %6, %cst_35 {dimension_numbers = #tpu.dot_dimension_numbers<[1], [0], [0], [1], [0, 0, 1, 1], [], []>} : vector<128x512xf32>, vector<512x128xf32>, vector<128x128xf32> -> vector<128x128xf32>
    %cst_36 = arith.constant dense<0.000000e+00> : vector<128x128xf32>
    %97 = tpu.matmul %2, %96, %cst_36 {dimension_numbers = #tpu.dot_dimension_numbers<[1], [0], [0], [1], [0, 0, 1, 1], [], []>} : vector<128x128xf32>, vector<128x128xf32>, vector<128x128xf32> -> vector<128x128xf32>
    %cst_37 = arith.constant 0.000000e+00 : f32
    %98 = vector.broadcast %cst_37 : f32 to vector<128x128xf32>
    %99 = arith.cmpf oge, %97, %98 : vector<128x128xf32>
    %cst_38 = arith.constant 0.00999999977 : f32
    %100 = vector.broadcast %cst_38 : f32 to vector<128x128xf32>
    %101 = arith.mulf %100, %97 : vector<128x128xf32>
    %102 = arith.select %99, %97, %101 : vector<128x128xi1>, vector<128x128xf32>
    %cst_39 = arith.constant dense<0.000000e+00> : vector<128x128xf32>
    %103 = tpu.matmul %3, %102, %cst_39 {dimension_numbers = #tpu.dot_dimension_numbers<[1], [0], [0], [1], [0, 0, 1, 1], [], []>} : vector<128x128xf32>, vector<128x128xf32>, vector<128x128xf32> -> vector<128x128xf32>
    %cst_40 = arith.constant 0.000000e+00 : f32
    %104 = vector.broadcast %cst_40 : f32 to vector<128x128xf32>
    %105 = arith.cmpf oge, %103, %104 : vector<128x128xf32>
    %cst_41 = arith.constant 0.00999999977 : f32
    %106 = vector.broadcast %cst_41 : f32 to vector<128x128xf32>
    %107 = arith.mulf %106, %103 : vector<128x128xf32>
    %108 = arith.select %105, %103, %107 : vector<128x128xi1>, vector<128x128xf32>
    %cst_42 = arith.constant dense<0.000000e+00> : vector<128x128xf32>
    %109 = tpu.matmul %4, %108, %cst_42 {dimension_numbers = #tpu.dot_dimension_numbers<[1], [0], [0], [1], [0, 0, 1, 1], [], []>} : vector<128x128xf32>, vector<128x128xf32>, vector<128x128xf32> -> vector<128x128xf32>
    %cst_43 = arith.constant 0.000000e+00 : f32
    %110 = vector.broadcast %cst_43 : f32 to vector<128x128xf32>
    %111 = arith.cmpf oge, %109, %110 : vector<128x128xf32>
    %cst_44 = arith.constant 0.00999999977 : f32
    %112 = vector.broadcast %cst_44 : f32 to vector<128x128xf32>
    %113 = arith.mulf %112, %109 : vector<128x128xf32>
    %114 = arith.select %111, %109, %113 : vector<128x128xi1>, vector<128x128xf32>
    %115 = arith.addf %114, %102 : vector<128x128xf32>
    %116 = arith.addf %63, %115 : vector<128x128xf32>
    %cst_45 = arith.constant 5.000000e-01 : f32
    %117 = vector.broadcast %cst_45 : f32 to vector<128x128xf32>
    %118 = arith.mulf %116, %117 : vector<128x128xf32>
    %119 = tpu.iota {dimensions = array<i32: 0>} : vector<128x128xi32>
    %c8_i32 = arith.constant 8 : i32
    %c0_i32 = arith.constant 0 : i32
    %120 = arith.cmpi eq, %c8_i32, %c0_i32 : i32
    %c1_i32 = arith.constant 1 : i32
    %121 = arith.select %120, %c1_i32, %c8_i32 : i32
    %122 = vector.broadcast %121 : i32 to vector<128x128xi32>
    %123 = arith.remsi %119, %122 : vector<128x128xi32>
    %c0_i32_46 = arith.constant 0 : i32
    %124 = vector.broadcast %c0_i32_46 : i32 to vector<128x128xi32>
    %125 = arith.cmpi ne, %123, %124 : vector<128x128xi32>
    %c0_i32_47 = arith.constant 0 : i32
    %126 = vector.broadcast %c0_i32_47 : i32 to vector<128x128xi32>
    %127 = arith.cmpi slt, %123, %126 : vector<128x128xi32>
    %c0_i32_48 = arith.constant 0 : i32
    %128 = arith.cmpi slt, %121, %c0_i32_48 : i32
    %129 = vector.broadcast %128 : i1 to vector<128x128xi1>
    %130 = vector.broadcast %129 : vector<128x128xi1> to vector<128x128xi1>
    %131 = arith.xori %127, %130 : vector<128x128xi1>
    %132 = arith.andi %131, %125 : vector<128x128xi1>
    %133 = vector.broadcast %121 : i32 to vector<128x128xi32>
    %134 = arith.addi %123, %133 : vector<128x128xi32>
    %135 = arith.select %132, %134, %123 : vector<128x128xi1>, vector<128x128xi32>
    %c0_i32_49 = arith.constant 0 : i32
    %136 = vector.broadcast %c0_i32_49 : i32 to vector<128x128xi32>
    %137 = arith.cmpi eq, %135, %136 : vector<128x128xi32>
    %cst_50 = arith.constant dense<0.000000e+00> : vector<128x128xf32>
    %138 = tpu.matmul %5, %118, %cst_50 {dimension_numbers = #tpu.dot_dimension_numbers<[1], [0], [0], [1], [0, 0, 1, 1], [], []>} : vector<128x128xf32>, vector<128x128xf32>, vector<128x128xf32> -> vector<128x128xf32>
    %c128_51 = arith.constant 128 : index
    %c0_52 = arith.constant 0 : index
    %139 = vector.load %arg2[%c128_51, %c0_52] : memref<256x768xf32, #tpu.memory_space<vmem>>, vector<128x512xf32>
    %cst_53 = arith.constant dense<0.000000e+00> : vector<128x512xf32>
    %140 = tpu.matmul %118, %139, %cst_53 {dimension_numbers = #tpu.dot_dimension_numbers<[1], [0], [0], [1], [0, 0, 1, 1], [], []>} : vector<128x128xf32>, vector<128x512xf32>, vector<128x512xf32> -> vector<128x512xf32>
    %c128_54 = arith.constant 128 : index
    %c512_55 = arith.constant 512 : index
    %141 = vector.load %arg2[%c128_54, %c512_55] : memref<256x768xf32, #tpu.memory_space<vmem>>, vector<128x256xf32>
    %cst_56 = arith.constant dense<0.000000e+00> : vector<128x256xf32>
    %142 = tpu.matmul %138, %141, %cst_56 {dimension_numbers = #tpu.dot_dimension_numbers<[1], [0], [0], [1], [0, 0, 1, 1], [], []>} : vector<128x128xf32>, vector<128x256xf32>, vector<128x256xf32> -> vector<128x256xf32>
    %143 = vector.extract_strided_slice %142 {offsets = [0, 0], sizes = [128, 128], strides = [1, 1]} : vector<128x256xf32> to vector<128x128xf32>
    %144 = vector.extract_strided_slice %142 {offsets = [0, 128], sizes = [128, 128], strides = [1, 1]} : vector<128x256xf32> to vector<128x128xf32>
    %145 = tpu.concatenate %143, %143, %143, %143 in 1 : vector<128x128xf32>, vector<128x128xf32>, vector<128x128xf32>, vector<128x128xf32> -> vector<128x512xf32>
    %146 = tpu.concatenate %144, %144, %144, %144 in 1 : vector<128x128xf32>, vector<128x128xf32>, vector<128x128xf32>, vector<128x128xf32> -> vector<128x512xf32>
    %147 = arith.mulf %140, %145 : vector<128x512xf32>
    %cst_57 = arith.constant dense<0.000000e+00> : vector<128x64xf32>
    %148 = tpu.matmul %147, %0, %cst_57 {dimension_numbers = #tpu.dot_dimension_numbers<[1], [0], [0], [1], [0, 0, 1, 1], [], []>} : vector<128x512xf32>, vector<512x64xf32>, vector<128x64xf32> -> vector<128x64xf32>
    %149 = vector.extract_strided_slice %148 {offsets = [0, 0], sizes = [128, 16], strides = [1, 1]} : vector<128x64xf32> to vector<128x16xf32>
    %150 = vector.extract_strided_slice %148 {offsets = [0, 16], sizes = [128, 16], strides = [1, 1]} : vector<128x64xf32> to vector<128x16xf32>
    %151 = arith.maximumf %149, %150 : vector<128x16xf32>
    %152 = vector.extract_strided_slice %148 {offsets = [0, 32], sizes = [128, 16], strides = [1, 1]} : vector<128x64xf32> to vector<128x16xf32>
    %153 = arith.maximumf %151, %152 : vector<128x16xf32>
    %154 = vector.extract_strided_slice %148 {offsets = [0, 48], sizes = [128, 16], strides = [1, 1]} : vector<128x64xf32> to vector<128x16xf32>
    %155 = arith.maximumf %153, %154 : vector<128x16xf32>
    %156 = tpu.concatenate %155, %155, %155, %155 in 1 : vector<128x16xf32>, vector<128x16xf32>, vector<128x16xf32>, vector<128x16xf32> -> vector<128x64xf32>
    %157 = arith.subf %148, %156 : vector<128x64xf32>
    %158 = math.exp %157 : vector<128x64xf32>
    %159 = vector.extract_strided_slice %158 {offsets = [0, 0], sizes = [128, 16], strides = [1, 1]} : vector<128x64xf32> to vector<128x16xf32>
    %160 = vector.extract_strided_slice %158 {offsets = [0, 16], sizes = [128, 16], strides = [1, 1]} : vector<128x64xf32> to vector<128x16xf32>
    %161 = arith.addf %159, %160 : vector<128x16xf32>
    %162 = vector.extract_strided_slice %158 {offsets = [0, 32], sizes = [128, 16], strides = [1, 1]} : vector<128x64xf32> to vector<128x16xf32>
    %163 = arith.addf %161, %162 : vector<128x16xf32>
    %164 = vector.extract_strided_slice %158 {offsets = [0, 48], sizes = [128, 16], strides = [1, 1]} : vector<128x64xf32> to vector<128x16xf32>
    %165 = arith.addf %163, %164 : vector<128x16xf32>
    %cst_58 = arith.constant 1.000000e+00 : f32
    %166 = vector.broadcast %cst_58 : f32 to vector<128x16xf32>
    %167 = arith.divf %166, %165 : vector<128x16xf32>
    %168 = tpu.concatenate %167, %167, %167, %167 in 1 : vector<128x16xf32>, vector<128x16xf32>, vector<128x16xf32>, vector<128x16xf32> -> vector<128x64xf32>
    %169 = arith.mulf %158, %168 : vector<128x64xf32>
    %cst_59 = arith.constant dense<0.000000e+00> : vector<128x512xf32>
    %170 = tpu.matmul %169, %1, %cst_59 {dimension_numbers = #tpu.dot_dimension_numbers<[1], [0], [0], [1], [0, 0, 1, 1], [], []>} : vector<128x64xf32>, vector<64x512xf32>, vector<128x512xf32> -> vector<128x512xf32>
    %171 = arith.mulf %170, %146 : vector<128x512xf32>
    %cst_60 = arith.constant dense<0.000000e+00> : vector<128x128xf32>
    %172 = tpu.matmul %171, %6, %cst_60 {dimension_numbers = #tpu.dot_dimension_numbers<[1], [0], [0], [1], [0, 0, 1, 1], [], []>} : vector<128x512xf32>, vector<512x128xf32>, vector<128x128xf32> -> vector<128x128xf32>
    %173 = arith.select %137, %118, %172 : vector<128x128xi1>, vector<128x128xf32>
    %cst_61 = arith.constant 0.000000e+00 : f32
    %174 = vector.broadcast %cst_61 : f32 to vector<128x128xf32>
    %175 = arith.cmpf oge, %173, %174 : vector<128x128xf32>
    %cst_62 = arith.constant 0.00999999977 : f32
    %176 = vector.broadcast %cst_62 : f32 to vector<128x128xf32>
    %177 = arith.mulf %176, %173 : vector<128x128xf32>
    %178 = arith.select %175, %173, %177 : vector<128x128xi1>, vector<128x128xf32>
    %179 = arith.addf %118, %178 : vector<128x128xf32>
    %cst_63 = arith.constant dense<0.000000e+00> : vector<128x128xf32>
    %180 = tpu.matmul %5, %178, %cst_63 {dimension_numbers = #tpu.dot_dimension_numbers<[1], [0], [0], [1], [0, 0, 1, 1], [], []>} : vector<128x128xf32>, vector<128x128xf32>, vector<128x128xf32> -> vector<128x128xf32>
    %c128_64 = arith.constant 128 : index
    %c0_65 = arith.constant 0 : index
    %181 = vector.load %arg2[%c128_64, %c0_65] : memref<256x768xf32, #tpu.memory_space<vmem>>, vector<128x512xf32>
    %cst_66 = arith.constant dense<0.000000e+00> : vector<128x512xf32>
    %182 = tpu.matmul %178, %181, %cst_66 {dimension_numbers = #tpu.dot_dimension_numbers<[1], [0], [0], [1], [0, 0, 1, 1], [], []>} : vector<128x128xf32>, vector<128x512xf32>, vector<128x512xf32> -> vector<128x512xf32>
    %c128_67 = arith.constant 128 : index
    %c512_68 = arith.constant 512 : index
    %183 = vector.load %arg2[%c128_67, %c512_68] : memref<256x768xf32, #tpu.memory_space<vmem>>, vector<128x256xf32>
    %cst_69 = arith.constant dense<0.000000e+00> : vector<128x256xf32>
    %184 = tpu.matmul %180, %183, %cst_69 {dimension_numbers = #tpu.dot_dimension_numbers<[1], [0], [0], [1], [0, 0, 1, 1], [], []>} : vector<128x128xf32>, vector<128x256xf32>, vector<128x256xf32> -> vector<128x256xf32>
    %185 = vector.extract_strided_slice %184 {offsets = [0, 0], sizes = [128, 128], strides = [1, 1]} : vector<128x256xf32> to vector<128x128xf32>
    %186 = vector.extract_strided_slice %184 {offsets = [0, 128], sizes = [128, 128], strides = [1, 1]} : vector<128x256xf32> to vector<128x128xf32>
    %187 = tpu.concatenate %185, %185, %185, %185 in 1 : vector<128x128xf32>, vector<128x128xf32>, vector<128x128xf32>, vector<128x128xf32> -> vector<128x512xf32>
    %188 = tpu.concatenate %186, %186, %186, %186 in 1 : vector<128x128xf32>, vector<128x128xf32>, vector<128x128xf32>, vector<128x128xf32> -> vector<128x512xf32>
    %189 = arith.mulf %182, %187 : vector<128x512xf32>
    %cst_70 = arith.constant dense<0.000000e+00> : vector<128x64xf32>
    %190 = tpu.matmul %189, %0, %cst_70 {dimension_numbers = #tpu.dot_dimension_numbers<[1], [0], [0], [1], [0, 0, 1, 1], [], []>} : vector<128x512xf32>, vector<512x64xf32>, vector<128x64xf32> -> vector<128x64xf32>
    %191 = vector.extract_strided_slice %190 {offsets = [0, 0], sizes = [128, 16], strides = [1, 1]} : vector<128x64xf32> to vector<128x16xf32>
    %192 = vector.extract_strided_slice %190 {offsets = [0, 16], sizes = [128, 16], strides = [1, 1]} : vector<128x64xf32> to vector<128x16xf32>
    %193 = arith.maximumf %191, %192 : vector<128x16xf32>
    %194 = vector.extract_strided_slice %190 {offsets = [0, 32], sizes = [128, 16], strides = [1, 1]} : vector<128x64xf32> to vector<128x16xf32>
    %195 = arith.maximumf %193, %194 : vector<128x16xf32>
    %196 = vector.extract_strided_slice %190 {offsets = [0, 48], sizes = [128, 16], strides = [1, 1]} : vector<128x64xf32> to vector<128x16xf32>
    %197 = arith.maximumf %195, %196 : vector<128x16xf32>
    %198 = tpu.concatenate %197, %197, %197, %197 in 1 : vector<128x16xf32>, vector<128x16xf32>, vector<128x16xf32>, vector<128x16xf32> -> vector<128x64xf32>
    %199 = arith.subf %190, %198 : vector<128x64xf32>
    %200 = math.exp %199 : vector<128x64xf32>
    %201 = vector.extract_strided_slice %200 {offsets = [0, 0], sizes = [128, 16], strides = [1, 1]} : vector<128x64xf32> to vector<128x16xf32>
    %202 = vector.extract_strided_slice %200 {offsets = [0, 16], sizes = [128, 16], strides = [1, 1]} : vector<128x64xf32> to vector<128x16xf32>
    %203 = arith.addf %201, %202 : vector<128x16xf32>
    %204 = vector.extract_strided_slice %200 {offsets = [0, 32], sizes = [128, 16], strides = [1, 1]} : vector<128x64xf32> to vector<128x16xf32>
    %205 = arith.addf %203, %204 : vector<128x16xf32>
    %206 = vector.extract_strided_slice %200 {offsets = [0, 48], sizes = [128, 16], strides = [1, 1]} : vector<128x64xf32> to vector<128x16xf32>
    %207 = arith.addf %205, %206 : vector<128x16xf32>
    %cst_71 = arith.constant 1.000000e+00 : f32
    %208 = vector.broadcast %cst_71 : f32 to vector<128x16xf32>
    %209 = arith.divf %208, %207 : vector<128x16xf32>
    %210 = tpu.concatenate %209, %209, %209, %209 in 1 : vector<128x16xf32>, vector<128x16xf32>, vector<128x16xf32>, vector<128x16xf32> -> vector<128x64xf32>
    %211 = arith.mulf %200, %210 : vector<128x64xf32>
    %cst_72 = arith.constant dense<0.000000e+00> : vector<128x512xf32>
    %212 = tpu.matmul %211, %1, %cst_72 {dimension_numbers = #tpu.dot_dimension_numbers<[1], [0], [0], [1], [0, 0, 1, 1], [], []>} : vector<128x64xf32>, vector<64x512xf32>, vector<128x512xf32> -> vector<128x512xf32>
    %213 = arith.mulf %212, %188 : vector<128x512xf32>
    %cst_73 = arith.constant dense<0.000000e+00> : vector<128x128xf32>
    %214 = tpu.matmul %213, %6, %cst_73 {dimension_numbers = #tpu.dot_dimension_numbers<[1], [0], [0], [1], [0, 0, 1, 1], [], []>} : vector<128x512xf32>, vector<512x128xf32>, vector<128x128xf32> -> vector<128x128xf32>
    %215 = arith.select %137, %178, %214 : vector<128x128xi1>, vector<128x128xf32>
    %cst_74 = arith.constant 0.000000e+00 : f32
    %216 = vector.broadcast %cst_74 : f32 to vector<128x128xf32>
    %217 = arith.cmpf oge, %215, %216 : vector<128x128xf32>
    %cst_75 = arith.constant 0.00999999977 : f32
    %218 = vector.broadcast %cst_75 : f32 to vector<128x128xf32>
    %219 = arith.mulf %218, %215 : vector<128x128xf32>
    %220 = arith.select %217, %215, %219 : vector<128x128xi1>, vector<128x128xf32>
    %221 = arith.addf %179, %220 : vector<128x128xf32>
    %cst_76 = arith.constant 5.000000e-01 : f32
    %222 = vector.broadcast %cst_76 : f32 to vector<128x128xf32>
    %223 = arith.mulf %221, %222 : vector<128x128xf32>
    %cst_77 = arith.constant dense<0.000000e+00> : vector<16x128xf32>
    %224 = tpu.matmul %7, %223, %cst_77 {dimension_numbers = #tpu.dot_dimension_numbers<[1], [0], [0], [1], [0, 0, 1, 1], [], []>} : vector<16x128xf32>, vector<128x128xf32>, vector<16x128xf32> -> vector<16x128xf32>
    %cst_78 = arith.constant dense<0.000000e+00> : vector<16x128xf32>
    %225 = tpu.matmul %224, %8, %cst_78 {dimension_numbers = #tpu.dot_dimension_numbers<[1], [0], [0], [1], [0, 0, 1, 1], [], []>} : vector<16x128xf32>, vector<128x128xf32>, vector<16x128xf32> -> vector<16x128xf32>
    %226 = vector.broadcast %9 : vector<1x128xf32> to vector<16x128xf32>
    %227 = arith.addf %225, %226 : vector<16x128xf32>
    %c0_79 = arith.constant 0 : index
    %c0_80 = arith.constant 0 : index
    %228 = vector.load %arg6[%c0_79, %c0_80] : memref<16x128xf32, #tpu.memory_space<vmem>>, vector<16x128xf32>
    tpu.vector_store %arg6[%c0_79, %c0_80], %227 {strides = array<i32>} : memref<16x128xf32, #tpu.memory_space<vmem>>, vector<16x128xf32>,
    return
  }
  func.func @transform_0(%arg0: i32) -> (i32, i32) {
    %c0_i32 = arith.constant 0 : i32
    %c0_i32_0 = arith.constant 0 : i32
    %c0_i32_1 = arith.constant 0 : i32
    return %c0_i32, %c0_i32_0 : i32, i32
  }
  func.func @transform_1(%arg0: i32) -> (i32, i32) {
    %c0_i32 = arith.constant 0 : i32
    %c0_i32_0 = arith.constant 0 : i32
    %c0_i32_1 = arith.constant 0 : i32
    return %c0_i32, %c0_i32_0 : i32, i32
  }
  func.func @transform_2(%arg0: i32) -> (i32, i32) {
    %c0_i32 = arith.constant 0 : i32
    %c0_i32_0 = arith.constant 0 : i32
    %c0_i32_1 = arith.constant 0 : i32
    return %c0_i32, %c0_i32_0 : i32, i32
  }
  func.func @transform_3(%arg0: i32) -> (i32, i32) {
    %c0_i32 = arith.constant 0 : i32
    %c0_i32_0 = arith.constant 0 : i32
    %c0_i32_1 = arith.constant 0 : i32
    return %c0_i32, %c0_i32_0 : i32, i32
  }
  func.func @transform_4(%arg0: i32) -> (i32, i32) {
    %c0_i32 = arith.constant 0 : i32
    %c0_i32_0 = arith.constant 0 : i32
    %c0_i32_1 = arith.constant 0 : i32
    return %c0_i32, %c0_i32_0 : i32, i32
  }
  func.func @transform_5(%arg0: i32) -> (i32, i32) {
    %c0_i32 = arith.constant 0 : i32
    %c0_i32_0 = arith.constant 0 : i32
    %c0_i32_1 = arith.constant 0 : i32
    return %c0_i32, %c0_i32_0 : i32, i32
  }
}

</mosaic_0001>

<llo_original>
// kernel: stshn_forward.1
$region0: #{stshn_forward.1}
  #allocation0 [shape = 'u32[]', space=smem, size = 0x4, offset = 0x4, fixed_abs, tag = 'smem constant byte address 0x4 - core index']
  #allocation1 [shape = 'u32[144,128]{1,0:T(1,128)}', space=vmem, size = 0x12000, scoped, tag = 'internal scratch']
  %s0 = inlined_call_operand.vmem [shape: f32[128,128], index: 0, kind: input, shape index: {}]
  %s1 = inlined_call_operand.vmem [shape: f32[256,768], index: 1, kind: input, shape index: {}]
  %s2 = inlined_call_operand.hbm [shape: f32[1176,128], index: 2, kind: input, shape index: {}]
  %s3 = inlined_call_operand.hbm [shape: f32[512,64], index: 3, kind: input, shape index: {}]
  %s4 = inlined_call_operand.vmem [shape: f32[64,512], index: 4, kind: input, shape index: {}]
  %s5 = inlined_call_operand.vmem [shape: f32[16,128], index: 5, kind: output, shape index: {}]
  %s6 = sld [smem:[#allocation0]]
  $region38: #{stshn_forward.1} parent=0
    _
  %s8 = ssub.s32 1, %s6
  %s9 = scalar_select 0, %s8, %s6
  $region1: #{stshn_forward.1} parent=0
    #allocation2 [shape = 'u8[602112]{0}', space=vmem, size = 0x93000, scoped, tag = 'input window, operand 2, single buffered']
    #allocation3 [shape = 's32[1]{0}', space=sflag, size = 0x4, scoped, tag = 'scoped memory for stshn_forward.1']
    #allocation4 [shape = 'u8[262144]{0}', space=vmem, size = 0x40000, scoped, tag = 'input window, operand 3, single buffered']
    #allocation5 [shape = 's32[1]{0}', space=sflag, size = 0x4, scoped, tag = 'scoped memory for stshn_forward.1']
    %10 = vsyncpa [#allocation3], 0
    %11 = vsyncpa [#allocation5], 0
    // Predicated region
    $region2: #{stshn_forward.1} parent=1 // pred_check
      _
    $region3: #{stshn_forward.1} parent=1 // pred_check_branch
      %13 = sbr.rel (0) target = $region5
    $region4: #{stshn_forward.1} parent=1 // pred_region
      _
    $region5: #{stshn_forward.1} parent=1 // pred_fallthru
      _
    // Predicated region
    $region6: #{stshn_forward.1} parent=1 // pred_check
      _
    $region7: #{stshn_forward.1} parent=1 // pred_check_branch
      %15 = sbr.rel (0) target = $region9
    $region8: #{stshn_forward.1} parent=1 // pred_region
      _
    $region9: #{stshn_forward.1} parent=1 // pred_fallthru
      _
    // Predicated region
    $region10: #{stshn_forward.1} parent=1 // pred_check
      _
    $region11: #{stshn_forward.1} parent=1 // pred_check_branch
      %17 = sbr.rel (0) target = $region13
    $region12: #{stshn_forward.1} parent=1 // pred_region
      %s19 = ssub.s32 18816, 18816
      %20 = vsyncadd [#allocation3], %s19
      %s21 = sshll.u32 [#allocation2], 4
      %s22 = int_to_ptr.vmem [resolvable:$true] %s21
      %27 = dma.hbm_to_vmem [thread:$0]  %s2, 18816, %s22, [#allocation3], 128, 128, 8
    $region13: #{stshn_forward.1} parent=1 // pred_fallthru
      _
    // Predicated region
    $region14: #{stshn_forward.1} parent=1 // pred_check
      _
    $region15: #{stshn_forward.1} parent=1 // pred_check_branch
      %29 = sbr.rel (0) target = $region17
    $region16: #{stshn_forward.1} parent=1 // pred_region
      %s31 = ssub.s32 8192, 8192
      %32 = vsyncadd [#allocation5], %s31
      %s33 = sshll.u32 [#allocation4], 4
      %s34 = int_to_ptr.vmem [resolvable:$true] %s33
      %39 = dma.hbm_to_vmem [thread:$0]  %s3, 8192, %s34, [#allocation5], 128, 128, 8
    $region17: #{stshn_forward.1} parent=1 // pred_fallthru
      _
    // Predicated region
    $region18: #{stshn_forward.1} parent=1 // pred_check
      _
    $region19: #{stshn_forward.1} parent=1 // pred_check_branch
      %41 = sbr.rel (0) target = $region21
    $region20: #{stshn_forward.1} parent=1 // pred_region
      _
    $region21: #{stshn_forward.1} parent=1 // pred_fallthru
      _
    // Predicated region
    $region22: #{stshn_forward.1} parent=1 // pred_check
      _
    $region23: #{stshn_forward.1} parent=1 // pred_check_branch
      %43 = sbr.rel (0) target = $region25
    $region24: #{stshn_forward.1} parent=1 // pred_region
      %44 = dma.done [#allocation3], 18816
    $region25: #{stshn_forward.1} parent=1 // pred_fallthru
      _
    // Predicated region
    $region26: #{stshn_forward.1} parent=1 // pred_check
      _
    $region27: #{stshn_forward.1} parent=1 // pred_check_branch
      %46 = sbr.rel (0) target = $region29
    $region28: #{stshn_forward.1} parent=1 // pred_region
      %47 = dma.done [#allocation5], 8192
    $region29: #{stshn_forward.1} parent=1 // pred_fallthru
      _
    %v48 = vld [vmem:[#allocation4] sm:$0xff]
    %v49 = vld [vmem:[#allocation4 + $0x8] sm:$0xff]
    %v50 = vld [vmem:[#allocation4 + $0x10] sm:$0xff]
    %v51 = vld [vmem:[#allocation4 + $0x18] sm:$0xff]
    %v52 = vld [vmem:[#allocation4 + $0x20] sm:$0xff]
    %v53 = vld [vmem:[#allocation4 + $0x28] sm:$0xff]
    %v54 = vld [vmem:[#allocation4 + $0x30] sm:$0xff]
    %v55 = vld [vmem:[#allocation4 + $0x38] sm:$0xff]
    %v56 = vld [vmem:[#allocation4 + $0x40] sm:$0xff]
    %v57 = vld [vmem:[#allocation4 + $0x48] sm:$0xff]
    %v58 = vld [vmem:[#allocation4 + $0x50] sm:$0xff]
    %v59 = vld [vmem:[#allocation4 + $0x58] sm:$0xff]
    %v60 = vld [vmem:[#allocation4 + $0x60] sm:$0xff]
    %v61 = vld [vmem:[#allocation4 + $0x68] sm:$0xff]
    %v62 = vld [vmem:[#allocation4 + $0x70] sm:$0xff]
    %v63 = vld [vmem:[#allocation4 + $0x78] sm:$0xff]
    %v64 = vld [vmem:[#allocation4 + $0x80] sm:$0xff]
    %v65 = vld [vmem:[#allocation4 + $0x88] sm:$0xff]
    %v66 = vld [vmem:[#allocation4 + $0x90] sm:$0xff]
    %v67 = vld [vmem:[#allocation4 + $0x98] sm:$0xff]
    %v68 = vld [vmem:[#allocation4 + $0xa0] sm:$0xff]
    %v69 = vld [vmem:[#allocation4 + $0xa8] sm:$0xff]
    %v70 = vld [vmem:[#allocation4 + $0xb0] sm:$0xff]
    %v71 = vld [vmem:[#allocation4 + $0xb8] sm:$0xff]
    %v72 = vld [vmem:[#allocation4 + $0xc0] sm:$0xff]
    %v73 = vld [vmem:[#allocation4 + $0xc8] sm:$0xff]
    %v74 = vld [vmem:[#allocation4 + $0xd0] sm:$0xff]
    %v75 = vld [vmem:[#allocation4 + $0xd8] sm:$0xff]
    %v76 = vld [vmem:[#allocation4 + $0xe0] sm:$0xff]
    %v77 = vld [vmem:[#allocation4 + $0xe8] sm:$0xff]
    %v78 = vld [vmem:[#allocation4 + $0xf0] sm:$0xff]
    %v79 = vld [vmem:[#allocation4 + $0xf8] sm:$0xff]
    %v80 = vld [vmem:[#allocation4 + $0x100] sm:$0xff]
    %v81 = vld [vmem:[#allocation4 + $0x108] sm:$0xff]
    %v82 = vld [vmem:[#allocation4 + $0x110] sm:$0xff]
    %v83 = vld [vmem:[#allocation4 + $0x118] sm:$0xff]
    %v84 = vld [vmem:[#allocation4 + $0x120] sm:$0xff]
    %v85 = vld [vmem:[#allocation4 + $0x128] sm:$0xff]
    %v86 = vld [vmem:[#allocation4 + $0x130] sm:$0xff]
    %v87 = vld [vmem:[#allocation4 + $0x138] sm:$0xff]
    %v88 = vld [vmem:[#allocation4 + $0x140] sm:$0xff]
    %v89 = vld [vmem:[#allocation4 + $0x148] sm:$0xff]
    %v90 = vld [vmem:[#allocation4 + $0x150] sm:$0xff]
    %v91 = vld [vmem:[#allocation4 + $0x158] sm:$0xff]
    %v92 = vld [vmem:[#allocation4 + $0x160] sm:$0xff]
    %v93 = vld [vmem:[#allocation4 + $0x168] sm:$0xff]
    %v94 = vld [vmem:[#allocation4 + $0x170] sm:$0xff]
    %v95 = vld [vmem:[#allocation4 + $0x178] sm:$0xff]
    %v96 = vld [vmem:[#allocation4 + $0x180] sm:$0xff]
    %v97 = vld [vmem:[#allocation4 + $0x188] sm:$0xff]
    %v98 = vld [vmem:[#allocation4 + $0x190] sm:$0xff]
    %v99 = vld [vmem:[#allocation4 + $0x198] sm:$0xff]
    %v100 = vld [vmem:[#allocation4 + $0x1a0] sm:$0xff]
    %v101 = vld [vmem:[#allocation4 + $0x1a8] sm:$0xff]
    %v102 = vld [vmem:[#allocation4 + $0x1b0] sm:$0xff]
    %v103 = vld [vmem:[#allocation4 + $0x1b8] sm:$0xff]
    %v104 = vld [vmem:[#allocation4 + $0x1c0] sm:$0xff]
    %v105 = vld [vmem:[#allocation4 + $0x1c8] sm:$0xff]
    %v106 = vld [vmem:[#allocation4 + $0x1d0] sm:$0xff]
    %v107 = vld [vmem:[#allocation4 + $0x1d8] sm:$0xff]
    %v108 = vld [vmem:[#allocation4 + $0x1e0] sm:$0xff]
    %v109 = vld [vmem:[#allocation4 + $0x1e8] sm:$0xff]
    %v110 = vld [vmem:[#allocation4 + $0x1f0] sm:$0xff]
    %v111 = vld [vmem:[#allocation4 + $0x1f8] sm:$0xff]
    %v112 = vld [vmem:[%s4] sm:$0xff]
    %v113 = vld [vmem:[%s4 + $0x8] sm:$0xff]
    %v114 = vld [vmem:[%s4 + $0x10] sm:$0xff]
    %v115 = vld [vmem:[%s4 + $0x18] sm:$0xff]
    %v116 = vld [vmem:[%s4 + $0x20] sm:$0xff]
    %v117 = vld [vmem:[%s4 + $0x28] sm:$0xff]
    %v118 = vld [vmem:[%s4 + $0x30] sm:$0xff]
    %v119 = vld [vmem:[%s4 + $0x38] sm:$0xff]
    %v120 = vld [vmem:[%s4 + $0x40] sm:$0xff]
    %v121 = vld [vmem:[%s4 + $0x48] sm:$0xff]
    %v122 = vld [vmem:[%s4 + $0x50] sm:$0xff]
    %v123 = vld [vmem:[%s4 + $0x58] sm:$0xff]
    %v124 = vld [vmem:[%s4 + $0x60] sm:$0xff]
    %v125 = vld [vmem:[%s4 + $0x68] sm:$0xff]
    %v126 = vld [vmem:[%s4 + $0x70] sm:$0xff]
    %v127 = vld [vmem:[%s4 + $0x78] sm:$0xff]
    %v128 = vld [vmem:[%s4 + $0x80] sm:$0xff]
    %v129 = vld [vmem:[%s4 + $0x88] sm:$0xff]
    %v130 = vld [vmem:[%s4 + $0x90] sm:$0xff]
    %v131 = vld [vmem:[%s4 + $0x98] sm:$0xff]
    %v132 = vld [vmem:[%s4 + $0xa0] sm:$0xff]
    %v133 = vld [vmem:[%s4 + $0xa8] sm:$0xff]
    %v134 = vld [vmem:[%s4 + $0xb0] sm:$0xff]
    %v135 = vld [vmem:[%s4 + $0xb8] sm:$0xff]
    %v136 = vld [vmem:[%s4 + $0xc0] sm:$0xff]
    %v137 = vld [vmem:[%s4 + $0xc8] sm:$0xff]
    %v138 = vld [vmem:[%s4 + $0xd0] sm:$0xff]
    %v139 = vld [vmem:[%s4 + $0xd8] sm:$0xff]
    %v140 = vld [vmem:[%s4 + $0xe0] sm:$0xff]
    %v141 = vld [vmem:[%s4 + $0xe8] sm:$0xff]
    %v142 = vld [vmem:[%s4 + $0xf0] sm:$0xff]
    %v143 = vld [vmem:[%s4 + $0xf8] sm:$0xff]
    %v144 = vld [vmem:[#allocation2] sm:$0xff]
    %v145 = vld [vmem:[#allocation2 + $0x8] sm:$0xff]
    %v146 = vld [vmem:[#allocation2 + $0x10] sm:$0xff]
    %v147 = vld [vmem:[#allocation2 + $0x18] sm:$0xff]
    %v148 = vld [vmem:[#allocation2 + $0x20] sm:$0xff]
    %v149 = vld [vmem:[#allocation2 + $0x28] sm:$0xff]
    %v150 = vld [vmem:[#allocation2 + $0x30] sm:$0xff]
    %v151 = vld [vmem:[#allocation2 + $0x38] sm:$0xff]
    %v152 = vld [vmem:[#allocation2 + $0x40] sm:$0xff]
    %v153 = vld [vmem:[#allocation2 + $0x48] sm:$0xff]
    %v154 = vld [vmem:[#allocation2 + $0x50] sm:$0xff]
    %v155 = vld [vmem:[#allocation2 + $0x58] sm:$0xff]
    %v156 = vld [vmem:[#allocation2 + $0x60] sm:$0xff]
    %v157 = vld [vmem:[#allocation2 + $0x68] sm:$0xff]
    %v158 = vld [vmem:[#allocation2 + $0x70] sm:$0xff]
    %v159 = vld [vmem:[#allocation2 + $0x78] sm:$0xff]
    %v160 = vld [vmem:[#allocation2 + $0x80] sm:$0xff]
    %v161 = vld [vmem:[#allocation2 + $0x88] sm:$0xff]
    %v162 = vld [vmem:[#allocation2 + $0x90] sm:$0xff]
    %v163 = vld [vmem:[#allocation2 + $0x98] sm:$0xff]
    %v164 = vld [vmem:[#allocation2 + $0xa0] sm:$0xff]
    %v165 = vld [vmem:[#allocation2 + $0xa8] sm:$0xff]
    %v166 = vld [vmem:[#allocation2 + $0xb0] sm:$0xff]
    %v167 = vld [vmem:[#allocation2 + $0xb8] sm:$0xff]
    %v168 = vld [vmem:[#allocation2 + $0xc0] sm:$0xff]
    %v169 = vld [vmem:[#allocation2 + $0xc8] sm:$0xff]
    %v170 = vld [vmem:[#allocation2 + $0xd0] sm:$0xff]
    %v171 = vld [vmem:[#allocation2 + $0xd8] sm:$0xff]
    %v172 = vld [vmem:[#allocation2 + $0xe0] sm:$0xff]
    %v173 = vld [vmem:[#allocation2 + $0xe8] sm:$0xff]
    %v174 = vld [vmem:[#allocation2 + $0xf0] sm:$0xff]
    %v175 = vld [vmem:[#allocation2 + $0xf8] sm:$0xff]
    %v176 = vld [vmem:[#allocation2 + $0x100] sm:$0xff]
    %v177 = vld [vmem:[#allocation2 + $0x108] sm:$0xff]
    %v178 = vld [vmem:[#allocation2 + $0x110] sm:$0xff]
    %v179 = vld [vmem:[#allocation2 + $0x118] sm:$0xff]
    %v180 = vld [vmem:[#allocation2 + $0x120] sm:$0xff]
    %v181 = vld [vmem:[#allocation2 + $0x128] sm:$0xff]
    %v182 = vld [vmem:[#allocation2 + $0x130] sm:$0xff]
    %v183 = vld [vmem:[#allocation2 + $0x138] sm:$0xff]
    %v184 = vld [vmem:[#allocation2 + $0x140] sm:$0xff]
    %v185 = vld [vmem:[#allocation2 + $0x148] sm:$0xff]
    %v186 = vld [vmem:[#allocation2 + $0x150] sm:$0xff]
    %v187 = vld [vmem:[#allocation2 + $0x158] sm:$0xff]
    %v188 = vld [vmem:[#allocation2 + $0x160] sm:$0xff]
    %v189 = vld [vmem:[#allocation2 + $0x168] sm:$0xff]
    %v190 = vld [vmem:[#allocation2 + $0x170] sm:$0xff]
    %v191 = vld [vmem:[#allocation2 + $0x178] sm:$0xff]
    %v192 = vld [vmem:[#allocation2 + $0x180] sm:$0xff]
    %v193 = vld [vmem:[#allocation2 + $0x188] sm:$0xff]
    %v194 = vld [vmem:[#allocation2 + $0x190] sm:$0xff]
    %v195 = vld [vmem:[#allocation2 + $0x198] sm:$0xff]
    %v196 = vld [vmem:[#allocation2 + $0x1a0] sm:$0xff]
    %v197 = vld [vmem:[#allocation2 + $0x1a8] sm:$0xff]
    %v198 = vld [vmem:[#allocation2 + $0x1b0] sm:$0xff]
    %v199 = vld [vmem:[#allocation2 + $0x1b8] sm:$0xff]
    %v200 = vld [vmem:[#allocation2 + $0x1c0] sm:$0xff]
    %v201 = vld [vmem:[#allocation2 + $0x1c8] sm:$0xff]
    %v202 = vld [vmem:[#allocation2 + $0x1d0] sm:$0xff]
    %v203 = vld [vmem:[#allocation2 + $0x1d8] sm:$0xff]
    %v204 = vld [vmem:[#allocation2 + $0x1e0] sm:$0xff]
    %v205 = vld [vmem:[#allocation2 + $0x1e8] sm:$0xff]
    %v206 = vld [vmem:[#allocation2 + $0x1f0] sm:$0xff]
    %v207 = vld [vmem:[#allocation2 + $0x1f8] sm:$0xff]
    %v208 = vld [vmem:[#allocation2 + $0x200] sm:$0xff]
    %v209 = vld [vmem:[#allocation2 + $0x208] sm:$0xff]
    %v210 = vld [vmem:[#allocation2 + $0x210] sm:$0xff]
    %v211 = vld [vmem:[#allocation2 + $0x218] sm:$0xff]
    %v212 = vld [vmem:[#allocation2 + $0x220] sm:$0xff]
    %v213 = vld [vmem:[#allocation2 + $0x228] sm:$0xff]
    %v214 = vld [vmem:[#allocation2 + $0x230] sm:$0xff]
    %v215 = vld [vmem:[#allocation2 + $0x238] sm:$0xff]
    %v216 = vld [vmem:[#allocation2 + $0x240] sm:$0xff]
    %v217 = vld [vmem:[#allocation2 + $0x248] sm:$0xff]
    %v218 = vld [vmem:[#allocation2 + $0x250] sm:$0xff]
    %v219 = vld [vmem:[#allocation2 + $0x258] sm:$0xff]
    %v220 = vld [vmem:[#allocation2 + $0x260] sm:$0xff]
    %v221 = vld [vmem:[#allocation2 + $0x268] sm:$0xff]
    %v222 = vld [vmem:[#allocation2 + $0x270] sm:$0xff]
    %v223 = vld [vmem:[#allocation2 + $0x278] sm:$0xff]
    %v224 = vld [vmem:[#allocation2 + $0x280] sm:$0xff]
    %v225 = vld [vmem:[#allocation2 + $0x288] sm:$0xff]
    %v226 = vld [vmem:[#allocation2 + $0x290] sm:$0xff]
    %v227 = vld [vmem:[#allocation2 + $0x298] sm:$0xff]
    %v228 = vld [vmem:[#allocation2 + $0x2a0] sm:$0xff]
    %v229 = vld [vmem:[#allocation2 + $0x2a8] sm:$0xff]
    %v230 = vld [vmem:[#allocation2 + $0x2b0] sm:$0xff]
    %v231 = vld [vmem:[#allocation2 + $0x2b8] sm:$0xff]
    %v232 = vld [vmem:[#allocation2 + $0x2c0] sm:$0xff]
    %v233 = vld [vmem:[#allocation2 + $0x2c8] sm:$0xff]
    %v234 = vld [vmem:[#allocation2 + $0x2d0] sm:$0xff]
    %v235 = vld [vmem:[#allocation2 + $0x2d8] sm:$0xff]
    %v236 = vld [vmem:[#allocation2 + $0x2e0] sm:$0xff]
    %v237 = vld [vmem:[#allocation2 + $0x2e8] sm:$0xff]
    %v238 = vld [vmem:[#allocation2 + $0x2f0] sm:$0xff]
    %v239 = vld [vmem:[#allocation2 + $0x2f8] sm:$0xff]
    %v240 = vld [vmem:[#allocation2 + $0x300] sm:$0xff]
    %v241 = vld [vmem:[#allocation2 + $0x308] sm:$0xff]
    %v242 = vld [vmem:[#allocation2 + $0x310] sm:$0xff]
    %v243 = vld [vmem:[#allocation2 + $0x318] sm:$0xff]
    %v244 = vld [vmem:[#allocation2 + $0x320] sm:$0xff]
    %v245 = vld [vmem:[#allocation2 + $0x328] sm:$0xff]
    %v246 = vld [vmem:[#allocation2 + $0x330] sm:$0xff]
    %v247 = vld [vmem:[#allocation2 + $0x338] sm:$0xff]
    %v248 = vld [vmem:[#allocation2 + $0x340] sm:$0xff]
    %v249 = vld [vmem:[#allocation2 + $0x348] sm:$0xff]
    %v250 = vld [vmem:[#allocation2 + $0x350] sm:$0xff]
    %v251 = vld [vmem:[#allocation2 + $0x358] sm:$0xff]
    %v252 = vld [vmem:[#allocation2 + $0x360] sm:$0xff]
    %v253 = vld [vmem:[#allocation2 + $0x368] sm:$0xff]
    %v254 = vld [vmem:[#allocation2 + $0x370] sm:$0xff]
    %v255 = vld [vmem:[#allocation2 + $0x378] sm:$0xff]
    %v256 = vld [vmem:[#allocation2 + $0x380] sm:$0xff]
    %v257 = vld [vmem:[#allocation2 + $0x388] sm:$0xff]
    %v258 = vld [vmem:[#allocation2 + $0x390] sm:$0xff]
    %v259 = vld [vmem:[#allocation2 + $0x398] sm:$0xff]
    %v260 = vld [vmem:[#allocation2 + $0x3a0] sm:$0xff]
    %v261 = vld [vmem:[#allocation2 + $0x3a8] sm:$0xff]
    %v262 = vld [vmem:[#allocation2 + $0x3b0] sm:$0xff]
    %v263 = vld [vmem:[#allocation2 + $0x3b8] sm:$0xff]
    %v264 = vld [vmem:[#allocation2 + $0x3c0] sm:$0xff]
    %v265 = vld [vmem:[#allocation2 + $0x3c8] sm:$0xff]
    %v266 = vld [vmem:[#allocation2 + $0x3d0] sm:$0xff]
    %v267 = vld [vmem:[#allocation2 + $0x3d8] sm:$0xff]
    %v268 = vld [vmem:[#allocation2 + $0x3e0] sm:$0xff]
    %v269 = vld [vmem:[#allocation2 + $0x3e8] sm:$0xff]
    %v270 = vld [vmem:[#allocation2 + $0x3f0] sm:$0xff]
    %v271 = vld [vmem:[#allocation2 + $0x3f8] sm:$0xff]
    %v272 = vld [vmem:[#allocation2 + $0x400] sm:$0xff]
    %v273 = vld [vmem:[#allocation2 + $0x408] sm:$0xff]
    %v274 = vld [vmem:[#allocation2 + $0x410] sm:$0xff]
    %v275 = vld [vmem:[#allocation2 + $0x418] sm:$0xff]
    %v276 = vld [vmem:[#allocation2 + $0x420] sm:$0xff]
    %v277 = vld [vmem:[#allocation2 + $0x428] sm:$0xff]
    %v278 = vld [vmem:[#allocation2 + $0x430] sm:$0xff]
    %v279 = vld [vmem:[#allocation2 + $0x438] sm:$0xff]
    %v280 = vld [vmem:[#allocation2 + $0x440] sm:$0xff]
    %v281 = vld [vmem:[#allocation2 + $0x448] sm:$0xff]
    %v282 = vld [vmem:[#allocation2 + $0x450] sm:$0xff]
    %v283 = vld [vmem:[#allocation2 + $0x458] sm:$0xff]
    %v284 = vld [vmem:[#allocation2 + $0x460] sm:$0xff]
    %v285 = vld [vmem:[#allocation2 + $0x468] sm:$0xff]
    %v286 = vld [vmem:[#allocation2 + $0x470] sm:$0xff]
    %v287 = vld [vmem:[#allocation2 + $0x478] sm:$0xff]
    %v288 = vld [vmem:[#allocation2 + $0x480] sm:$0xff]
    %v289 = vld [vmem:[#allocation2 + $0x488] sm:$0xff]
    %v290 = vld [vmem:[#allocation2 + $0x490] sm:$0x1]
    %v291 = vld [vmem:[%s0] sm:$0xff]
    %v292 = vld [vmem:[%s0 + $0x8] sm:$0xff]
    %v293 = vld [vmem:[%s0 + $0x10] sm:$0xff]
    %v294 = vld [vmem:[%s0 + $0x18] sm:$0xff]
    %v295 = vld [vmem:[%s0 + $0x20] sm:$0xff]
    %v296 = vld [vmem:[%s0 + $0x28] sm:$0xff]
    %v297 = vld [vmem:[%s0 + $0x30] sm:$0xff]
    %v298 = vld [vmem:[%s0 + $0x38] sm:$0xff]
    %v299 = vld [vmem:[%s0 + $0x40] sm:$0xff]
    %v300 = vld [vmem:[%s0 + $0x48] sm:$0xff]
    %v301 = vld [vmem:[%s0 + $0x50] sm:$0xff]
    %v302 = vld [vmem:[%s0 + $0x58] sm:$0xff]
    %v303 = vld [vmem:[%s0 + $0x60] sm:$0xff]
    %v304 = vld [vmem:[%s0 + $0x68] sm:$0xff]
    %v305 = vld [vmem:[%s0 + $0x70] sm:$0xff]
    %v306 = vld [vmem:[%s0 + $0x78] sm:$0xff]
    %v307 = vld [vmem:[%s1] sm:$0xff]
    %v308 = vld [vmem:[%s1 + $0x8] sm:$0xff]
    %v309 = vld [vmem:[%s1 + $0x10] sm:$0xff]
    %v310 = vld [vmem:[%s1 + $0x18] sm:$0xff]
    %v311 = vld [vmem:[%s1 + $0x20] sm:$0xff]
    %v312 = vld [vmem:[%s1 + $0x28] sm:$0xff]
    %v313 = vld [vmem:[%s1 + $0x30] sm:$0xff]
    %v314 = vld [vmem:[%s1 + $0x38] sm:$0xff]
    %v315 = vld [vmem:[%s1 + $0x40] sm:$0xff]
    %v316 = vld [vmem:[%s1 + $0x48] sm:$0xff]
    %v317 = vld [vmem:[%s1 + $0x50] sm:$0xff]
    %v318 = vld [vmem:[%s1 + $0x58] sm:$0xff]
    %v319 = vld [vmem:[%s1 + $0x60] sm:$0xff]
    %v320 = vld [vmem:[%s1 + $0x68] sm:$0xff]
    %v321 = vld [vmem:[%s1 + $0x70] sm:$0xff]
    %v322 = vld [vmem:[%s1 + $0x78] sm:$0xff]
    %v323 = vld [vmem:[%s1 + $0x80] sm:$0xff]
    %v324 = vld [vmem:[%s1 + $0x88] sm:$0xff]
    %v325 = vld [vmem:[%s1 + $0x90] sm:$0xff]
    %v326 = vld [vmem:[%s1 + $0x98] sm:$0xff]
    %v327 = vld [vmem:[%s1 + $0xa0] sm:$0xff]
    %v328 = vld [vmem:[%s1 + $0xa8] sm:$0xff]
    %v329 = vld [vmem:[%s1 + $0xb0] sm:$0xff]
    %v330 = vld [vmem:[%s1 + $0xb8] sm:$0xff]
    %v331 = vld [vmem:[%s1 + $0xc0] sm:$0xff]
    %v332 = vld [vmem:[%s1 + $0xc8] sm:$0xff]
    %v333 = vld [vmem:[%s1 + $0xd0] sm:$0xff]
    %v334 = vld [vmem:[%s1 + $0xd8] sm:$0xff]
    %v335 = vld [vmem:[%s1 + $0xe0] sm:$0xff]
    %v336 = vld [vmem:[%s1 + $0xe8] sm:$0xff]
    %v337 = vld [vmem:[%s1 + $0xf0] sm:$0xff]
    %v338 = vld [vmem:[%s1 + $0xf8] sm:$0xff]
    %v339 = vld [vmem:[%s1 + $0x100] sm:$0xff]
    %v340 = vld [vmem:[%s1 + $0x108] sm:$0xff]
    %v341 = vld [vmem:[%s1 + $0x110] sm:$0xff]
    %v342 = vld [vmem:[%s1 + $0x118] sm:$0xff]
    %v343 = vld [vmem:[%s1 + $0x120] sm:$0xff]
    %v344 = vld [vmem:[%s1 + $0x128] sm:$0xff]
    %v345 = vld [vmem:[%s1 + $0x130] sm:$0xff]
    %v346 = vld [vmem:[%s1 + $0x138] sm:$0xff]
    %v347 = vld [vmem:[%s1 + $0x140] sm:$0xff]
    %v348 = vld [vmem:[%s1 + $0x148] sm:$0xff]
    %v349 = vld [vmem:[%s1 + $0x150] sm:$0xff]
    %v350 = vld [vmem:[%s1 + $0x158] sm:$0xff]
    %v351 = vld [vmem:[%s1 + $0x160] sm:$0xff]
    %v352 = vld [vmem:[%s1 + $0x168] sm:$0xff]
    %v353 = vld [vmem:[%s1 + $0x170] sm:$0xff]
    %v354 = vld [vmem:[%s1 + $0x178] sm:$0xff]
    %v355 = vld [vmem:[%s1 + $0x180] sm:$0xff]
    %v356 = vld [vmem:[%s1 + $0x188] sm:$0xff]
    %v357 = vld [vmem:[%s1 + $0x190] sm:$0xff]
    %v358 = vld [vmem:[%s1 + $0x198] sm:$0xff]
    %v359 = vld [vmem:[%s1 + $0x1a0] sm:$0xff]
    %v360 = vld [vmem:[%s1 + $0x1a8] sm:$0xff]
    %v361 = vld [vmem:[%s1 + $0x1b0] sm:$0xff]
    %v362 = vld [vmem:[%s1 + $0x1b8] sm:$0xff]
    %v363 = vld [vmem:[%s1 + $0x1c0] sm:$0xff]
    %v364 = vld [vmem:[%s1 + $0x1c8] sm:$0xff]
    %v365 = vld [vmem:[%s1 + $0x1d0] sm:$0xff]
    %v366 = vld [vmem:[%s1 + $0x1d8] sm:$0xff]
    %v367 = vld [vmem:[%s1 + $0x1e0] sm:$0xff]
    %v368 = vld [vmem:[%s1 + $0x1e8] sm:$0xff]
    %v369 = vld [vmem:[%s1 + $0x1f0] sm:$0xff]
    %v370 = vld [vmem:[%s1 + $0x1f8] sm:$0xff]
    %v371 = vld [vmem:[%s1 + $0x200] sm:$0xff]
    %v372 = vld [vmem:[%s1 + $0x208] sm:$0xff]
    %v373 = vld [vmem:[%s1 + $0x210] sm:$0xff]
    %v374 = vld [vmem:[%s1 + $0x218] sm:$0xff]
    %v375 = vld [vmem:[%s1 + $0x220] sm:$0xff]
    %v376 = vld [vmem:[%s1 + $0x228] sm:$0xff]
    %v377 = vld [vmem:[%s1 + $0x230] sm:$0xff]
    %v378 = vld [vmem:[%s1 + $0x238] sm:$0xff]
    %v379 = vld [vmem:[%s1 + $0x240] sm:$0xff]
    %v380 = vld [vmem:[%s1 + $0x248] sm:$0xff]
    %v381 = vld [vmem:[%s1 + $0x250] sm:$0xff]
    %v382 = vld [vmem:[%s1 + $0x258] sm:$0xff]
    %v383 = vld [vmem:[%s1 + $0x260] sm:$0xff]
    %v384 = vld [vmem:[%s1 + $0x268] sm:$0xff]
    %v385 = vld [vmem:[%s1 + $0x270] sm:$0xff]
    %v386 = vld [vmem:[%s1 + $0x278] sm:$0xff]
    %v387 = vld [vmem:[%s1 + $0x280] sm:$0xff]
    %v388 = vld [vmem:[%s1 + $0x288] sm:$0xff]
    %v389 = vld [vmem:[%s1 + $0x290] sm:$0xff]
    %v390 = vld [vmem:[%s1 + $0x298] sm:$0xff]
    %v391 = vld [vmem:[%s1 + $0x2a0] sm:$0xff]
    %v392 = vld [vmem:[%s1 + $0x2a8] sm:$0xff]
    %v393 = vld [vmem:[%s1 + $0x2b0] sm:$0xff]
    %v394 = vld [vmem:[%s1 + $0x2b8] sm:$0xff]
    %v395 = vld [vmem:[%s1 + $0x2c0] sm:$0xff]
    %v396 = vld [vmem:[%s1 + $0x2c8] sm:$0xff]
    %v397 = vld [vmem:[%s1 + $0x2d0] sm:$0xff]
    %v398 = vld [vmem:[%s1 + $0x2d8] sm:$0xff]
    %v399 = vld [vmem:[%s1 + $0x2e0] sm:$0xff]
    %v400 = vld [vmem:[%s1 + $0x2e8] sm:$0xff]
    %v401 = vld [vmem:[%s1 + $0x2f0] sm:$0xff]
    %v402 = vld [vmem:[%s1 + $0x2f8] sm:$0xff]
    %403 = vmatprep.subr.mxu0 %v398
    %404 = vmatpush1.msra.mxu0 %v397
    %405 = vmatprep.subr.mxu0 %v392
    %406 = vmatpush1.msra.mxu0 %v391
    %407 = vmatprep.subr.mxu0 %v386
    %408 = vmatpush1.msra.mxu0 %v385
    %409 = vmatprep.subr.mxu0 %v380
    %410 = vmatpush1.msra.mxu0 %v379
    %411 = vmatprep.subr.mxu0 %v374
    %412 = vmatpush1.msra.mxu0 %v373
    %413 = vmatprep.subr.mxu0 %v368
    %414 = vmatpush1.msra.mxu0 %v367
    %415 = vmatprep.subr.mxu0 %v362
    %416 = vmatpush1.msra.mxu0 %v361
    %417 = vmatprep.subr.mxu0 %v356
    %418 = vmatpush1.msra.mxu0 %v355
    %419 = vmatprep.subr.mxu0 %v350
    %420 = vmatpush1.msra.mxu0 %v349
    %421 = vmatprep.subr.mxu0 %v344
    %422 = vmatpush1.msra.mxu0 %v343
    %423 = vmatprep.subr.mxu0 %v338
    %424 = vmatpush1.msra.mxu0 %v337
    %425 = vmatprep.subr.mxu0 %v332
    %426 = vmatpush1.msra.mxu0 %v331
    %427 = vmatprep.subr.mxu0 %v326
    %428 = vmatpush1.msra.mxu0 %v325
    %429 = vmatprep.subr.mxu0 %v320
    %430 = vmatpush1.msra.mxu0 %v319
    %431 = vmatprep.subr.mxu0 %v314
    %432 = vmatpush1.msra.mxu0 %v313
    %433 = vmatprep.subr.mxu0 %v308
    %434 = vmatpush1.msra.mxu0 %v307
    %435 = vmatprep.subr.mxu0 0.0
    %436 = vmatpush2.msra.mxu0 0.0
    %437 = vmatprep.subr.mxu0 0.0
    %438 = vmatpush2.msra.mxu0 0.0
    %439 = vmatprep.subr.mxu0 0.0
    %440 = vmatpush2.msra.mxu0 0.0
    %441 = vmatprep.subr.mxu0 0.0
    %442 = vmatpush2.msra.mxu0 0.0
    %443 = vmatprep.subr.mxu0 0.0
    %444 = vmatpush2.msra.mxu0 0.0
    %445 = vmatprep.subr.mxu0 0.0
    %446 = vmatpush2.msra.mxu0 0.0
    %447 = vmatprep.subr.mxu0 0.0
    %448 = vmatpush2.msra.mxu0 0.0
    %449 = vmatprep.subr.mxu0 0.0
    %450 = vmatpush2.msra.mxu0 0.0
    %451 = vmatprep.subr.mxu0 0.0
    %452 = vmatpush2.msra.mxu0 0.0
    %453 = vmatprep.subr.mxu0 0.0
    %454 = vmatpush2.msra.mxu0 0.0
    %455 = vmatprep.subr.mxu0 0.0
    %456 = vmatpush2.msra.mxu0 0.0
    %457 = vmatprep.subr.mxu0 0.0
    %458 = vmatpush2.msra.mxu0 0.0
    %459 = vmatprep.subr.mxu0 0.0
    %460 = vmatpush2.msra.mxu0 0.0
    %461 = vmatprep.subr.mxu0 0.0
    %462 = vmatpush2.msra.mxu0 0.0
    %463 = vmatprep.subr.mxu0 0.0
    %464 = vmatpush2.msra.mxu0 0.0
    %465 = vmatprep.subr.mxu0 0.0
    %466 = vmatpush2.msra.mxu0 0.0
    %467 = vmatprep.mubr.f32.mxu0 0.0
    %468 = vmatmul.mubr.f32.gmra.mxu0 %v291
    %v469 = vpop.f32.mrf.mxu0
    %v470 = vadd.f32 0.0, %v469
    %v471 = vpop.f32.mrf.mxu0
    %v472 = vadd.f32 0.0, %v471
    %473 = vmatprep.mubr.f32.mxu0 0.0
    %474 = vmatmul.mubr.f32.gmra.mxu0 %v292
    %v475 = vpop.f32.mrf.mxu0
    %v476 = vadd.f32 0.0, %v475
    %v477 = vpop.f32.mrf.mxu0
    %v478 = vadd.f32 0.0, %v477
    %479 = vmatprep.mubr.f32.mxu0 0.0
    %480 = vmatmul.mubr.f32.gmra.mxu0 %v293
    %v481 = vpop.f32.mrf.mxu0
    %v482 = vadd.f32 0.0, %v481
    %v483 = vpop.f32.mrf.mxu0
    %v484 = vadd.f32 0.0, %v483
    %485 = vmatprep.mubr.f32.mxu0 0.0
    %486 = vmatmul.mubr.f32.gmra.mxu0 %v294
    %v487 = vpop.f32.mrf.mxu0
    %v488 = vadd.f32 0.0, %v487
    %v489 = vpop.f32.mrf.mxu0
    %v490 = vadd.f32 0.0, %v489
    %491 = vmatprep.mubr.f32.mxu0 0.0
    %492 = vmatmul.mubr.f32.gmra.mxu0 %v295
    %v493 = vpop.f32.mrf.mxu0
    %v494 = vadd.f32 0.0, %v493
    %v495 = vpop.f32.mrf.mxu0
    %v496 = vadd.f32 0.0, %v495
    %497 = vmatprep.mubr.f32.mxu0 0.0
    %498 = vmatmul.mubr.f32.gmra.mxu0 %v296
    %v499 = vpop.f32.mrf.mxu0
    %v500 = vadd.f32 0.0, %v499
    %v501 = vpop.f32.mrf.mxu0
    %v502 = vadd.f32 0.0, %v501
    %503 = vmatprep.mubr.f32.mxu0 0.0
    %504 = vmatmul.mubr.f32.gmra.mxu0 %v297
    %v505 = vpop.f32.mrf.mxu0
    %v506 = vadd.f32 0.0, %v505
    %v507 = vpop.f32.mrf.mxu0
    %v508 = vadd.f32 0.0, %v507
    %509 = vmatprep.mubr.f32.mxu0 0.0
    %510 = vmatmul.mubr.f32.gmra.mxu0 %v298
    %v511 = vpop.f32.mrf.mxu0
    %v512 = vadd.f32 0.0, %v511
    %v513 = vpop.f32.mrf.mxu0
    %v514 = vadd.f32 0.0, %v513
    %515 = vmatprep.mubr.f32.mxu0 0.0
    %516 = vmatmul.mubr.f32.gmra.mxu0 %v299
    %v517 = vpop.f32.mrf.mxu0
    %v518 = vadd.f32 0.0, %v517
    %v519 = vpop.f32.mrf.mxu0
    %v520 = vadd.f32 0.0, %v519
    %521 = vmatprep.mubr.f32.mxu0 0.0
    %522 = vmatmul.mubr.f32.gmra.mxu0 %v300
    %v523 = vpop.f32.mrf.mxu0
    %v524 = vadd.f32 0.0, %v523
    %v525 = vpop.f32.mrf.mxu0
    %v526 = vadd.f32 0.0, %v525
    %527 = vmatprep.mubr.f32.mxu0 0.0
    %528 = vmatmul.mubr.f32.gmra.mxu0 %v301
    %v529 = vpop.f32.mrf.mxu0
    %v530 = vadd.f32 0.0, %v529
    %v531 = vpop.f32.mrf.mxu0
    %v532 = vadd.f32 0.0, %v531
    %533 = vmatprep.mubr.f32.mxu0 0.0
    %534 = vmatmul.mubr.f32.gmra.mxu0 %v302
    %v535 = vpop.f32.mrf.mxu0
    %v536 = vadd.f32 0.0, %v535
    %v537 = vpop.f32.mrf.mxu0
    %v538 = vadd.f32 0.0, %v537
    %539 = vmatprep.mubr.f32.mxu0 0.0
    %540 = vmatmul.mubr.f32.gmra.mxu0 %v303
    %v541 = vpop.f32.mrf.mxu0
    %v542 = vadd.f32 0.0, %v541
    %v543 = vpop.f32.mrf.mxu0
    %v544 = vadd.f32 0.0, %v543
    %545 = vmatprep.mubr.f32.mxu0 0.0
    %546 = vmatmul.mubr.f32.gmra.mxu0 %v304
    %v547 = vpop.f32.mrf.mxu0
    %v548 = vadd.f32 0.0, %v547
    %v549 = vpop.f32.mrf.mxu0
    %v550 = vadd.f32 0.0, %v549
    %551 = vmatprep.mubr.f32.mxu0 0.0
    %552 = vmatmul.mubr.f32.gmra.mxu0 %v305
    %v553 = vpop.f32.mrf.mxu0
    %v554 = vadd.f32 0.0, %v553
    %v555 = vpop.f32.mrf.mxu0
    %v556 = vadd.f32 0.0, %v555
    %557 = vmatprep.mubr.f32.mxu0 0.0
    %558 = vmatmul.mubr.f32.gmra.mxu0 %v306
    %v559 = vpop.f32.mrf.mxu0
    %v560 = vadd.f32 0.0, %v559
    %v561 = vpop.f32.mrf.mxu0
    %v562 = vadd.f32 0.0, %v561
    %563 = vdwg.mxu0
    %564 = vmatprep.subr.mxu0 %v400
    %565 = vmatpush1.msra.mxu0 %v399
    %566 = vmatprep.subr.mxu0 %v394
    %567 = vmatpush1.msra.mxu0 %v393
    %568 = vmatprep.subr.mxu0 %v388
    %569 = vmatpush1.msra.mxu0 %v387
    %570 = vmatprep.subr.mxu0 %v382
    %571 = vmatpush1.msra.mxu0 %v381
    %572 = vmatprep.subr.mxu0 %v376
    %573 = vmatpush1.msra.mxu0 %v375
    %574 = vmatprep.subr.mxu0 %v370
    %575 = vmatpush1.msra.mxu0 %v369
    %576 = vmatprep.subr.mxu0 %v364
    %577 = vmatpush1.msra.mxu0 %v363
    %578 = vmatprep.subr.mxu0 %v358
    %579 = vmatpush1.msra.mxu0 %v357
    %580 = vmatprep.subr.mxu0 %v352
    %581 = vmatpush1.msra.mxu0 %v351
    %582 = vmatprep.subr.mxu0 %v346
    %583 = vmatpush1.msra.mxu0 %v345
    %584 = vmatprep.subr.mxu0 %v340
    %585 = vmatpush1.msra.mxu0 %v339
    %586 = vmatprep.subr.mxu0 %v334
    %587 = vmatpush1.msra.mxu0 %v333
    %588 = vmatprep.subr.mxu0 %v328
    %589 = vmatpush1.msra.mxu0 %v327
    %590 = vmatprep.subr.mxu0 %v322
    %591 = vmatpush1.msra.mxu0 %v321
    %592 = vmatprep.subr.mxu0 %v316
    %593 = vmatpush1.msra.mxu0 %v315
    %594 = vmatprep.subr.mxu0 %v310
    %595 = vmatpush1.msra.mxu0 %v309
    %596 = vmatprep.subr.mxu0 0.0
    %597 = vmatpush2.msra.mxu0 0.0
    %598 = vmatprep.subr.mxu0 0.0
    %599 = vmatpush2.msra.mxu0 0.0
    %600 = vmatprep.subr.mxu0 0.0
    %601 = vmatpush2.msra.mxu0 0.0
    %602 = vmatprep.subr.mxu0 0.0
    %603 = vmatpush2.msra.mxu0 0.0
    %604 = vmatprep.subr.mxu0 0.0
    %605 = vmatpush2.msra.mxu0 0.0
    %606 = vmatprep.subr.mxu0 0.0
    %607 = vmatpush2.msra.mxu0 0.0
    %608 = vmatprep.subr.mxu0 0.0
    %609 = vmatpush2.msra.mxu0 0.0
    %610 = vmatprep.subr.mxu0 0.0
    %611 = vmatpush2.msra.mxu0 0.0
    %612 = vmatprep.subr.mxu0 0.0
    %613 = vmatpush2.msra.mxu0 0.0
    %614 = vmatprep.subr.mxu0 0.0
    %615 = vmatpush2.msra.mxu0 0.0
    %616 = vmatprep.subr.mxu0 0.0
    %617 = vmatpush2.msra.mxu0 0.0
    %618 = vmatprep.subr.mxu0 0.0
    %619 = vmatpush2.msra.mxu0 0.0
    %620 = vmatprep.subr.mxu0 0.0
    %621 = vmatpush2.msra.mxu0 0.0
    %622 = vmatprep.subr.mxu0 0.0
    %623 = vmatpush2.msra.mxu0 0.0
    %624 = vmatprep.subr.mxu0 0.0
    %625 = vmatpush2.msra.mxu0 0.0
    %626 = vmatprep.subr.mxu0 0.0
    %627 = vmatpush2.msra.mxu0 0.0
    %628 = vmatprep.mubr.f32.mxu0 0.0
    %629 = vmatmul.mubr.f32.gmra.mxu0 %v291
    %v630 = vpop.f32.mrf.mxu0
    %v631 = vadd.f32 0.0, %v630
    %v632 = vpop.f32.mrf.mxu0
    %v633 = vadd.f32 0.0, %v632
    %634 = vmatprep.mubr.f32.mxu0 0.0
    %635 = vmatmul.mubr.f32.gmra.mxu0 %v292
    %v636 = vpop.f32.mrf.mxu0
    %v637 = vadd.f32 0.0, %v636
    %v638 = vpop.f32.mrf.mxu0
    %v639 = vadd.f32 0.0, %v638
    %640 = vmatprep.mubr.f32.mxu0 0.0
    %641 = vmatmul.mubr.f32.gmra.mxu0 %v293
    %v642 = vpop.f32.mrf.mxu0
    %v643 = vadd.f32 0.0, %v642
    %v644 = vpop.f32.mrf.mxu0
    %v645 = vadd.f32 0.0, %v644
    %646 = vmatprep.mubr.f32.mxu0 0.0
    %647 = vmatmul.mubr.f32.gmra.mxu0 %v294
    %v648 = vpop.f32.mrf.mxu0
    %v649 = vadd.f32 0.0, %v648
    %v650 = vpop.f32.mrf.mxu0
    %v651 = vadd.f32 0.0, %v650
    %652 = vmatprep.mubr.f32.mxu0 0.0
    %653 = vmatmul.mubr.f32.gmra.mxu0 %v295
    %v654 = vpop.f32.mrf.mxu0
    %v655 = vadd.f32 0.0, %v654
    %v656 = vpop.f32.mrf.mxu0
    %v657 = vadd.f32 0.0, %v656
    %658 = vmatprep.mubr.f32.mxu0 0.0
    %659 = vmatmul.mubr.f32.gmra.mxu0 %v296
    %v660 = vpop.f32.mrf.mxu0
    %v661 = vadd.f32 0.0, %v660
    %v662 = vpop.f32.mrf.mxu0
    %v663 = vadd.f32 0.0, %v662
    %664 = vmatprep.mubr.f32.mxu0 0.0
    %665 = vmatmul.mubr.f32.gmra.mxu0 %v297
    %v666 = vpop.f32.mrf.mxu0
    %v667 = vadd.f32 0.0, %v666
    %v668 = vpop.f32.mrf.mxu0
    %v669 = vadd.f32 0.0, %v668
    %670 = vmatprep.mubr.f32.mxu0 0.0
    %671 = vmatmul.mubr.f32.gmra.mxu0 %v298
    %v672 = vpop.f32.mrf.mxu0
    %v673 = vadd.f32 0.0, %v672
    %v674 = vpop.f32.mrf.mxu0
    %v675 = vadd.f32 0.0, %v674
    %676 = vmatprep.mubr.f32.mxu0 0.0
    %677 = vmatmul.mubr.f32.gmra.mxu0 %v299
    %v678 = vpop.f32.mrf.mxu0
    %v679 = vadd.f32 0.0, %v678
    %v680 = vpop.f32.mrf.mxu0
    %v681 = vadd.f32 0.0, %v680
    %682 = vmatprep.mubr.f32.mxu0 0.0
    %683 = vmatmul.mubr.f32.gmra.mxu0 %v300
    %v684 = vpop.f32.mrf.mxu0
    %v685 = vadd.f32 0.0, %v684
    %v686 = vpop.f32.mrf.mxu0
    %v687 = vadd.f32 0.0, %v686
    %688 = vmatprep.mubr.f32.mxu0 0.0
    %689 = vmatmul.mubr.f32.gmra.mxu0 %v301
    %v690 = vpop.f32.mrf.mxu0
    %v691 = vadd.f32 0.0, %v690
    %v692 = vpop.f32.mrf.mxu0
    %v693 = vadd.f32 0.0, %v692
    %694 = vmatprep.mubr.f32.mxu0 0.0
    %695 = vmatmul.mubr.f32.gmra.mxu0 %v302
    %v696 = vpop.f32.mrf.mxu0
    %v697 = vadd.f32 0.0, %v696
    %v698 = vpop.f32.mrf.mxu0
    %v699 = vadd.f32 0.0, %v698
    %700 = vmatprep.mubr.f32.mxu0 0.0
    %701 = vmatmul.mubr.f32.gmra.mxu0 %v303
    %v702 = vpop.f32.mrf.mxu0
    %v703 = vadd.f32 0.0, %v702
    %v704 = vpop.f32.mrf.mxu0
    %v705 = vadd.f32 0.0, %v704
    %706 = vmatprep.mubr.f32.mxu0 0.0
    %707 = vmatmul.mubr.f32.gmra.mxu0 %v304
    %v708 = vpop.f32.mrf.mxu0
    %v709 = vadd.f32 0.0, %v708
    %v710 = vpop.f32.mrf.mxu0
    %v711 = vadd.f32 0.0, %v710
    %712 = vmatprep.mubr.f32.mxu0 0.0
    %713 = vmatmul.mubr.f32.gmra.mxu0 %v305
    %v714 = vpop.f32.mrf.mxu0
    %v715 = vadd.f32 0.0, %v714
    %v716 = vpop.f32.mrf.mxu0
    %v717 = vadd.f32 0.0, %v716
    %718 = vmatprep.mubr.f32.mxu0 0.0
    %719 = vmatmul.mubr.f32.gmra.mxu0 %v306
    %v720 = vpop.f32.mrf.mxu0
    %v721 = vadd.f32 0.0, %v720
    %v722 = vpop.f32.mrf.mxu0
    %v723 = vadd.f32 0.0, %v722
    %724 = vdwg.mxu0
    %725 = vmatprep.subr.mxu0 %v402
    %726 = vmatpush1.msra.mxu0 %v401
    %727 = vmatprep.subr.mxu0 %v396
    %728 = vmatpush1.msra.mxu0 %v395
    %729 = vmatprep.subr.mxu0 %v390
    %730 = vmatpush1.msra.mxu0 %v389
    %731 = vmatprep.subr.mxu0 %v384
    %732 = vmatpush1.msra.mxu0 %v383
    %733 = vmatprep.subr.mxu0 %v378
    %734 = vmatpush1.msra.mxu0 %v377
    %735 = vmatprep.subr.mxu0 %v372
    %736 = vmatpush1.msra.mxu0 %v371
    %737 = vmatprep.subr.mxu0 %v366
    %738 = vmatpush1.msra.mxu0 %v365
    %739 = vmatprep.subr.mxu0 %v360
    %740 = vmatpush1.msra.mxu0 %v359
    %741 = vmatprep.subr.mxu0 %v354
    %742 = vmatpush1.msra.mxu0 %v353
    %743 = vmatprep.subr.mxu0 %v348
    %744 = vmatpush1.msra.mxu0 %v347
    %745 = vmatprep.subr.mxu0 %v342
    %746 = vmatpush1.msra.mxu0 %v341
    %747 = vmatprep.subr.mxu0 %v336
    %748 = vmatpush1.msra.mxu0 %v335
    %749 = vmatprep.subr.mxu0 %v330
    %750 = vmatpush1.msra.mxu0 %v329
    %751 = vmatprep.subr.mxu0 %v324
    %752 = vmatpush1.msra.mxu0 %v323
    %753 = vmatprep.subr.mxu0 %v318
    %754 = vmatpush1.msra.mxu0 %v317
    %755 = vmatprep.subr.mxu0 %v312
    %756 = vmatpush1.msra.mxu0 %v311
    %757 = vmatprep.subr.mxu0 0.0
    %758 = vmatpush2.msra.mxu0 0.0
    %759 = vmatprep.subr.mxu0 0.0
    %760 = vmatpush2.msra.mxu0 0.0
    %761 = vmatprep.subr.mxu0 0.0
    %762 = vmatpush2.msra.mxu0 0.0
    %763 = vmatprep.subr.mxu0 0.0
    %764 = vmatpush2.msra.mxu0 0.0
    %765 = vmatprep.subr.mxu0 0.0
    %766 = vmatpush2.msra.mxu0 0.0
    %767 = vmatprep.subr.mxu0 0.0
    %768 = vmatpush2.msra.mxu0 0.0
    %769 = vmatprep.subr.mxu0 0.0
    %770 = vmatpush2.msra.mxu0 0.0
    %771 = vmatprep.subr.mxu0 0.0
    %772 = vmatpush2.msra.mxu0 0.0
    %773 = vmatprep.subr.mxu0 0.0
    %774 = vmatpush2.msra.mxu0 0.0
    %775 = vmatprep.subr.mxu0 0.0
    %776 = vmatpush2.msra.mxu0 0.0
    %777 = vmatprep.subr.mxu0 0.0
    %778 = vmatpush2.msra.mxu0 0.0
    %779 = vmatprep.subr.mxu0 0.0
    %780 = vmatpush2.msra.mxu0 0.0
    %781 = vmatprep.subr.mxu0 0.0
    %782 = vmatpush2.msra.mxu0 0.0
    %783 = vmatprep.subr.mxu0 0.0
    %784 = vmatpush2.msra.mxu0 0.0
    %785 = vmatprep.subr.mxu0 0.0
    %786 = vmatpush2.msra.mxu0 0.0
    %787 = vmatprep.subr.mxu0 0.0
    %788 = vmatpush2.msra.mxu0 0.0
    %789 = vmatprep.mubr.f32.mxu0 0.0
    %790 = vmatmul.mubr.f32.gmra.mxu0 %v291
    %v791 = vpop.f32.mrf.mxu0
    %v792 = vadd.f32 0.0, %v791
    %v793 = vpop.f32.mrf.mxu0
    %v794 = vadd.f32 0.0, %v793
    %795 = vmatprep.mubr.f32.mxu0 0.0
    %796 = vmatmul.mubr.f32.gmra.mxu0 %v292
    %v797 = vpop.f32.mrf.mxu0
    %v798 = vadd.f32 0.0, %v797
    %v799 = vpop.f32.mrf.mxu0
    %v800 = vadd.f32 0.0, %v799
    %801 = vmatprep.mubr.f32.mxu0 0.0
    %802 = vmatmul.mubr.f32.gmra.mxu0 %v293
    %v803 = vpop.f32.mrf.mxu0
    %v804 = vadd.f32 0.0, %v803
    %v805 = vpop.f32.mrf.mxu0
    %v806 = vadd.f32 0.0, %v805
    %807 = vmatprep.mubr.f32.mxu0 0.0
    %808 = vmatmul.mubr.f32.gmra.mxu0 %v294
    %v809 = vpop.f32.mrf.mxu0
    %v810 = vadd.f32 0.0, %v809
    %v811 = vpop.f32.mrf.mxu0
    %v812 = vadd.f32 0.0, %v811
    %813 = vmatprep.mubr.f32.mxu0 0.0
    %814 = vmatmul.mubr.f32.gmra.mxu0 %v295
    %v815 = vpop.f32.mrf.mxu0
    %v816 = vadd.f32 0.0, %v815
    %v817 = vpop.f32.mrf.mxu0
    %v818 = vadd.f32 0.0, %v817
    %819 = vmatprep.mubr.f32.mxu0 0.0
    %820 = vmatmul.mubr.f32.gmra.mxu0 %v296
    %v821 = vpop.f32.mrf.mxu0
    %v822 = vadd.f32 0.0, %v821
    %v823 = vpop.f32.mrf.mxu0
    %v824 = vadd.f32 0.0, %v823
    %825 = vmatprep.mubr.f32.mxu0 0.0
    %826 = vmatmul.mubr.f32.gmra.mxu0 %v297
    %v827 = vpop.f32.mrf.mxu0
    %v828 = vadd.f32 0.0, %v827
    %v829 = vpop.f32.mrf.mxu0
    %v830 = vadd.f32 0.0, %v829
    %831 = vmatprep.mubr.f32.mxu0 0.0
    %832 = vmatmul.mubr.f32.gmra.mxu0 %v298
    %v833 = vpop.f32.mrf.mxu0
    %v834 = vadd.f32 0.0, %v833
    %v835 = vpop.f32.mrf.mxu0
    %v836 = vadd.f32 0.0, %v835
    %837 = vmatprep.mubr.f32.mxu0 0.0
    %838 = vmatmul.mubr.f32.gmra.mxu0 %v299
    %v839 = vpop.f32.mrf.mxu0
    %v840 = vadd.f32 0.0, %v839
    %v841 = vpop.f32.mrf.mxu0
    %v842 = vadd.f32 0.0, %v841
    %843 = vmatprep.mubr.f32.mxu0 0.0
    %844 = vmatmul.mubr.f32.gmra.mxu0 %v300
    %v845 = vpop.f32.mrf.mxu0
    %v846 = vadd.f32 0.0, %v845
    %v847 = vpop.f32.mrf.mxu0
    %v848 = vadd.f32 0.0, %v847
    %849 = vmatprep.mubr.f32.mxu0 0.0
    %850 = vmatmul.mubr.f32.gmra.mxu0 %v301
    %v851 = vpop.f32.mrf.mxu0
    %v852 = vadd.f32 0.0, %v851
    %v853 = vpop.f32.mrf.mxu0
    %v854 = vadd.f32 0.0, %v853
    %855 = vmatprep.mubr.f32.mxu0 0.0
    %856 = vmatmul.mubr.f32.gmra.mxu0 %v302
    %v857 = vpop.f32.mrf.mxu0
    %v858 = vadd.f32 0.0, %v857
    %v859 = vpop.f32.mrf.mxu0
    %v860 = vadd.f32 0.0, %v859
    %861 = vmatprep.mubr.f32.mxu0 0.0
    %862 = vmatmul.mubr.f32.gmra.mxu0 %v303
    %v863 = vpop.f32.mrf.mxu0
    %v864 = vadd.f32 0.0, %v863
    %v865 = vpop.f32.mrf.mxu0
    %v866 = vadd.f32 0.0, %v865
    %867 = vmatprep.mubr.f32.mxu0 0.0
    %868 = vmatmul.mubr.f32.gmra.mxu0 %v304
    %v869 = vpop.f32.mrf.mxu0
    %v870 = vadd.f32 0.0, %v869
    %v871 = vpop.f32.mrf.mxu0
    %v872 = vadd.f32 0.0, %v871
    %873 = vmatprep.mubr.f32.mxu0 0.0
    %874 = vmatmul.mubr.f32.gmra.mxu0 %v305
    %v875 = vpop.f32.mrf.mxu0
    %v876 = vadd.f32 0.0, %v875
    %v877 = vpop.f32.mrf.mxu0
    %v878 = vadd.f32 0.0, %v877
    %879 = vmatprep.mubr.f32.mxu0 0.0
    %880 = vmatmul.mubr.f32.gmra.mxu0 %v306
    %v881 = vpop.f32.mrf.mxu0
    %v882 = vadd.f32 0.0, %v881
    %v883 = vpop.f32.mrf.mxu0
    %v884 = vadd.f32 0.0, %v883
    %885 = vdwg.mxu0
    %v886 = vmul.f32 %v470, %v792
    %v887 = vmul.f32 %v472, %v792
    %v888 = vmul.f32 %v631, %v792
    %v889 = vmul.f32 %v633, %v792
    %v890 = vmul.f32 %v476, %v798
    %v891 = vmul.f32 %v478, %v798
    %v892 = vmul.f32 %v637, %v798
    %v893 = vmul.f32 %v639, %v798
    %v894 = vmul.f32 %v482, %v804
    %v895 = vmul.f32 %v484, %v804
    %v896 = vmul.f32 %v643, %v804
    %v897 = vmul.f32 %v645, %v804
    %v898 = vmul.f32 %v488, %v810
    %v899 = vmul.f32 %v490, %v810
    %v900 = vmul.f32 %v649, %v810
    %v901 = vmul.f32 %v651, %v810
    %v902 = vmul.f32 %v494, %v816
    %v903 = vmul.f32 %v496, %v816
    %v904 = vmul.f32 %v655, %v816
    %v905 = vmul.f32 %v657, %v816
    %v906 = vmul.f32 %v500, %v822
    %v907 = vmul.f32 %v502, %v822
    %v908 = vmul.f32 %v661, %v822
    %v909 = vmul.f32 %v663, %v822
    %v910 = vmul.f32 %v506, %v828
    %v911 = vmul.f32 %v508, %v828
    %v912 = vmul.f32 %v667, %v828
    %v913 = vmul.f32 %v669, %v828
    %v914 = vmul.f32 %v512, %v834
    %v915 = vmul.f32 %v514, %v834
    %v916 = vmul.f32 %v673, %v834
    %v917 = vmul.f32 %v675, %v834
    %v918 = vmul.f32 %v518, %v840
    %v919 = vmul.f32 %v520, %v840
    %v920 = vmul.f32 %v679, %v840
    %v921 = vmul.f32 %v681, %v840
    %v922 = vmul.f32 %v524, %v846
    %v923 = vmul.f32 %v526, %v846
    %v924 = vmul.f32 %v685, %v846
    %v925 = vmul.f32 %v687, %v846
    %v926 = vmul.f32 %v530, %v852
    %v927 = vmul.f32 %v532, %v852
    %v928 = vmul.f32 %v691, %v852
    %v929 = vmul.f32 %v693, %v852
    %v930 = vmul.f32 %v536, %v858
    %v931 = vmul.f32 %v538, %v858
    %v932 = vmul.f32 %v697, %v858
    %v933 = vmul.f32 %v699, %v858
    %v934 = vmul.f32 %v542, %v864
    %v935 = vmul.f32 %v544, %v864
    %v936 = vmul.f32 %v703, %v864
    %v937 = vmul.f32 %v705, %v864
    %v938 = vmul.f32 %v548, %v870
    %v939 = vmul.f32 %v550, %v870
    %v940 = vmul.f32 %v709, %v870
    %v941 = vmul.f32 %v711, %v870
    %v942 = vmul.f32 %v554, %v876
    %v943 = vmul.f32 %v556, %v876
    %v944 = vmul.f32 %v715, %v876
    %v945 = vmul.f32 %v717, %v876
    %v946 = vmul.f32 %v560, %v882
    %v947 = vmul.f32 %v562, %v882
    %v948 = vmul.f32 %v721, %v882
    %v949 = vmul.f32 %v723, %v882
    %950 = vmatprep.subr.mxu0 0.0
    %951 = vmatpush1.msra.mxu0 %v63
    %952 = vmatprep.subr.mxu0 0.0
    %953 = vmatpush1.msra.mxu0 %v62
    %954 = vmatprep.subr.mxu0 0.0
    %955 = vmatpush1.msra.mxu0 %v61
    %956 = vmatprep.subr.mxu0 0.0
    %957 = vmatpush1.msra.mxu0 %v60
    %958 = vmatprep.subr.mxu0 0.0
    %959 = vmatpush1.msra.mxu0 %v59
    %960 = vmatprep.subr.mxu0 0.0
    %961 = vmatpush1.msra.mxu0 %v58
    %962 = vmatprep.subr.mxu0 0.0
    %963 = vmatpush1.msra.mxu0 %v57
    %964 = vmatprep.subr.mxu0 0.0
    %965 = vmatpush1.msra.mxu0 %v56
    %966 = vmatprep.subr.mxu0 0.0
    %967 = vmatpush1.msra.mxu0 %v55
    %968 = vmatprep.subr.mxu0 0.0
    %969 = vmatpush1.msra.mxu0 %v54
    %970 = vmatprep.subr.mxu0 0.0
    %971 = vmatpush1.msra.mxu0 %v53
    %972 = vmatprep.subr.mxu0 0.0
    %973 = vmatpush1.msra.mxu0 %v52
    %974 = vmatprep.subr.mxu0 0.0
    %975 = vmatpush1.msra.mxu0 %v51
    %976 = vmatprep.subr.mxu0 0.0
    %977 = vmatpush1.msra.mxu0 %v50
    %978 = vmatprep.subr.mxu0 0.0
    %979 = vmatpush1.msra.mxu0 %v49
    %980 = vmatprep.subr.mxu0 0.0
    %981 = vmatpush1.msra.mxu0 %v48
    %982 = vmatprep.subr.mxu0 0.0
    %983 = vmatpush2.msra.mxu0 %v79
    %984 = vmatprep.subr.mxu0 0.0
    %985 = vmatpush2.msra.mxu0 %v78
    %986 = vmatprep.subr.mxu0 0.0
    %987 = vmatpush2.msra.mxu0 %v77
    %988 = vmatprep.subr.mxu0 0.0
    %989 = vmatpush2.msra.mxu0 %v76
    %990 = vmatprep.subr.mxu0 0.0
    %991 = vmatpush2.msra.mxu0 %v75
    %992 = vmatprep.subr.mxu0 0.0
    %993 = vmatpush2.msra.mxu0 %v74
    %994 = vmatprep.subr.mxu0 0.0
    %995 = vmatpush2.msra.mxu0 %v73
    %996 = vmatprep.subr.mxu0 0.0
    %997 = vmatpush2.msra.mxu0 %v72
    %998 = vmatprep.subr.mxu0 0.0
    %999 = vmatpush2.msra.mxu0 %v71
    %1000 = vmatprep.subr.mxu0 0.0
    %1001 = vmatpush2.msra.mxu0 %v70
    %1002 = vmatprep.subr.mxu0 0.0
    %1003 = vmatpush2.msra.mxu0 %v69
    %1004 = vmatprep.subr.mxu0 0.0
    %1005 = vmatpush2.msra.mxu0 %v68
    %1006 = vmatprep.subr.mxu0 0.0
    %1007 = vmatpush2.msra.mxu0 %v67
    %1008 = vmatprep.subr.mxu0 0.0
    %1009 = vmatpush2.msra.mxu0 %v66
    %1010 = vmatprep.subr.mxu0 0.0
    %1011 = vmatpush2.msra.mxu0 %v65
    %1012 = vmatprep.subr.mxu0 0.0
    %1013 = vmatpush2.msra.mxu0 %v64
    %1014 = vmatprep.mubr.f32.mxu0 %v887
    %1015 = vmatmul.mubr.f32.gmra.mxu0 %v886
    %v1016 = vpop.f32.mrf.mxu0
    %v1017 = vadd.f32 0.0, %v1016
    %v1018 = vpop.f32.mrf.mxu0
    %1019 = vmatprep.mubr.f32.mxu0 %v891
    %1020 = vmatmul.mubr.f32.gmra.mxu0 %v890
    %v1021 = vpop.f32.mrf.mxu0
    %v1022 = vadd.f32 0.0, %v1021
    %v1023 = vpop.f32.mrf.mxu0
    %1024 = vmatprep.mubr.f32.mxu0 %v895
    %1025 = vmatmul.mubr.f32.gmra.mxu0 %v894
    %v1026 = vpop.f32.mrf.mxu0
    %v1027 = vadd.f32 0.0, %v1026
    %v1028 = vpop.f32.mrf.mxu0
    %1029 = vmatprep.mubr.f32.mxu0 %v899
    %1030 = vmatmul.mubr.f32.gmra.mxu0 %v898
    %v1031 = vpop.f32.mrf.mxu0
    %v1032 = vadd.f32 0.0, %v1031
    %v1033 = vpop.f32.mrf.mxu0
    %1034 = vmatprep.mubr.f32.mxu0 %v903
    %1035 = vmatmul.mubr.f32.gmra.mxu0 %v902
    %v1036 = vpop.f32.mrf.mxu0
    %v1037 = vadd.f32 0.0, %v1036
    %v1038 = vpop.f32.mrf.mxu0
    %1039 = vmatprep.mubr.f32.mxu0 %v907
    %1040 = vmatmul.mubr.f32.gmra.mxu0 %v906
    %v1041 = vpop.f32.mrf.mxu0
    %v1042 = vadd.f32 0.0, %v1041
    %v1043 = vpop.f32.mrf.mxu0
    %1044 = vmatprep.mubr.f32.mxu0 %v911
    %1045 = vmatmul.mubr.f32.gmra.mxu0 %v910
    %v1046 = vpop.f32.mrf.mxu0
    %v1047 = vadd.f32 0.0, %v1046
    %v1048 = vpop.f32.mrf.mxu0
    %1049 = vmatprep.mubr.f32.mxu0 %v915
    %1050 = vmatmul.mubr.f32.gmra.mxu0 %v914
    %v1051 = vpop.f32.mrf.mxu0
    %v1052 = vadd.f32 0.0, %v1051
    %v1053 = vpop.f32.mrf.mxu0
    %1054 = vmatprep.mubr.f32.mxu0 %v919
    %1055 = vmatmul.mubr.f32.gmra.mxu0 %v918
    %v1056 = vpop.f32.mrf.mxu0
    %v1057 = vadd.f32 0.0, %v1056
    %v1058 = vpop.f32.mrf.mxu0
    %1059 = vmatprep.mubr.f32.mxu0 %v923
    %1060 = vmatmul.mubr.f32.gmra.mxu0 %v922
    %v1061 = vpop.f32.mrf.mxu0
    %v1062 = vadd.f32 0.0, %v1061
    %v1063 = vpop.f32.mrf.mxu0
    %1064 = vmatprep.mubr.f32.mxu0 %v927
    %1065 = vmatmul.mubr.f32.gmra.mxu0 %v926
    %v1066 = vpop.f32.mrf.mxu0
    %v1067 = vadd.f32 0.0, %v1066
    %v1068 = vpop.f32.mrf.mxu0
    %1069 = vmatprep.mubr.f32.mxu0 %v931
    %1070 = vmatmul.mubr.f32.gmra.mxu0 %v930
    %v1071 = vpop.f32.mrf.mxu0
    %v1072 = vadd.f32 0.0, %v1071
    %v1073 = vpop.f32.mrf.mxu0
    %1074 = vmatprep.mubr.f32.mxu0 %v935
    %1075 = vmatmul.mubr.f32.gmra.mxu0 %v934
    %v1076 = vpop.f32.mrf.mxu0
    %v1077 = vadd.f32 0.0, %v1076
    %v1078 = vpop.f32.mrf.mxu0
    %1079 = vmatprep.mubr.f32.mxu0 %v939
    %1080 = vmatmul.mubr.f32.gmra.mxu0 %v938
    %v1081 = vpop.f32.mrf.mxu0
    %v1082 = vadd.f32 0.0, %v1081
    %v1083 = vpop.f32.mrf.mxu0
    %1084 = vmatprep.mubr.f32.mxu0 %v943
    %1085 = vmatmul.mubr.f32.gmra.mxu0 %v942
    %v1086 = vpop.f32.mrf.mxu0
    %v1087 = vadd.f32 0.0, %v1086
    %v1088 = vpop.f32.mrf.mxu0
    %1089 = vmatprep.mubr.f32.mxu0 %v947
    %1090 = vmatmul.mubr.f32.gmra.mxu0 %v946
    %v1091 = vpop.f32.mrf.mxu0
    %v1092 = vadd.f32 0.0, %v1091
    %v1093 = vpop.f32.mrf.mxu0
    %1094 = vdwg.mxu0
    %1095 = vmatprep.subr.mxu0 0.0
    %1096 = vmatpush1.msra.mxu0 %v95
    %1097 = vmatprep.subr.mxu0 0.0
    %1098 = vmatpush1.msra.mxu0 %v94
    %1099 = vmatprep.subr.mxu0 0.0
    %1100 = vmatpush1.msra.mxu0 %v93
    %1101 = vmatprep.subr.mxu0 0.0
    %1102 = vmatpush1.msra.mxu0 %v92
    %1103 = vmatprep.subr.mxu0 0.0
    %1104 = vmatpush1.msra.mxu0 %v91
    %1105 = vmatprep.subr.mxu0 0.0
    %1106 = vmatpush1.msra.mxu0 %v90
    %1107 = vmatprep.subr.mxu0 0.0
    %1108 = vmatpush1.msra.mxu0 %v89
    %1109 = vmatprep.subr.mxu0 0.0
    %1110 = vmatpush1.msra.mxu0 %v88
    %1111 = vmatprep.subr.mxu0 0.0
    %1112 = vmatpush1.msra.mxu0 %v87
    %1113 = vmatprep.subr.mxu0 0.0
    %1114 = vmatpush1.msra.mxu0 %v86
    %1115 = vmatprep.subr.mxu0 0.0
    %1116 = vmatpush1.msra.mxu0 %v85
    %1117 = vmatprep.subr.mxu0 0.0
    %1118 = vmatpush1.msra.mxu0 %v84
    %1119 = vmatprep.subr.mxu0 0.0
    %1120 = vmatpush1.msra.mxu0 %v83
    %1121 = vmatprep.subr.mxu0 0.0
    %1122 = vmatpush1.msra.mxu0 %v82
    %1123 = vmatprep.subr.mxu0 0.0
    %1124 = vmatpush1.msra.mxu0 %v81
    %1125 = vmatprep.subr.mxu0 0.0
    %1126 = vmatpush1.msra.mxu0 %v80
    %1127 = vmatprep.subr.mxu0 0.0
    %1128 = vmatpush2.msra.mxu0 %v111
    %1129 = vmatprep.subr.mxu0 0.0
    %1130 = vmatpush2.msra.mxu0 %v110
    %1131 = vmatprep.subr.mxu0 0.0
    %1132 = vmatpush2.msra.mxu0 %v109
    %1133 = vmatprep.subr.mxu0 0.0
    %1134 = vmatpush2.msra.mxu0 %v108
    %1135 = vmatprep.subr.mxu0 0.0
    %1136 = vmatpush2.msra.mxu0 %v107
    %1137 = vmatprep.subr.mxu0 0.0
    %1138 = vmatpush2.msra.mxu0 %v106
    %1139 = vmatprep.subr.mxu0 0.0
    %1140 = vmatpush2.msra.mxu0 %v105
    %1141 = vmatprep.subr.mxu0 0.0
    %1142 = vmatpush2.msra.mxu0 %v104
    %1143 = vmatprep.subr.mxu0 0.0
    %1144 = vmatpush2.msra.mxu0 %v103
    %1145 = vmatprep.subr.mxu0 0.0
    %1146 = vmatpush2.msra.mxu0 %v102
    %1147 = vmatprep.subr.mxu0 0.0
    %1148 = vmatpush2.msra.mxu0 %v101
    %1149 = vmatprep.subr.mxu0 0.0
    %1150 = vmatpush2.msra.mxu0 %v100
    %1151 = vmatprep.subr.mxu0 0.0
    %1152 = vmatpush2.msra.mxu0 %v99
    %1153 = vmatprep.subr.mxu0 0.0
    %1154 = vmatpush2.msra.mxu0 %v98
    %1155 = vmatprep.subr.mxu0 0.0
    %1156 = vmatpush2.msra.mxu0 %v97
    %1157 = vmatprep.subr.mxu0 0.0
    %1158 = vmatpush2.msra.mxu0 %v96
    %1159 = vmatprep.mubr.f32.mxu0 %v889
    %1160 = vmatmul.mubr.f32.gmra.mxu0 %v888
    %v1161 = vpop.f32.mrf.mxu0
    %v1162 = vadd.f32 %v1017, %v1161
    %v1163 = vpop.f32.mrf.mxu0
    %1164 = vmatprep.mubr.f32.mxu0 %v893
    %1165 = vmatmul.mubr.f32.gmra.mxu0 %v892
    %v1166 = vpop.f32.mrf.mxu0
    %v1167 = vadd.f32 %v1022, %v1166
    %v1168 = vpop.f32.mrf.mxu0
    %1169 = vmatprep.mubr.f32.mxu0 %v897
    %1170 = vmatmul.mubr.f32.gmra.mxu0 %v896
    %v1171 = vpop.f32.mrf.mxu0
    %v1172 = vadd.f32 %v1027, %v1171
    %v1173 = vpop.f32.mrf.mxu0
    %1174 = vmatprep.mubr.f32.mxu0 %v901
    %1175 = vmatmul.mubr.f32.gmra.mxu0 %v900
    %v1176 = vpop.f32.mrf.mxu0
    %v1177 = vadd.f32 %v1032, %v1176
    %v1178 = vpop.f32.mrf.mxu0
    %1179 = vmatprep.mubr.f32.mxu0 %v905
    %1180 = vmatmul.mubr.f32.gmra.mxu0 %v904
    %v1181 = vpop.f32.mrf.mxu0
    %v1182 = vadd.f32 %v1037, %v1181
    %v1183 = vpop.f32.mrf.mxu0
    %1184 = vmatprep.mubr.f32.mxu0 %v909
    %1185 = vmatmul.mubr.f32.gmra.mxu0 %v908
    %v1186 = vpop.f32.mrf.mxu0
    %v1187 = vadd.f32 %v1042, %v1186
    %v1188 = vpop.f32.mrf.mxu0
    %1189 = vmatprep.mubr.f32.mxu0 %v913
    %1190 = vmatmul.mubr.f32.gmra.mxu0 %v912
    %v1191 = vpop.f32.mrf.mxu0
    %v1192 = vadd.f32 %v1047, %v1191
    %v1193 = vpop.f32.mrf.mxu0
    %1194 = vmatprep.mubr.f32.mxu0 %v917
    %1195 = vmatmul.mubr.f32.gmra.mxu0 %v916
    %v1196 = vpop.f32.mrf.mxu0
    %v1197 = vadd.f32 %v1052, %v1196
    %v1198 = vpop.f32.mrf.mxu0
    %1199 = vmatprep.mubr.f32.mxu0 %v921
    %1200 = vmatmul.mubr.f32.gmra.mxu0 %v920
    %v1201 = vpop.f32.mrf.mxu0
    %v1202 = vadd.f32 %v1057, %v1201
    %v1203 = vpop.f32.mrf.mxu0
    %1204 = vmatprep.mubr.f32.mxu0 %v925
    %1205 = vmatmul.mubr.f32.gmra.mxu0 %v924
    %v1206 = vpop.f32.mrf.mxu0
    %v1207 = vadd.f32 %v1062, %v1206
    %v1208 = vpop.f32.mrf.mxu0
    %1209 = vmatprep.mubr.f32.mxu0 %v929
    %1210 = vmatmul.mubr.f32.gmra.mxu0 %v928
    %v1211 = vpop.f32.mrf.mxu0
    %v1212 = vadd.f32 %v1067, %v1211
    %v1213 = vpop.f32.mrf.mxu0
    %1214 = vmatprep.mubr.f32.mxu0 %v933
    %1215 = vmatmul.mubr.f32.gmra.mxu0 %v932
    %v1216 = vpop.f32.mrf.mxu0
    %v1217 = vadd.f32 %v1072, %v1216
    %v1218 = vpop.f32.mrf.mxu0
    %1219 = vmatprep.mubr.f32.mxu0 %v937
    %1220 = vmatmul.mubr.f32.gmra.mxu0 %v936
    %v1221 = vpop.f32.mrf.mxu0
    %v1222 = vadd.f32 %v1077, %v1221
    %v1223 = vpop.f32.mrf.mxu0
    %1224 = vmatprep.mubr.f32.mxu0 %v941
    %1225 = vmatmul.mubr.f32.gmra.mxu0 %v940
    %v1226 = vpop.f32.mrf.mxu0
    %v1227 = vadd.f32 %v1082, %v1226
    %v1228 = vpop.f32.mrf.mxu0
    %1229 = vmatprep.mubr.f32.mxu0 %v945
    %1230 = vmatmul.mubr.f32.gmra.mxu0 %v944
    %v1231 = vpop.f32.mrf.mxu0
    %v1232 = vadd.f32 %v1087, %v1231
    %v1233 = vpop.f32.mrf.mxu0
    %1234 = vmatprep.mubr.f32.mxu0 %v949
    %1235 = vmatmul.mubr.f32.gmra.mxu0 %v948
    %v1236 = vpop.f32.mrf.mxu0
    %v1237 = vadd.f32 %v1092, %v1236
    %v1238 = vpop.f32.mrf.mxu0
    %1239 = vdwg.mxu0
    %1256 = vrot.lane.b32.xlu0 %v1162, 112
    %v1257 = vpop.permute.xlu0 %1256
    %1258 = vrot.lane.b32.xlu0 %v1167, 112
    %v1259 = vpop.permute.xlu0 %1258
    %1260 = vrot.lane.b32.xlu0 %v1172, 112
    %v1261 = vpop.permute.xlu0 %1260
    %1262 = vrot.lane.b32.xlu0 %v1177, 112
    %v1263 = vpop.permute.xlu0 %1262
    %1264 = vrot.lane.b32.xlu0 %v1182, 112
    %v1265 = vpop.permute.xlu0 %1264
    %1266 = vrot.lane.b32.xlu0 %v1187, 112
    %v1267 = vpop.permute.xlu0 %1266
    %1268 = vrot.lane.b32.xlu0 %v1192, 112
    %v1269 = vpop.permute.xlu0 %1268
    %1270 = vrot.lane.b32.xlu0 %v1197, 112
    %v1271 = vpop.permute.xlu0 %1270
    %1272 = vrot.lane.b32.xlu0 %v1202, 112
    %v1273 = vpop.permute.xlu0 %1272
    %1274 = vrot.lane.b32.xlu0 %v1207, 112
    %v1275 = vpop.permute.xlu0 %1274
    %1276 = vrot.lane.b32.xlu0 %v1212, 112
    %v1277 = vpop.permute.xlu0 %1276
    %1278 = vrot.lane.b32.xlu0 %v1217, 112
    %v1279 = vpop.permute.xlu0 %1278
    %1280 = vrot.lane.b32.xlu0 %v1222, 112
    %v1281 = vpop.permute.xlu0 %1280
    %1282 = vrot.lane.b32.xlu0 %v1227, 112
    %v1283 = vpop.permute.xlu0 %1282
    %1284 = vrot.lane.b32.xlu0 %v1232, 112
    %v1285 = vpop.permute.xlu0 %1284
    %1286 = vrot.lane.b32.xlu0 %v1237, 112
    %v1287 = vpop.permute.xlu0 %1286
    %v1304 = vmax.f32 %v1162, %v1257
    %v1305 = vmax.f32 %v1167, %v1259
    %v1306 = vmax.f32 %v1172, %v1261
    %v1307 = vmax.f32 %v1177, %v1263
    %v1308 = vmax.f32 %v1182, %v1265
    %v1309 = vmax.f32 %v1187, %v1267
    %v1310 = vmax.f32 %v1192, %v1269
    %v1311 = vmax.f32 %v1197, %v1271
    %v1312 = vmax.f32 %v1202, %v1273
    %v1313 = vmax.f32 %v1207, %v1275
    %v1314 = vmax.f32 %v1212, %v1277
    %v1315 = vmax.f32 %v1217, %v1279
    %v1316 = vmax.f32 %v1222, %v1281
    %v1317 = vmax.f32 %v1227, %v1283
    %v1318 = vmax.f32 %v1232, %v1285
    %v1319 = vmax.f32 %v1237, %v1287
    %1320 = vrot.lane.b32.xlu0 %v1162, 96
    %v1321 = vpop.permute.xlu0 %1320
    %1322 = vrot.lane.b32.xlu0 %v1167, 96
    %v1323 = vpop.permute.xlu0 %1322
    %1324 = vrot.lane.b32.xlu0 %v1172, 96
    %v1325 = vpop.permute.xlu0 %1324
    %1326 = vrot.lane.b32.xlu0 %v1177, 96
    %v1327 = vpop.permute.xlu0 %1326
    %1328 = vrot.lane.b32.xlu0 %v1182, 96
    %v1329 = vpop.permute.xlu0 %1328
    %1330 = vrot.lane.b32.xlu0 %v1187, 96
    %v1331 = vpop.permute.xlu0 %1330
    %1332 = vrot.lane.b32.xlu0 %v1192, 96
    %v1333 = vpop.permute.xlu0 %1332
    %1334 = vrot.lane.b32.xlu0 %v1197, 96
    %v1335 = vpop.permute.xlu0 %1334
    %1336 = vrot.lane.b32.xlu0 %v1202, 96
    %v1337 = vpop.permute.xlu0 %1336
    %1338 = vrot.lane.b32.xlu0 %v1207, 96
    %v1339 = vpop.permute.xlu0 %1338
    %1340 = vrot.lane.b32.xlu0 %v1212, 96
    %v1341 = vpop.permute.xlu0 %1340
    %1342 = vrot.lane.b32.xlu0 %v1217, 96
    %v1343 = vpop.permute.xlu0 %1342
    %1344 = vrot.lane.b32.xlu0 %v1222, 96
    %v1345 = vpop.permute.xlu0 %1344
    %1346 = vrot.lane.b32.xlu0 %v1227, 96
    %v1347 = vpop.permute.xlu0 %1346
    %1348 = vrot.lane.b32.xlu0 %v1232, 96
    %v1349 = vpop.permute.xlu0 %1348
    %1350 = vrot.lane.b32.xlu0 %v1237, 96
    %v1351 = vpop.permute.xlu0 %1350
    %v1368 = vmax.f32 %v1304, %v1321
    %v1369 = vmax.f32 %v1305, %v1323
    %v1370 = vmax.f32 %v1306, %v1325
    %v1371 = vmax.f32 %v1307, %v1327
    %v1372 = vmax.f32 %v1308, %v1329
    %v1373 = vmax.f32 %v1309, %v1331
    %v1374 = vmax.f32 %v1310, %v1333
    %v1375 = vmax.f32 %v1311, %v1335
    %v1376 = vmax.f32 %v1312, %v1337
    %v1377 = vmax.f32 %v1313, %v1339
    %v1378 = vmax.f32 %v1314, %v1341
    %v1379 = vmax.f32 %v1315, %v1343
    %v1380 = vmax.f32 %v1316, %v1345
    %v1381 = vmax.f32 %v1317, %v1347
    %v1382 = vmax.f32 %v1318, %v1349
    %v1383 = vmax.f32 %v1319, %v1351
    %1384 = vrot.lane.b32.xlu0 %v1162, 80
    %v1385 = vpop.permute.xlu0 %1384
    %1386 = vrot.lane.b32.xlu0 %v1167, 80
    %v1387 = vpop.permute.xlu0 %1386
    %1388 = vrot.lane.b32.xlu0 %v1172, 80
    %v1389 = vpop.permute.xlu0 %1388
    %1390 = vrot.lane.b32.xlu0 %v1177, 80
    %v1391 = vpop.permute.xlu0 %1390
    %1392 = vrot.lane.b32.xlu0 %v1182, 80
    %v1393 = vpop.permute.xlu0 %1392
    %1394 = vrot.lane.b32.xlu0 %v1187, 80
    %v1395 = vpop.permute.xlu0 %1394
    %1396 = vrot.lane.b32.xlu0 %v1192, 80
    %v1397 = vpop.permute.xlu0 %1396
    %1398 = vrot.lane.b32.xlu0 %v1197, 80
    %v1399 = vpop.permute.xlu0 %1398
    %1400 = vrot.lane.b32.xlu0 %v1202, 80
    %v1401 = vpop.permute.xlu0 %1400
    %1402 = vrot.lane.b32.xlu0 %v1207, 80
    %v1403 = vpop.permute.xlu0 %1402
    %1404 = vrot.lane.b32.xlu0 %v1212, 80
    %v1405 = vpop.permute.xlu0 %1404
    %1406 = vrot.lane.b32.xlu0 %v1217, 80
    %v1407 = vpop.permute.xlu0 %1406
    %1408 = vrot.lane.b32.xlu0 %v1222, 80
    %v1409 = vpop.permute.xlu0 %1408
    %1410 = vrot.lane.b32.xlu0 %v1227, 80
    %v1411 = vpop.permute.xlu0 %1410
    %1412 = vrot.lane.b32.xlu0 %v1232, 80
    %v1413 = vpop.permute.xlu0 %1412
    %1414 = vrot.lane.b32.xlu0 %v1237, 80
    %v1415 = vpop.permute.xlu0 %1414
    %v1432 = vmax.f32 %v1368, %v1385
    %v1433 = vmax.f32 %v1369, %v1387
    %v1434 = vmax.f32 %v1370, %v1389
    %v1435 = vmax.f32 %v1371, %v1391
    %v1436 = vmax.f32 %v1372, %v1393
    %v1437 = vmax.f32 %v1373, %v1395
    %v1438 = vmax.f32 %v1374, %v1397
    %v1439 = vmax.f32 %v1375, %v1399
    %v1440 = vmax.f32 %v1376, %v1401
    %v1441 = vmax.f32 %v1377, %v1403
    %v1442 = vmax.f32 %v1378, %v1405
    %v1443 = vmax.f32 %v1379, %v1407
    %v1444 = vmax.f32 %v1380, %v1409
    %v1445 = vmax.f32 %v1381, %v1411
    %v1446 = vmax.f32 %v1382, %v1413
    %v1447 = vmax.f32 %v1383, %v1415
    %1464 = vrot.lane.b32.xlu0 %v1432, 16
    %v1465 = vpop.permute.xlu0 %1464
    %1466 = vrot.lane.b32.xlu0 %v1433, 16
    %v1467 = vpop.permute.xlu0 %1466
    %1468 = vrot.lane.b32.xlu0 %v1434, 16
    %v1469 = vpop.permute.xlu0 %1468
    %1470 = vrot.lane.b32.xlu0 %v1435, 16
    %v1471 = vpop.permute.xlu0 %1470
    %1472 = vrot.lane.b32.xlu0 %v1436, 16
    %v1473 = vpop.permute.xlu0 %1472
    %1474 = vrot.lane.b32.xlu0 %v1437, 16
    %v1475 = vpop.permute.xlu0 %1474
    %1476 = vrot.lane.b32.xlu0 %v1438, 16
    %v1477 = vpop.permute.xlu0 %1476
    %1478 = vrot.lane.b32.xlu0 %v1439, 16
    %v1479 = vpop.permute.xlu0 %1478
    %1480 = vrot.lane.b32.xlu0 %v1440, 16
    %v1481 = vpop.permute.xlu0 %1480
    %1482 = vrot.lane.b32.xlu0 %v1441, 16
    %v1483 = vpop.permute.xlu0 %1482
    %1484 = vrot.lane.b32.xlu0 %v1442, 16
    %v1485 = vpop.permute.xlu0 %1484
    %1486 = vrot.lane.b32.xlu0 %v1443, 16
    %v1487 = vpop.permute.xlu0 %1486
    %1488 = vrot.lane.b32.xlu0 %v1444, 16
    %v1489 = vpop.permute.xlu0 %1488
    %1490 = vrot.lane.b32.xlu0 %v1445, 16
    %v1491 = vpop.permute.xlu0 %1490
    %1492 = vrot.lane.b32.xlu0 %v1446, 16
    %v1493 = vpop.permute.xlu0 %1492
    %1494 = vrot.lane.b32.xlu0 %v1447, 16
    %v1495 = vpop.permute.xlu0 %1494
    %1512 = vrot.lane.b32.xlu0 %v1432, 32
    %v1513 = vpop.permute.xlu0 %1512
    %1514 = vrot.lane.b32.xlu0 %v1433, 32
    %v1515 = vpop.permute.xlu0 %1514
    %1516 = vrot.lane.b32.xlu0 %v1434, 32
    %v1517 = vpop.permute.xlu0 %1516
    %1518 = vrot.lane.b32.xlu0 %v1435, 32
    %v1519 = vpop.permute.xlu0 %1518
    %1520 = vrot.lane.b32.xlu0 %v1436, 32
    %v1521 = vpop.permute.xlu0 %1520
    %1522 = vrot.lane.b32.xlu0 %v1437, 32
    %v1523 = vpop.permute.xlu0 %1522
    %1524 = vrot.lane.b32.xlu0 %v1438, 32
    %v1525 = vpop.permute.xlu0 %1524
    %1526 = vrot.lane.b32.xlu0 %v1439, 32
    %v1527 = vpop.permute.xlu0 %1526
    %1528 = vrot.lane.b32.xlu0 %v1440, 32
    %v1529 = vpop.permute.xlu0 %1528
    %1530 = vrot.lane.b32.xlu0 %v1441, 32
    %v1531 = vpop.permute.xlu0 %1530
    %1532 = vrot.lane.b32.xlu0 %v1442, 32
    %v1533 = vpop.permute.xlu0 %1532
    %1534 = vrot.lane.b32.xlu0 %v1443, 32
    %v1535 = vpop.permute.xlu0 %1534
    %1536 = vrot.lane.b32.xlu0 %v1444, 32
    %v1537 = vpop.permute.xlu0 %1536
    %1538 = vrot.lane.b32.xlu0 %v1445, 32
    %v1539 = vpop.permute.xlu0 %1538
    %1540 = vrot.lane.b32.xlu0 %v1446, 32
    %v1541 = vpop.permute.xlu0 %1540
    %1542 = vrot.lane.b32.xlu0 %v1447, 32
    %v1543 = vpop.permute.xlu0 %1542
    %1560 = vrot.lane.b32.xlu0 %v1432, 48
    %v1561 = vpop.permute.xlu0 %1560
    %1562 = vrot.lane.b32.xlu0 %v1433, 48
    %v1563 = vpop.permute.xlu0 %1562
    %1564 = vrot.lane.b32.xlu0 %v1434, 48
    %v1565 = vpop.permute.xlu0 %1564
    %1566 = vrot.lane.b32.xlu0 %v1435, 48
    %v1567 = vpop.permute.xlu0 %1566
    %1568 = vrot.lane.b32.xlu0 %v1436, 48
    %v1569 = vpop.permute.xlu0 %1568
    %1570 = vrot.lane.b32.xlu0 %v1437, 48
    %v1571 = vpop.permute.xlu0 %1570
    %1572 = vrot.lane.b32.xlu0 %v1438, 48
    %v1573 = vpop.permute.xlu0 %1572
    %1574 = vrot.lane.b32.xlu0 %v1439, 48
    %v1575 = vpop.permute.xlu0 %1574
    %1576 = vrot.lane.b32.xlu0 %v1440, 48
    %v1577 = vpop.permute.xlu0 %1576
    %1578 = vrot.lane.b32.xlu0 %v1441, 48
    %v1579 = vpop.permute.xlu0 %1578
    %1580 = vrot.lane.b32.xlu0 %v1442, 48
    %v1581 = vpop.permute.xlu0 %1580
    %1582 = vrot.lane.b32.xlu0 %v1443, 48
    %v1583 = vpop.permute.xlu0 %1582
    %1584 = vrot.lane.b32.xlu0 %v1444, 48
    %v1585 = vpop.permute.xlu0 %1584
    %1586 = vrot.lane.b32.xlu0 %v1445, 48
    %v1587 = vpop.permute.xlu0 %1586
    %1588 = vrot.lane.b32.xlu0 %v1446, 48
    %v1589 = vpop.permute.xlu0 %1588
    %1590 = vrot.lane.b32.xlu0 %v1447, 48
    %v1591 = vpop.permute.xlu0 %1590
    %vm1608 = vcmask 130048
    %v1609 = vsel %vm1608, %v1432, %v1465
    %v1610 = vsel %vm1608, %v1433, %v1467
    %v1611 = vsel %vm1608, %v1434, %v1469
    %v1612 = vsel %vm1608, %v1435, %v1471
    %v1613 = vsel %vm1608, %v1436, %v1473
    %v1614 = vsel %vm1608, %v1437, %v1475
    %v1615 = vsel %vm1608, %v1438, %v1477
    %v1616 = vsel %vm1608, %v1439, %v1479
    %v1617 = vsel %vm1608, %v1440, %v1481
    %v1618 = vsel %vm1608, %v1441, %v1483
    %v1619 = vsel %vm1608, %v1442, %v1485
    %v1620 = vsel %vm1608, %v1443, %v1487
    %v1621 = vsel %vm1608, %v1444, %v1489
    %v1622 = vsel %vm1608, %v1445, %v1491
    %v1623 = vsel %vm1608, %v1446, %v1493
    %v1624 = vsel %vm1608, %v1447, %v1495
    %vm1625 = vcmask 261120
    %v1626 = vsel %vm1625, %v1609, %v1513
    %v1627 = vsel %vm1625, %v1610, %v1515
    %v1628 = vsel %vm1625, %v1611, %v1517
    %v1629 = vsel %vm1625, %v1612, %v1519
    %v1630 = vsel %vm1625, %v1613, %v1521
    %v1631 = vsel %vm1625, %v1614, %v1523
    %v1632 = vsel %vm1625, %v1615, %v1525
    %v1633 = vsel %vm1625, %v1616, %v1527
    %v1634 = vsel %vm1625, %v1617, %v1529
    %v1635 = vsel %vm1625, %v1618, %v1531
    %v1636 = vsel %vm1625, %v1619, %v1533
    %v1637 = vsel %vm1625, %v1620, %v1535
    %v1638 = vsel %vm1625, %v1621, %v1537
    %v1639 = vsel %vm1625, %v1622, %v1539
    %v1640 = vsel %vm1625, %v1623, %v1541
    %v1641 = vsel %vm1625, %v1624, %v1543
    %vm1642 = vcmask 392192
    %v1643 = vsel %vm1642, %v1626, %v1561
    %v1644 = vsel %vm1642, %v1627, %v1563
    %v1645 = vsel %vm1642, %v1628, %v1565
    %v1646 = vsel %vm1642, %v1629, %v1567
    %v1647 = vsel %vm1642, %v1630, %v1569
    %v1648 = vsel %vm1642, %v1631, %v1571
    %v1649 = vsel %vm1642, %v1632, %v1573
    %v1650 = vsel %vm1642, %v1633, %v1575
    %v1651 = vsel %vm1642, %v1634, %v1577
    %v1652 = vsel %vm1642, %v1635, %v1579
    %v1653 = vsel %vm1642, %v1636, %v1581
    %v1654 = vsel %vm1642, %v1637, %v1583
    %v1655 = vsel %vm1642, %v1638, %v1585
    %v1656 = vsel %vm1642, %v1639, %v1587
    %v1657 = vsel %vm1642, %v1640, %v1589
    %v1658 = vsel %vm1642, %v1641, %v1591
    %v1659 = vsub.f32 %v1162, %v1643
    %v1660 = vsub.f32 %v1167, %v1644
    %v1661 = vsub.f32 %v1172, %v1645
    %v1662 = vsub.f32 %v1177, %v1646
    %v1663 = vsub.f32 %v1182, %v1647
    %v1664 = vsub.f32 %v1187, %v1648
    %v1665 = vsub.f32 %v1192, %v1649
    %v1666 = vsub.f32 %v1197, %v1650
    %v1667 = vsub.f32 %v1202, %v1651
    %v1668 = vsub.f32 %v1207, %v1652
    %v1669 = vsub.f32 %v1212, %v1653
    %v1670 = vsub.f32 %v1217, %v1654
    %v1671 = vsub.f32 %v1222, %v1655
    %v1672 = vsub.f32 %v1227, %v1656
    %v1673 = vsub.f32 %v1232, %v1657
    %v1674 = vsub.f32 %v1237, %v1658
    %v1675 = vmul.f32 %v1659, 1.442695
    %v1676 = vpow.pop %v1675
    %v1677 = vmul.f32 %v1660, 1.442695
    %v1678 = vpow.pop %v1677
    %v1679 = vmul.f32 %v1661, 1.442695
    %v1680 = vpow.pop %v1679
    %v1681 = vmul.f32 %v1662, 1.442695
    %v1682 = vpow.pop %v1681
    %v1683 = vmul.f32 %v1663, 1.442695
    %v1684 = vpow.pop %v1683
    %v1685 = vmul.f32 %v1664, 1.442695
    %v1686 = vpow.pop %v1685
    %v1687 = vmul.f32 %v1665, 1.442695
    %v1688 = vpow.pop %v1687
    %v1689 = vmul.f32 %v1666, 1.442695
    %v1690 = vpow.pop %v1689
    %v1691 = vmul.f32 %v1667, 1.442695
    %v1692 = vpow.pop %v1691
    %v1693 = vmul.f32 %v1668, 1.442695
    %v1694 = vpow.pop %v1693
    %v1695 = vmul.f32 %v1669, 1.442695
    %v1696 = vpow.pop %v1695
    %v1697 = vmul.f32 %v1670, 1.442695
    %v1698 = vpow.pop %v1697
    %v1699 = vmul.f32 %v1671, 1.442695
    %v1700 = vpow.pop %v1699
    %v1701 = vmul.f32 %v1672, 1.442695
    %v1702 = vpow.pop %v1701
    %v1703 = vmul.f32 %v1673, 1.442695
    %v1704 = vpow.pop %v1703
    %v1705 = vmul.f32 %v1674, 1.442695
    %v1706 = vpow.pop %v1705
    %1723 = vrot.lane.b32.xlu0 %v1676, 112
    %v1724 = vpop.permute.xlu0 %1723
    %1725 = vrot.lane.b32.xlu0 %v1678, 112
    %v1726 = vpop.permute.xlu0 %1725
    %1727 = vrot.lane.b32.xlu0 %v1680, 112
    %v1728 = vpop.permute.xlu0 %1727
    %1729 = vrot.lane.b32.xlu0 %v1682, 112
    %v1730 = vpop.permute.xlu0 %1729
    %1731 = vrot.lane.b32.xlu0 %v1684, 112
    %v1732 = vpop.permute.xlu0 %1731
    %1733 = vrot.lane.b32.xlu0 %v1686, 112
    %v1734 = vpop.permute.xlu0 %1733
    %1735 = vrot.lane.b32.xlu0 %v1688, 112
    %v1736 = vpop.permute.xlu0 %1735
    %1737 = vrot.lane.b32.xlu0 %v1690, 112
    %v1738 = vpop.permute.xlu0 %1737
    %1739 = vrot.lane.b32.xlu0 %v1692, 112
    %v1740 = vpop.permute.xlu0 %1739
    %1741 = vrot.lane.b32.xlu0 %v1694, 112
    %v1742 = vpop.permute.xlu0 %1741
    %1743 = vrot.lane.b32.xlu0 %v1696, 112
    %v1744 = vpop.permute.xlu0 %1743
    %1745 = vrot.lane.b32.xlu0 %v1698, 112
    %v1746 = vpop.permute.xlu0 %1745
    %1747 = vrot.lane.b32.xlu0 %v1700, 112
    %v1748 = vpop.permute.xlu0 %1747
    %1749 = vrot.lane.b32.xlu0 %v1702, 112
    %v1750 = vpop.permute.xlu0 %1749
    %1751 = vrot.lane.b32.xlu0 %v1704, 112
    %v1752 = vpop.permute.xlu0 %1751
    %1753 = vrot.lane.b32.xlu0 %v1706, 112
    %v1754 = vpop.permute.xlu0 %1753
    %v1771 = vadd.f32 %v1676, %v1724
    %v1772 = vadd.f32 %v1678, %v1726
    %v1773 = vadd.f32 %v1680, %v1728
    %v1774 = vadd.f32 %v1682, %v1730
    %v1775 = vadd.f32 %v1684, %v1732
    %v1776 = vadd.f32 %v1686, %v1734
    %v1777 = vadd.f32 %v1688, %v1736
    %v1778 = vadd.f32 %v1690, %v1738
    %v1779 = vadd.f32 %v1692, %v1740
    %v1780 = vadd.f32 %v1694, %v1742
    %v1781 = vadd.f32 %v1696, %v1744
    %v1782 = vadd.f32 %v1698, %v1746
    %v1783 = vadd.f32 %v1700, %v1748
    %v1784 = vadd.f32 %v1702, %v1750
    %v1785 = vadd.f32 %v1704, %v1752
    %v1786 = vadd.f32 %v1706, %v1754
    %1787 = vrot.lane.b32.xlu0 %v1676, 96
    %v1788 = vpop.permute.xlu0 %1787
    %1789 = vrot.lane.b32.xlu0 %v1678, 96
    %v1790 = vpop.permute.xlu0 %1789
    %1791 = vrot.lane.b32.xlu0 %v1680, 96
    %v1792 = vpop.permute.xlu0 %1791
    %1793 = vrot.lane.b32.xlu0 %v1682, 96
    %v1794 = vpop.permute.xlu0 %1793
    %1795 = vrot.lane.b32.xlu0 %v1684, 96
    %v1796 = vpop.permute.xlu0 %1795
    %1797 = vrot.lane.b32.xlu0 %v1686, 96
    %v1798 = vpop.permute.xlu0 %1797
    %1799 = vrot.lane.b32.xlu0 %v1688, 96
    %v1800 = vpop.permute.xlu0 %1799
    %1801 = vrot.lane.b32.xlu0 %v1690, 96
    %v1802 = vpop.permute.xlu0 %1801
    %1803 = vrot.lane.b32.xlu0 %v1692, 96
    %v1804 = vpop.permute.xlu0 %1803
    %1805 = vrot.lane.b32.xlu0 %v1694, 96
    %v1806 = vpop.permute.xlu0 %1805
    %1807 = vrot.lane.b32.xlu0 %v1696, 96
    %v1808 = vpop.permute.xlu0 %1807
    %1809 = vrot.lane.b32.xlu0 %v1698, 96
    %v1810 = vpop.permute.xlu0 %1809
    %1811 = vrot.lane.b32.xlu0 %v1700, 96
    %v1812 = vpop.permute.xlu0 %1811
    %1813 = vrot.lane.b32.xlu0 %v1702, 96
    %v1814 = vpop.permute.xlu0 %1813
    %1815 = vrot.lane.b32.xlu0 %v1704, 96
    %v1816 = vpop.permute.xlu0 %1815
    %1817 = vrot.lane.b32.xlu0 %v1706, 96
    %v1818 = vpop.permute.xlu0 %1817
    %v1835 = vadd.f32 %v1771, %v1788
    %v1836 = vadd.f32 %v1772, %v1790
    %v1837 = vadd.f32 %v1773, %v1792
    %v1838 = vadd.f32 %v1774, %v1794
    %v1839 = vadd.f32 %v1775, %v1796
    %v1840 = vadd.f32 %v1776, %v1798
    %v1841 = vadd.f32 %v1777, %v1800
    %v1842 = vadd.f32 %v1778, %v1802
    %v1843 = vadd.f32 %v1779, %v1804
    %v1844 = vadd.f32 %v1780, %v1806
    %v1845 = vadd.f32 %v1781, %v1808
    %v1846 = vadd.f32 %v1782, %v1810
    %v1847 = vadd.f32 %v1783, %v1812
    %v1848 = vadd.f32 %v1784, %v1814
    %v1849 = vadd.f32 %v1785, %v1816
    %v1850 = vadd.f32 %v1786, %v1818
    %1851 = vrot.lane.b32.xlu0 %v1676, 80
    %v1852 = vpop.permute.xlu0 %1851
    %1853 = vrot.lane.b32.xlu0 %v1678, 80
    %v1854 = vpop.permute.xlu0 %1853
    %1855 = vrot.lane.b32.xlu0 %v1680, 80
    %v1856 = vpop.permute.xlu0 %1855
    %1857 = vrot.lane.b32.xlu0 %v1682, 80
    %v1858 = vpop.permute.xlu0 %1857
    %1859 = vrot.lane.b32.xlu0 %v1684, 80
    %v1860 = vpop.permute.xlu0 %1859
    %1861 = vrot.lane.b32.xlu0 %v1686, 80
    %v1862 = vpop.permute.xlu0 %1861
    %1863 = vrot.lane.b32.xlu0 %v1688, 80
    %v1864 = vpop.permute.xlu0 %1863
    %1865 = vrot.lane.b32.xlu0 %v1690, 80
    %v1866 = vpop.permute.xlu0 %1865
    %1867 = vrot.lane.b32.xlu0 %v1692, 80
    %v1868 = vpop.permute.xlu0 %1867
    %1869 = vrot.lane.b32.xlu0 %v1694, 80
    %v1870 = vpop.permute.xlu0 %1869
    %1871 = vrot.lane.b32.xlu0 %v1696, 80
    %v1872 = vpop.permute.xlu0 %1871
    %1873 = vrot.lane.b32.xlu0 %v1698, 80
    %v1874 = vpop.permute.xlu0 %1873
    %1875 = vrot.lane.b32.xlu0 %v1700, 80
    %v1876 = vpop.permute.xlu0 %1875
    %1877 = vrot.lane.b32.xlu0 %v1702, 80
    %v1878 = vpop.permute.xlu0 %1877
    %1879 = vrot.lane.b32.xlu0 %v1704, 80
    %v1880 = vpop.permute.xlu0 %1879
    %1881 = vrot.lane.b32.xlu0 %v1706, 80
    %v1882 = vpop.permute.xlu0 %1881
    %v1899 = vadd.f32 %v1835, %v1852
    %v1900 = vadd.f32 %v1836, %v1854
    %v1901 = vadd.f32 %v1837, %v1856
    %v1902 = vadd.f32 %v1838, %v1858
    %v1903 = vadd.f32 %v1839, %v1860
    %v1904 = vadd.f32 %v1840, %v1862
    %v1905 = vadd.f32 %v1841, %v1864
    %v1906 = vadd.f32 %v1842, %v1866
    %v1907 = vadd.f32 %v1843, %v1868
    %v1908 = vadd.f32 %v1844, %v1870
    %v1909 = vadd.f32 %v1845, %v1872
    %v1910 = vadd.f32 %v1846, %v1874
    %v1911 = vadd.f32 %v1847, %v1876
    %v1912 = vadd.f32 %v1848, %v1878
    %v1913 = vadd.f32 %v1849, %v1880
    %v1914 = vadd.f32 %v1850, %v1882
    %v1915 = vrcp.pop %v1899
    %v1916 = vmul.f32 1.0, %v1915
    %v1917 = vrcp.pop %v1900
    %v1918 = vmul.f32 1.0, %v1917
    %v1919 = vrcp.pop %v1901
    %v1920 = vmul.f32 1.0, %v1919
    %v1921 = vrcp.pop %v1902
    %v1922 = vmul.f32 1.0, %v1921
    %v1923 = vrcp.pop %v1903
    %v1924 = vmul.f32 1.0, %v1923
    %v1925 = vrcp.pop %v1904
    %v1926 = vmul.f32 1.0, %v1925
    %v1927 = vrcp.pop %v1905
    %v1928 = vmul.f32 1.0, %v1927
    %v1929 = vrcp.pop %v1906
    %v1930 = vmul.f32 1.0, %v1929
    %v1931 = vrcp.pop %v1907
    %v1932 = vmul.f32 1.0, %v1931
    %v1933 = vrcp.pop %v1908
    %v1934 = vmul.f32 1.0, %v1933
    %v1935 = vrcp.pop %v1909
    %v1936 = vmul.f32 1.0, %v1935
    %v1937 = vrcp.pop %v1910
    %v1938 = vmul.f32 1.0, %v1937
    %v1939 = vrcp.pop %v1911
    %v1940 = vmul.f32 1.0, %v1939
    %v1941 = vrcp.pop %v1912
    %v1942 = vmul.f32 1.0, %v1941
    %v1943 = vrcp.pop %v1913
    %v1944 = vmul.f32 1.0, %v1943
    %v1945 = vrcp.pop %v1914
    %v1946 = vmul.f32 1.0, %v1945
    %1963 = vrot.lane.b32.xlu0 %v1916, 16
    %v1964 = vpop.permute.xlu0 %1963
    %1965 = vrot.lane.b32.xlu0 %v1918, 16
    %v1966 = vpop.permute.xlu0 %1965
    %1967 = vrot.lane.b32.xlu0 %v1920, 16
    %v1968 = vpop.permute.xlu0 %1967
    %1969 = vrot.lane.b32.xlu0 %v1922, 16
    %v1970 = vpop.permute.xlu0 %1969
    %1971 = vrot.lane.b32.xlu0 %v1924, 16
    %v1972 = vpop.permute.xlu0 %1971
    %1973 = vrot.lane.b32.xlu0 %v1926, 16
    %v1974 = vpop.permute.xlu0 %1973
    %1975 = vrot.lane.b32.xlu0 %v1928, 16
    %v1976 = vpop.permute.xlu0 %1975
    %1977 = vrot.lane.b32.xlu0 %v1930, 16
    %v1978 = vpop.permute.xlu0 %1977
    %1979 = vrot.lane.b32.xlu0 %v1932, 16
    %v1980 = vpop.permute.xlu0 %1979
    %1981 = vrot.lane.b32.xlu0 %v1934, 16
    %v1982 = vpop.permute.xlu0 %1981
    %1983 = vrot.lane.b32.xlu0 %v1936, 16
    %v1984 = vpop.permute.xlu0 %1983
    %1985 = vrot.lane.b32.xlu0 %v1938, 16
    %v1986 = vpop.permute.xlu0 %1985
    %1987 = vrot.lane.b32.xlu0 %v1940, 16
    %v1988 = vpop.permute.xlu0 %1987
    %1989 = vrot.lane.b32.xlu0 %v1942, 16
    %v1990 = vpop.permute.xlu0 %1989
    %1991 = vrot.lane.b32.xlu0 %v1944, 16
    %v1992 = vpop.permute.xlu0 %1991
    %1993 = vrot.lane.b32.xlu0 %v1946, 16
    %v1994 = vpop.permute.xlu0 %1993
    %2011 = vrot.lane.b32.xlu0 %v1916, 32
    %v2012 = vpop.permute.xlu0 %2011
    %2013 = vrot.lane.b32.xlu0 %v1918, 32
    %v2014 = vpop.permute.xlu0 %2013
    %2015 = vrot.lane.b32.xlu0 %v1920, 32
    %v2016 = vpop.permute.xlu0 %2015
    %2017 = vrot.lane.b32.xlu0 %v1922, 32
    %v2018 = vpop.permute.xlu0 %2017
    %2019 = vrot.lane.b32.xlu0 %v1924, 32
    %v2020 = vpop.permute.xlu0 %2019
    %2021 = vrot.lane.b32.xlu0 %v1926, 32
    %v2022 = vpop.permute.xlu0 %2021
    %2023 = vrot.lane.b32.xlu0 %v1928, 32
    %v2024 = vpop.permute.xlu0 %2023
    %2025 = vrot.lane.b32.xlu0 %v1930, 32
    %v2026 = vpop.permute.xlu0 %2025
    %2027 = vrot.lane.b32.xlu0 %v1932, 32
    %v2028 = vpop.permute.xlu0 %2027
    %2029 = vrot.lane.b32.xlu0 %v1934, 32
    %v2030 = vpop.permute.xlu0 %2029
    %2031 = vrot.lane.b32.xlu0 %v1936, 32
    %v2032 = vpop.permute.xlu0 %2031
    %2033 = vrot.lane.b32.xlu0 %v1938, 32
    %v2034 = vpop.permute.xlu0 %2033
    %2035 = vrot.lane.b32.xlu0 %v1940, 32
    %v2036 = vpop.permute.xlu0 %2035
    %2037 = vrot.lane.b32.xlu0 %v1942, 32
    %v2038 = vpop.permute.xlu0 %2037
    %2039 = vrot.lane.b32.xlu0 %v1944, 32
    %v2040 = vpop.permute.xlu0 %2039
    %2041 = vrot.lane.b32.xlu0 %v1946, 32
    %v2042 = vpop.permute.xlu0 %2041
    %2059 = vrot.lane.b32.xlu0 %v1916, 48
    %v2060 = vpop.permute.xlu0 %2059
    %2061 = vrot.lane.b32.xlu0 %v1918, 48
    %v2062 = vpop.permute.xlu0 %2061
    %2063 = vrot.lane.b32.xlu0 %v1920, 48
    %v2064 = vpop.permute.xlu0 %2063
    %2065 = vrot.lane.b32.xlu0 %v1922, 48
    %v2066 = vpop.permute.xlu0 %2065
    %2067 = vrot.lane.b32.xlu0 %v1924, 48
    %v2068 = vpop.permute.xlu0 %2067
    %2069 = vrot.lane.b32.xlu0 %v1926, 48
    %v2070 = vpop.permute.xlu0 %2069
    %2071 = vrot.lane.b32.xlu0 %v1928, 48
    %v2072 = vpop.permute.xlu0 %2071
    %2073 = vrot.lane.b32.xlu0 %v1930, 48
    %v2074 = vpop.permute.xlu0 %2073
    %2075 = vrot.lane.b32.xlu0 %v1932, 48
    %v2076 = vpop.permute.xlu0 %2075
    %2077 = vrot.lane.b32.xlu0 %v1934, 48
    %v2078 = vpop.permute.xlu0 %2077
    %2079 = vrot.lane.b32.xlu0 %v1936, 48
    %v2080 = vpop.permute.xlu0 %2079
    %2081 = vrot.lane.b32.xlu0 %v1938, 48
    %v2082 = vpop.permute.xlu0 %2081
    %2083 = vrot.lane.b32.xlu0 %v1940, 48
    %v2084 = vpop.permute.xlu0 %2083
    %2085 = vrot.lane.b32.xlu0 %v1942, 48
    %v2086 = vpop.permute.xlu0 %2085
    %2087 = vrot.lane.b32.xlu0 %v1944, 48
    %v2088 = vpop.permute.xlu0 %2087
    %2089 = vrot.lane.b32.xlu0 %v1946, 48
    %v2090 = vpop.permute.xlu0 %2089
    %v2107 = vsel %vm1608, %v1916, %v1964
    %v2108 = vsel %vm1608, %v1918, %v1966
    %v2109 = vsel %vm1608, %v1920, %v1968
    %v2110 = vsel %vm1608, %v1922, %v1970
    %v2111 = vsel %vm1608, %v1924, %v1972
    %v2112 = vsel %vm1608, %v1926, %v1974
    %v2113 = vsel %vm1608, %v1928, %v1976
    %v2114 = vsel %vm1608, %v1930, %v1978
    %v2115 = vsel %vm1608, %v1932, %v1980
    %v2116 = vsel %vm1608, %v1934, %v1982
    %v2117 = vsel %vm1608, %v1936, %v1984
    %v2118 = vsel %vm1608, %v1938, %v1986
    %v2119 = vsel %vm1608, %v1940, %v1988
    %v2120 = vsel %vm1608, %v1942, %v1990
    %v2121 = vsel %vm1608, %v1944, %v1992
    %v2122 = vsel %vm1608, %v1946, %v1994
    %v2123 = vsel %vm1625, %v2107, %v2012
    %v2124 = vsel %vm1625, %v2108, %v2014
    %v2125 = vsel %vm1625, %v2109, %v2016
    %v2126 = vsel %vm1625, %v2110, %v2018
    %v2127 = vsel %vm1625, %v2111, %v2020
    %v2128 = vsel %vm1625, %v2112, %v2022
    %v2129 = vsel %vm1625, %v2113, %v2024
    %v2130 = vsel %vm1625, %v2114, %v2026
    %v2131 = vsel %vm1625, %v2115, %v2028
    %v2132 = vsel %vm1625, %v2116, %v2030
    %v2133 = vsel %vm1625, %v2117, %v2032
    %v2134 = vsel %vm1625, %v2118, %v2034
    %v2135 = vsel %vm1625, %v2119, %v2036
    %v2136 = vsel %vm1625, %v2120, %v2038
    %v2137 = vsel %vm1625, %v2121, %v2040
    %v2138 = vsel %vm1625, %v2122, %v2042
    %v2139 = vsel %vm1642, %v2123, %v2060
    %v2140 = vsel %vm1642, %v2124, %v2062
    %v2141 = vsel %vm1642, %v2125, %v2064
    %v2142 = vsel %vm1642, %v2126, %v2066
    %v2143 = vsel %vm1642, %v2127, %v2068
    %v2144 = vsel %vm1642, %v2128, %v2070
    %v2145 = vsel %vm1642, %v2129, %v2072
    %v2146 = vsel %vm1642, %v2130, %v2074
    %v2147 = vsel %vm1642, %v2131, %v2076
    %v2148 = vsel %vm1642, %v2132, %v2078
    %v2149 = vsel %vm1642, %v2133, %v2080
    %v2150 = vsel %vm1642, %v2134, %v2082
    %v2151 = vsel %vm1642, %v2135, %v2084
    %v2152 = vsel %vm1642, %v2136, %v2086
    %v2153 = vsel %vm1642, %v2137, %v2088
    %v2154 = vsel %vm1642, %v2138, %v2090
    %v2155 = vmul.f32 %v1676, %v2139
    %v2156 = vmul.f32 %v1678, %v2140
    %v2157 = vmul.f32 %v1680, %v2141
    %v2158 = vmul.f32 %v1682, %v2142
    %v2159 = vmul.f32 %v1684, %v2143
    %v2160 = vmul.f32 %v1686, %v2144
    %v2161 = vmul.f32 %v1688, %v2145
    %v2162 = vmul.f32 %v1690, %v2146
    %v2163 = vmul.f32 %v1692, %v2147
    %v2164 = vmul.f32 %v1694, %v2148
    %v2165 = vmul.f32 %v1696, %v2149
    %v2166 = vmul.f32 %v1698, %v2150
    %v2167 = vmul.f32 %v1700, %v2151
    %v2168 = vmul.f32 %v1702, %v2152
    %v2169 = vmul.f32 %v1704, %v2153
    %v2170 = vmul.f32 %v1706, %v2154
    %vm2171 = vcmask 523264
    %v2173 = vsel %vm2171, %v2155, 0
    %v2176 = vsel %vm2171, %v2156, 0
    %v2179 = vsel %vm2171, %v2157, 0
    %v2182 = vsel %vm2171, %v2158, 0
    %v2185 = vsel %vm2171, %v2159, 0
    %v2188 = vsel %vm2171, %v2160, 0
    %v2191 = vsel %vm2171, %v2161, 0
    %v2194 = vsel %vm2171, %v2162, 0
    %v2197 = vsel %vm2171, %v2163, 0
    %v2200 = vsel %vm2171, %v2164, 0
    %v2203 = vsel %vm2171, %v2165, 0
    %v2206 = vsel %vm2171, %v2166, 0
    %v2209 = vsel %vm2171, %v2167, 0
    %v2212 = vsel %vm2171, %v2168, 0
    %v2215 = vsel %vm2171, %v2169, 0
    %v2218 = vsel %vm2171, %v2170, 0
    %2220 = vmatprep.subr.mxu0 0.0
    %2221 = vmatpush1.msra.mxu0 0.0
    %2222 = vmatprep.subr.mxu0 0.0
    %2223 = vmatpush1.msra.mxu0 0.0
    %2224 = vmatprep.subr.mxu0 0.0
    %2225 = vmatpush1.msra.mxu0 0.0
    %2226 = vmatprep.subr.mxu0 0.0
    %2227 = vmatpush1.msra.mxu0 0.0
    %2228 = vmatprep.subr.mxu0 0.0
    %2229 = vmatpush1.msra.mxu0 0.0
    %2230 = vmatprep.subr.mxu0 0.0
    %2231 = vmatpush1.msra.mxu0 0.0
    %2232 = vmatprep.subr.mxu0 0.0
    %2233 = vmatpush1.msra.mxu0 0.0
    %2234 = vmatprep.subr.mxu0 0.0
    %2235 = vmatpush1.msra.mxu0 0.0
    %2236 = vmatprep.subr.mxu0 %v141
    %2237 = vmatpush1.msra.mxu0 %v140
    %2238 = vmatprep.subr.mxu0 %v137
    %2239 = vmatpush1.msra.mxu0 %v136
    %2240 = vmatprep.subr.mxu0 %v133
    %2241 = vmatpush1.msra.mxu0 %v132
    %2242 = vmatprep.subr.mxu0 %v129
    %2243 = vmatpush1.msra.mxu0 %v128
    %2244 = vmatprep.subr.mxu0 %v125
    %2245 = vmatpush1.msra.mxu0 %v124
    %2246 = vmatprep.subr.mxu0 %v121
    %2247 = vmatpush1.msra.mxu0 %v120
    %2248 = vmatprep.subr.mxu0 %v117
    %2249 = vmatpush1.msra.mxu0 %v116
    %2250 = vmatprep.subr.mxu0 %v113
    %2251 = vmatpush1.msra.mxu0 %v112
    %2252 = vmatprep.subr.mxu0 0.0
    %2253 = vmatpush2.msra.mxu0 0.0
    %2254 = vmatprep.subr.mxu0 0.0
    %2255 = vmatpush2.msra.mxu0 0.0
    %2256 = vmatprep.subr.mxu0 0.0
    %2257 = vmatpush2.msra.mxu0 0.0
    %2258 = vmatprep.subr.mxu0 0.0
    %2259 = vmatpush2.msra.mxu0 0.0
    %2260 = vmatprep.subr.mxu0 0.0
    %2261 = vmatpush2.msra.mxu0 0.0
    %2262 = vmatprep.subr.mxu0 0.0
    %2263 = vmatpush2.msra.mxu0 0.0
    %2264 = vmatprep.subr.mxu0 0.0
    %2265 = vmatpush2.msra.mxu0 0.0
    %2266 = vmatprep.subr.mxu0 0.0
    %2267 = vmatpush2.msra.mxu0 0.0
    %2268 = vmatprep.subr.mxu0 0.0
    %2269 = vmatpush2.msra.mxu0 0.0
    %2270 = vmatprep.subr.mxu0 0.0
    %2271 = vmatpush2.msra.mxu0 0.0
    %2272 = vmatprep.subr.mxu0 0.0
    %2273 = vmatpush2.msra.mxu0 0.0
    %2274 = vmatprep.subr.mxu0 0.0
    %2275 = vmatpush2.msra.mxu0 0.0
    %2276 = vmatprep.subr.mxu0 0.0
    %2277 = vmatpush2.msra.mxu0 0.0
    %2278 = vmatprep.subr.mxu0 0.0
    %2279 = vmatpush2.msra.mxu0 0.0
    %2280 = vmatprep.subr.mxu0 0.0
    %2281 = vmatpush2.msra.mxu0 0.0
    %2282 = vmatprep.subr.mxu0 0.0
    %2283 = vmatpush2.msra.mxu0 0.0
    %2284 = vmatprep.mubr.f32.mxu0 0.0
    %2285 = vmatmul.mubr.f32.gmra.mxu0 %v2173
    %v2286 = vpop.f32.mrf.mxu0
    %v2287 = vadd.f32 0.0, %v2286
    %v2288 = vpop.f32.mrf.mxu0
    %v2289 = vadd.f32 0.0, %v2288
    %2290 = vmatprep.mubr.f32.mxu0 0.0
    %2291 = vmatmul.mubr.f32.gmra.mxu0 %v2176
    %v2292 = vpop.f32.mrf.mxu0
    %v2293 = vadd.f32 0.0, %v2292
    %v2294 = vpop.f32.mrf.mxu0
    %v2295 = vadd.f32 0.0, %v2294
    %2296 = vmatprep.mubr.f32.mxu0 0.0
    %2297 = vmatmul.mubr.f32.gmra.mxu0 %v2179
    %v2298 = vpop.f32.mrf.mxu0
    %v2299 = vadd.f32 0.0, %v2298
    %v2300 = vpop.f32.mrf.mxu0
    %v2301 = vadd.f32 0.0, %v2300
    %2302 = vmatprep.mubr.f32.mxu0 0.0
    %2303 = vmatmul.mubr.f32.gmra.mxu0 %v2182
    %v2304 = vpop.f32.mrf.mxu0
    %v2305 = vadd.f32 0.0, %v2304
    %v2306 = vpop.f32.mrf.mxu0
    %v2307 = vadd.f32 0.0, %v2306
    %2308 = vmatprep.mubr.f32.mxu0 0.0
    %2309 = vmatmul.mubr.f32.gmra.mxu0 %v2185
    %v2310 = vpop.f32.mrf.mxu0
    %v2311 = vadd.f32 0.0, %v2310
    %v2312 = vpop.f32.mrf.mxu0
    %v2313 = vadd.f32 0.0, %v2312
    %2314 = vmatprep.mubr.f32.mxu0 0.0
    %2315 = vmatmul.mubr.f32.gmra.mxu0 %v2188
    %v2316 = vpop.f32.mrf.mxu0
    %v2317 = vadd.f32 0.0, %v2316
    %v2318 = vpop.f32.mrf.mxu0
    %v2319 = vadd.f32 0.0, %v2318
    %2320 = vmatprep.mubr.f32.mxu0 0.0
    %2321 = vmatmul.mubr.f32.gmra.mxu0 %v2191
    %v2322 = vpop.f32.mrf.mxu0
    %v2323 = vadd.f32 0.0, %v2322
    %v2324 = vpop.f32.mrf.mxu0
    %v2325 = vadd.f32 0.0, %v2324
    %2326 = vmatprep.mubr.f32.mxu0 0.0
    %2327 = vmatmul.mubr.f32.gmra.mxu0 %v2194
    %v2328 = vpop.f32.mrf.mxu0
    %v2329 = vadd.f32 0.0, %v2328
    %v2330 = vpop.f32.mrf.mxu0
    %v2331 = vadd.f32 0.0, %v2330
    %2332 = vmatprep.mubr.f32.mxu0 0.0
    %2333 = vmatmul.mubr.f32.gmra.mxu0 %v2197
    %v2334 = vpop.f32.mrf.mxu0
    %v2335 = vadd.f32 0.0, %v2334
    %v2336 = vpop.f32.mrf.mxu0
    %v2337 = vadd.f32 0.0, %v2336
    %2338 = vmatprep.mubr.f32.mxu0 0.0
    %2339 = vmatmul.mubr.f32.gmra.mxu0 %v2200
    %v2340 = vpop.f32.mrf.mxu0
    %v2341 = vadd.f32 0.0, %v2340
    %v2342 = vpop.f32.mrf.mxu0
    %v2343 = vadd.f32 0.0, %v2342
    %2344 = vmatprep.mubr.f32.mxu0 0.0
    %2345 = vmatmul.mubr.f32.gmra.mxu0 %v2203
    %v2346 = vpop.f32.mrf.mxu0
    %v2347 = vadd.f32 0.0, %v2346
    %v2348 = vpop.f32.mrf.mxu0
    %v2349 = vadd.f32 0.0, %v2348
    %2350 = vmatprep.mubr.f32.mxu0 0.0
    %2351 = vmatmul.mubr.f32.gmra.mxu0 %v2206
    %v2352 = vpop.f32.mrf.mxu0
    %v2353 = vadd.f32 0.0, %v2352
    %v2354 = vpop.f32.mrf.mxu0
    %v2355 = vadd.f32 0.0, %v2354
    %2356 = vmatprep.mubr.f32.mxu0 0.0
    %2357 = vmatmul.mubr.f32.gmra.mxu0 %v2209
    %v2358 = vpop.f32.mrf.mxu0
    %v2359 = vadd.f32 0.0, %v2358
    %v2360 = vpop.f32.mrf.mxu0
    %v2361 = vadd.f32 0.0, %v2360
    %2362 = vmatprep.mubr.f32.mxu0 0.0
    %2363 = vmatmul.mubr.f32.gmra.mxu0 %v2212
    %v2364 = vpop.f32.mrf.mxu0
    %v2365 = vadd.f32 0.0, %v2364
    %v2366 = vpop.f32.mrf.mxu0
    %v2367 = vadd.f32 0.0, %v2366
    %2368 = vmatprep.mubr.f32.mxu0 0.0
    %2369 = vmatmul.mubr.f32.gmra.mxu0 %v2215
    %v2370 = vpop.f32.mrf.mxu0
    %v2371 = vadd.f32 0.0, %v2370
    %v2372 = vpop.f32.mrf.mxu0
    %v2373 = vadd.f32 0.0, %v2372
    %2374 = vmatprep.mubr.f32.mxu0 0.0
    %2375 = vmatmul.mubr.f32.gmra.mxu0 %v2218
    %v2376 = vpop.f32.mrf.mxu0
    %v2377 = vadd.f32 0.0, %v2376
    %v2378 = vpop.f32.mrf.mxu0
    %v2379 = vadd.f32 0.0, %v2378
    %2380 = vdwg.mxu0
    %2381 = vmatprep.subr.mxu0 0.0
    %2382 = vmatpush1.msra.mxu0 0.0
    %2383 = vmatprep.subr.mxu0 0.0
    %2384 = vmatpush1.msra.mxu0 0.0
    %2385 = vmatprep.subr.mxu0 0.0
    %2386 = vmatpush1.msra.mxu0 0.0
    %2387 = vmatprep.subr.mxu0 0.0
    %2388 = vmatpush1.msra.mxu0 0.0
    %2389 = vmatprep.subr.mxu0 0.0
    %2390 = vmatpush1.msra.mxu0 0.0
    %2391 = vmatprep.subr.mxu0 0.0
    %2392 = vmatpush1.msra.mxu0 0.0
    %2393 = vmatprep.subr.mxu0 0.0
    %2394 = vmatpush1.msra.mxu0 0.0
    %2395 = vmatprep.subr.mxu0 0.0
    %2396 = vmatpush1.msra.mxu0 0.0
    %2397 = vmatprep.subr.mxu0 %v143
    %2398 = vmatpush1.msra.mxu0 %v142
    %2399 = vmatprep.subr.mxu0 %v139
    %2400 = vmatpush1.msra.mxu0 %v138
    %2401 = vmatprep.subr.mxu0 %v135
    %2402 = vmatpush1.msra.mxu0 %v134
    %2403 = vmatprep.subr.mxu0 %v131
    %2404 = vmatpush1.msra.mxu0 %v130
    %2405 = vmatprep.subr.mxu0 %v127
    %2406 = vmatpush1.msra.mxu0 %v126
    %2407 = vmatprep.subr.mxu0 %v123
    %2408 = vmatpush1.msra.mxu0 %v122
    %2409 = vmatprep.subr.mxu0 %v119
    %2410 = vmatpush1.msra.mxu0 %v118
    %2411 = vmatprep.subr.mxu0 %v115
    %2412 = vmatpush1.msra.mxu0 %v114
    %2413 = vmatprep.subr.mxu0 0.0
    %2414 = vmatpush2.msra.mxu0 0.0
    %2415 = vmatprep.subr.mxu0 0.0
    %2416 = vmatpush2.msra.mxu0 0.0
    %2417 = vmatprep.subr.mxu0 0.0
    %2418 = vmatpush2.msra.mxu0 0.0
    %2419 = vmatprep.subr.mxu0 0.0
    %2420 = vmatpush2.msra.mxu0 0.0
    %2421 = vmatprep.subr.mxu0 0.0
    %2422 = vmatpush2.msra.mxu0 0.0
    %2423 = vmatprep.subr.mxu0 0.0
    %2424 = vmatpush2.msra.mxu0 0.0
    %2425 = vmatprep.subr.mxu0 0.0
    %2426 = vmatpush2.msra.mxu0 0.0
    %2427 = vmatprep.subr.mxu0 0.0
    %2428 = vmatpush2.msra.mxu0 0.0
    %2429 = vmatprep.subr.mxu0 0.0
    %2430 = vmatpush2.msra.mxu0 0.0
    %2431 = vmatprep.subr.mxu0 0.0
    %2432 = vmatpush2.msra.mxu0 0.0
    %2433 = vmatprep.subr.mxu0 0.0
    %2434 = vmatpush2.msra.mxu0 0.0
    %2435 = vmatprep.subr.mxu0 0.0
    %2436 = vmatpush2.msra.mxu0 0.0
    %2437 = vmatprep.subr.mxu0 0.0
    %2438 = vmatpush2.msra.mxu0 0.0
    %2439 = vmatprep.subr.mxu0 0.0
    %2440 = vmatpush2.msra.mxu0 0.0
    %2441 = vmatprep.subr.mxu0 0.0
    %2442 = vmatpush2.msra.mxu0 0.0
    %2443 = vmatprep.subr.mxu0 0.0
    %2444 = vmatpush2.msra.mxu0 0.0
    %2445 = vmatprep.mubr.f32.mxu0 0.0
    %2446 = vmatmul.mubr.f32.gmra.mxu0 %v2173
    %v2447 = vpop.f32.mrf.mxu0
    %v2448 = vadd.f32 0.0, %v2447
    %v2449 = vpop.f32.mrf.mxu0
    %v2450 = vadd.f32 0.0, %v2449
    %2451 = vmatprep.mubr.f32.mxu0 0.0
    %2452 = vmatmul.mubr.f32.gmra.mxu0 %v2176
    %v2453 = vpop.f32.mrf.mxu0
    %v2454 = vadd.f32 0.0, %v2453
    %v2455 = vpop.f32.mrf.mxu0
    %v2456 = vadd.f32 0.0, %v2455
    %2457 = vmatprep.mubr.f32.mxu0 0.0
    %2458 = vmatmul.mubr.f32.gmra.mxu0 %v2179
    %v2459 = vpop.f32.mrf.mxu0
    %v2460 = vadd.f32 0.0, %v2459
    %v2461 = vpop.f32.mrf.mxu0
    %v2462 = vadd.f32 0.0, %v2461
    %2463 = vmatprep.mubr.f32.mxu0 0.0
    %2464 = vmatmul.mubr.f32.gmra.mxu0 %v2182
    %v2465 = vpop.f32.mrf.mxu0
    %v2466 = vadd.f32 0.0, %v2465
    %v2467 = vpop.f32.mrf.mxu0
    %v2468 = vadd.f32 0.0, %v2467
    %2469 = vmatprep.mubr.f32.mxu0 0.0
    %2470 = vmatmul.mubr.f32.gmra.mxu0 %v2185
    %v2471 = vpop.f32.mrf.mxu0
    %v2472 = vadd.f32 0.0, %v2471
    %v2473 = vpop.f32.mrf.mxu0
    %v2474 = vadd.f32 0.0, %v2473
    %2475 = vmatprep.mubr.f32.mxu0 0.0
    %2476 = vmatmul.mubr.f32.gmra.mxu0 %v2188
    %v2477 = vpop.f32.mrf.mxu0
    %v2478 = vadd.f32 0.0, %v2477
    %v2479 = vpop.f32.mrf.mxu0
    %v2480 = vadd.f32 0.0, %v2479
    %2481 = vmatprep.mubr.f32.mxu0 0.0
    %2482 = vmatmul.mubr.f32.gmra.mxu0 %v2191
    %v2483 = vpop.f32.mrf.mxu0
    %v2484 = vadd.f32 0.0, %v2483
    %v2485 = vpop.f32.mrf.mxu0
    %v2486 = vadd.f32 0.0, %v2485
    %2487 = vmatprep.mubr.f32.mxu0 0.0
    %2488 = vmatmul.mubr.f32.gmra.mxu0 %v2194
    %v2489 = vpop.f32.mrf.mxu0
    %v2490 = vadd.f32 0.0, %v2489
    %v2491 = vpop.f32.mrf.mxu0
    %v2492 = vadd.f32 0.0, %v2491
    %2493 = vmatprep.mubr.f32.mxu0 0.0
    %2494 = vmatmul.mubr.f32.gmra.mxu0 %v2197
    %v2495 = vpop.f32.mrf.mxu0
    %v2496 = vadd.f32 0.0, %v2495
    %v2497 = vpop.f32.mrf.mxu0
    %v2498 = vadd.f32 0.0, %v2497
    %2499 = vmatprep.mubr.f32.mxu0 0.0
    %2500 = vmatmul.mubr.f32.gmra.mxu0 %v2200
    %v2501 = vpop.f32.mrf.mxu0
    %v2502 = vadd.f32 0.0, %v2501
    %v2503 = vpop.f32.mrf.mxu0
    %v2504 = vadd.f32 0.0, %v2503
    %2505 = vmatprep.mubr.f32.mxu0 0.0
    %2506 = vmatmul.mubr.f32.gmra.mxu0 %v2203
    %v2507 = vpop.f32.mrf.mxu0
    %v2508 = vadd.f32 0.0, %v2507
    %v2509 = vpop.f32.mrf.mxu0
    %v2510 = vadd.f32 0.0, %v2509
    %2511 = vmatprep.mubr.f32.mxu0 0.0
    %2512 = vmatmul.mubr.f32.gmra.mxu0 %v2206
    %v2513 = vpop.f32.mrf.mxu0
    %v2514 = vadd.f32 0.0, %v2513
    %v2515 = vpop.f32.mrf.mxu0
    %v2516 = vadd.f32 0.0, %v2515
    %2517 = vmatprep.mubr.f32.mxu0 0.0
    %2518 = vmatmul.mubr.f32.gmra.mxu0 %v2209
    %v2519 = vpop.f32.mrf.mxu0
    %v2520 = vadd.f32 0.0, %v2519
    %v2521 = vpop.f32.mrf.mxu0
    %v2522 = vadd.f32 0.0, %v2521
    %2523 = vmatprep.mubr.f32.mxu0 0.0
    %2524 = vmatmul.mubr.f32.gmra.mxu0 %v2212
    %v2525 = vpop.f32.mrf.mxu0
    %v2526 = vadd.f32 0.0, %v2525
    %v2527 = vpop.f32.mrf.mxu0
    %v2528 = vadd.f32 0.0, %v2527
    %2529 = vmatprep.mubr.f32.mxu0 0.0
    %2530 = vmatmul.mubr.f32.gmra.mxu0 %v2215
    %v2531 = vpop.f32.mrf.mxu0
    %v2532 = vadd.f32 0.0, %v2531
    %v2533 = vpop.f32.mrf.mxu0
    %v2534 = vadd.f32 0.0, %v2533
    %2535 = vmatprep.mubr.f32.mxu0 0.0
    %2536 = vmatmul.mubr.f32.gmra.mxu0 %v2218
    %v2537 = vpop.f32.mrf.mxu0
    %v2538 = vadd.f32 0.0, %v2537
    %v2539 = vpop.f32.mrf.mxu0
    %v2540 = vadd.f32 0.0, %v2539
    %2541 = vdwg.mxu0
    %v2542 = vmul.f32 %v2287, %v794
    %v2543 = vmul.f32 %v2289, %v794
    %v2544 = vmul.f32 %v2448, %v794
    %v2545 = vmul.f32 %v2450, %v794
    %v2546 = vmul.f32 %v2293, %v800
    %v2547 = vmul.f32 %v2295, %v800
    %v2548 = vmul.f32 %v2454, %v800
    %v2549 = vmul.f32 %v2456, %v800
    %v2550 = vmul.f32 %v2299, %v806
    %v2551 = vmul.f32 %v2301, %v806
    %v2552 = vmul.f32 %v2460, %v806
    %v2553 = vmul.f32 %v2462, %v806
    %v2554 = vmul.f32 %v2305, %v812
    %v2555 = vmul.f32 %v2307, %v812
    %v2556 = vmul.f32 %v2466, %v812
    %v2557 = vmul.f32 %v2468, %v812
    %v2558 = vmul.f32 %v2311, %v818
    %v2559 = vmul.f32 %v2313, %v818
    %v2560 = vmul.f32 %v2472, %v818
    %v2561 = vmul.f32 %v2474, %v818
    %v2562 = vmul.f32 %v2317, %v824
    %v2563 = vmul.f32 %v2319, %v824
    %v2564 = vmul.f32 %v2478, %v824
    %v2565 = vmul.f32 %v2480, %v824
    %v2566 = vmul.f32 %v2323, %v830
    %v2567 = vmul.f32 %v2325, %v830
    %v2568 = vmul.f32 %v2484, %v830
    %v2569 = vmul.f32 %v2486, %v830
    %v2570 = vmul.f32 %v2329, %v836
    %v2571 = vmul.f32 %v2331, %v836
    %v2572 = vmul.f32 %v2490, %v836
    %v2573 = vmul.f32 %v2492, %v836
    %v2574 = vmul.f32 %v2335, %v842
    %v2575 = vmul.f32 %v2337, %v842
    %v2576 = vmul.f32 %v2496, %v842
    %v2577 = vmul.f32 %v2498, %v842
    %v2578 = vmul.f32 %v2341, %v848
    %v2579 = vmul.f32 %v2343, %v848
    %v2580 = vmul.f32 %v2502, %v848
    %v2581 = vmul.f32 %v2504, %v848
    %v2582 = vmul.f32 %v2347, %v854
    %v2583 = vmul.f32 %v2349, %v854
    %v2584 = vmul.f32 %v2508, %v854
    %v2585 = vmul.f32 %v2510, %v854
    %v2586 = vmul.f32 %v2353, %v860
    %v2587 = vmul.f32 %v2355, %v860
    %v2588 = vmul.f32 %v2514, %v860
    %v2589 = vmul.f32 %v2516, %v860
    %v2590 = vmul.f32 %v2359, %v866
    %v2591 = vmul.f32 %v2361, %v866
    %v2592 = vmul.f32 %v2520, %v866
    %v2593 = vmul.f32 %v2522, %v866
    %v2594 = vmul.f32 %v2365, %v872
    %v2595 = vmul.f32 %v2367, %v872
    %v2596 = vmul.f32 %v2526, %v872
    %v2597 = vmul.f32 %v2528, %v872
    %v2598 = vmul.f32 %v2371, %v878
    %v2599 = vmul.f32 %v2373, %v878
    %v2600 = vmul.f32 %v2532, %v878
    %v2601 = vmul.f32 %v2534, %v878
    %v2602 = vmul.f32 %v2377, %v884
    %v2603 = vmul.f32 %v2379, %v884
    %v2604 = vmul.f32 %v2538, %v884
    %v2605 = vmul.f32 %v2540, %v884
    %2606 = vmatprep.subr.mxu0 0.0
    %2607 = vmatpush1.msra.mxu0 %v223
    %2608 = vmatprep.subr.mxu0 0.0
    %2609 = vmatpush1.msra.mxu0 %v222
    %2610 = vmatprep.subr.mxu0 0.0
    %2611 = vmatpush1.msra.mxu0 %v221
    %2612 = vmatprep.subr.mxu0 0.0
    %2613 = vmatpush1.msra.mxu0 %v220
    %2614 = vmatprep.subr.mxu0 0.0
    %2615 = vmatpush1.msra.mxu0 %v219
    %2616 = vmatprep.subr.mxu0 0.0
    %2617 = vmatpush1.msra.mxu0 %v218
    %2618 = vmatprep.subr.mxu0 0.0
    %2619 = vmatpush1.msra.mxu0 %v217
    %2620 = vmatprep.subr.mxu0 0.0
    %2621 = vmatpush1.msra.mxu0 %v216
    %2622 = vmatprep.subr.mxu0 0.0
    %2623 = vmatpush1.msra.mxu0 %v215
    %2624 = vmatprep.subr.mxu0 0.0
    %2625 = vmatpush1.msra.mxu0 %v214
    %2626 = vmatprep.subr.mxu0 0.0
    %2627 = vmatpush1.msra.mxu0 %v213
    %2628 = vmatprep.subr.mxu0 0.0
    %2629 = vmatpush1.msra.mxu0 %v212
    %2630 = vmatprep.subr.mxu0 0.0
    %2631 = vmatpush1.msra.mxu0 %v211
    %2632 = vmatprep.subr.mxu0 0.0
    %2633 = vmatpush1.msra.mxu0 %v210
    %2634 = vmatprep.subr.mxu0 0.0
    %2635 = vmatpush1.msra.mxu0 %v209
    %2636 = vmatprep.subr.mxu0 0.0
    %2637 = vmatpush1.msra.mxu0 %v208
    %2638 = vmatprep.subr.mxu0 0.0
    %2639 = vmatpush2.msra.mxu0 %v239
    %2640 = vmatprep.subr.mxu0 0.0
    %2641 = vmatpush2.msra.mxu0 %v238
    %2642 = vmatprep.subr.mxu0 0.0
    %2643 = vmatpush2.msra.mxu0 %v237
    %2644 = vmatprep.subr.mxu0 0.0
    %2645 = vmatpush2.msra.mxu0 %v236
    %2646 = vmatprep.subr.mxu0 0.0
    %2647 = vmatpush2.msra.mxu0 %v235
    %2648 = vmatprep.subr.mxu0 0.0
    %2649 = vmatpush2.msra.mxu0 %v234
    %2650 = vmatprep.subr.mxu0 0.0
    %2651 = vmatpush2.msra.mxu0 %v233
    %2652 = vmatprep.subr.mxu0 0.0
    %2653 = vmatpush2.msra.mxu0 %v232
    %2654 = vmatprep.subr.mxu0 0.0
    %2655 = vmatpush2.msra.mxu0 %v231
    %2656 = vmatprep.subr.mxu0 0.0
    %2657 = vmatpush2.msra.mxu0 %v230
    %2658 = vmatprep.subr.mxu0 0.0
    %2659 = vmatpush2.msra.mxu0 %v229
    %2660 = vmatprep.subr.mxu0 0.0
    %2661 = vmatpush2.msra.mxu0 %v228
    %2662 = vmatprep.subr.mxu0 0.0
    %2663 = vmatpush2.msra.mxu0 %v227
    %2664 = vmatprep.subr.mxu0 0.0
    %2665 = vmatpush2.msra.mxu0 %v226
    %2666 = vmatprep.subr.mxu0 0.0
    %2667 = vmatpush2.msra.mxu0 %v225
    %2668 = vmatprep.subr.mxu0 0.0
    %2669 = vmatpush2.msra.mxu0 %v224
    %2670 = vmatprep.mubr.f32.mxu0 %v2543
    %2671 = vmatmul.mubr.f32.gmra.mxu0 %v2542
    %v2672 = vpop.f32.mrf.mxu0
    %v2673 = vadd.f32 0.0, %v2672
    %v2674 = vpop.f32.mrf.mxu0
    %2675 = vmatprep.mubr.f32.mxu0 %v2547
    %2676 = vmatmul.mubr.f32.gmra.mxu0 %v2546
    %v2677 = vpop.f32.mrf.mxu0
    %v2678 = vadd.f32 0.0, %v2677
    %v2679 = vpop.f32.mrf.mxu0
    %2680 = vmatprep.mubr.f32.mxu0 %v2551
    %2681 = vmatmul.mubr.f32.gmra.mxu0 %v2550
    %v2682 = vpop.f32.mrf.mxu0
    %v2683 = vadd.f32 0.0, %v2682
    %v2684 = vpop.f32.mrf.mxu0
    %2685 = vmatprep.mubr.f32.mxu0 %v2555
    %2686 = vmatmul.mubr.f32.gmra.mxu0 %v2554
    %v2687 = vpop.f32.mrf.mxu0
    %v2688 = vadd.f32 0.0, %v2687
    %v2689 = vpop.f32.mrf.mxu0
    %2690 = vmatprep.mubr.f32.mxu0 %v2559
    %2691 = vmatmul.mubr.f32.gmra.mxu0 %v2558
    %v2692 = vpop.f32.mrf.mxu0
    %v2693 = vadd.f32 0.0, %v2692
    %v2694 = vpop.f32.mrf.mxu0
    %2695 = vmatprep.mubr.f32.mxu0 %v2563
    %2696 = vmatmul.mubr.f32.gmra.mxu0 %v2562
    %v2697 = vpop.f32.mrf.mxu0
    %v2698 = vadd.f32 0.0, %v2697
    %v2699 = vpop.f32.mrf.mxu0
    %2700 = vmatprep.mubr.f32.mxu0 %v2567
    %2701 = vmatmul.mubr.f32.gmra.mxu0 %v2566
    %v2702 = vpop.f32.mrf.mxu0
    %v2703 = vadd.f32 0.0, %v2702
    %v2704 = vpop.f32.mrf.mxu0
    %2705 = vmatprep.mubr.f32.mxu0 %v2571
    %2706 = vmatmul.mubr.f32.gmra.mxu0 %v2570
    %v2707 = vpop.f32.mrf.mxu0
    %v2708 = vadd.f32 0.0, %v2707
    %v2709 = vpop.f32.mrf.mxu0
    %2710 = vmatprep.mubr.f32.mxu0 %v2575
    %2711 = vmatmul.mubr.f32.gmra.mxu0 %v2574
    %v2712 = vpop.f32.mrf.mxu0
    %v2713 = vadd.f32 0.0, %v2712
    %v2714 = vpop.f32.mrf.mxu0
    %2715 = vmatprep.mubr.f32.mxu0 %v2579
    %2716 = vmatmul.mubr.f32.gmra.mxu0 %v2578
    %v2717 = vpop.f32.mrf.mxu0
    %v2718 = vadd.f32 0.0, %v2717
    %v2719 = vpop.f32.mrf.mxu0
    %2720 = vmatprep.mubr.f32.mxu0 %v2583
    %2721 = vmatmul.mubr.f32.gmra.mxu0 %v2582
    %v2722 = vpop.f32.mrf.mxu0
    %v2723 = vadd.f32 0.0, %v2722
    %v2724 = vpop.f32.mrf.mxu0
    %2725 = vmatprep.mubr.f32.mxu0 %v2587
    %2726 = vmatmul.mubr.f32.gmra.mxu0 %v2586
    %v2727 = vpop.f32.mrf.mxu0
    %v2728 = vadd.f32 0.0, %v2727
    %v2729 = vpop.f32.mrf.mxu0
    %2730 = vmatprep.mubr.f32.mxu0 %v2591
    %2731 = vmatmul.mubr.f32.gmra.mxu0 %v2590
    %v2732 = vpop.f32.mrf.mxu0
    %v2733 = vadd.f32 0.0, %v2732
    %v2734 = vpop.f32.mrf.mxu0
    %2735 = vmatprep.mubr.f32.mxu0 %v2595
    %2736 = vmatmul.mubr.f32.gmra.mxu0 %v2594
    %v2737 = vpop.f32.mrf.mxu0
    %v2738 = vadd.f32 0.0, %v2737
    %v2739 = vpop.f32.mrf.mxu0
    %2740 = vmatprep.mubr.f32.mxu0 %v2599
    %2741 = vmatmul.mubr.f32.gmra.mxu0 %v2598
    %v2742 = vpop.f32.mrf.mxu0
    %v2743 = vadd.f32 0.0, %v2742
    %v2744 = vpop.f32.mrf.mxu0
    %2745 = vmatprep.mubr.f32.mxu0 %v2603
    %2746 = vmatmul.mubr.f32.gmra.mxu0 %v2602
    %v2747 = vpop.f32.mrf.mxu0
    %v2748 = vadd.f32 0.0, %v2747
    %v2749 = vpop.f32.mrf.mxu0
    %2750 = vdwg.mxu0
    %2751 = vmatprep.subr.mxu0 0.0
    %2752 = vmatpush1.msra.mxu0 %v255
    %2753 = vmatprep.subr.mxu0 0.0
    %2754 = vmatpush1.msra.mxu0 %v254
    %2755 = vmatprep.subr.mxu0 0.0
    %2756 = vmatpush1.msra.mxu0 %v253
    %2757 = vmatprep.subr.mxu0 0.0
    %2758 = vmatpush1.msra.mxu0 %v252
    %2759 = vmatprep.subr.mxu0 0.0
    %2760 = vmatpush1.msra.mxu0 %v251
    %2761 = vmatprep.subr.mxu0 0.0
    %2762 = vmatpush1.msra.mxu0 %v250
    %2763 = vmatprep.subr.mxu0 0.0
    %2764 = vmatpush1.msra.mxu0 %v249
    %2765 = vmatprep.subr.mxu0 0.0
    %2766 = vmatpush1.msra.mxu0 %v248
    %2767 = vmatprep.subr.mxu0 0.0
    %2768 = vmatpush1.msra.mxu0 %v247
    %2769 = vmatprep.subr.mxu0 0.0
    %2770 = vmatpush1.msra.mxu0 %v246
    %2771 = vmatprep.subr.mxu0 0.0
    %2772 = vmatpush1.msra.mxu0 %v245
    %2773 = vmatprep.subr.mxu0 0.0
    %2774 = vmatpush1.msra.mxu0 %v244
    %2775 = vmatprep.subr.mxu0 0.0
    %2776 = vmatpush1.msra.mxu0 %v243
    %2777 = vmatprep.subr.mxu0 0.0
    %2778 = vmatpush1.msra.mxu0 %v242
    %2779 = vmatprep.subr.mxu0 0.0
    %2780 = vmatpush1.msra.mxu0 %v241
    %2781 = vmatprep.subr.mxu0 0.0
    %2782 = vmatpush1.msra.mxu0 %v240
    %2783 = vmatprep.subr.mxu0 0.0
    %2784 = vmatpush2.msra.mxu0 %v271
    %2785 = vmatprep.subr.mxu0 0.0
    %2786 = vmatpush2.msra.mxu0 %v270
    %2787 = vmatprep.subr.mxu0 0.0
    %2788 = vmatpush2.msra.mxu0 %v269
    %2789 = vmatprep.subr.mxu0 0.0
    %2790 = vmatpush2.msra.mxu0 %v268
    %2791 = vmatprep.subr.mxu0 0.0
    %2792 = vmatpush2.msra.mxu0 %v267
    %2793 = vmatprep.subr.mxu0 0.0
    %2794 = vmatpush2.msra.mxu0 %v266
    %2795 = vmatprep.subr.mxu0 0.0
    %2796 = vmatpush2.msra.mxu0 %v265
    %2797 = vmatprep.subr.mxu0 0.0
    %2798 = vmatpush2.msra.mxu0 %v264
    %2799 = vmatprep.subr.mxu0 0.0
    %2800 = vmatpush2.msra.mxu0 %v263
    %2801 = vmatprep.subr.mxu0 0.0
    %2802 = vmatpush2.msra.mxu0 %v262
    %2803 = vmatprep.subr.mxu0 0.0
    %2804 = vmatpush2.msra.mxu0 %v261
    %2805 = vmatprep.subr.mxu0 0.0
    %2806 = vmatpush2.msra.mxu0 %v260
    %2807 = vmatprep.subr.mxu0 0.0
    %2808 = vmatpush2.msra.mxu0 %v259
    %2809 = vmatprep.subr.mxu0 0.0
    %2810 = vmatpush2.msra.mxu0 %v258
    %2811 = vmatprep.subr.mxu0 0.0
    %2812 = vmatpush2.msra.mxu0 %v257
    %2813 = vmatprep.subr.mxu0 0.0
    %2814 = vmatpush2.msra.mxu0 %v256
    %2815 = vmatprep.mubr.f32.mxu0 %v2545
    %2816 = vmatmul.mubr.f32.gmra.mxu0 %v2544
    %v2817 = vpop.f32.mrf.mxu0
    %v2818 = vadd.f32 %v2673, %v2817
    %v2819 = vpop.f32.mrf.mxu0
    %2820 = vmatprep.mubr.f32.mxu0 %v2549
    %2821 = vmatmul.mubr.f32.gmra.mxu0 %v2548
    %v2822 = vpop.f32.mrf.mxu0
    %v2823 = vadd.f32 %v2678, %v2822
    %v2824 = vpop.f32.mrf.mxu0
    %2825 = vmatprep.mubr.f32.mxu0 %v2553
    %2826 = vmatmul.mubr.f32.gmra.mxu0 %v2552
    %v2827 = vpop.f32.mrf.mxu0
    %v2828 = vadd.f32 %v2683, %v2827
    %v2829 = vpop.f32.mrf.mxu0
    %2830 = vmatprep.mubr.f32.mxu0 %v2557
    %2831 = vmatmul.mubr.f32.gmra.mxu0 %v2556
    %v2832 = vpop.f32.mrf.mxu0
    %v2833 = vadd.f32 %v2688, %v2832
    %v2834 = vpop.f32.mrf.mxu0
    %2835 = vmatprep.mubr.f32.mxu0 %v2561
    %2836 = vmatmul.mubr.f32.gmra.mxu0 %v2560
    %v2837 = vpop.f32.mrf.mxu0
    %v2838 = vadd.f32 %v2693, %v2837
    %v2839 = vpop.f32.mrf.mxu0
    %2840 = vmatprep.mubr.f32.mxu0 %v2565
    %2841 = vmatmul.mubr.f32.gmra.mxu0 %v2564
    %v2842 = vpop.f32.mrf.mxu0
    %v2843 = vadd.f32 %v2698, %v2842
    %v2844 = vpop.f32.mrf.mxu0
    %2845 = vmatprep.mubr.f32.mxu0 %v2569
    %2846 = vmatmul.mubr.f32.gmra.mxu0 %v2568
    %v2847 = vpop.f32.mrf.mxu0
    %v2848 = vadd.f32 %v2703, %v2847
    %v2849 = vpop.f32.mrf.mxu0
    %2850 = vmatprep.mubr.f32.mxu0 %v2573
    %2851 = vmatmul.mubr.f32.gmra.mxu0 %v2572
    %v2852 = vpop.f32.mrf.mxu0
    %v2853 = vadd.f32 %v2708, %v2852
    %v2854 = vpop.f32.mrf.mxu0
    %2855 = vmatprep.mubr.f32.mxu0 %v2577
    %2856 = vmatmul.mubr.f32.gmra.mxu0 %v2576
    %v2857 = vpop.f32.mrf.mxu0
    %v2858 = vadd.f32 %v2713, %v2857
    %v2859 = vpop.f32.mrf.mxu0
    %2860 = vmatprep.mubr.f32.mxu0 %v2581
    %2861 = vmatmul.mubr.f32.gmra.mxu0 %v2580
    %v2862 = vpop.f32.mrf.mxu0
    %v2863 = vadd.f32 %v2718, %v2862
    %v2864 = vpop.f32.mrf.mxu0
    %2865 = vmatprep.mubr.f32.mxu0 %v2585
    %2866 = vmatmul.mubr.f32.gmra.mxu0 %v2584
    %v2867 = vpop.f32.mrf.mxu0
    %v2868 = vadd.f32 %v2723, %v2867
    %v2869 = vpop.f32.mrf.mxu0
    %2870 = vmatprep.mubr.f32.mxu0 %v2589
    %2871 = vmatmul.mubr.f32.gmra.mxu0 %v2588
    %v2872 = vpop.f32.mrf.mxu0
    %v2873 = vadd.f32 %v2728, %v2872
    %v2874 = vpop.f32.mrf.mxu0
    %2875 = vmatprep.mubr.f32.mxu0 %v2593
    %2876 = vmatmul.mubr.f32.gmra.mxu0 %v2592
    %v2877 = vpop.f32.mrf.mxu0
    %v2878 = vadd.f32 %v2733, %v2877
    %v2879 = vpop.f32.mrf.mxu0
    %2880 = vmatprep.mubr.f32.mxu0 %v2597
    %2881 = vmatmul.mubr.f32.gmra.mxu0 %v2596
    %v2882 = vpop.f32.mrf.mxu0
    %v2883 = vadd.f32 %v2738, %v2882
    %v2884 = vpop.f32.mrf.mxu0
    %2885 = vmatprep.mubr.f32.mxu0 %v2601
    %2886 = vmatmul.mubr.f32.gmra.mxu0 %v2600
    %v2887 = vpop.f32.mrf.mxu0
    %v2888 = vadd.f32 %v2743, %v2887
    %v2889 = vpop.f32.mrf.mxu0
    %2890 = vmatprep.mubr.f32.mxu0 %v2605
    %2891 = vmatmul.mubr.f32.gmra.mxu0 %v2604
    %v2892 = vpop.f32.mrf.mxu0
    %v2893 = vadd.f32 %v2748, %v2892
    %v2894 = vpop.f32.mrf.mxu0
    %2895 = vdwg.mxu0
    %2896 = vmatprep.subr.mxu0 0.0
    %2897 = vmatpush1.msra.mxu0 %v2893
    %2898 = vmatprep.subr.mxu0 0.0
    %2899 = vmatpush1.msra.mxu0 %v2888
    %2900 = vmatprep.subr.mxu0 0.0
    %2901 = vmatpush1.msra.mxu0 %v2883
    %2902 = vmatprep.subr.mxu0 0.0
    %2903 = vmatpush1.msra.mxu0 %v2878
    %2904 = vmatprep.subr.mxu0 0.0
    %2905 = vmatpush1.msra.mxu0 %v2873
    %2906 = vmatprep.subr.mxu0 0.0
    %2907 = vmatpush1.msra.mxu0 %v2868
    %2908 = vmatprep.subr.mxu0 0.0
    %2909 = vmatpush1.msra.mxu0 %v2863
    %2910 = vmatprep.subr.mxu0 0.0
    %2911 = vmatpush1.msra.mxu0 %v2858
    %2912 = vmatprep.subr.mxu0 0.0
    %2913 = vmatpush1.msra.mxu0 %v2853
    %2914 = vmatprep.subr.mxu0 0.0
    %2915 = vmatpush1.msra.mxu0 %v2848
    %2916 = vmatprep.subr.mxu0 0.0
    %2917 = vmatpush1.msra.mxu0 %v2843
    %2918 = vmatprep.subr.mxu0 0.0
    %2919 = vmatpush1.msra.mxu0 %v2838
    %2920 = vmatprep.subr.mxu0 0.0
    %2921 = vmatpush1.msra.mxu0 %v2833
    %2922 = vmatprep.subr.mxu0 0.0
    %2923 = vmatpush1.msra.mxu0 %v2828
    %2924 = vmatprep.subr.mxu0 0.0
    %2925 = vmatpush1.msra.mxu0 %v2823
    %2926 = vmatprep.subr.mxu0 0.0
    %2927 = vmatpush1.msra.mxu0 %v2818
    %2928 = vmatprep.subr.mxu0 0.0
    %2929 = vmatpush2.msra.mxu0 0.0
    %2930 = vmatprep.subr.mxu0 0.0
    %2931 = vmatpush2.msra.mxu0 0.0
    %2932 = vmatprep.subr.mxu0 0.0
    %2933 = vmatpush2.msra.mxu0 0.0
    %2934 = vmatprep.subr.mxu0 0.0
    %2935 = vmatpush2.msra.mxu0 0.0
    %2936 = vmatprep.subr.mxu0 0.0
    %2937 = vmatpush2.msra.mxu0 0.0
    %2938 = vmatprep.subr.mxu0 0.0
    %2939 = vmatpush2.msra.mxu0 0.0
    %2940 = vmatprep.subr.mxu0 0.0
    %2941 = vmatpush2.msra.mxu0 0.0
    %2942 = vmatprep.subr.mxu0 0.0
    %2943 = vmatpush2.msra.mxu0 0.0
    %2944 = vmatprep.subr.mxu0 0.0
    %2945 = vmatpush2.msra.mxu0 0.0
    %2946 = vmatprep.subr.mxu0 0.0
    %2947 = vmatpush2.msra.mxu0 0.0
    %2948 = vmatprep.subr.mxu0 0.0
    %2949 = vmatpush2.msra.mxu0 0.0
    %2950 = vmatprep.subr.mxu0 0.0
    %2951 = vmatpush2.msra.mxu0 0.0
    %2952 = vmatprep.subr.mxu0 0.0
    %2953 = vmatpush2.msra.mxu0 0.0
    %2954 = vmatprep.subr.mxu0 0.0
    %2955 = vmatpush2.msra.mxu0 0.0
    %2956 = vmatprep.subr.mxu0 0.0
    %2957 = vmatpush2.msra.mxu0 0.0
    %2958 = vmatprep.subr.mxu0 0.0
    %2959 = vmatpush2.msra.mxu0 0.0
    %2960 = vmatprep.mubr.f32.mxu0 0.0
    %2961 = vmatmul.mubr.f32.gmra.mxu0 %v144
    %v2962 = vpop.f32.mrf.mxu0
    %v2963 = vadd.f32 0.0, %v2962
    %v2964 = vpop.f32.mrf.mxu0
    %2965 = vmatprep.mubr.f32.mxu0 0.0
    %2966 = vmatmul.mubr.f32.gmra.mxu0 %v145
    %v2967 = vpop.f32.mrf.mxu0
    %v2968 = vadd.f32 0.0, %v2967
    %v2969 = vpop.f32.mrf.mxu0
    %2970 = vmatprep.mubr.f32.mxu0 0.0
    %2971 = vmatmul.mubr.f32.gmra.mxu0 %v146
    %v2972 = vpop.f32.mrf.mxu0
    %v2973 = vadd.f32 0.0, %v2972
    %v2974 = vpop.f32.mrf.mxu0
    %2975 = vmatprep.mubr.f32.mxu0 0.0
    %2976 = vmatmul.mubr.f32.gmra.mxu0 %v147
    %v2977 = vpop.f32.mrf.mxu0
    %v2978 = vadd.f32 0.0, %v2977
    %v2979 = vpop.f32.mrf.mxu0
    %2980 = vmatprep.mubr.f32.mxu0 0.0
    %2981 = vmatmul.mubr.f32.gmra.mxu0 %v148
    %v2982 = vpop.f32.mrf.mxu0
    %v2983 = vadd.f32 0.0, %v2982
    %v2984 = vpop.f32.mrf.mxu0
    %2985 = vmatprep.mubr.f32.mxu0 0.0
    %2986 = vmatmul.mubr.f32.gmra.mxu0 %v149
    %v2987 = vpop.f32.mrf.mxu0
    %v2988 = vadd.f32 0.0, %v2987
    %v2989 = vpop.f32.mrf.mxu0
    %2990 = vmatprep.mubr.f32.mxu0 0.0
    %2991 = vmatmul.mubr.f32.gmra.mxu0 %v150
    %v2992 = vpop.f32.mrf.mxu0
    %v2993 = vadd.f32 0.0, %v2992
    %v2994 = vpop.f32.mrf.mxu0
    %2995 = vmatprep.mubr.f32.mxu0 0.0
    %2996 = vmatmul.mubr.f32.gmra.mxu0 %v151
    %v2997 = vpop.f32.mrf.mxu0
    %v2998 = vadd.f32 0.0, %v2997
    %v2999 = vpop.f32.mrf.mxu0
    %3000 = vmatprep.mubr.f32.mxu0 0.0
    %3001 = vmatmul.mubr.f32.gmra.mxu0 %v152
    %v3002 = vpop.f32.mrf.mxu0
    %v3003 = vadd.f32 0.0, %v3002
    %v3004 = vpop.f32.mrf.mxu0
    %3005 = vmatprep.mubr.f32.mxu0 0.0
    %3006 = vmatmul.mubr.f32.gmra.mxu0 %v153
    %v3007 = vpop.f32.mrf.mxu0
    %v3008 = vadd.f32 0.0, %v3007
    %v3009 = vpop.f32.mrf.mxu0
    %3010 = vmatprep.mubr.f32.mxu0 0.0
    %3011 = vmatmul.mubr.f32.gmra.mxu0 %v154
    %v3012 = vpop.f32.mrf.mxu0
    %v3013 = vadd.f32 0.0, %v3012
    %v3014 = vpop.f32.mrf.mxu0
    %3015 = vmatprep.mubr.f32.mxu0 0.0
    %3016 = vmatmul.mubr.f32.gmra.mxu0 %v155
    %v3017 = vpop.f32.mrf.mxu0
    %v3018 = vadd.f32 0.0, %v3017
    %v3019 = vpop.f32.mrf.mxu0
    %3020 = vmatprep.mubr.f32.mxu0 0.0
    %3021 = vmatmul.mubr.f32.gmra.mxu0 %v156
    %v3022 = vpop.f32.mrf.mxu0
    %v3023 = vadd.f32 0.0, %v3022
    %v3024 = vpop.f32.mrf.mxu0
    %3025 = vmatprep.mubr.f32.mxu0 0.0
    %3026 = vmatmul.mubr.f32.gmra.mxu0 %v157
    %v3027 = vpop.f32.mrf.mxu0
    %v3028 = vadd.f32 0.0, %v3027
    %v3029 = vpop.f32.mrf.mxu0
    %3030 = vmatprep.mubr.f32.mxu0 0.0
    %3031 = vmatmul.mubr.f32.gmra.mxu0 %v158
    %v3032 = vpop.f32.mrf.mxu0
    %v3033 = vadd.f32 0.0, %v3032
    %v3034 = vpop.f32.mrf.mxu0
    %3035 = vmatprep.mubr.f32.mxu0 0.0
    %3036 = vmatmul.mubr.f32.gmra.mxu0 %v159
    %v3037 = vpop.f32.mrf.mxu0
    %v3038 = vadd.f32 0.0, %v3037
    %v3039 = vpop.f32.mrf.mxu0
    %3040 = vdwg.mxu0
    %vm3041 = vcmp.ge.f32.partialorder %v2963, 0.0
    %vm3042 = vcmp.ge.f32.partialorder %v2968, 0.0
    %vm3043 = vcmp.ge.f32.partialorder %v2973, 0.0
    %vm3044 = vcmp.ge.f32.partialorder %v2978, 0.0
    %vm3045 = vcmp.ge.f32.partialorder %v2983, 0.0
    %vm3046 = vcmp.ge.f32.partialorder %v2988, 0.0
    %vm3047 = vcmp.ge.f32.partialorder %v2993, 0.0
    %vm3048 = vcmp.ge.f32.partialorder %v2998, 0.0
    %vm3049 = vcmp.ge.f32.partialorder %v3003, 0.0
    %vm3050 = vcmp.ge.f32.partialorder %v3008, 0.0
    %vm3051 = vcmp.ge.f32.partialorder %v3013, 0.0
    %vm3052 = vcmp.ge.f32.partialorder %v3018, 0.0
    %vm3053 = vcmp.ge.f32.partialorder %v3023, 0.0
    %vm3054 = vcmp.ge.f32.partialorder %v3028, 0.0
    %vm3055 = vcmp.ge.f32.partialorder %v3033, 0.0
    %vm3056 = vcmp.ge.f32.partialorder %v3038, 0.0
    %v3057 = vmul.f32 %v2963, 0.01
    %v3058 = vmul.f32 %v2968, 0.01
    %v3059 = vmul.f32 %v2973, 0.01
    %v3060 = vmul.f32 %v2978, 0.01
    %v3061 = vmul.f32 %v2983, 0.01
    %v3062 = vmul.f32 %v2988, 0.01
    %v3063 = vmul.f32 %v2993, 0.01
    %v3064 = vmul.f32 %v2998, 0.01
    %v3065 = vmul.f32 %v3003, 0.01
    %v3066 = vmul.f32 %v3008, 0.01
    %v3067 = vmul.f32 %v3013, 0.01
    %v3068 = vmul.f32 %v3018, 0.01
    %v3069 = vmul.f32 %v3023, 0.01
    %v3070 = vmul.f32 %v3028, 0.01
    %v3071 = vmul.f32 %v3033, 0.01
    %v3072 = vmul.f32 %v3038, 0.01
    %v3073 = vsel %vm3041, %v2963, %v3057
    %v3074 = vsel %vm3042, %v2968, %v3058
    %v3075 = vsel %vm3043, %v2973, %v3059
    %v3076 = vsel %vm3044, %v2978, %v3060
    %v3077 = vsel %vm3045, %v2983, %v3061
    %v3078 = vsel %vm3046, %v2988, %v3062
    %v3079 = vsel %vm3047, %v2993, %v3063
    %v3080 = vsel %vm3048, %v2998, %v3064
    %v3081 = vsel %vm3049, %v3003, %v3065
    %v3082 = vsel %vm3050, %v3008, %v3066
    %v3083 = vsel %vm3051, %v3013, %v3067
    %v3084 = vsel %vm3052, %v3018, %v3068
    %v3085 = vsel %vm3053, %v3023, %v3069
    %v3086 = vsel %vm3054, %v3028, %v3070
    %v3087 = vsel %vm3055, %v3033, %v3071
    %v3088 = vsel %vm3056, %v3038, %v3072
    %3089 = vmatprep.subr.mxu0 0.0
    %3090 = vmatpush1.msra.mxu0 %v3088
    %3091 = vmatprep.subr.mxu0 0.0
    %3092 = vmatpush1.msra.mxu0 %v3087
    %3093 = vmatprep.subr.mxu0 0.0
    %3094 = vmatpush1.msra.mxu0 %v3086
    %3095 = vmatprep.subr.mxu0 0.0
    %3096 = vmatpush1.msra.mxu0 %v3085
    %3097 = vmatprep.subr.mxu0 0.0
    %3098 = vmatpush1.msra.mxu0 %v3084
    %3099 = vmatprep.subr.mxu0 0.0
    %3100 = vmatpush1.msra.mxu0 %v3083
    %3101 = vmatprep.subr.mxu0 0.0
    %3102 = vmatpush1.msra.mxu0 %v3082
    %3103 = vmatprep.subr.mxu0 0.0
    %3104 = vmatpush1.msra.mxu0 %v3081
    %3105 = vmatprep.subr.mxu0 0.0
    %3106 = vmatpush1.msra.mxu0 %v3080
    %3107 = vmatprep.subr.mxu0 0.0
    %3108 = vmatpush1.msra.mxu0 %v3079
    %3109 = vmatprep.subr.mxu0 0.0
    %3110 = vmatpush1.msra.mxu0 %v3078
    %3111 = vmatprep.subr.mxu0 0.0
    %3112 = vmatpush1.msra.mxu0 %v3077
    %3113 = vmatprep.subr.mxu0 0.0
    %3114 = vmatpush1.msra.mxu0 %v3076
    %3115 = vmatprep.subr.mxu0 0.0
    %3116 = vmatpush1.msra.mxu0 %v3075
    %3117 = vmatprep.subr.mxu0 0.0
    %3118 = vmatpush1.msra.mxu0 %v3074
    %3119 = vmatprep.subr.mxu0 0.0
    %3120 = vmatpush1.msra.mxu0 %v3073
    %3121 = vmatprep.subr.mxu0 0.0
    %3122 = vmatpush2.msra.mxu0 0.0
    %3123 = vmatprep.subr.mxu0 0.0
    %3124 = vmatpush2.msra.mxu0 0.0
    %3125 = vmatprep.subr.mxu0 0.0
    %3126 = vmatpush2.msra.mxu0 0.0
    %3127 = vmatprep.subr.mxu0 0.0
    %3128 = vmatpush2.msra.mxu0 0.0
    %3129 = vmatprep.subr.mxu0 0.0
    %3130 = vmatpush2.msra.mxu0 0.0
    %3131 = vmatprep.subr.mxu0 0.0
    %3132 = vmatpush2.msra.mxu0 0.0
    %3133 = vmatprep.subr.mxu0 0.0
    %3134 = vmatpush2.msra.mxu0 0.0
    %3135 = vmatprep.subr.mxu0 0.0
    %3136 = vmatpush2.msra.mxu0 0.0
    %3137 = vmatprep.subr.mxu0 0.0
    %3138 = vmatpush2.msra.mxu0 0.0
    %3139 = vmatprep.subr.mxu0 0.0
    %3140 = vmatpush2.msra.mxu0 0.0
    %3141 = vmatprep.subr.mxu0 0.0
    %3142 = vmatpush2.msra.mxu0 0.0
    %3143 = vmatprep.subr.mxu0 0.0
    %3144 = vmatpush2.msra.mxu0 0.0
    %3145 = vmatprep.subr.mxu0 0.0
    %3146 = vmatpush2.msra.mxu0 0.0
    %3147 = vmatprep.subr.mxu0 0.0
    %3148 = vmatpush2.msra.mxu0 0.0
    %3149 = vmatprep.subr.mxu0 0.0
    %3150 = vmatpush2.msra.mxu0 0.0
    %3151 = vmatprep.subr.mxu0 0.0
    %3152 = vmatpush2.msra.mxu0 0.0
    %3153 = vmatprep.mubr.f32.mxu0 0.0
    %3154 = vmatmul.mubr.f32.gmra.mxu0 %v160
    %v3155 = vpop.f32.mrf.mxu0
    %v3156 = vadd.f32 0.0, %v3155
    %v3157 = vpop.f32.mrf.mxu0
    %3158 = vmatprep.mubr.f32.mxu0 0.0
    %3159 = vmatmul.mubr.f32.gmra.mxu0 %v161
    %v3160 = vpop.f32.mrf.mxu0
    %v3161 = vadd.f32 0.0, %v3160
    %v3162 = vpop.f32.mrf.mxu0
    %3163 = vmatprep.mubr.f32.mxu0 0.0
    %3164 = vmatmul.mubr.f32.gmra.mxu0 %v162
    %v3165 = vpop.f32.mrf.mxu0
    %v3166 = vadd.f32 0.0, %v3165
    %v3167 = vpop.f32.mrf.mxu0
    %3168 = vmatprep.mubr.f32.mxu0 0.0
    %3169 = vmatmul.mubr.f32.gmra.mxu0 %v163
    %v3170 = vpop.f32.mrf.mxu0
    %v3171 = vadd.f32 0.0, %v3170
    %v3172 = vpop.f32.mrf.mxu0
    %3173 = vmatprep.mubr.f32.mxu0 0.0
    %3174 = vmatmul.mubr.f32.gmra.mxu0 %v164
    %v3175 = vpop.f32.mrf.mxu0
    %v3176 = vadd.f32 0.0, %v3175
    %v3177 = vpop.f32.mrf.mxu0
    %3178 = vmatprep.mubr.f32.mxu0 0.0
    %3179 = vmatmul.mubr.f32.gmra.mxu0 %v165
    %v3180 = vpop.f32.mrf.mxu0
    %v3181 = vadd.f32 0.0, %v3180
    %v3182 = vpop.f32.mrf.mxu0
    %3183 = vmatprep.mubr.f32.mxu0 0.0
    %3184 = vmatmul.mubr.f32.gmra.mxu0 %v166
    %v3185 = vpop.f32.mrf.mxu0
    %v3186 = vadd.f32 0.0, %v3185
    %v3187 = vpop.f32.mrf.mxu0
    %3188 = vmatprep.mubr.f32.mxu0 0.0
    %3189 = vmatmul.mubr.f32.gmra.mxu0 %v167
    %v3190 = vpop.f32.mrf.mxu0
    %v3191 = vadd.f32 0.0, %v3190
    %v3192 = vpop.f32.mrf.mxu0
    %3193 = vmatprep.mubr.f32.mxu0 0.0
    %3194 = vmatmul.mubr.f32.gmra.mxu0 %v168
    %v3195 = vpop.f32.mrf.mxu0
    %v3196 = vadd.f32 0.0, %v3195
    %v3197 = vpop.f32.mrf.mxu0
    %3198 = vmatprep.mubr.f32.mxu0 0.0
    %3199 = vmatmul.mubr.f32.gmra.mxu0 %v169
    %v3200 = vpop.f32.mrf.mxu0
    %v3201 = vadd.f32 0.0, %v3200
    %v3202 = vpop.f32.mrf.mxu0
    %3203 = vmatprep.mubr.f32.mxu0 0.0
    %3204 = vmatmul.mubr.f32.gmra.mxu0 %v170
    %v3205 = vpop.f32.mrf.mxu0
    %v3206 = vadd.f32 0.0, %v3205
    %v3207 = vpop.f32.mrf.mxu0
    %3208 = vmatprep.mubr.f32.mxu0 0.0
    %3209 = vmatmul.mubr.f32.gmra.mxu0 %v171
    %v3210 = vpop.f32.mrf.mxu0
    %v3211 = vadd.f32 0.0, %v3210
    %v3212 = vpop.f32.mrf.mxu0
    %3213 = vmatprep.mubr.f32.mxu0 0.0
    %3214 = vmatmul.mubr.f32.gmra.mxu0 %v172
    %v3215 = vpop.f32.mrf.mxu0
    %v3216 = vadd.f32 0.0, %v3215
    %v3217 = vpop.f32.mrf.mxu0
    %3218 = vmatprep.mubr.f32.mxu0 0.0
    %3219 = vmatmul.mubr.f32.gmra.mxu0 %v173
    %v3220 = vpop.f32.mrf.mxu0
    %v3221 = vadd.f32 0.0, %v3220
    %v3222 = vpop.f32.mrf.mxu0
    %3223 = vmatprep.mubr.f32.mxu0 0.0
    %3224 = vmatmul.mubr.f32.gmra.mxu0 %v174
    %v3225 = vpop.f32.mrf.mxu0
    %v3226 = vadd.f32 0.0, %v3225
    %v3227 = vpop.f32.mrf.mxu0
    %3228 = vmatprep.mubr.f32.mxu0 0.0
    %3229 = vmatmul.mubr.f32.gmra.mxu0 %v175
    %v3230 = vpop.f32.mrf.mxu0
    %v3231 = vadd.f32 0.0, %v3230
    %v3232 = vpop.f32.mrf.mxu0
    %3233 = vdwg.mxu0
    %vm3234 = vcmp.ge.f32.partialorder %v3156, 0.0
    %vm3235 = vcmp.ge.f32.partialorder %v3161, 0.0
    %vm3236 = vcmp.ge.f32.partialorder %v3166, 0.0
    %vm3237 = vcmp.ge.f32.partialorder %v3171, 0.0
    %vm3238 = vcmp.ge.f32.partialorder %v3176, 0.0
    %vm3239 = vcmp.ge.f32.partialorder %v3181, 0.0
    %vm3240 = vcmp.ge.f32.partialorder %v3186, 0.0
    %vm3241 = vcmp.ge.f32.partialorder %v3191, 0.0
    %vm3242 = vcmp.ge.f32.partialorder %v3196, 0.0
    %vm3243 = vcmp.ge.f32.partialorder %v3201, 0.0
    %vm3244 = vcmp.ge.f32.partialorder %v3206, 0.0
    %vm3245 = vcmp.ge.f32.partialorder %v3211, 0.0
    %vm3246 = vcmp.ge.f32.partialorder %v3216, 0.0
    %vm3247 = vcmp.ge.f32.partialorder %v3221, 0.0
    %vm3248 = vcmp.ge.f32.partialorder %v3226, 0.0
    %vm3249 = vcmp.ge.f32.partialorder %v3231, 0.0
    %v3250 = vmul.f32 %v3156, 0.01
    %v3251 = vmul.f32 %v3161, 0.01
    %v3252 = vmul.f32 %v3166, 0.01
    %v3253 = vmul.f32 %v3171, 0.01
    %v3254 = vmul.f32 %v3176, 0.01
    %v3255 = vmul.f32 %v3181, 0.01
    %v3256 = vmul.f32 %v3186, 0.01
    %v3257 = vmul.f32 %v3191, 0.01
    %v3258 = vmul.f32 %v3196, 0.01
    %v3259 = vmul.f32 %v3201, 0.01
    %v3260 = vmul.f32 %v3206, 0.01
    %v3261 = vmul.f32 %v3211, 0.01
    %v3262 = vmul.f32 %v3216, 0.01
    %v3263 = vmul.f32 %v3221, 0.01
    %v3264 = vmul.f32 %v3226, 0.01
    %v3265 = vmul.f32 %v3231, 0.01
    %v3266 = vsel %vm3234, %v3156, %v3250
    %v3267 = vsel %vm3235, %v3161, %v3251
    %v3268 = vsel %vm3236, %v3166, %v3252
    %v3269 = vsel %vm3237, %v3171, %v3253
    %v3270 = vsel %vm3238, %v3176, %v3254
    %v3271 = vsel %vm3239, %v3181, %v3255
    %v3272 = vsel %vm3240, %v3186, %v3256
    %v3273 = vsel %vm3241, %v3191, %v3257
    %v3274 = vsel %vm3242, %v3196, %v3258
    %v3275 = vsel %vm3243, %v3201, %v3259
    %v3276 = vsel %vm3244, %v3206, %v3260
    %v3277 = vsel %vm3245, %v3211, %v3261
    %v3278 = vsel %vm3246, %v3216, %v3262
    %v3279 = vsel %vm3247, %v3221, %v3263
    %v3280 = vsel %vm3248, %v3226, %v3264
    %v3281 = vsel %vm3249, %v3231, %v3265
    %3282 = vmatprep.subr.mxu0 0.0
    %3283 = vmatpush1.msra.mxu0 %v3281
    %3284 = vmatprep.subr.mxu0 0.0
    %3285 = vmatpush1.msra.mxu0 %v3280
    %3286 = vmatprep.subr.mxu0 0.0
    %3287 = vmatpush1.msra.mxu0 %v3279
    %3288 = vmatprep.subr.mxu0 0.0
    %3289 = vmatpush1.msra.mxu0 %v3278
    %3290 = vmatprep.subr.mxu0 0.0
    %3291 = vmatpush1.msra.mxu0 %v3277
    %3292 = vmatprep.subr.mxu0 0.0
    %3293 = vmatpush1.msra.mxu0 %v3276
    %3294 = vmatprep.subr.mxu0 0.0
    %3295 = vmatpush1.msra.mxu0 %v3275
    %3296 = vmatprep.subr.mxu0 0.0
    %3297 = vmatpush1.msra.mxu0 %v3274
    %3298 = vmatprep.subr.mxu0 0.0
    %3299 = vmatpush1.msra.mxu0 %v3273
    %3300 = vmatprep.subr.mxu0 0.0
    %3301 = vmatpush1.msra.mxu0 %v3272
    %3302 = vmatprep.subr.mxu0 0.0
    %3303 = vmatpush1.msra.mxu0 %v3271
    %3304 = vmatprep.subr.mxu0 0.0
    %3305 = vmatpush1.msra.mxu0 %v3270
    %3306 = vmatprep.subr.mxu0 0.0
    %3307 = vmatpush1.msra.mxu0 %v3269
    %3308 = vmatprep.subr.mxu0 0.0
    %3309 = vmatpush1.msra.mxu0 %v3268
    %3310 = vmatprep.subr.mxu0 0.0
    %3311 = vmatpush1.msra.mxu0 %v3267
    %3312 = vmatprep.subr.mxu0 0.0
    %3313 = vmatpush1.msra.mxu0 %v3266
    %3314 = vmatprep.subr.mxu0 0.0
    %3315 = vmatpush2.msra.mxu0 0.0
    %3316 = vmatprep.subr.mxu0 0.0
    %3317 = vmatpush2.msra.mxu0 0.0
    %3318 = vmatprep.subr.mxu0 0.0
    %3319 = vmatpush2.msra.mxu0 0.0
    %3320 = vmatprep.subr.mxu0 0.0
    %3321 = vmatpush2.msra.mxu0 0.0
    %3322 = vmatprep.subr.mxu0 0.0
    %3323 = vmatpush2.msra.mxu0 0.0
    %3324 = vmatprep.subr.mxu0 0.0
    %3325 = vmatpush2.msra.mxu0 0.0
    %3326 = vmatprep.subr.mxu0 0.0
    %3327 = vmatpush2.msra.mxu0 0.0
    %3328 = vmatprep.subr.mxu0 0.0
    %3329 = vmatpush2.msra.mxu0 0.0
    %3330 = vmatprep.subr.mxu0 0.0
    %3331 = vmatpush2.msra.mxu0 0.0
    %3332 = vmatprep.subr.mxu0 0.0
    %3333 = vmatpush2.msra.mxu0 0.0
    %3334 = vmatprep.subr.mxu0 0.0
    %3335 = vmatpush2.msra.mxu0 0.0
    %3336 = vmatprep.subr.mxu0 0.0
    %3337 = vmatpush2.msra.mxu0 0.0
    %3338 = vmatprep.subr.mxu0 0.0
    %3339 = vmatpush2.msra.mxu0 0.0
    %3340 = vmatprep.subr.mxu0 0.0
    %3341 = vmatpush2.msra.mxu0 0.0
    %3342 = vmatprep.subr.mxu0 0.0
    %3343 = vmatpush2.msra.mxu0 0.0
    %3344 = vmatprep.subr.mxu0 0.0
    %3345 = vmatpush2.msra.mxu0 0.0
    %3346 = vmatprep.mubr.f32.mxu0 0.0
    %3347 = vmatmul.mubr.f32.gmra.mxu0 %v176
    %v3348 = vpop.f32.mrf.mxu0
    %v3349 = vadd.f32 0.0, %v3348
    %v3350 = vpop.f32.mrf.mxu0
    %3351 = vmatprep.mubr.f32.mxu0 0.0
    %3352 = vmatmul.mubr.f32.gmra.mxu0 %v177
    %v3353 = vpop.f32.mrf.mxu0
    %v3354 = vadd.f32 0.0, %v3353
    %v3355 = vpop.f32.mrf.mxu0
    %3356 = vmatprep.mubr.f32.mxu0 0.0
    %3357 = vmatmul.mubr.f32.gmra.mxu0 %v178
    %v3358 = vpop.f32.mrf.mxu0
    %v3359 = vadd.f32 0.0, %v3358
    %v3360 = vpop.f32.mrf.mxu0
    %3361 = vmatprep.mubr.f32.mxu0 0.0
    %3362 = vmatmul.mubr.f32.gmra.mxu0 %v179
    %v3363 = vpop.f32.mrf.mxu0
    %v3364 = vadd.f32 0.0, %v3363
    %v3365 = vpop.f32.mrf.mxu0
    %3366 = vmatprep.mubr.f32.mxu0 0.0
    %3367 = vmatmul.mubr.f32.gmra.mxu0 %v180
    %v3368 = vpop.f32.mrf.mxu0
    %v3369 = vadd.f32 0.0, %v3368
    %v3370 = vpop.f32.mrf.mxu0
    %3371 = vmatprep.mubr.f32.mxu0 0.0
    %3372 = vmatmul.mubr.f32.gmra.mxu0 %v181
    %v3373 = vpop.f32.mrf.mxu0
    %v3374 = vadd.f32 0.0, %v3373
    %v3375 = vpop.f32.mrf.mxu0
    %3376 = vmatprep.mubr.f32.mxu0 0.0
    %3377 = vmatmul.mubr.f32.gmra.mxu0 %v182
    %v3378 = vpop.f32.mrf.mxu0
    %v3379 = vadd.f32 0.0, %v3378
    %v3380 = vpop.f32.mrf.mxu0
    %3381 = vmatprep.mubr.f32.mxu0 0.0
    %3382 = vmatmul.mubr.f32.gmra.mxu0 %v183
    %v3383 = vpop.f32.mrf.mxu0
    %v3384 = vadd.f32 0.0, %v3383
    %v3385 = vpop.f32.mrf.mxu0
    %3386 = vmatprep.mubr.f32.mxu0 0.0
    %3387 = vmatmul.mubr.f32.gmra.mxu0 %v184
    %v3388 = vpop.f32.mrf.mxu0
    %v3389 = vadd.f32 0.0, %v3388
    %v3390 = vpop.f32.mrf.mxu0
    %3391 = vmatprep.mubr.f32.mxu0 0.0
    %3392 = vmatmul.mubr.f32.gmra.mxu0 %v185
    %v3393 = vpop.f32.mrf.mxu0
    %v3394 = vadd.f32 0.0, %v3393
    %v3395 = vpop.f32.mrf.mxu0
    %3396 = vmatprep.mubr.f32.mxu0 0.0
    %3397 = vmatmul.mubr.f32.gmra.mxu0 %v186
    %v3398 = vpop.f32.mrf.mxu0
    %v3399 = vadd.f32 0.0, %v3398
    %v3400 = vpop.f32.mrf.mxu0
    %3401 = vmatprep.mubr.f32.mxu0 0.0
    %3402 = vmatmul.mubr.f32.gmra.mxu0 %v187
    %v3403 = vpop.f32.mrf.mxu0
    %v3404 = vadd.f32 0.0, %v3403
    %v3405 = vpop.f32.mrf.mxu0
    %3406 = vmatprep.mubr.f32.mxu0 0.0
    %3407 = vmatmul.mubr.f32.gmra.mxu0 %v188
    %v3408 = vpop.f32.mrf.mxu0
    %v3409 = vadd.f32 0.0, %v3408
    %v3410 = vpop.f32.mrf.mxu0
    %3411 = vmatprep.mubr.f32.mxu0 0.0
    %3412 = vmatmul.mubr.f32.gmra.mxu0 %v189
    %v3413 = vpop.f32.mrf.mxu0
    %v3414 = vadd.f32 0.0, %v3413
    %v3415 = vpop.f32.mrf.mxu0
    %3416 = vmatprep.mubr.f32.mxu0 0.0
    %3417 = vmatmul.mubr.f32.gmra.mxu0 %v190
    %v3418 = vpop.f32.mrf.mxu0
    %v3419 = vadd.f32 0.0, %v3418
    %v3420 = vpop.f32.mrf.mxu0
    %3421 = vmatprep.mubr.f32.mxu0 0.0
    %3422 = vmatmul.mubr.f32.gmra.mxu0 %v191
    %v3423 = vpop.f32.mrf.mxu0
    %v3424 = vadd.f32 0.0, %v3423
    %v3425 = vpop.f32.mrf.mxu0
    %3426 = vdwg.mxu0
    %vm3427 = vcmp.ge.f32.partialorder %v3349, 0.0
    %vm3428 = vcmp.ge.f32.partialorder %v3354, 0.0
    %vm3429 = vcmp.ge.f32.partialorder %v3359, 0.0
    %vm3430 = vcmp.ge.f32.partialorder %v3364, 0.0
    %vm3431 = vcmp.ge.f32.partialorder %v3369, 0.0
    %vm3432 = vcmp.ge.f32.partialorder %v3374, 0.0
    %vm3433 = vcmp.ge.f32.partialorder %v3379, 0.0
    %vm3434 = vcmp.ge.f32.partialorder %v3384, 0.0
    %vm3435 = vcmp.ge.f32.partialorder %v3389, 0.0
    %vm3436 = vcmp.ge.f32.partialorder %v3394, 0.0
    %vm3437 = vcmp.ge.f32.partialorder %v3399, 0.0
    %vm3438 = vcmp.ge.f32.partialorder %v3404, 0.0
    %vm3439 = vcmp.ge.f32.partialorder %v3409, 0.0
    %vm3440 = vcmp.ge.f32.partialorder %v3414, 0.0
    %vm3441 = vcmp.ge.f32.partialorder %v3419, 0.0
    %vm3442 = vcmp.ge.f32.partialorder %v3424, 0.0
    %v3443 = vmul.f32 %v3349, 0.01
    %v3444 = vmul.f32 %v3354, 0.01
    %v3445 = vmul.f32 %v3359, 0.01
    %v3446 = vmul.f32 %v3364, 0.01
    %v3447 = vmul.f32 %v3369, 0.01
    %v3448 = vmul.f32 %v3374, 0.01
    %v3449 = vmul.f32 %v3379, 0.01
    %v3450 = vmul.f32 %v3384, 0.01
    %v3451 = vmul.f32 %v3389, 0.01
    %v3452 = vmul.f32 %v3394, 0.01
    %v3453 = vmul.f32 %v3399, 0.01
    %v3454 = vmul.f32 %v3404, 0.01
    %v3455 = vmul.f32 %v3409, 0.01
    %v3456 = vmul.f32 %v3414, 0.01
    %v3457 = vmul.f32 %v3419, 0.01
    %v3458 = vmul.f32 %v3424, 0.01
    %v3459 = vsel %vm3427, %v3349, %v3443
    %v3460 = vsel %vm3428, %v3354, %v3444
    %v3461 = vsel %vm3429, %v3359, %v3445
    %v3462 = vsel %vm3430, %v3364, %v3446
    %v3463 = vsel %vm3431, %v3369, %v3447
    %v3464 = vsel %vm3432, %v3374, %v3448
    %v3465 = vsel %vm3433, %v3379, %v3449
    %v3466 = vsel %vm3434, %v3384, %v3450
    %v3467 = vsel %vm3435, %v3389, %v3451
    %v3468 = vsel %vm3436, %v3394, %v3452
    %v3469 = vsel %vm3437, %v3399, %v3453
    %v3470 = vsel %vm3438, %v3404, %v3454
    %v3471 = vsel %vm3439, %v3409, %v3455
    %v3472 = vsel %vm3440, %v3414, %v3456
    %v3473 = vsel %vm3441, %v3419, %v3457
    %v3474 = vsel %vm3442, %v3424, %v3458
    %v3475 = vadd.f32 %v3459, %v3073
    %v3476 = vadd.f32 %v3460, %v3074
    %v3477 = vadd.f32 %v3461, %v3075
    %v3478 = vadd.f32 %v3462, %v3076
    %v3479 = vadd.f32 %v3463, %v3077
    %v3480 = vadd.f32 %v3464, %v3078
    %v3481 = vadd.f32 %v3465, %v3079
    %v3482 = vadd.f32 %v3466, %v3080
    %v3483 = vadd.f32 %v3467, %v3081
    %v3484 = vadd.f32 %v3468, %v3082
    %v3485 = vadd.f32 %v3469, %v3083
    %v3486 = vadd.f32 %v3470, %v3084
    %v3487 = vadd.f32 %v3471, %v3085
    %v3488 = vadd.f32 %v3472, %v3086
    %v3489 = vadd.f32 %v3473, %v3087
    %v3490 = vadd.f32 %v3474, %v3088
    %v3491 = vadd.f32 %v291, %v3475
    %v3492 = vadd.f32 %v292, %v3476
    %v3493 = vadd.f32 %v293, %v3477
    %v3494 = vadd.f32 %v294, %v3478
    %v3495 = vadd.f32 %v295, %v3479
    %v3496 = vadd.f32 %v296, %v3480
    %v3497 = vadd.f32 %v297, %v3481
    %v3498 = vadd.f32 %v298, %v3482
    %v3499 = vadd.f32 %v299, %v3483
    %v3500 = vadd.f32 %v300, %v3484
    %v3501 = vadd.f32 %v301, %v3485
    %v3502 = vadd.f32 %v302, %v3486
    %v3503 = vadd.f32 %v303, %v3487
    %v3504 = vadd.f32 %v304, %v3488
    %v3505 = vadd.f32 %v305, %v3489
    %v3506 = vadd.f32 %v306, %v3490
    %3507 = vmatprep.subr.mxu0 %v398
    %3508 = vmatpush1.msra.mxu0 %v397
    %3509 = vmatprep.subr.mxu0 %v392
    %3510 = vmatpush1.msra.mxu0 %v391
    %3511 = vmatprep.subr.mxu0 %v386
    %3512 = vmatpush1.msra.mxu0 %v385
    %3513 = vmatprep.subr.mxu0 %v380
    %3514 = vmatpush1.msra.mxu0 %v379
    %3515 = vmatprep.subr.mxu0 %v374
    %3516 = vmatpush1.msra.mxu0 %v373
    %3517 = vmatprep.subr.mxu0 %v368
    %3518 = vmatpush1.msra.mxu0 %v367
    %3519 = vmatprep.subr.mxu0 %v362
    %3520 = vmatpush1.msra.mxu0 %v361
    %3521 = vmatprep.subr.mxu0 %v356
    %3522 = vmatpush1.msra.mxu0 %v355
    %3523 = vmatprep.subr.mxu0 %v350
    %3524 = vmatpush1.msra.mxu0 %v349
    %3525 = vmatprep.subr.mxu0 %v344
    %3526 = vmatpush1.msra.mxu0 %v343
    %3527 = vmatprep.subr.mxu0 %v338
    %3528 = vmatpush1.msra.mxu0 %v337
    %3529 = vmatprep.subr.mxu0 %v332
    %3530 = vmatpush1.msra.mxu0 %v331
    %3531 = vmatprep.subr.mxu0 %v326
    %3532 = vmatpush1.msra.mxu0 %v325
    %3533 = vmatprep.subr.mxu0 %v320
    %3534 = vmatpush1.msra.mxu0 %v319
    %3535 = vmatprep.subr.mxu0 %v314
    %3536 = vmatpush1.msra.mxu0 %v313
    %3537 = vmatprep.subr.mxu0 %v308
    %3538 = vmatpush1.msra.mxu0 %v307
    %3539 = vmatprep.subr.mxu0 0.0
    %3540 = vmatpush2.msra.mxu0 0.0
    %3541 = vmatprep.subr.mxu0 0.0
    %3542 = vmatpush2.msra.mxu0 0.0
    %3543 = vmatprep.subr.mxu0 0.0
    %3544 = vmatpush2.msra.mxu0 0.0
    %3545 = vmatprep.subr.mxu0 0.0
    %3546 = vmatpush2.msra.mxu0 0.0
    %3547 = vmatprep.subr.mxu0 0.0
    %3548 = vmatpush2.msra.mxu0 0.0
    %3549 = vmatprep.subr.mxu0 0.0
    %3550 = vmatpush2.msra.mxu0 0.0
    %3551 = vmatprep.subr.mxu0 0.0
    %3552 = vmatpush2.msra.mxu0 0.0
    %3553 = vmatprep.subr.mxu0 0.0
    %3554 = vmatpush2.msra.mxu0 0.0
    %3555 = vmatprep.subr.mxu0 0.0
    %3556 = vmatpush2.msra.mxu0 0.0
    %3557 = vmatprep.subr.mxu0 0.0
    %3558 = vmatpush2.msra.mxu0 0.0
    %3559 = vmatprep.subr.mxu0 0.0
    %3560 = vmatpush2.msra.mxu0 0.0
    %3561 = vmatprep.subr.mxu0 0.0
    %3562 = vmatpush2.msra.mxu0 0.0
    %3563 = vmatprep.subr.mxu0 0.0
    %3564 = vmatpush2.msra.mxu0 0.0
    %3565 = vmatprep.subr.mxu0 0.0
    %3566 = vmatpush2.msra.mxu0 0.0
    %3567 = vmatprep.subr.mxu0 0.0
    %3568 = vmatpush2.msra.mxu0 0.0
    %3569 = vmatprep.subr.mxu0 0.0
    %3570 = vmatpush2.msra.mxu0 0.0
    %3571 = vmatprep.mubr.f32.mxu0 0.0
    %3572 = vmatmul.mubr.f32.gmra.mxu0 %v3475
    %v3573 = vpop.f32.mrf.mxu0
    %v3574 = vadd.f32 0.0, %v3573
    %v3575 = vpop.f32.mrf.mxu0
    %v3576 = vadd.f32 0.0, %v3575
    %3577 = vmatprep.mubr.f32.mxu0 0.0
    %3578 = vmatmul.mubr.f32.gmra.mxu0 %v3476
    %v3579 = vpop.f32.mrf.mxu0
    %v3580 = vadd.f32 0.0, %v3579
    %v3581 = vpop.f32.mrf.mxu0
    %v3582 = vadd.f32 0.0, %v3581
    %3583 = vmatprep.mubr.f32.mxu0 0.0
    %3584 = vmatmul.mubr.f32.gmra.mxu0 %v3477
    %v3585 = vpop.f32.mrf.mxu0
    %v3586 = vadd.f32 0.0, %v3585
    %v3587 = vpop.f32.mrf.mxu0
    %v3588 = vadd.f32 0.0, %v3587
    %3589 = vmatprep.mubr.f32.mxu0 0.0
    %3590 = vmatmul.mubr.f32.gmra.mxu0 %v3478
    %v3591 = vpop.f32.mrf.mxu0
    %v3592 = vadd.f32 0.0, %v3591
    %v3593 = vpop.f32.mrf.mxu0
    %v3594 = vadd.f32 0.0, %v3593
    %3595 = vmatprep.mubr.f32.mxu0 0.0
    %3596 = vmatmul.mubr.f32.gmra.mxu0 %v3479
    %v3597 = vpop.f32.mrf.mxu0
    %v3598 = vadd.f32 0.0, %v3597
    %v3599 = vpop.f32.mrf.mxu0
    %v3600 = vadd.f32 0.0, %v3599
    %3601 = vmatprep.mubr.f32.mxu0 0.0
    %3602 = vmatmul.mubr.f32.gmra.mxu0 %v3480
    %v3603 = vpop.f32.mrf.mxu0
    %v3604 = vadd.f32 0.0, %v3603
    %v3605 = vpop.f32.mrf.mxu0
    %v3606 = vadd.f32 0.0, %v3605
    %3607 = vmatprep.mubr.f32.mxu0 0.0
    %3608 = vmatmul.mubr.f32.gmra.mxu0 %v3481
    %v3609 = vpop.f32.mrf.mxu0
    %v3610 = vadd.f32 0.0, %v3609
    %v3611 = vpop.f32.mrf.mxu0
    %v3612 = vadd.f32 0.0, %v3611
    %3613 = vmatprep.mubr.f32.mxu0 0.0
    %3614 = vmatmul.mubr.f32.gmra.mxu0 %v3482
    %v3615 = vpop.f32.mrf.mxu0
    %v3616 = vadd.f32 0.0, %v3615
    %v3617 = vpop.f32.mrf.mxu0
    %v3618 = vadd.f32 0.0, %v3617
    %3619 = vmatprep.mubr.f32.mxu0 0.0
    %3620 = vmatmul.mubr.f32.gmra.mxu0 %v3483
    %v3621 = vpop.f32.mrf.mxu0
    %v3622 = vadd.f32 0.0, %v3621
    %v3623 = vpop.f32.mrf.mxu0
    %v3624 = vadd.f32 0.0, %v3623
    %3625 = vmatprep.mubr.f32.mxu0 0.0
    %3626 = vmatmul.mubr.f32.gmra.mxu0 %v3484
    %v3627 = vpop.f32.mrf.mxu0
    %v3628 = vadd.f32 0.0, %v3627
    %v3629 = vpop.f32.mrf.mxu0
    %v3630 = vadd.f32 0.0, %v3629
    %3631 = vmatprep.mubr.f32.mxu0 0.0
    %3632 = vmatmul.mubr.f32.gmra.mxu0 %v3485
    %v3633 = vpop.f32.mrf.mxu0
    %v3634 = vadd.f32 0.0, %v3633
    %v3635 = vpop.f32.mrf.mxu0
    %v3636 = vadd.f32 0.0, %v3635
    %3637 = vmatprep.mubr.f32.mxu0 0.0
    %3638 = vmatmul.mubr.f32.gmra.mxu0 %v3486
    %v3639 = vpop.f32.mrf.mxu0
    %v3640 = vadd.f32 0.0, %v3639
    %v3641 = vpop.f32.mrf.mxu0
    %v3642 = vadd.f32 0.0, %v3641
    %3643 = vmatprep.mubr.f32.mxu0 0.0
    %3644 = vmatmul.mubr.f32.gmra.mxu0 %v3487
    %v3645 = vpop.f32.mrf.mxu0
    %v3646 = vadd.f32 0.0, %v3645
    %v3647 = vpop.f32.mrf.mxu0
    %v3648 = vadd.f32 0.0, %v3647
    %3649 = vmatprep.mubr.f32.mxu0 0.0
    %3650 = vmatmul.mubr.f32.gmra.mxu0 %v3488
    %v3651 = vpop.f32.mrf.mxu0
    %v3652 = vadd.f32 0.0, %v3651
    %v3653 = vpop.f32.mrf.mxu0
    %v3654 = vadd.f32 0.0, %v3653
    %3655 = vmatprep.mubr.f32.mxu0 0.0
    %3656 = vmatmul.mubr.f32.gmra.mxu0 %v3489
    %v3657 = vpop.f32.mrf.mxu0
    %v3658 = vadd.f32 0.0, %v3657
    %v3659 = vpop.f32.mrf.mxu0
    %v3660 = vadd.f32 0.0, %v3659
    %3661 = vmatprep.mubr.f32.mxu0 0.0
    %3662 = vmatmul.mubr.f32.gmra.mxu0 %v3490
    %v3663 = vpop.f32.mrf.mxu0
    %v3664 = vadd.f32 0.0, %v3663
    %v3665 = vpop.f32.mrf.mxu0
    %v3666 = vadd.f32 0.0, %v3665
    %3667 = vdwg.mxu0
    %3668 = vmatprep.subr.mxu0 %v400
    %3669 = vmatpush1.msra.mxu0 %v399
    %3670 = vmatprep.subr.mxu0 %v394
    %3671 = vmatpush1.msra.mxu0 %v393
    %3672 = vmatprep.subr.mxu0 %v388
    %3673 = vmatpush1.msra.mxu0 %v387
    %3674 = vmatprep.subr.mxu0 %v382
    %3675 = vmatpush1.msra.mxu0 %v381
    %3676 = vmatprep.subr.mxu0 %v376
    %3677 = vmatpush1.msra.mxu0 %v375
    %3678 = vmatprep.subr.mxu0 %v370
    %3679 = vmatpush1.msra.mxu0 %v369
    %3680 = vmatprep.subr.mxu0 %v364
    %3681 = vmatpush1.msra.mxu0 %v363
    %3682 = vmatprep.subr.mxu0 %v358
    %3683 = vmatpush1.msra.mxu0 %v357
    %3684 = vmatprep.subr.mxu0 %v352
    %3685 = vmatpush1.msra.mxu0 %v351
    %3686 = vmatprep.subr.mxu0 %v346
    %3687 = vmatpush1.msra.mxu0 %v345
    %3688 = vmatprep.subr.mxu0 %v340
    %3689 = vmatpush1.msra.mxu0 %v339
    %3690 = vmatprep.subr.mxu0 %v334
    %3691 = vmatpush1.msra.mxu0 %v333
    %3692 = vmatprep.subr.mxu0 %v328
    %3693 = vmatpush1.msra.mxu0 %v327
    %3694 = vmatprep.subr.mxu0 %v322
    %3695 = vmatpush1.msra.mxu0 %v321
    %3696 = vmatprep.subr.mxu0 %v316
    %3697 = vmatpush1.msra.mxu0 %v315
    %3698 = vmatprep.subr.mxu0 %v310
    %3699 = vmatpush1.msra.mxu0 %v309
    %3700 = vmatprep.subr.mxu0 0.0
    %3701 = vmatpush2.msra.mxu0 0.0
    %3702 = vmatprep.subr.mxu0 0.0
    %3703 = vmatpush2.msra.mxu0 0.0
    %3704 = vmatprep.subr.mxu0 0.0
    %3705 = vmatpush2.msra.mxu0 0.0
    %3706 = vmatprep.subr.mxu0 0.0
    %3707 = vmatpush2.msra.mxu0 0.0
    %3708 = vmatprep.subr.mxu0 0.0
    %3709 = vmatpush2.msra.mxu0 0.0
    %3710 = vmatprep.subr.mxu0 0.0
    %3711 = vmatpush2.msra.mxu0 0.0
    %3712 = vmatprep.subr.mxu0 0.0
    %3713 = vmatpush2.msra.mxu0 0.0
    %3714 = vmatprep.subr.mxu0 0.0
    %3715 = vmatpush2.msra.mxu0 0.0
    %3716 = vmatprep.subr.mxu0 0.0
    %3717 = vmatpush2.msra.mxu0 0.0
    %3718 = vmatprep.subr.mxu0 0.0
    %3719 = vmatpush2.msra.mxu0 0.0
    %3720 = vmatprep.subr.mxu0 0.0
    %3721 = vmatpush2.msra.mxu0 0.0
    %3722 = vmatprep.subr.mxu0 0.0
    %3723 = vmatpush2.msra.mxu0 0.0
    %3724 = vmatprep.subr.mxu0 0.0
    %3725 = vmatpush2.msra.mxu0 0.0
    %3726 = vmatprep.subr.mxu0 0.0
    %3727 = vmatpush2.msra.mxu0 0.0
    %3728 = vmatprep.subr.mxu0 0.0
    %3729 = vmatpush2.msra.mxu0 0.0
    %3730 = vmatprep.subr.mxu0 0.0
    %3731 = vmatpush2.msra.mxu0 0.0
    %3732 = vmatprep.mubr.f32.mxu0 0.0
    %3733 = vmatmul.mubr.f32.gmra.mxu0 %v3475
    %v3734 = vpop.f32.mrf.mxu0
    %v3735 = vadd.f32 0.0, %v3734
    %v3736 = vpop.f32.mrf.mxu0
    %v3737 = vadd.f32 0.0, %v3736
    %3738 = vmatprep.mubr.f32.mxu0 0.0
    %3739 = vmatmul.mubr.f32.gmra.mxu0 %v3476
    %v3740 = vpop.f32.mrf.mxu0
    %v3741 = vadd.f32 0.0, %v3740
    %v3742 = vpop.f32.mrf.mxu0
    %v3743 = vadd.f32 0.0, %v3742
    %3744 = vmatprep.mubr.f32.mxu0 0.0
    %3745 = vmatmul.mubr.f32.gmra.mxu0 %v3477
    %v3746 = vpop.f32.mrf.mxu0
    %v3747 = vadd.f32 0.0, %v3746
    %v3748 = vpop.f32.mrf.mxu0
    %v3749 = vadd.f32 0.0, %v3748
    %3750 = vmatprep.mubr.f32.mxu0 0.0
    %3751 = vmatmul.mubr.f32.gmra.mxu0 %v3478
    %v3752 = vpop.f32.mrf.mxu0
    %v3753 = vadd.f32 0.0, %v3752
    %v3754 = vpop.f32.mrf.mxu0
    %v3755 = vadd.f32 0.0, %v3754
    %3756 = vmatprep.mubr.f32.mxu0 0.0
    %3757 = vmatmul.mubr.f32.gmra.mxu0 %v3479
    %v3758 = vpop.f32.mrf.mxu0
    %v3759 = vadd.f32 0.0, %v3758
    %v3760 = vpop.f32.mrf.mxu0
    %v3761 = vadd.f32 0.0, %v3760
    %3762 = vmatprep.mubr.f32.mxu0 0.0
    %3763 = vmatmul.mubr.f32.gmra.mxu0 %v3480
    %v3764 = vpop.f32.mrf.mxu0
    %v3765 = vadd.f32 0.0, %v3764
    %v3766 = vpop.f32.mrf.mxu0
    %v3767 = vadd.f32 0.0, %v3766
    %3768 = vmatprep.mubr.f32.mxu0 0.0
    %3769 = vmatmul.mubr.f32.gmra.mxu0 %v3481
    %v3770 = vpop.f32.mrf.mxu0
    %v3771 = vadd.f32 0.0, %v3770
    %v3772 = vpop.f32.mrf.mxu0
    %v3773 = vadd.f32 0.0, %v3772
    %3774 = vmatprep.mubr.f32.mxu0 0.0
    %3775 = vmatmul.mubr.f32.gmra.mxu0 %v3482
    %v3776 = vpop.f32.mrf.mxu0
    %v3777 = vadd.f32 0.0, %v3776
    %v3778 = vpop.f32.mrf.mxu0
    %v3779 = vadd.f32 0.0, %v3778
    %3780 = vmatprep.mubr.f32.mxu0 0.0
    %3781 = vmatmul.mubr.f32.gmra.mxu0 %v3483
    %v3782 = vpop.f32.mrf.mxu0
    %v3783 = vadd.f32 0.0, %v3782
    %v3784 = vpop.f32.mrf.mxu0
    %v3785 = vadd.f32 0.0, %v3784
    %3786 = vmatprep.mubr.f32.mxu0 0.0
    %3787 = vmatmul.mubr.f32.gmra.mxu0 %v3484
    %v3788 = vpop.f32.mrf.mxu0
    %v3789 = vadd.f32 0.0, %v3788
    %v3790 = vpop.f32.mrf.mxu0
    %v3791 = vadd.f32 0.0, %v3790
    %3792 = vmatprep.mubr.f32.mxu0 0.0
    %3793 = vmatmul.mubr.f32.gmra.mxu0 %v3485
    %v3794 = vpop.f32.mrf.mxu0
    %v3795 = vadd.f32 0.0, %v3794
    %v3796 = vpop.f32.mrf.mxu0
    %v3797 = vadd.f32 0.0, %v3796
    %3798 = vmatprep.mubr.f32.mxu0 0.0
    %3799 = vmatmul.mubr.f32.gmra.mxu0 %v3486
    %v3800 = vpop.f32.mrf.mxu0
    %v3801 = vadd.f32 0.0, %v3800
    %v3802 = vpop.f32.mrf.mxu0
    %v3803 = vadd.f32 0.0, %v3802
    %3804 = vmatprep.mubr.f32.mxu0 0.0
    %3805 = vmatmul.mubr.f32.gmra.mxu0 %v3487
    %v3806 = vpop.f32.mrf.mxu0
    %v3807 = vadd.f32 0.0, %v3806
    %v3808 = vpop.f32.mrf.mxu0
    %v3809 = vadd.f32 0.0, %v3808
    %3810 = vmatprep.mubr.f32.mxu0 0.0
    %3811 = vmatmul.mubr.f32.gmra.mxu0 %v3488
    %v3812 = vpop.f32.mrf.mxu0
    %v3813 = vadd.f32 0.0, %v3812
    %v3814 = vpop.f32.mrf.mxu0
    %v3815 = vadd.f32 0.0, %v3814
    %3816 = vmatprep.mubr.f32.mxu0 0.0
    %3817 = vmatmul.mubr.f32.gmra.mxu0 %v3489
    %v3818 = vpop.f32.mrf.mxu0
    %v3819 = vadd.f32 0.0, %v3818
    %v3820 = vpop.f32.mrf.mxu0
    %v3821 = vadd.f32 0.0, %v3820
    %3822 = vmatprep.mubr.f32.mxu0 0.0
    %3823 = vmatmul.mubr.f32.gmra.mxu0 %v3490
    %v3824 = vpop.f32.mrf.mxu0
    %v3825 = vadd.f32 0.0, %v3824
    %v3826 = vpop.f32.mrf.mxu0
    %v3827 = vadd.f32 0.0, %v3826
    %3828 = vdwg.mxu0
    %3829 = vmatprep.subr.mxu0 %v402
    %3830 = vmatpush1.msra.mxu0 %v401
    %3831 = vmatprep.subr.mxu0 %v396
    %3832 = vmatpush1.msra.mxu0 %v395
    %3833 = vmatprep.subr.mxu0 %v390
    %3834 = vmatpush1.msra.mxu0 %v389
    %3835 = vmatprep.subr.mxu0 %v384
    %3836 = vmatpush1.msra.mxu0 %v383
    %3837 = vmatprep.subr.mxu0 %v378
    %3838 = vmatpush1.msra.mxu0 %v377
    %3839 = vmatprep.subr.mxu0 %v372
    %3840 = vmatpush1.msra.mxu0 %v371
    %3841 = vmatprep.subr.mxu0 %v366
    %3842 = vmatpush1.msra.mxu0 %v365
    %3843 = vmatprep.subr.mxu0 %v360
    %3844 = vmatpush1.msra.mxu0 %v359
    %3845 = vmatprep.subr.mxu0 %v354
    %3846 = vmatpush1.msra.mxu0 %v353
    %3847 = vmatprep.subr.mxu0 %v348
    %3848 = vmatpush1.msra.mxu0 %v347
    %3849 = vmatprep.subr.mxu0 %v342
    %3850 = vmatpush1.msra.mxu0 %v341
    %3851 = vmatprep.subr.mxu0 %v336
    %3852 = vmatpush1.msra.mxu0 %v335
    %3853 = vmatprep.subr.mxu0 %v330
    %3854 = vmatpush1.msra.mxu0 %v329
    %3855 = vmatprep.subr.mxu0 %v324
    %3856 = vmatpush1.msra.mxu0 %v323
    %3857 = vmatprep.subr.mxu0 %v318
    %3858 = vmatpush1.msra.mxu0 %v317
    %3859 = vmatprep.subr.mxu0 %v312
    %3860 = vmatpush1.msra.mxu0 %v311
    %3861 = vmatprep.subr.mxu0 0.0
    %3862 = vmatpush2.msra.mxu0 0.0
    %3863 = vmatprep.subr.mxu0 0.0
    %3864 = vmatpush2.msra.mxu0 0.0
    %3865 = vmatprep.subr.mxu0 0.0
    %3866 = vmatpush2.msra.mxu0 0.0
    %3867 = vmatprep.subr.mxu0 0.0
    %3868 = vmatpush2.msra.mxu0 0.0
    %3869 = vmatprep.subr.mxu0 0.0
    %3870 = vmatpush2.msra.mxu0 0.0
    %3871 = vmatprep.subr.mxu0 0.0
    %3872 = vmatpush2.msra.mxu0 0.0
    %3873 = vmatprep.subr.mxu0 0.0
    %3874 = vmatpush2.msra.mxu0 0.0
    %3875 = vmatprep.subr.mxu0 0.0
    %3876 = vmatpush2.msra.mxu0 0.0
    %3877 = vmatprep.subr.mxu0 0.0
    %3878 = vmatpush2.msra.mxu0 0.0
    %3879 = vmatprep.subr.mxu0 0.0
    %3880 = vmatpush2.msra.mxu0 0.0
    %3881 = vmatprep.subr.mxu0 0.0
    %3882 = vmatpush2.msra.mxu0 0.0
    %3883 = vmatprep.subr.mxu0 0.0
    %3884 = vmatpush2.msra.mxu0 0.0
    %3885 = vmatprep.subr.mxu0 0.0
    %3886 = vmatpush2.msra.mxu0 0.0
    %3887 = vmatprep.subr.mxu0 0.0
    %3888 = vmatpush2.msra.mxu0 0.0
    %3889 = vmatprep.subr.mxu0 0.0
    %3890 = vmatpush2.msra.mxu0 0.0
    %3891 = vmatprep.subr.mxu0 0.0
    %3892 = vmatpush2.msra.mxu0 0.0
    %3893 = vmatprep.mubr.f32.mxu0 0.0
    %3894 = vmatmul.mubr.f32.gmra.mxu0 %v3475
    %v3895 = vpop.f32.mrf.mxu0
    %v3896 = vadd.f32 0.0, %v3895
    %v3897 = vpop.f32.mrf.mxu0
    %v3898 = vadd.f32 0.0, %v3897
    %3899 = vmatprep.mubr.f32.mxu0 0.0
    %3900 = vmatmul.mubr.f32.gmra.mxu0 %v3476
    %v3901 = vpop.f32.mrf.mxu0
    %v3902 = vadd.f32 0.0, %v3901
    %v3903 = vpop.f32.mrf.mxu0
    %v3904 = vadd.f32 0.0, %v3903
    %3905 = vmatprep.mubr.f32.mxu0 0.0
    %3906 = vmatmul.mubr.f32.gmra.mxu0 %v3477
    %v3907 = vpop.f32.mrf.mxu0
    %v3908 = vadd.f32 0.0, %v3907
    %v3909 = vpop.f32.mrf.mxu0
    %v3910 = vadd.f32 0.0, %v3909
    %3911 = vmatprep.mubr.f32.mxu0 0.0
    %3912 = vmatmul.mubr.f32.gmra.mxu0 %v3478
    %v3913 = vpop.f32.mrf.mxu0
    %v3914 = vadd.f32 0.0, %v3913
    %v3915 = vpop.f32.mrf.mxu0
    %v3916 = vadd.f32 0.0, %v3915
    %3917 = vmatprep.mubr.f32.mxu0 0.0
    %3918 = vmatmul.mubr.f32.gmra.mxu0 %v3479
    %v3919 = vpop.f32.mrf.mxu0
    %v3920 = vadd.f32 0.0, %v3919
    %v3921 = vpop.f32.mrf.mxu0
    %v3922 = vadd.f32 0.0, %v3921
    %3923 = vmatprep.mubr.f32.mxu0 0.0
    %3924 = vmatmul.mubr.f32.gmra.mxu0 %v3480
    %v3925 = vpop.f32.mrf.mxu0
    %v3926 = vadd.f32 0.0, %v3925
    %v3927 = vpop.f32.mrf.mxu0
    %v3928 = vadd.f32 0.0, %v3927
    %3929 = vmatprep.mubr.f32.mxu0 0.0
    %3930 = vmatmul.mubr.f32.gmra.mxu0 %v3481
    %v3931 = vpop.f32.mrf.mxu0
    %v3932 = vadd.f32 0.0, %v3931
    %v3933 = vpop.f32.mrf.mxu0
    %v3934 = vadd.f32 0.0, %v3933
    %3935 = vmatprep.mubr.f32.mxu0 0.0
    %3936 = vmatmul.mubr.f32.gmra.mxu0 %v3482
    %v3937 = vpop.f32.mrf.mxu0
    %v3938 = vadd.f32 0.0, %v3937
    %v3939 = vpop.f32.mrf.mxu0
    %v3940 = vadd.f32 0.0, %v3939
    %3941 = vmatprep.mubr.f32.mxu0 0.0
    %3942 = vmatmul.mubr.f32.gmra.mxu0 %v3483
    %v3943 = vpop.f32.mrf.mxu0
    %v3944 = vadd.f32 0.0, %v3943
    %v3945 = vpop.f32.mrf.mxu0
    %v3946 = vadd.f32 0.0, %v3945
    %3947 = vmatprep.mubr.f32.mxu0 0.0
    %3948 = vmatmul.mubr.f32.gmra.mxu0 %v3484
    %v3949 = vpop.f32.mrf.mxu0
    %v3950 = vadd.f32 0.0, %v3949
    %v3951 = vpop.f32.mrf.mxu0
    %v3952 = vadd.f32 0.0, %v3951
    %3953 = vmatprep.mubr.f32.mxu0 0.0
    %3954 = vmatmul.mubr.f32.gmra.mxu0 %v3485
    %v3955 = vpop.f32.mrf.mxu0
    %v3956 = vadd.f32 0.0, %v3955
    %v3957 = vpop.f32.mrf.mxu0
    %v3958 = vadd.f32 0.0, %v3957
    %3959 = vmatprep.mubr.f32.mxu0 0.0
    %3960 = vmatmul.mubr.f32.gmra.mxu0 %v3486
    %v3961 = vpop.f32.mrf.mxu0
    %v3962 = vadd.f32 0.0, %v3961
    %v3963 = vpop.f32.mrf.mxu0
    %v3964 = vadd.f32 0.0, %v3963
    %3965 = vmatprep.mubr.f32.mxu0 0.0
    %3966 = vmatmul.mubr.f32.gmra.mxu0 %v3487
    %v3967 = vpop.f32.mrf.mxu0
    %v3968 = vadd.f32 0.0, %v3967
    %v3969 = vpop.f32.mrf.mxu0
    %v3970 = vadd.f32 0.0, %v3969
    %3971 = vmatprep.mubr.f32.mxu0 0.0
    %3972 = vmatmul.mubr.f32.gmra.mxu0 %v3488
    %v3973 = vpop.f32.mrf.mxu0
    %v3974 = vadd.f32 0.0, %v3973
    %v3975 = vpop.f32.mrf.mxu0
    %v3976 = vadd.f32 0.0, %v3975
    %3977 = vmatprep.mubr.f32.mxu0 0.0
    %3978 = vmatmul.mubr.f32.gmra.mxu0 %v3489
    %v3979 = vpop.f32.mrf.mxu0
    %v3980 = vadd.f32 0.0, %v3979
    %v3981 = vpop.f32.mrf.mxu0
    %v3982 = vadd.f32 0.0, %v3981
    %3983 = vmatprep.mubr.f32.mxu0 0.0
    %3984 = vmatmul.mubr.f32.gmra.mxu0 %v3490
    %v3985 = vpop.f32.mrf.mxu0
    %v3986 = vadd.f32 0.0, %v3985
    %v3987 = vpop.f32.mrf.mxu0
    %v3988 = vadd.f32 0.0, %v3987
    %3989 = vdwg.mxu0
    %v3990 = vmul.f32 %v3574, %v3896
    %v3991 = vmul.f32 %v3576, %v3896
    %v3992 = vmul.f32 %v3735, %v3896
    %v3993 = vmul.f32 %v3737, %v3896
    %v3994 = vmul.f32 %v3580, %v3902
    %v3995 = vmul.f32 %v3582, %v3902
    %v3996 = vmul.f32 %v3741, %v3902
    %v3997 = vmul.f32 %v3743, %v3902
    %v3998 = vmul.f32 %v3586, %v3908
    %v3999 = vmul.f32 %v3588, %v3908
    %v4000 = vmul.f32 %v3747, %v3908
    %v4001 = vmul.f32 %v3749, %v3908
    %v4002 = vmul.f32 %v3592, %v3914
    %v4003 = vmul.f32 %v3594, %v3914
    %v4004 = vmul.f32 %v3753, %v3914
    %v4005 = vmul.f32 %v3755, %v3914
    %v4006 = vmul.f32 %v3598, %v3920
    %v4007 = vmul.f32 %v3600, %v3920
    %v4008 = vmul.f32 %v3759, %v3920
    %v4009 = vmul.f32 %v3761, %v3920
    %v4010 = vmul.f32 %v3604, %v3926
    %v4011 = vmul.f32 %v3606, %v3926
    %v4012 = vmul.f32 %v3765, %v3926
    %v4013 = vmul.f32 %v3767, %v3926
    %v4014 = vmul.f32 %v3610, %v3932
    %v4015 = vmul.f32 %v3612, %v3932
    %v4016 = vmul.f32 %v3771, %v3932
    %v4017 = vmul.f32 %v3773, %v3932
    %v4018 = vmul.f32 %v3616, %v3938
    %v4019 = vmul.f32 %v3618, %v3938
    %v4020 = vmul.f32 %v3777, %v3938
    %v4021 = vmul.f32 %v3779, %v3938
    %v4022 = vmul.f32 %v3622, %v3944
    %v4023 = vmul.f32 %v3624, %v3944
    %v4024 = vmul.f32 %v3783, %v3944
    %v4025 = vmul.f32 %v3785, %v3944
    %v4026 = vmul.f32 %v3628, %v3950
    %v4027 = vmul.f32 %v3630, %v3950
    %v4028 = vmul.f32 %v3789, %v3950
    %v4029 = vmul.f32 %v3791, %v3950
    %v4030 = vmul.f32 %v3634, %v3956
    %v4031 = vmul.f32 %v3636, %v3956
    %v4032 = vmul.f32 %v3795, %v3956
    %v4033 = vmul.f32 %v3797, %v3956
    %v4034 = vmul.f32 %v3640, %v3962
    %v4035 = vmul.f32 %v3642, %v3962
    %v4036 = vmul.f32 %v3801, %v3962
    %v4037 = vmul.f32 %v3803, %v3962
    %v4038 = vmul.f32 %v3646, %v3968
    %v4039 = vmul.f32 %v3648, %v3968
    %v4040 = vmul.f32 %v3807, %v3968
    %v4041 = vmul.f32 %v3809, %v3968
    %v4042 = vmul.f32 %v3652, %v3974
    %v4043 = vmul.f32 %v3654, %v3974
    %v4044 = vmul.f32 %v3813, %v3974
    %v4045 = vmul.f32 %v3815, %v3974
    %v4046 = vmul.f32 %v3658, %v3980
    %v4047 = vmul.f32 %v3660, %v3980
    %v4048 = vmul.f32 %v3819, %v3980
    %v4049 = vmul.f32 %v3821, %v3980
    %v4050 = vmul.f32 %v3664, %v3986
    %v4051 = vmul.f32 %v3666, %v3986
    %v4052 = vmul.f32 %v3825, %v3986
    %v4053 = vmul.f32 %v3827, %v3986
    %4054 = vmatprep.subr.mxu0 0.0
    %4055 = vmatpush1.msra.mxu0 %v63
    %4056 = vmatprep.subr.mxu0 0.0
    %4057 = vmatpush1.msra.mxu0 %v62
    %4058 = vmatprep.subr.mxu0 0.0
    %4059 = vmatpush1.msra.mxu0 %v61
    %4060 = vmatprep.subr.mxu0 0.0
    %4061 = vmatpush1.msra.mxu0 %v60
    %4062 = vmatprep.subr.mxu0 0.0
    %4063 = vmatpush1.msra.mxu0 %v59
    %4064 = vmatprep.subr.mxu0 0.0
    %4065 = vmatpush1.msra.mxu0 %v58
    %4066 = vmatprep.subr.mxu0 0.0
    %4067 = vmatpush1.msra.mxu0 %v57
    %4068 = vmatprep.subr.mxu0 0.0
    %4069 = vmatpush1.msra.mxu0 %v56
    %4070 = vmatprep.subr.mxu0 0.0
    %4071 = vmatpush1.msra.mxu0 %v55
    %4072 = vmatprep.subr.mxu0 0.0
    %4073 = vmatpush1.msra.mxu0 %v54
    %4074 = vmatprep.subr.mxu0 0.0
    %4075 = vmatpush1.msra.mxu0 %v53
    %4076 = vmatprep.subr.mxu0 0.0
    %4077 = vmatpush1.msra.mxu0 %v52
    %4078 = vmatprep.subr.mxu0 0.0
    %4079 = vmatpush1.msra.mxu0 %v51
    %4080 = vmatprep.subr.mxu0 0.0
    %4081 = vmatpush1.msra.mxu0 %v50
    %4082 = vmatprep.subr.mxu0 0.0
    %4083 = vmatpush1.msra.mxu0 %v49
    %4084 = vmatprep.subr.mxu0 0.0
    %4085 = vmatpush1.msra.mxu0 %v48
    %4086 = vmatprep.subr.mxu0 0.0
    %4087 = vmatpush2.msra.mxu0 %v79
    %4088 = vmatprep.subr.mxu0 0.0
    %4089 = vmatpush2.msra.mxu0 %v78
    %4090 = vmatprep.subr.mxu0 0.0
    %4091 = vmatpush2.msra.mxu0 %v77
    %4092 = vmatprep.subr.mxu0 0.0
    %4093 = vmatpush2.msra.mxu0 %v76
    %4094 = vmatprep.subr.mxu0 0.0
    %4095 = vmatpush2.msra.mxu0 %v75
    %4096 = vmatprep.subr.mxu0 0.0
    %4097 = vmatpush2.msra.mxu0 %v74
    %4098 = vmatprep.subr.mxu0 0.0
    %4099 = vmatpush2.msra.mxu0 %v73
    %4100 = vmatprep.subr.mxu0 0.0
    %4101 = vmatpush2.msra.mxu0 %v72
    %4102 = vmatprep.subr.mxu0 0.0
    %4103 = vmatpush2.msra.mxu0 %v71
    %4104 = vmatprep.subr.mxu0 0.0
    %4105 = vmatpush2.msra.mxu0 %v70
    %4106 = vmatprep.subr.mxu0 0.0
    %4107 = vmatpush2.msra.mxu0 %v69
    %4108 = vmatprep.subr.mxu0 0.0
    %4109 = vmatpush2.msra.mxu0 %v68
    %4110 = vmatprep.subr.mxu0 0.0
    %4111 = vmatpush2.msra.mxu0 %v67
    %4112 = vmatprep.subr.mxu0 0.0
    %4113 = vmatpush2.msra.mxu0 %v66
    %4114 = vmatprep.subr.mxu0 0.0
    %4115 = vmatpush2.msra.mxu0 %v65
    %4116 = vmatprep.subr.mxu0 0.0
    %4117 = vmatpush2.msra.mxu0 %v64
    %4118 = vmatprep.mubr.f32.mxu0 %v3991
    %4119 = vmatmul.mubr.f32.gmra.mxu0 %v3990
    %v4120 = vpop.f32.mrf.mxu0
    %v4121 = vadd.f32 0.0, %v4120
    %v4122 = vpop.f32.mrf.mxu0
    %4123 = vmatprep.mubr.f32.mxu0 %v3995
    %4124 = vmatmul.mubr.f32.gmra.mxu0 %v3994
    %v4125 = vpop.f32.mrf.mxu0
    %v4126 = vadd.f32 0.0, %v4125
    %v4127 = vpop.f32.mrf.mxu0
    %4128 = vmatprep.mubr.f32.mxu0 %v3999
    %4129 = vmatmul.mubr.f32.gmra.mxu0 %v3998
    %v4130 = vpop.f32.mrf.mxu0
    %v4131 = vadd.f32 0.0, %v4130
    %v4132 = vpop.f32.mrf.mxu0
    %4133 = vmatprep.mubr.f32.mxu0 %v4003
    %4134 = vmatmul.mubr.f32.gmra.mxu0 %v4002
    %v4135 = vpop.f32.mrf.mxu0
    %v4136 = vadd.f32 0.0, %v4135
    %v4137 = vpop.f32.mrf.mxu0
    %4138 = vmatprep.mubr.f32.mxu0 %v4007
    %4139 = vmatmul.mubr.f32.gmra.mxu0 %v4006
    %v4140 = vpop.f32.mrf.mxu0
    %v4141 = vadd.f32 0.0, %v4140
    %v4142 = vpop.f32.mrf.mxu0
    %4143 = vmatprep.mubr.f32.mxu0 %v4011
    %4144 = vmatmul.mubr.f32.gmra.mxu0 %v4010
    %v4145 = vpop.f32.mrf.mxu0
    %v4146 = vadd.f32 0.0, %v4145
    %v4147 = vpop.f32.mrf.mxu0
    %4148 = vmatprep.mubr.f32.mxu0 %v4015
    %4149 = vmatmul.mubr.f32.gmra.mxu0 %v4014
    %v4150 = vpop.f32.mrf.mxu0
    %v4151 = vadd.f32 0.0, %v4150
    %v4152 = vpop.f32.mrf.mxu0
    %4153 = vmatprep.mubr.f32.mxu0 %v4019
    %4154 = vmatmul.mubr.f32.gmra.mxu0 %v4018
    %v4155 = vpop.f32.mrf.mxu0
    %v4156 = vadd.f32 0.0, %v4155
    %v4157 = vpop.f32.mrf.mxu0
    %4158 = vmatprep.mubr.f32.mxu0 %v4023
    %4159 = vmatmul.mubr.f32.gmra.mxu0 %v4022
    %v4160 = vpop.f32.mrf.mxu0
    %v4161 = vadd.f32 0.0, %v4160
    %v4162 = vpop.f32.mrf.mxu0
    %4163 = vmatprep.mubr.f32.mxu0 %v4027
    %4164 = vmatmul.mubr.f32.gmra.mxu0 %v4026
    %v4165 = vpop.f32.mrf.mxu0
    %v4166 = vadd.f32 0.0, %v4165
    %v4167 = vpop.f32.mrf.mxu0
    %4168 = vmatprep.mubr.f32.mxu0 %v4031
    %4169 = vmatmul.mubr.f32.gmra.mxu0 %v4030
    %v4170 = vpop.f32.mrf.mxu0
    %v4171 = vadd.f32 0.0, %v4170
    %v4172 = vpop.f32.mrf.mxu0
    %4173 = vmatprep.mubr.f32.mxu0 %v4035
    %4174 = vmatmul.mubr.f32.gmra.mxu0 %v4034
    %v4175 = vpop.f32.mrf.mxu0
    %v4176 = vadd.f32 0.0, %v4175
    %v4177 = vpop.f32.mrf.mxu0
    %4178 = vmatprep.mubr.f32.mxu0 %v4039
    %4179 = vmatmul.mubr.f32.gmra.mxu0 %v4038
    %v4180 = vpop.f32.mrf.mxu0
    %v4181 = vadd.f32 0.0, %v4180
    %v4182 = vpop.f32.mrf.mxu0
    %4183 = vmatprep.mubr.f32.mxu0 %v4043
    %4184 = vmatmul.mubr.f32.gmra.mxu0 %v4042
    %v4185 = vpop.f32.mrf.mxu0
    %v4186 = vadd.f32 0.0, %v4185
    %v4187 = vpop.f32.mrf.mxu0
    %4188 = vmatprep.mubr.f32.mxu0 %v4047
    %4189 = vmatmul.mubr.f32.gmra.mxu0 %v4046
    %v4190 = vpop.f32.mrf.mxu0
    %v4191 = vadd.f32 0.0, %v4190
    %v4192 = vpop.f32.mrf.mxu0
    %4193 = vmatprep.mubr.f32.mxu0 %v4051
    %4194 = vmatmul.mubr.f32.gmra.mxu0 %v4050
    %v4195 = vpop.f32.mrf.mxu0
    %v4196 = vadd.f32 0.0, %v4195
    %v4197 = vpop.f32.mrf.mxu0
    %4198 = vdwg.mxu0
    %4199 = vmatprep.subr.mxu0 0.0
    %4200 = vmatpush1.msra.mxu0 %v95
    %4201 = vmatprep.subr.mxu0 0.0
    %4202 = vmatpush1.msra.mxu0 %v94
    %4203 = vmatprep.subr.mxu0 0.0
    %4204 = vmatpush1.msra.mxu0 %v93
    %4205 = vmatprep.subr.mxu0 0.0
    %4206 = vmatpush1.msra.mxu0 %v92
    %4207 = vmatprep.subr.mxu0 0.0
    %4208 = vmatpush1.msra.mxu0 %v91
    %4209 = vmatprep.subr.mxu0 0.0
    %4210 = vmatpush1.msra.mxu0 %v90
    %4211 = vmatprep.subr.mxu0 0.0
    %4212 = vmatpush1.msra.mxu0 %v89
    %4213 = vmatprep.subr.mxu0 0.0
    %4214 = vmatpush1.msra.mxu0 %v88
    %4215 = vmatprep.subr.mxu0 0.0
    %4216 = vmatpush1.msra.mxu0 %v87
    %4217 = vmatprep.subr.mxu0 0.0
    %4218 = vmatpush1.msra.mxu0 %v86
    %4219 = vmatprep.subr.mxu0 0.0
    %4220 = vmatpush1.msra.mxu0 %v85
    %4221 = vmatprep.subr.mxu0 0.0
    %4222 = vmatpush1.msra.mxu0 %v84
    %4223 = vmatprep.subr.mxu0 0.0
    %4224 = vmatpush1.msra.mxu0 %v83
    %4225 = vmatprep.subr.mxu0 0.0
    %4226 = vmatpush1.msra.mxu0 %v82
    %4227 = vmatprep.subr.mxu0 0.0
    %4228 = vmatpush1.msra.mxu0 %v81
    %4229 = vmatprep.subr.mxu0 0.0
    %4230 = vmatpush1.msra.mxu0 %v80
    %4231 = vmatprep.subr.mxu0 0.0
    %4232 = vmatpush2.msra.mxu0 %v111
    %4233 = vmatprep.subr.mxu0 0.0
    %4234 = vmatpush2.msra.mxu0 %v110
    %4235 = vmatprep.subr.mxu0 0.0
    %4236 = vmatpush2.msra.mxu0 %v109
    %4237 = vmatprep.subr.mxu0 0.0
    %4238 = vmatpush2.msra.mxu0 %v108
    %4239 = vmatprep.subr.mxu0 0.0
    %4240 = vmatpush2.msra.mxu0 %v107
    %4241 = vmatprep.subr.mxu0 0.0
    %4242 = vmatpush2.msra.mxu0 %v106
    %4243 = vmatprep.subr.mxu0 0.0
    %4244 = vmatpush2.msra.mxu0 %v105
    %4245 = vmatprep.subr.mxu0 0.0
    %4246 = vmatpush2.msra.mxu0 %v104
    %4247 = vmatprep.subr.mxu0 0.0
    %4248 = vmatpush2.msra.mxu0 %v103
    %4249 = vmatprep.subr.mxu0 0.0
    %4250 = vmatpush2.msra.mxu0 %v102
    %4251 = vmatprep.subr.mxu0 0.0
    %4252 = vmatpush2.msra.mxu0 %v101
    %4253 = vmatprep.subr.mxu0 0.0
    %4254 = vmatpush2.msra.mxu0 %v100
    %4255 = vmatprep.subr.mxu0 0.0
    %4256 = vmatpush2.msra.mxu0 %v99
    %4257 = vmatprep.subr.mxu0 0.0
    %4258 = vmatpush2.msra.mxu0 %v98
    %4259 = vmatprep.subr.mxu0 0.0
    %4260 = vmatpush2.msra.mxu0 %v97
    %4261 = vmatprep.subr.mxu0 0.0
    %4262 = vmatpush2.msra.mxu0 %v96
    %4263 = vmatprep.mubr.f32.mxu0 %v3993
    %4264 = vmatmul.mubr.f32.gmra.mxu0 %v3992
    %v4265 = vpop.f32.mrf.mxu0
    %v4266 = vadd.f32 %v4121, %v4265
    %v4267 = vpop.f32.mrf.mxu0
    %4268 = vmatprep.mubr.f32.mxu0 %v3997
    %4269 = vmatmul.mubr.f32.gmra.mxu0 %v3996
    %v4270 = vpop.f32.mrf.mxu0
    %v4271 = vadd.f32 %v4126, %v4270
    %v4272 = vpop.f32.mrf.mxu0
    %4273 = vmatprep.mubr.f32.mxu0 %v4001
    %4274 = vmatmul.mubr.f32.gmra.mxu0 %v4000
    %v4275 = vpop.f32.mrf.mxu0
    %v4276 = vadd.f32 %v4131, %v4275
    %v4277 = vpop.f32.mrf.mxu0
    %4278 = vmatprep.mubr.f32.mxu0 %v4005
    %4279 = vmatmul.mubr.f32.gmra.mxu0 %v4004
    %v4280 = vpop.f32.mrf.mxu0
    %v4281 = vadd.f32 %v4136, %v4280
    %v4282 = vpop.f32.mrf.mxu0
    %4283 = vmatprep.mubr.f32.mxu0 %v4009
    %4284 = vmatmul.mubr.f32.gmra.mxu0 %v4008
    %v4285 = vpop.f32.mrf.mxu0
    %v4286 = vadd.f32 %v4141, %v4285
    %v4287 = vpop.f32.mrf.mxu0
    %4288 = vmatprep.mubr.f32.mxu0 %v4013
    %4289 = vmatmul.mubr.f32.gmra.mxu0 %v4012
    %v4290 = vpop.f32.mrf.mxu0
    %v4291 = vadd.f32 %v4146, %v4290
    %v4292 = vpop.f32.mrf.mxu0
    %4293 = vmatprep.mubr.f32.mxu0 %v4017
    %4294 = vmatmul.mubr.f32.gmra.mxu0 %v4016
    %v4295 = vpop.f32.mrf.mxu0
    %v4296 = vadd.f32 %v4151, %v4295
    %v4297 = vpop.f32.mrf.mxu0
    %4298 = vmatprep.mubr.f32.mxu0 %v4021
    %4299 = vmatmul.mubr.f32.gmra.mxu0 %v4020
    %v4300 = vpop.f32.mrf.mxu0
    %v4301 = vadd.f32 %v4156, %v4300
    %v4302 = vpop.f32.mrf.mxu0
    %4303 = vmatprep.mubr.f32.mxu0 %v4025
    %4304 = vmatmul.mubr.f32.gmra.mxu0 %v4024
    %v4305 = vpop.f32.mrf.mxu0
    %v4306 = vadd.f32 %v4161, %v4305
    %v4307 = vpop.f32.mrf.mxu0
    %4308 = vmatprep.mubr.f32.mxu0 %v4029
    %4309 = vmatmul.mubr.f32.gmra.mxu0 %v4028
    %v4310 = vpop.f32.mrf.mxu0
    %v4311 = vadd.f32 %v4166, %v4310
    %v4312 = vpop.f32.mrf.mxu0
    %4313 = vmatprep.mubr.f32.mxu0 %v4033
    %4314 = vmatmul.mubr.f32.gmra.mxu0 %v4032
    %v4315 = vpop.f32.mrf.mxu0
    %v4316 = vadd.f32 %v4171, %v4315
    %v4317 = vpop.f32.mrf.mxu0
    %4318 = vmatprep.mubr.f32.mxu0 %v4037
    %4319 = vmatmul.mubr.f32.gmra.mxu0 %v4036
    %v4320 = vpop.f32.mrf.mxu0
    %v4321 = vadd.f32 %v4176, %v4320
    %v4322 = vpop.f32.mrf.mxu0
    %4323 = vmatprep.mubr.f32.mxu0 %v4041
    %4324 = vmatmul.mubr.f32.gmra.mxu0 %v4040
    %v4325 = vpop.f32.mrf.mxu0
    %v4326 = vadd.f32 %v4181, %v4325
    %v4327 = vpop.f32.mrf.mxu0
    %4328 = vmatprep.mubr.f32.mxu0 %v4045
    %4329 = vmatmul.mubr.f32.gmra.mxu0 %v4044
    %v4330 = vpop.f32.mrf.mxu0
    %v4331 = vadd.f32 %v4186, %v4330
    %v4332 = vpop.f32.mrf.mxu0
    %4333 = vmatprep.mubr.f32.mxu0 %v4049
    %4334 = vmatmul.mubr.f32.gmra.mxu0 %v4048
    %v4335 = vpop.f32.mrf.mxu0
    %v4336 = vadd.f32 %v4191, %v4335
    %v4337 = vpop.f32.mrf.mxu0
    %4338 = vmatprep.mubr.f32.mxu0 %v4053
    %4339 = vmatmul.mubr.f32.gmra.mxu0 %v4052
    %v4340 = vpop.f32.mrf.mxu0
    %v4341 = vadd.f32 %v4196, %v4340
    %v4342 = vpop.f32.mrf.mxu0
    %4343 = vdwg.mxu0
    %4360 = vrot.lane.b32.xlu0 %v4266, 112
    %v4361 = vpop.permute.xlu0 %4360
    %4362 = vrot.lane.b32.xlu0 %v4271, 112
    %v4363 = vpop.permute.xlu0 %4362
    %4364 = vrot.lane.b32.xlu0 %v4276, 112
    %v4365 = vpop.permute.xlu0 %4364
    %4366 = vrot.lane.b32.xlu0 %v4281, 112
    %v4367 = vpop.permute.xlu0 %4366
    %4368 = vrot.lane.b32.xlu0 %v4286, 112
    %v4369 = vpop.permute.xlu0 %4368
    %4370 = vrot.lane.b32.xlu0 %v4291, 112
    %v4371 = vpop.permute.xlu0 %4370
    %4372 = vrot.lane.b32.xlu0 %v4296, 112
    %v4373 = vpop.permute.xlu0 %4372
    %4374 = vrot.lane.b32.xlu0 %v4301, 112
    %v4375 = vpop.permute.xlu0 %4374
    %4376 = vrot.lane.b32.xlu0 %v4306, 112
    %v4377 = vpop.permute.xlu0 %4376
    %4378 = vrot.lane.b32.xlu0 %v4311, 112
    %v4379 = vpop.permute.xlu0 %4378
    %4380 = vrot.lane.b32.xlu0 %v4316, 112
    %v4381 = vpop.permute.xlu0 %4380
    %4382 = vrot.lane.b32.xlu0 %v4321, 112
    %v4383 = vpop.permute.xlu0 %4382
    %4384 = vrot.lane.b32.xlu0 %v4326, 112
    %v4385 = vpop.permute.xlu0 %4384
    %4386 = vrot.lane.b32.xlu0 %v4331, 112
    %v4387 = vpop.permute.xlu0 %4386
    %4388 = vrot.lane.b32.xlu0 %v4336, 112
    %v4389 = vpop.permute.xlu0 %4388
    %4390 = vrot.lane.b32.xlu0 %v4341, 112
    %v4391 = vpop.permute.xlu0 %4390
    %v4408 = vmax.f32 %v4266, %v4361
    %v4409 = vmax.f32 %v4271, %v4363
    %v4410 = vmax.f32 %v4276, %v4365
    %v4411 = vmax.f32 %v4281, %v4367
    %v4412 = vmax.f32 %v4286, %v4369
    %v4413 = vmax.f32 %v4291, %v4371
    %v4414 = vmax.f32 %v4296, %v4373
    %v4415 = vmax.f32 %v4301, %v4375
    %v4416 = vmax.f32 %v4306, %v4377
    %v4417 = vmax.f32 %v4311, %v4379
    %v4418 = vmax.f32 %v4316, %v4381
    %v4419 = vmax.f32 %v4321, %v4383
    %v4420 = vmax.f32 %v4326, %v4385
    %v4421 = vmax.f32 %v4331, %v4387
    %v4422 = vmax.f32 %v4336, %v4389
    %v4423 = vmax.f32 %v4341, %v4391
    %4424 = vrot.lane.b32.xlu0 %v4266, 96
    %v4425 = vpop.permute.xlu0 %4424
    %4426 = vrot.lane.b32.xlu0 %v4271, 96
    %v4427 = vpop.permute.xlu0 %4426
    %4428 = vrot.lane.b32.xlu0 %v4276, 96
    %v4429 = vpop.permute.xlu0 %4428
    %4430 = vrot.lane.b32.xlu0 %v4281, 96
    %v4431 = vpop.permute.xlu0 %4430
    %4432 = vrot.lane.b32.xlu0 %v4286, 96
    %v4433 = vpop.permute.xlu0 %4432
    %4434 = vrot.lane.b32.xlu0 %v4291, 96
    %v4435 = vpop.permute.xlu0 %4434
    %4436 = vrot.lane.b32.xlu0 %v4296, 96
    %v4437 = vpop.permute.xlu0 %4436
    %4438 = vrot.lane.b32.xlu0 %v4301, 96
    %v4439 = vpop.permute.xlu0 %4438
    %4440 = vrot.lane.b32.xlu0 %v4306, 96
    %v4441 = vpop.permute.xlu0 %4440
    %4442 = vrot.lane.b32.xlu0 %v4311, 96
    %v4443 = vpop.permute.xlu0 %4442
    %4444 = vrot.lane.b32.xlu0 %v4316, 96
    %v4445 = vpop.permute.xlu0 %4444
    %4446 = vrot.lane.b32.xlu0 %v4321, 96
    %v4447 = vpop.permute.xlu0 %4446
    %4448 = vrot.lane.b32.xlu0 %v4326, 96
    %v4449 = vpop.permute.xlu0 %4448
    %4450 = vrot.lane.b32.xlu0 %v4331, 96
    %v4451 = vpop.permute.xlu0 %4450
    %4452 = vrot.lane.b32.xlu0 %v4336, 96
    %v4453 = vpop.permute.xlu0 %4452
    %4454 = vrot.lane.b32.xlu0 %v4341, 96
    %v4455 = vpop.permute.xlu0 %4454
    %v4472 = vmax.f32 %v4408, %v4425
    %v4473 = vmax.f32 %v4409, %v4427
    %v4474 = vmax.f32 %v4410, %v4429
    %v4475 = vmax.f32 %v4411, %v4431
    %v4476 = vmax.f32 %v4412, %v4433
    %v4477 = vmax.f32 %v4413, %v4435
    %v4478 = vmax.f32 %v4414, %v4437
    %v4479 = vmax.f32 %v4415, %v4439
    %v4480 = vmax.f32 %v4416, %v4441
    %v4481 = vmax.f32 %v4417, %v4443
    %v4482 = vmax.f32 %v4418, %v4445
    %v4483 = vmax.f32 %v4419, %v4447
    %v4484 = vmax.f32 %v4420, %v4449
    %v4485 = vmax.f32 %v4421, %v4451
    %v4486 = vmax.f32 %v4422, %v4453
    %v4487 = vmax.f32 %v4423, %v4455
    %4488 = vrot.lane.b32.xlu0 %v4266, 80
    %v4489 = vpop.permute.xlu0 %4488
    %4490 = vrot.lane.b32.xlu0 %v4271, 80
    %v4491 = vpop.permute.xlu0 %4490
    %4492 = vrot.lane.b32.xlu0 %v4276, 80
    %v4493 = vpop.permute.xlu0 %4492
    %4494 = vrot.lane.b32.xlu0 %v4281, 80
    %v4495 = vpop.permute.xlu0 %4494
    %4496 = vrot.lane.b32.xlu0 %v4286, 80
    %v4497 = vpop.permute.xlu0 %4496
    %4498 = vrot.lane.b32.xlu0 %v4291, 80
    %v4499 = vpop.permute.xlu0 %4498
    %4500 = vrot.lane.b32.xlu0 %v4296, 80
    %v4501 = vpop.permute.xlu0 %4500
    %4502 = vrot.lane.b32.xlu0 %v4301, 80
    %v4503 = vpop.permute.xlu0 %4502
    %4504 = vrot.lane.b32.xlu0 %v4306, 80
    %v4505 = vpop.permute.xlu0 %4504
    %4506 = vrot.lane.b32.xlu0 %v4311, 80
    %v4507 = vpop.permute.xlu0 %4506
    %4508 = vrot.lane.b32.xlu0 %v4316, 80
    %v4509 = vpop.permute.xlu0 %4508
    %4510 = vrot.lane.b32.xlu0 %v4321, 80
    %v4511 = vpop.permute.xlu0 %4510
    %4512 = vrot.lane.b32.xlu0 %v4326, 80
    %v4513 = vpop.permute.xlu0 %4512
    %4514 = vrot.lane.b32.xlu0 %v4331, 80
    %v4515 = vpop.permute.xlu0 %4514
    %4516 = vrot.lane.b32.xlu0 %v4336, 80
    %v4517 = vpop.permute.xlu0 %4516
    %4518 = vrot.lane.b32.xlu0 %v4341, 80
    %v4519 = vpop.permute.xlu0 %4518
    %v4536 = vmax.f32 %v4472, %v4489
    %v4537 = vmax.f32 %v4473, %v4491
    %v4538 = vmax.f32 %v4474, %v4493
    %v4539 = vmax.f32 %v4475, %v4495
    %v4540 = vmax.f32 %v4476, %v4497
    %v4541 = vmax.f32 %v4477, %v4499
    %v4542 = vmax.f32 %v4478, %v4501
    %v4543 = vmax.f32 %v4479, %v4503
    %v4544 = vmax.f32 %v4480, %v4505
    %v4545 = vmax.f32 %v4481, %v4507
    %v4546 = vmax.f32 %v4482, %v4509
    %v4547 = vmax.f32 %v4483, %v4511
    %v4548 = vmax.f32 %v4484, %v4513
    %v4549 = vmax.f32 %v4485, %v4515
    %v4550 = vmax.f32 %v4486, %v4517
    %v4551 = vmax.f32 %v4487, %v4519
    %4568 = vrot.lane.b32.xlu0 %v4536, 16
    %v4569 = vpop.permute.xlu0 %4568
    %4570 = vrot.lane.b32.xlu0 %v4537, 16
    %v4571 = vpop.permute.xlu0 %4570
    %4572 = vrot.lane.b32.xlu0 %v4538, 16
    %v4573 = vpop.permute.xlu0 %4572
    %4574 = vrot.lane.b32.xlu0 %v4539, 16
    %v4575 = vpop.permute.xlu0 %4574
    %4576 = vrot.lane.b32.xlu0 %v4540, 16
    %v4577 = vpop.permute.xlu0 %4576
    %4578 = vrot.lane.b32.xlu0 %v4541, 16
    %v4579 = vpop.permute.xlu0 %4578
    %4580 = vrot.lane.b32.xlu0 %v4542, 16
    %v4581 = vpop.permute.xlu0 %4580
    %4582 = vrot.lane.b32.xlu0 %v4543, 16
    %v4583 = vpop.permute.xlu0 %4582
    %4584 = vrot.lane.b32.xlu0 %v4544, 16
    %v4585 = vpop.permute.xlu0 %4584
    %4586 = vrot.lane.b32.xlu0 %v4545, 16
    %v4587 = vpop.permute.xlu0 %4586
    %4588 = vrot.lane.b32.xlu0 %v4546, 16
    %v4589 = vpop.permute.xlu0 %4588
    %4590 = vrot.lane.b32.xlu0 %v4547, 16
    %v4591 = vpop.permute.xlu0 %4590
    %4592 = vrot.lane.b32.xlu0 %v4548, 16
    %v4593 = vpop.permute.xlu0 %4592
    %4594 = vrot.lane.b32.xlu0 %v4549, 16
    %v4595 = vpop.permute.xlu0 %4594
    %4596 = vrot.lane.b32.xlu0 %v4550, 16
    %v4597 = vpop.permute.xlu0 %4596
    %4598 = vrot.lane.b32.xlu0 %v4551, 16
    %v4599 = vpop.permute.xlu0 %4598
    %4616 = vrot.lane.b32.xlu0 %v4536, 32
    %v4617 = vpop.permute.xlu0 %4616
    %4618 = vrot.lane.b32.xlu0 %v4537, 32
    %v4619 = vpop.permute.xlu0 %4618
    %4620 = vrot.lane.b32.xlu0 %v4538, 32
    %v4621 = vpop.permute.xlu0 %4620
    %4622 = vrot.lane.b32.xlu0 %v4539, 32
    %v4623 = vpop.permute.xlu0 %4622
    %4624 = vrot.lane.b32.xlu0 %v4540, 32
    %v4625 = vpop.permute.xlu0 %4624
    %4626 = vrot.lane.b32.xlu0 %v4541, 32
    %v4627 = vpop.permute.xlu0 %4626
    %4628 = vrot.lane.b32.xlu0 %v4542, 32
    %v4629 = vpop.permute.xlu0 %4628
    %4630 = vrot.lane.b32.xlu0 %v4543, 32
    %v4631 = vpop.permute.xlu0 %4630
    %4632 = vrot.lane.b32.xlu0 %v4544, 32
    %v4633 = vpop.permute.xlu0 %4632
    %4634 = vrot.lane.b32.xlu0 %v4545, 32
    %v4635 = vpop.permute.xlu0 %4634
    %4636 = vrot.lane.b32.xlu0 %v4546, 32
    %v4637 = vpop.permute.xlu0 %4636
    %4638 = vrot.lane.b32.xlu0 %v4547, 32
    %v4639 = vpop.permute.xlu0 %4638
    %4640 = vrot.lane.b32.xlu0 %v4548, 32
    %v4641 = vpop.permute.xlu0 %4640
    %4642 = vrot.lane.b32.xlu0 %v4549, 32
    %v4643 = vpop.permute.xlu0 %4642
    %4644 = vrot.lane.b32.xlu0 %v4550, 32
    %v4645 = vpop.permute.xlu0 %4644
    %4646 = vrot.lane.b32.xlu0 %v4551, 32
    %v4647 = vpop.permute.xlu0 %4646
    %4664 = vrot.lane.b32.xlu0 %v4536, 48
    %v4665 = vpop.permute.xlu0 %4664
    %4666 = vrot.lane.b32.xlu0 %v4537, 48
    %v4667 = vpop.permute.xlu0 %4666
    %4668 = vrot.lane.b32.xlu0 %v4538, 48
    %v4669 = vpop.permute.xlu0 %4668
    %4670 = vrot.lane.b32.xlu0 %v4539, 48
    %v4671 = vpop.permute.xlu0 %4670
    %4672 = vrot.lane.b32.xlu0 %v4540, 48
    %v4673 = vpop.permute.xlu0 %4672
    %4674 = vrot.lane.b32.xlu0 %v4541, 48
    %v4675 = vpop.permute.xlu0 %4674
    %4676 = vrot.lane.b32.xlu0 %v4542, 48
    %v4677 = vpop.permute.xlu0 %4676
    %4678 = vrot.lane.b32.xlu0 %v4543, 48
    %v4679 = vpop.permute.xlu0 %4678
    %4680 = vrot.lane.b32.xlu0 %v4544, 48
    %v4681 = vpop.permute.xlu0 %4680
    %4682 = vrot.lane.b32.xlu0 %v4545, 48
    %v4683 = vpop.permute.xlu0 %4682
    %4684 = vrot.lane.b32.xlu0 %v4546, 48
    %v4685 = vpop.permute.xlu0 %4684
    %4686 = vrot.lane.b32.xlu0 %v4547, 48
    %v4687 = vpop.permute.xlu0 %4686
    %4688 = vrot.lane.b32.xlu0 %v4548, 48
    %v4689 = vpop.permute.xlu0 %4688
    %4690 = vrot.lane.b32.xlu0 %v4549, 48
    %v4691 = vpop.permute.xlu0 %4690
    %4692 = vrot.lane.b32.xlu0 %v4550, 48
    %v4693 = vpop.permute.xlu0 %4692
    %4694 = vrot.lane.b32.xlu0 %v4551, 48
    %v4695 = vpop.permute.xlu0 %4694
    %v4712 = vsel %vm1608, %v4536, %v4569
    %v4713 = vsel %vm1608, %v4537, %v4571
    %v4714 = vsel %vm1608, %v4538, %v4573
    %v4715 = vsel %vm1608, %v4539, %v4575
    %v4716 = vsel %vm1608, %v4540, %v4577
    %v4717 = vsel %vm1608, %v4541, %v4579
    %v4718 = vsel %vm1608, %v4542, %v4581
    %v4719 = vsel %vm1608, %v4543, %v4583
    %v4720 = vsel %vm1608, %v4544, %v4585
    %v4721 = vsel %vm1608, %v4545, %v4587
    %v4722 = vsel %vm1608, %v4546, %v4589
    %v4723 = vsel %vm1608, %v4547, %v4591
    %v4724 = vsel %vm1608, %v4548, %v4593
    %v4725 = vsel %vm1608, %v4549, %v4595
    %v4726 = vsel %vm1608, %v4550, %v4597
    %v4727 = vsel %vm1608, %v4551, %v4599
    %v4728 = vsel %vm1625, %v4712, %v4617
    %v4729 = vsel %vm1625, %v4713, %v4619
    %v4730 = vsel %vm1625, %v4714, %v4621
    %v4731 = vsel %vm1625, %v4715, %v4623
    %v4732 = vsel %vm1625, %v4716, %v4625
    %v4733 = vsel %vm1625, %v4717, %v4627
    %v4734 = vsel %vm1625, %v4718, %v4629
    %v4735 = vsel %vm1625, %v4719, %v4631
    %v4736 = vsel %vm1625, %v4720, %v4633
    %v4737 = vsel %vm1625, %v4721, %v4635
    %v4738 = vsel %vm1625, %v4722, %v4637
    %v4739 = vsel %vm1625, %v4723, %v4639
    %v4740 = vsel %vm1625, %v4724, %v4641
    %v4741 = vsel %vm1625, %v4725, %v4643
    %v4742 = vsel %vm1625, %v4726, %v4645
    %v4743 = vsel %vm1625, %v4727, %v4647
    %v4744 = vsel %vm1642, %v4728, %v4665
    %v4745 = vsel %vm1642, %v4729, %v4667
    %v4746 = vsel %vm1642, %v4730, %v4669
    %v4747 = vsel %vm1642, %v4731, %v4671
    %v4748 = vsel %vm1642, %v4732, %v4673
    %v4749 = vsel %vm1642, %v4733, %v4675
    %v4750 = vsel %vm1642, %v4734, %v4677
    %v4751 = vsel %vm1642, %v4735, %v4679
    %v4752 = vsel %vm1642, %v4736, %v4681
    %v4753 = vsel %vm1642, %v4737, %v4683
    %v4754 = vsel %vm1642, %v4738, %v4685
    %v4755 = vsel %vm1642, %v4739, %v4687
    %v4756 = vsel %vm1642, %v4740, %v4689
    %v4757 = vsel %vm1642, %v4741, %v4691
    %v4758 = vsel %vm1642, %v4742, %v4693
    %v4759 = vsel %vm1642, %v4743, %v4695
    %v4760 = vsub.f32 %v4266, %v4744
    %v4761 = vsub.f32 %v4271, %v4745
    %v4762 = vsub.f32 %v4276, %v4746
    %v4763 = vsub.f32 %v4281, %v4747
    %v4764 = vsub.f32 %v4286, %v4748
    %v4765 = vsub.f32 %v4291, %v4749
    %v4766 = vsub.f32 %v4296, %v4750
    %v4767 = vsub.f32 %v4301, %v4751
    %v4768 = vsub.f32 %v4306, %v4752
    %v4769 = vsub.f32 %v4311, %v4753
    %v4770 = vsub.f32 %v4316, %v4754
    %v4771 = vsub.f32 %v4321, %v4755
    %v4772 = vsub.f32 %v4326, %v4756
    %v4773 = vsub.f32 %v4331, %v4757
    %v4774 = vsub.f32 %v4336, %v4758
    %v4775 = vsub.f32 %v4341, %v4759
    %v4776 = vmul.f32 %v4760, 1.442695
    %v4777 = vpow.pop %v4776
    %v4778 = vmul.f32 %v4761, 1.442695
    %v4779 = vpow.pop %v4778
    %v4780 = vmul.f32 %v4762, 1.442695
    %v4781 = vpow.pop %v4780
    %v4782 = vmul.f32 %v4763, 1.442695
    %v4783 = vpow.pop %v4782
    %v4784 = vmul.f32 %v4764, 1.442695
    %v4785 = vpow.pop %v4784
    %v4786 = vmul.f32 %v4765, 1.442695
    %v4787 = vpow.pop %v4786
    %v4788 = vmul.f32 %v4766, 1.442695
    %v4789 = vpow.pop %v4788
    %v4790 = vmul.f32 %v4767, 1.442695
    %v4791 = vpow.pop %v4790
    %v4792 = vmul.f32 %v4768, 1.442695
    %v4793 = vpow.pop %v4792
    %v4794 = vmul.f32 %v4769, 1.442695
    %v4795 = vpow.pop %v4794
    %v4796 = vmul.f32 %v4770, 1.442695
    %v4797 = vpow.pop %v4796
    %v4798 = vmul.f32 %v4771, 1.442695
    %v4799 = vpow.pop %v4798
    %v4800 = vmul.f32 %v4772, 1.442695
    %v4801 = vpow.pop %v4800
    %v4802 = vmul.f32 %v4773, 1.442695
    %v4803 = vpow.pop %v4802
    %v4804 = vmul.f32 %v4774, 1.442695
    %v4805 = vpow.pop %v4804
    %v4806 = vmul.f32 %v4775, 1.442695
    %v4807 = vpow.pop %v4806
    %4824 = vrot.lane.b32.xlu0 %v4777, 112
    %v4825 = vpop.permute.xlu0 %4824
    %4826 = vrot.lane.b32.xlu0 %v4779, 112
    %v4827 = vpop.permute.xlu0 %4826
    %4828 = vrot.lane.b32.xlu0 %v4781, 112
    %v4829 = vpop.permute.xlu0 %4828
    %4830 = vrot.lane.b32.xlu0 %v4783, 112
    %v4831 = vpop.permute.xlu0 %4830
    %4832 = vrot.lane.b32.xlu0 %v4785, 112
    %v4833 = vpop.permute.xlu0 %4832
    %4834 = vrot.lane.b32.xlu0 %v4787, 112
    %v4835 = vpop.permute.xlu0 %4834
    %4836 = vrot.lane.b32.xlu0 %v4789, 112
    %v4837 = vpop.permute.xlu0 %4836
    %4838 = vrot.lane.b32.xlu0 %v4791, 112
    %v4839 = vpop.permute.xlu0 %4838
    %4840 = vrot.lane.b32.xlu0 %v4793, 112
    %v4841 = vpop.permute.xlu0 %4840
    %4842 = vrot.lane.b32.xlu0 %v4795, 112
    %v4843 = vpop.permute.xlu0 %4842
    %4844 = vrot.lane.b32.xlu0 %v4797, 112
    %v4845 = vpop.permute.xlu0 %4844
    %4846 = vrot.lane.b32.xlu0 %v4799, 112
    %v4847 = vpop.permute.xlu0 %4846
    %4848 = vrot.lane.b32.xlu0 %v4801, 112
    %v4849 = vpop.permute.xlu0 %4848
    %4850 = vrot.lane.b32.xlu0 %v4803, 112
    %v4851 = vpop.permute.xlu0 %4850
    %4852 = vrot.lane.b32.xlu0 %v4805, 112
    %v4853 = vpop.permute.xlu0 %4852
    %4854 = vrot.lane.b32.xlu0 %v4807, 112
    %v4855 = vpop.permute.xlu0 %4854
    %v4872 = vadd.f32 %v4777, %v4825
    %v4873 = vadd.f32 %v4779, %v4827
    %v4874 = vadd.f32 %v4781, %v4829
    %v4875 = vadd.f32 %v4783, %v4831
    %v4876 = vadd.f32 %v4785, %v4833
    %v4877 = vadd.f32 %v4787, %v4835
    %v4878 = vadd.f32 %v4789, %v4837
    %v4879 = vadd.f32 %v4791, %v4839
    %v4880 = vadd.f32 %v4793, %v4841
    %v4881 = vadd.f32 %v4795, %v4843
    %v4882 = vadd.f32 %v4797, %v4845
    %v4883 = vadd.f32 %v4799, %v4847
    %v4884 = vadd.f32 %v4801, %v4849
    %v4885 = vadd.f32 %v4803, %v4851
    %v4886 = vadd.f32 %v4805, %v4853
    %v4887 = vadd.f32 %v4807, %v4855
    %4888 = vrot.lane.b32.xlu0 %v4777, 96
    %v4889 = vpop.permute.xlu0 %4888
    %4890 = vrot.lane.b32.xlu0 %v4779, 96
    %v4891 = vpop.permute.xlu0 %4890
    %4892 = vrot.lane.b32.xlu0 %v4781, 96
    %v4893 = vpop.permute.xlu0 %4892
    %4894 = vrot.lane.b32.xlu0 %v4783, 96
    %v4895 = vpop.permute.xlu0 %4894
    %4896 = vrot.lane.b32.xlu0 %v4785, 96
    %v4897 = vpop.permute.xlu0 %4896
    %4898 = vrot.lane.b32.xlu0 %v4787, 96
    %v4899 = vpop.permute.xlu0 %4898
    %4900 = vrot.lane.b32.xlu0 %v4789, 96
    %v4901 = vpop.permute.xlu0 %4900
    %4902 = vrot.lane.b32.xlu0 %v4791, 96
    %v4903 = vpop.permute.xlu0 %4902
    %4904 = vrot.lane.b32.xlu0 %v4793, 96
    %v4905 = vpop.permute.xlu0 %4904
    %4906 = vrot.lane.b32.xlu0 %v4795, 96
    %v4907 = vpop.permute.xlu0 %4906
    %4908 = vrot.lane.b32.xlu0 %v4797, 96
    %v4909 = vpop.permute.xlu0 %4908
    %4910 = vrot.lane.b32.xlu0 %v4799, 96
    %v4911 = vpop.permute.xlu0 %4910
    %4912 = vrot.lane.b32.xlu0 %v4801, 96
    %v4913 = vpop.permute.xlu0 %4912
    %4914 = vrot.lane.b32.xlu0 %v4803, 96
    %v4915 = vpop.permute.xlu0 %4914
    %4916 = vrot.lane.b32.xlu0 %v4805, 96
    %v4917 = vpop.permute.xlu0 %4916
    %4918 = vrot.lane.b32.xlu0 %v4807, 96
    %v4919 = vpop.permute.xlu0 %4918
    %v4936 = vadd.f32 %v4872, %v4889
    %v4937 = vadd.f32 %v4873, %v4891
    %v4938 = vadd.f32 %v4874, %v4893
    %v4939 = vadd.f32 %v4875, %v4895
    %v4940 = vadd.f32 %v4876, %v4897
    %v4941 = vadd.f32 %v4877, %v4899
    %v4942 = vadd.f32 %v4878, %v4901
    %v4943 = vadd.f32 %v4879, %v4903
    %v4944 = vadd.f32 %v4880, %v4905
    %v4945 = vadd.f32 %v4881, %v4907
    %v4946 = vadd.f32 %v4882, %v4909
    %v4947 = vadd.f32 %v4883, %v4911
    %v4948 = vadd.f32 %v4884, %v4913
    %v4949 = vadd.f32 %v4885, %v4915
    %v4950 = vadd.f32 %v4886, %v4917
    %v4951 = vadd.f32 %v4887, %v4919
    %4952 = vrot.lane.b32.xlu0 %v4777, 80
    %v4953 = vpop.permute.xlu0 %4952
    %4954 = vrot.lane.b32.xlu0 %v4779, 80
    %v4955 = vpop.permute.xlu0 %4954
    %4956 = vrot.lane.b32.xlu0 %v4781, 80
    %v4957 = vpop.permute.xlu0 %4956
    %4958 = vrot.lane.b32.xlu0 %v4783, 80
    %v4959 = vpop.permute.xlu0 %4958
    %4960 = vrot.lane.b32.xlu0 %v4785, 80
    %v4961 = vpop.permute.xlu0 %4960
    %4962 = vrot.lane.b32.xlu0 %v4787, 80
    %v4963 = vpop.permute.xlu0 %4962
    %4964 = vrot.lane.b32.xlu0 %v4789, 80
    %v4965 = vpop.permute.xlu0 %4964
    %4966 = vrot.lane.b32.xlu0 %v4791, 80
    %v4967 = vpop.permute.xlu0 %4966
    %4968 = vrot.lane.b32.xlu0 %v4793, 80
    %v4969 = vpop.permute.xlu0 %4968
    %4970 = vrot.lane.b32.xlu0 %v4795, 80
    %v4971 = vpop.permute.xlu0 %4970
    %4972 = vrot.lane.b32.xlu0 %v4797, 80
    %v4973 = vpop.permute.xlu0 %4972
    %4974 = vrot.lane.b32.xlu0 %v4799, 80
    %v4975 = vpop.permute.xlu0 %4974
    %4976 = vrot.lane.b32.xlu0 %v4801, 80
    %v4977 = vpop.permute.xlu0 %4976
    %4978 = vrot.lane.b32.xlu0 %v4803, 80
    %v4979 = vpop.permute.xlu0 %4978
    %4980 = vrot.lane.b32.xlu0 %v4805, 80
    %v4981 = vpop.permute.xlu0 %4980
    %4982 = vrot.lane.b32.xlu0 %v4807, 80
    %v4983 = vpop.permute.xlu0 %4982
    %v5000 = vadd.f32 %v4936, %v4953
    %v5001 = vadd.f32 %v4937, %v4955
    %v5002 = vadd.f32 %v4938, %v4957
    %v5003 = vadd.f32 %v4939, %v4959
    %v5004 = vadd.f32 %v4940, %v4961
    %v5005 = vadd.f32 %v4941, %v4963
    %v5006 = vadd.f32 %v4942, %v4965
    %v5007 = vadd.f32 %v4943, %v4967
    %v5008 = vadd.f32 %v4944, %v4969
    %v5009 = vadd.f32 %v4945, %v4971
    %v5010 = vadd.f32 %v4946, %v4973
    %v5011 = vadd.f32 %v4947, %v4975
    %v5012 = vadd.f32 %v4948, %v4977
    %v5013 = vadd.f32 %v4949, %v4979
    %v5014 = vadd.f32 %v4950, %v4981
    %v5015 = vadd.f32 %v4951, %v4983
    %v5016 = vrcp.pop %v5000
    %v5017 = vmul.f32 1.0, %v5016
    %v5018 = vrcp.pop %v5001
    %v5019 = vmul.f32 1.0, %v5018
    %v5020 = vrcp.pop %v5002
    %v5021 = vmul.f32 1.0, %v5020
    %v5022 = vrcp.pop %v5003
    %v5023 = vmul.f32 1.0, %v5022
    %v5024 = vrcp.pop %v5004
    %v5025 = vmul.f32 1.0, %v5024
    %v5026 = vrcp.pop %v5005
    %v5027 = vmul.f32 1.0, %v5026
    %v5028 = vrcp.pop %v5006
    %v5029 = vmul.f32 1.0, %v5028
    %v5030 = vrcp.pop %v5007
    %v5031 = vmul.f32 1.0, %v5030
    %v5032 = vrcp.pop %v5008
    %v5033 = vmul.f32 1.0, %v5032
    %v5034 = vrcp.pop %v5009
    %v5035 = vmul.f32 1.0, %v5034
    %v5036 = vrcp.pop %v5010
    %v5037 = vmul.f32 1.0, %v5036
    %v5038 = vrcp.pop %v5011
    %v5039 = vmul.f32 1.0, %v5038
    %v5040 = vrcp.pop %v5012
    %v5041 = vmul.f32 1.0, %v5040
    %v5042 = vrcp.pop %v5013
    %v5043 = vmul.f32 1.0, %v5042
    %v5044 = vrcp.pop %v5014
    %v5045 = vmul.f32 1.0, %v5044
    %v5046 = vrcp.pop %v5015
    %v5047 = vmul.f32 1.0, %v5046
    %5064 = vrot.lane.b32.xlu0 %v5017, 16
    %v5065 = vpop.permute.xlu0 %5064
    %5066 = vrot.lane.b32.xlu0 %v5019, 16
    %v5067 = vpop.permute.xlu0 %5066
    %5068 = vrot.lane.b32.xlu0 %v5021, 16
    %v5069 = vpop.permute.xlu0 %5068
    %5070 = vrot.lane.b32.xlu0 %v5023, 16
    %v5071 = vpop.permute.xlu0 %5070
    %5072 = vrot.lane.b32.xlu0 %v5025, 16
    %v5073 = vpop.permute.xlu0 %5072
    %5074 = vrot.lane.b32.xlu0 %v5027, 16
    %v5075 = vpop.permute.xlu0 %5074
    %5076 = vrot.lane.b32.xlu0 %v5029, 16
    %v5077 = vpop.permute.xlu0 %5076
    %5078 = vrot.lane.b32.xlu0 %v5031, 16
    %v5079 = vpop.permute.xlu0 %5078
    %5080 = vrot.lane.b32.xlu0 %v5033, 16
    %v5081 = vpop.permute.xlu0 %5080
    %5082 = vrot.lane.b32.xlu0 %v5035, 16
    %v5083 = vpop.permute.xlu0 %5082
    %5084 = vrot.lane.b32.xlu0 %v5037, 16
    %v5085 = vpop.permute.xlu0 %5084
    %5086 = vrot.lane.b32.xlu0 %v5039, 16
    %v5087 = vpop.permute.xlu0 %5086
    %5088 = vrot.lane.b32.xlu0 %v5041, 16
    %v5089 = vpop.permute.xlu0 %5088
    %5090 = vrot.lane.b32.xlu0 %v5043, 16
    %v5091 = vpop.permute.xlu0 %5090
    %5092 = vrot.lane.b32.xlu0 %v5045, 16
    %v5093 = vpop.permute.xlu0 %5092
    %5094 = vrot.lane.b32.xlu0 %v5047, 16
    %v5095 = vpop.permute.xlu0 %5094
    %5112 = vrot.lane.b32.xlu0 %v5017, 32
    %v5113 = vpop.permute.xlu0 %5112
    %5114 = vrot.lane.b32.xlu0 %v5019, 32
    %v5115 = vpop.permute.xlu0 %5114
    %5116 = vrot.lane.b32.xlu0 %v5021, 32
    %v5117 = vpop.permute.xlu0 %5116
    %5118 = vrot.lane.b32.xlu0 %v5023, 32
    %v5119 = vpop.permute.xlu0 %5118
    %5120 = vrot.lane.b32.xlu0 %v5025, 32
    %v5121 = vpop.permute.xlu0 %5120
    %5122 = vrot.lane.b32.xlu0 %v5027, 32
    %v5123 = vpop.permute.xlu0 %5122
    %5124 = vrot.lane.b32.xlu0 %v5029, 32
    %v5125 = vpop.permute.xlu0 %5124
    %5126 = vrot.lane.b32.xlu0 %v5031, 32
    %v5127 = vpop.permute.xlu0 %5126
    %5128 = vrot.lane.b32.xlu0 %v5033, 32
    %v5129 = vpop.permute.xlu0 %5128
    %5130 = vrot.lane.b32.xlu0 %v5035, 32
    %v5131 = vpop.permute.xlu0 %5130
    %5132 = vrot.lane.b32.xlu0 %v5037, 32
    %v5133 = vpop.permute.xlu0 %5132
    %5134 = vrot.lane.b32.xlu0 %v5039, 32
    %v5135 = vpop.permute.xlu0 %5134
    %5136 = vrot.lane.b32.xlu0 %v5041, 32
    %v5137 = vpop.permute.xlu0 %5136
    %5138 = vrot.lane.b32.xlu0 %v5043, 32
    %v5139 = vpop.permute.xlu0 %5138
    %5140 = vrot.lane.b32.xlu0 %v5045, 32
    %v5141 = vpop.permute.xlu0 %5140
    %5142 = vrot.lane.b32.xlu0 %v5047, 32
    %v5143 = vpop.permute.xlu0 %5142
    %5160 = vrot.lane.b32.xlu0 %v5017, 48
    %v5161 = vpop.permute.xlu0 %5160
    %5162 = vrot.lane.b32.xlu0 %v5019, 48
    %v5163 = vpop.permute.xlu0 %5162
    %5164 = vrot.lane.b32.xlu0 %v5021, 48
    %v5165 = vpop.permute.xlu0 %5164
    %5166 = vrot.lane.b32.xlu0 %v5023, 48
    %v5167 = vpop.permute.xlu0 %5166
    %5168 = vrot.lane.b32.xlu0 %v5025, 48
    %v5169 = vpop.permute.xlu0 %5168
    %5170 = vrot.lane.b32.xlu0 %v5027, 48
    %v5171 = vpop.permute.xlu0 %5170
    %5172 = vrot.lane.b32.xlu0 %v5029, 48
    %v5173 = vpop.permute.xlu0 %5172
    %5174 = vrot.lane.b32.xlu0 %v5031, 48
    %v5175 = vpop.permute.xlu0 %5174
    %5176 = vrot.lane.b32.xlu0 %v5033, 48
    %v5177 = vpop.permute.xlu0 %5176
    %5178 = vrot.lane.b32.xlu0 %v5035, 48
    %v5179 = vpop.permute.xlu0 %5178
    %5180 = vrot.lane.b32.xlu0 %v5037, 48
    %v5181 = vpop.permute.xlu0 %5180
    %5182 = vrot.lane.b32.xlu0 %v5039, 48
    %v5183 = vpop.permute.xlu0 %5182
    %5184 = vrot.lane.b32.xlu0 %v5041, 48
    %v5185 = vpop.permute.xlu0 %5184
    %5186 = vrot.lane.b32.xlu0 %v5043, 48
    %v5187 = vpop.permute.xlu0 %5186
    %5188 = vrot.lane.b32.xlu0 %v5045, 48
    %v5189 = vpop.permute.xlu0 %5188
    %5190 = vrot.lane.b32.xlu0 %v5047, 48
    %v5191 = vpop.permute.xlu0 %5190
    %v5208 = vsel %vm1608, %v5017, %v5065
    %v5209 = vsel %vm1608, %v5019, %v5067
    %v5210 = vsel %vm1608, %v5021, %v5069
    %v5211 = vsel %vm1608, %v5023, %v5071
    %v5212 = vsel %vm1608, %v5025, %v5073
    %v5213 = vsel %vm1608, %v5027, %v5075
    %v5214 = vsel %vm1608, %v5029, %v5077
    %v5215 = vsel %vm1608, %v5031, %v5079
    %v5216 = vsel %vm1608, %v5033, %v5081
    %v5217 = vsel %vm1608, %v5035, %v5083
    %v5218 = vsel %vm1608, %v5037, %v5085
    %v5219 = vsel %vm1608, %v5039, %v5087
    %v5220 = vsel %vm1608, %v5041, %v5089
    %v5221 = vsel %vm1608, %v5043, %v5091
    %v5222 = vsel %vm1608, %v5045, %v5093
    %v5223 = vsel %vm1608, %v5047, %v5095
    %v5224 = vsel %vm1625, %v5208, %v5113
    %v5225 = vsel %vm1625, %v5209, %v5115
    %v5226 = vsel %vm1625, %v5210, %v5117
    %v5227 = vsel %vm1625, %v5211, %v5119
    %v5228 = vsel %vm1625, %v5212, %v5121
    %v5229 = vsel %vm1625, %v5213, %v5123
    %v5230 = vsel %vm1625, %v5214, %v5125
    %v5231 = vsel %vm1625, %v5215, %v5127
    %v5232 = vsel %vm1625, %v5216, %v5129
    %v5233 = vsel %vm1625, %v5217, %v5131
    %v5234 = vsel %vm1625, %v5218, %v5133
    %v5235 = vsel %vm1625, %v5219, %v5135
    %v5236 = vsel %vm1625, %v5220, %v5137
    %v5237 = vsel %vm1625, %v5221, %v5139
    %v5238 = vsel %vm1625, %v5222, %v5141
    %v5239 = vsel %vm1625, %v5223, %v5143
    %v5240 = vsel %vm1642, %v5224, %v5161
    %v5241 = vsel %vm1642, %v5225, %v5163
    %v5242 = vsel %vm1642, %v5226, %v5165
    %v5243 = vsel %vm1642, %v5227, %v5167
    %v5244 = vsel %vm1642, %v5228, %v5169
    %v5245 = vsel %vm1642, %v5229, %v5171
    %v5246 = vsel %vm1642, %v5230, %v5173
    %v5247 = vsel %vm1642, %v5231, %v5175
    %v5248 = vsel %vm1642, %v5232, %v5177
    %v5249 = vsel %vm1642, %v5233, %v5179
    %v5250 = vsel %vm1642, %v5234, %v5181
    %v5251 = vsel %vm1642, %v5235, %v5183
    %v5252 = vsel %vm1642, %v5236, %v5185
    %v5253 = vsel %vm1642, %v5237, %v5187
    %v5254 = vsel %vm1642, %v5238, %v5189
    %v5255 = vsel %vm1642, %v5239, %v5191
    %v5256 = vmul.f32 %v4777, %v5240
    %v5257 = vmul.f32 %v4779, %v5241
    %v5258 = vmul.f32 %v4781, %v5242
    %v5259 = vmul.f32 %v4783, %v5243
    %v5260 = vmul.f32 %v4785, %v5244
    %v5261 = vmul.f32 %v4787, %v5245
    %v5262 = vmul.f32 %v4789, %v5246
    %v5263 = vmul.f32 %v4791, %v5247
    %v5264 = vmul.f32 %v4793, %v5248
    %v5265 = vmul.f32 %v4795, %v5249
    %v5266 = vmul.f32 %v4797, %v5250
    %v5267 = vmul.f32 %v4799, %v5251
    %v5268 = vmul.f32 %v4801, %v5252
    %v5269 = vmul.f32 %v4803, %v5253
    %v5270 = vmul.f32 %v4805, %v5254
    %v5271 = vmul.f32 %v4807, %v5255
    %v5273 = vsel %vm2171, %v5256, 0
    %v5276 = vsel %vm2171, %v5257, 0
    %v5279 = vsel %vm2171, %v5258, 0
    %v5282 = vsel %vm2171, %v5259, 0
    %v5285 = vsel %vm2171, %v5260, 0
    %v5288 = vsel %vm2171, %v5261, 0
    %v5291 = vsel %vm2171, %v5262, 0
    %v5294 = vsel %vm2171, %v5263, 0
    %v5297 = vsel %vm2171, %v5264, 0
    %v5300 = vsel %vm2171, %v5265, 0
    %v5303 = vsel %vm2171, %v5266, 0
    %v5306 = vsel %vm2171, %v5267, 0
    %v5309 = vsel %vm2171, %v5268, 0
    %v5312 = vsel %vm2171, %v5269, 0
    %v5315 = vsel %vm2171, %v5270, 0
    %v5318 = vsel %vm2171, %v5271, 0
    %5320 = vmatprep.subr.mxu0 0.0
    %5321 = vmatpush1.msra.mxu0 0.0
    %5322 = vmatprep.subr.mxu0 0.0
    %5323 = vmatpush1.msra.mxu0 0.0
    %5324 = vmatprep.subr.mxu0 0.0
    %5325 = vmatpush1.msra.mxu0 0.0
    %5326 = vmatprep.subr.mxu0 0.0
    %5327 = vmatpush1.msra.mxu0 0.0
    %5328 = vmatprep.subr.mxu0 0.0
    %5329 = vmatpush1.msra.mxu0 0.0
    %5330 = vmatprep.subr.mxu0 0.0
    %5331 = vmatpush1.msra.mxu0 0.0
    %5332 = vmatprep.subr.mxu0 0.0
    %5333 = vmatpush1.msra.mxu0 0.0
    %5334 = vmatprep.subr.mxu0 0.0
    %5335 = vmatpush1.msra.mxu0 0.0
    %5336 = vmatprep.subr.mxu0 %v141
    %5337 = vmatpush1.msra.mxu0 %v140
    %5338 = vmatprep.subr.mxu0 %v137
    %5339 = vmatpush1.msra.mxu0 %v136
    %5340 = vmatprep.subr.mxu0 %v133
    %5341 = vmatpush1.msra.mxu0 %v132
    %5342 = vmatprep.subr.mxu0 %v129
    %5343 = vmatpush1.msra.mxu0 %v128
    %5344 = vmatprep.subr.mxu0 %v125
    %5345 = vmatpush1.msra.mxu0 %v124
    %5346 = vmatprep.subr.mxu0 %v121
    %5347 = vmatpush1.msra.mxu0 %v120
    %5348 = vmatprep.subr.mxu0 %v117
    %5349 = vmatpush1.msra.mxu0 %v116
    %5350 = vmatprep.subr.mxu0 %v113
    %5351 = vmatpush1.msra.mxu0 %v112
    %5352 = vmatprep.subr.mxu0 0.0
    %5353 = vmatpush2.msra.mxu0 0.0
    %5354 = vmatprep.subr.mxu0 0.0
    %5355 = vmatpush2.msra.mxu0 0.0
    %5356 = vmatprep.subr.mxu0 0.0
    %5357 = vmatpush2.msra.mxu0 0.0
    %5358 = vmatprep.subr.mxu0 0.0
    %5359 = vmatpush2.msra.mxu0 0.0
    %5360 = vmatprep.subr.mxu0 0.0
    %5361 = vmatpush2.msra.mxu0 0.0
    %5362 = vmatprep.subr.mxu0 0.0
    %5363 = vmatpush2.msra.mxu0 0.0
    %5364 = vmatprep.subr.mxu0 0.0
    %5365 = vmatpush2.msra.mxu0 0.0
    %5366 = vmatprep.subr.mxu0 0.0
    %5367 = vmatpush2.msra.mxu0 0.0
    %5368 = vmatprep.subr.mxu0 0.0
    %5369 = vmatpush2.msra.mxu0 0.0
    %5370 = vmatprep.subr.mxu0 0.0
    %5371 = vmatpush2.msra.mxu0 0.0
    %5372 = vmatprep.subr.mxu0 0.0
    %5373 = vmatpush2.msra.mxu0 0.0
    %5374 = vmatprep.subr.mxu0 0.0
    %5375 = vmatpush2.msra.mxu0 0.0
    %5376 = vmatprep.subr.mxu0 0.0
    %5377 = vmatpush2.msra.mxu0 0.0
    %5378 = vmatprep.subr.mxu0 0.0
    %5379 = vmatpush2.msra.mxu0 0.0
    %5380 = vmatprep.subr.mxu0 0.0
    %5381 = vmatpush2.msra.mxu0 0.0
    %5382 = vmatprep.subr.mxu0 0.0
    %5383 = vmatpush2.msra.mxu0 0.0
    %5384 = vmatprep.mubr.f32.mxu0 0.0
    %5385 = vmatmul.mubr.f32.gmra.mxu0 %v5273
    %v5386 = vpop.f32.mrf.mxu0
    %v5387 = vadd.f32 0.0, %v5386
    %v5388 = vpop.f32.mrf.mxu0
    %v5389 = vadd.f32 0.0, %v5388
    %5390 = vmatprep.mubr.f32.mxu0 0.0
    %5391 = vmatmul.mubr.f32.gmra.mxu0 %v5276
    %v5392 = vpop.f32.mrf.mxu0
    %v5393 = vadd.f32 0.0, %v5392
    %v5394 = vpop.f32.mrf.mxu0
    %v5395 = vadd.f32 0.0, %v5394
    %5396 = vmatprep.mubr.f32.mxu0 0.0
    %5397 = vmatmul.mubr.f32.gmra.mxu0 %v5279
    %v5398 = vpop.f32.mrf.mxu0
    %v5399 = vadd.f32 0.0, %v5398
    %v5400 = vpop.f32.mrf.mxu0
    %v5401 = vadd.f32 0.0, %v5400
    %5402 = vmatprep.mubr.f32.mxu0 0.0
    %5403 = vmatmul.mubr.f32.gmra.mxu0 %v5282
    %v5404 = vpop.f32.mrf.mxu0
    %v5405 = vadd.f32 0.0, %v5404
    %v5406 = vpop.f32.mrf.mxu0
    %v5407 = vadd.f32 0.0, %v5406
    %5408 = vmatprep.mubr.f32.mxu0 0.0
    %5409 = vmatmul.mubr.f32.gmra.mxu0 %v5285
    %v5410 = vpop.f32.mrf.mxu0
    %v5411 = vadd.f32 0.0, %v5410
    %v5412 = vpop.f32.mrf.mxu0
    %v5413 = vadd.f32 0.0, %v5412
    %5414 = vmatprep.mubr.f32.mxu0 0.0
    %5415 = vmatmul.mubr.f32.gmra.mxu0 %v5288
    %v5416 = vpop.f32.mrf.mxu0
    %v5417 = vadd.f32 0.0, %v5416
    %v5418 = vpop.f32.mrf.mxu0
    %v5419 = vadd.f32 0.0, %v5418
    %5420 = vmatprep.mubr.f32.mxu0 0.0
    %5421 = vmatmul.mubr.f32.gmra.mxu0 %v5291
    %v5422 = vpop.f32.mrf.mxu0
    %v5423 = vadd.f32 0.0, %v5422
    %v5424 = vpop.f32.mrf.mxu0
    %v5425 = vadd.f32 0.0, %v5424
    %5426 = vmatprep.mubr.f32.mxu0 0.0
    %5427 = vmatmul.mubr.f32.gmra.mxu0 %v5294
    %v5428 = vpop.f32.mrf.mxu0
    %v5429 = vadd.f32 0.0, %v5428
    %v5430 = vpop.f32.mrf.mxu0
    %v5431 = vadd.f32 0.0, %v5430
    %5432 = vmatprep.mubr.f32.mxu0 0.0
    %5433 = vmatmul.mubr.f32.gmra.mxu0 %v5297
    %v5434 = vpop.f32.mrf.mxu0
    %v5435 = vadd.f32 0.0, %v5434
    %v5436 = vpop.f32.mrf.mxu0
    %v5437 = vadd.f32 0.0, %v5436
    %5438 = vmatprep.mubr.f32.mxu0 0.0
    %5439 = vmatmul.mubr.f32.gmra.mxu0 %v5300
    %v5440 = vpop.f32.mrf.mxu0
    %v5441 = vadd.f32 0.0, %v5440
    %v5442 = vpop.f32.mrf.mxu0
    %v5443 = vadd.f32 0.0, %v5442
    %5444 = vmatprep.mubr.f32.mxu0 0.0
    %5445 = vmatmul.mubr.f32.gmra.mxu0 %v5303
    %v5446 = vpop.f32.mrf.mxu0
    %v5447 = vadd.f32 0.0, %v5446
    %v5448 = vpop.f32.mrf.mxu0
    %v5449 = vadd.f32 0.0, %v5448
    %5450 = vmatprep.mubr.f32.mxu0 0.0
    %5451 = vmatmul.mubr.f32.gmra.mxu0 %v5306
    %v5452 = vpop.f32.mrf.mxu0
    %v5453 = vadd.f32 0.0, %v5452
    %v5454 = vpop.f32.mrf.mxu0
    %v5455 = vadd.f32 0.0, %v5454
    %5456 = vmatprep.mubr.f32.mxu0 0.0
    %5457 = vmatmul.mubr.f32.gmra.mxu0 %v5309
    %v5458 = vpop.f32.mrf.mxu0
    %v5459 = vadd.f32 0.0, %v5458
    %v5460 = vpop.f32.mrf.mxu0
    %v5461 = vadd.f32 0.0, %v5460
    %5462 = vmatprep.mubr.f32.mxu0 0.0
    %5463 = vmatmul.mubr.f32.gmra.mxu0 %v5312
    %v5464 = vpop.f32.mrf.mxu0
    %v5465 = vadd.f32 0.0, %v5464
    %v5466 = vpop.f32.mrf.mxu0
    %v5467 = vadd.f32 0.0, %v5466
    %5468 = vmatprep.mubr.f32.mxu0 0.0
    %5469 = vmatmul.mubr.f32.gmra.mxu0 %v5315
    %v5470 = vpop.f32.mrf.mxu0
    %v5471 = vadd.f32 0.0, %v5470
    %v5472 = vpop.f32.mrf.mxu0
    %v5473 = vadd.f32 0.0, %v5472
    %5474 = vmatprep.mubr.f32.mxu0 0.0
    %5475 = vmatmul.mubr.f32.gmra.mxu0 %v5318
    %v5476 = vpop.f32.mrf.mxu0
    %v5477 = vadd.f32 0.0, %v5476
    %v5478 = vpop.f32.mrf.mxu0
    %v5479 = vadd.f32 0.0, %v5478
    %5480 = vdwg.mxu0
    %5481 = vmatprep.subr.mxu0 0.0
    %5482 = vmatpush1.msra.mxu0 0.0
    %5483 = vmatprep.subr.mxu0 0.0
    %5484 = vmatpush1.msra.mxu0 0.0
    %5485 = vmatprep.subr.mxu0 0.0
    %5486 = vmatpush1.msra.mxu0 0.0
    %5487 = vmatprep.subr.mxu0 0.0
    %5488 = vmatpush1.msra.mxu0 0.0
    %5489 = vmatprep.subr.mxu0 0.0
    %5490 = vmatpush1.msra.mxu0 0.0
    %5491 = vmatprep.subr.mxu0 0.0
    %5492 = vmatpush1.msra.mxu0 0.0
    %5493 = vmatprep.subr.mxu0 0.0
    %5494 = vmatpush1.msra.mxu0 0.0
    %5495 = vmatprep.subr.mxu0 0.0
    %5496 = vmatpush1.msra.mxu0 0.0
    %5497 = vmatprep.subr.mxu0 %v143
    %5498 = vmatpush1.msra.mxu0 %v142
    %5499 = vmatprep.subr.mxu0 %v139
    %5500 = vmatpush1.msra.mxu0 %v138
    %5501 = vmatprep.subr.mxu0 %v135
    %5502 = vmatpush1.msra.mxu0 %v134
    %5503 = vmatprep.subr.mxu0 %v131
    %5504 = vmatpush1.msra.mxu0 %v130
    %5505 = vmatprep.subr.mxu0 %v127
    %5506 = vmatpush1.msra.mxu0 %v126
    %5507 = vmatprep.subr.mxu0 %v123
    %5508 = vmatpush1.msra.mxu0 %v122
    %5509 = vmatprep.subr.mxu0 %v119
    %5510 = vmatpush1.msra.mxu0 %v118
    %5511 = vmatprep.subr.mxu0 %v115
    %5512 = vmatpush1.msra.mxu0 %v114
    %5513 = vmatprep.subr.mxu0 0.0
    %5514 = vmatpush2.msra.mxu0 0.0
    %5515 = vmatprep.subr.mxu0 0.0
    %5516 = vmatpush2.msra.mxu0 0.0
    %5517 = vmatprep.subr.mxu0 0.0
    %5518 = vmatpush2.msra.mxu0 0.0
    %5519 = vmatprep.subr.mxu0 0.0
    %5520 = vmatpush2.msra.mxu0 0.0
    %5521 = vmatprep.subr.mxu0 0.0
    %5522 = vmatpush2.msra.mxu0 0.0
    %5523 = vmatprep.subr.mxu0 0.0
    %5524 = vmatpush2.msra.mxu0 0.0
    %5525 = vmatprep.subr.mxu0 0.0
    %5526 = vmatpush2.msra.mxu0 0.0
    %5527 = vmatprep.subr.mxu0 0.0
    %5528 = vmatpush2.msra.mxu0 0.0
    %5529 = vmatprep.subr.mxu0 0.0
    %5530 = vmatpush2.msra.mxu0 0.0
    %5531 = vmatprep.subr.mxu0 0.0
    %5532 = vmatpush2.msra.mxu0 0.0
    %5533 = vmatprep.subr.mxu0 0.0
    %5534 = vmatpush2.msra.mxu0 0.0
    %5535 = vmatprep.subr.mxu0 0.0
    %5536 = vmatpush2.msra.mxu0 0.0
    %5537 = vmatprep.subr.mxu0 0.0
    %5538 = vmatpush2.msra.mxu0 0.0
    %5539 = vmatprep.subr.mxu0 0.0
    %5540 = vmatpush2.msra.mxu0 0.0
    %5541 = vmatprep.subr.mxu0 0.0
    %5542 = vmatpush2.msra.mxu0 0.0
    %5543 = vmatprep.subr.mxu0 0.0
    %5544 = vmatpush2.msra.mxu0 0.0
    %5545 = vmatprep.mubr.f32.mxu0 0.0
    %5546 = vmatmul.mubr.f32.gmra.mxu0 %v5273
    %v5547 = vpop.f32.mrf.mxu0
    %v5548 = vadd.f32 0.0, %v5547
    %v5549 = vpop.f32.mrf.mxu0
    %v5550 = vadd.f32 0.0, %v5549
    %5551 = vmatprep.mubr.f32.mxu0 0.0
    %5552 = vmatmul.mubr.f32.gmra.mxu0 %v5276
    %v5553 = vpop.f32.mrf.mxu0
    %v5554 = vadd.f32 0.0, %v5553
    %v5555 = vpop.f32.mrf.mxu0
    %v5556 = vadd.f32 0.0, %v5555
    %5557 = vmatprep.mubr.f32.mxu0 0.0
    %5558 = vmatmul.mubr.f32.gmra.mxu0 %v5279
    %v5559 = vpop.f32.mrf.mxu0
    %v5560 = vadd.f32 0.0, %v5559
    %v5561 = vpop.f32.mrf.mxu0
    %v5562 = vadd.f32 0.0, %v5561
    %5563 = vmatprep.mubr.f32.mxu0 0.0
    %5564 = vmatmul.mubr.f32.gmra.mxu0 %v5282
    %v5565 = vpop.f32.mrf.mxu0
    %v5566 = vadd.f32 0.0, %v5565
    %v5567 = vpop.f32.mrf.mxu0
    %v5568 = vadd.f32 0.0, %v5567
    %5569 = vmatprep.mubr.f32.mxu0 0.0
    %5570 = vmatmul.mubr.f32.gmra.mxu0 %v5285
    %v5571 = vpop.f32.mrf.mxu0
    %v5572 = vadd.f32 0.0, %v5571
    %v5573 = vpop.f32.mrf.mxu0
    %v5574 = vadd.f32 0.0, %v5573
    %5575 = vmatprep.mubr.f32.mxu0 0.0
    %5576 = vmatmul.mubr.f32.gmra.mxu0 %v5288
    %v5577 = vpop.f32.mrf.mxu0
    %v5578 = vadd.f32 0.0, %v5577
    %v5579 = vpop.f32.mrf.mxu0
    %v5580 = vadd.f32 0.0, %v5579
    %5581 = vmatprep.mubr.f32.mxu0 0.0
    %5582 = vmatmul.mubr.f32.gmra.mxu0 %v5291
    %v5583 = vpop.f32.mrf.mxu0
    %v5584 = vadd.f32 0.0, %v5583
    %v5585 = vpop.f32.mrf.mxu0
    %v5586 = vadd.f32 0.0, %v5585
    %5587 = vmatprep.mubr.f32.mxu0 0.0
    %5588 = vmatmul.mubr.f32.gmra.mxu0 %v5294
    %v5589 = vpop.f32.mrf.mxu0
    %v5590 = vadd.f32 0.0, %v5589
    %v5591 = vpop.f32.mrf.mxu0
    %v5592 = vadd.f32 0.0, %v5591
    %5593 = vmatprep.mubr.f32.mxu0 0.0
    %5594 = vmatmul.mubr.f32.gmra.mxu0 %v5297
    %v5595 = vpop.f32.mrf.mxu0
    %v5596 = vadd.f32 0.0, %v5595
    %v5597 = vpop.f32.mrf.mxu0
    %v5598 = vadd.f32 0.0, %v5597
    %5599 = vmatprep.mubr.f32.mxu0 0.0
    %5600 = vmatmul.mubr.f32.gmra.mxu0 %v5300
    %v5601 = vpop.f32.mrf.mxu0
    %v5602 = vadd.f32 0.0, %v5601
    %v5603 = vpop.f32.mrf.mxu0
    %v5604 = vadd.f32 0.0, %v5603
    %5605 = vmatprep.mubr.f32.mxu0 0.0
    %5606 = vmatmul.mubr.f32.gmra.mxu0 %v5303
    %v5607 = vpop.f32.mrf.mxu0
    %v5608 = vadd.f32 0.0, %v5607
    %v5609 = vpop.f32.mrf.mxu0
    %v5610 = vadd.f32 0.0, %v5609
    %5611 = vmatprep.mubr.f32.mxu0 0.0
    %5612 = vmatmul.mubr.f32.gmra.mxu0 %v5306
    %v5613 = vpop.f32.mrf.mxu0
    %v5614 = vadd.f32 0.0, %v5613
    %v5615 = vpop.f32.mrf.mxu0
    %v5616 = vadd.f32 0.0, %v5615
    %5617 = vmatprep.mubr.f32.mxu0 0.0
    %5618 = vmatmul.mubr.f32.gmra.mxu0 %v5309
    %v5619 = vpop.f32.mrf.mxu0
    %v5620 = vadd.f32 0.0, %v5619
    %v5621 = vpop.f32.mrf.mxu0
    %v5622 = vadd.f32 0.0, %v5621
    %5623 = vmatprep.mubr.f32.mxu0 0.0
    %5624 = vmatmul.mubr.f32.gmra.mxu0 %v5312
    %v5625 = vpop.f32.mrf.mxu0
    %v5626 = vadd.f32 0.0, %v5625
    %v5627 = vpop.f32.mrf.mxu0
    %v5628 = vadd.f32 0.0, %v5627
    %5629 = vmatprep.mubr.f32.mxu0 0.0
    %5630 = vmatmul.mubr.f32.gmra.mxu0 %v5315
    %v5631 = vpop.f32.mrf.mxu0
    %v5632 = vadd.f32 0.0, %v5631
    %v5633 = vpop.f32.mrf.mxu0
    %v5634 = vadd.f32 0.0, %v5633
    %5635 = vmatprep.mubr.f32.mxu0 0.0
    %5636 = vmatmul.mubr.f32.gmra.mxu0 %v5318
    %v5637 = vpop.f32.mrf.mxu0
    %v5638 = vadd.f32 0.0, %v5637
    %v5639 = vpop.f32.mrf.mxu0
    %v5640 = vadd.f32 0.0, %v5639
    %5641 = vdwg.mxu0
    %v5642 = vmul.f32 %v5387, %v3898
    %v5643 = vmul.f32 %v5389, %v3898
    %v5644 = vmul.f32 %v5548, %v3898
    %v5645 = vmul.f32 %v5550, %v3898
    %v5646 = vmul.f32 %v5393, %v3904
    %v5647 = vmul.f32 %v5395, %v3904
    %v5648 = vmul.f32 %v5554, %v3904
    %v5649 = vmul.f32 %v5556, %v3904
    %v5650 = vmul.f32 %v5399, %v3910
    %v5651 = vmul.f32 %v5401, %v3910
    %v5652 = vmul.f32 %v5560, %v3910
    %v5653 = vmul.f32 %v5562, %v3910
    %v5654 = vmul.f32 %v5405, %v3916
    %v5655 = vmul.f32 %v5407, %v3916
    %v5656 = vmul.f32 %v5566, %v3916
    %v5657 = vmul.f32 %v5568, %v3916
    %v5658 = vmul.f32 %v5411, %v3922
    %v5659 = vmul.f32 %v5413, %v3922
    %v5660 = vmul.f32 %v5572, %v3922
    %v5661 = vmul.f32 %v5574, %v3922
    %v5662 = vmul.f32 %v5417, %v3928
    %v5663 = vmul.f32 %v5419, %v3928
    %v5664 = vmul.f32 %v5578, %v3928
    %v5665 = vmul.f32 %v5580, %v3928
    %v5666 = vmul.f32 %v5423, %v3934
    %v5667 = vmul.f32 %v5425, %v3934
    %v5668 = vmul.f32 %v5584, %v3934
    %v5669 = vmul.f32 %v5586, %v3934
    %v5670 = vmul.f32 %v5429, %v3940
    %v5671 = vmul.f32 %v5431, %v3940
    %v5672 = vmul.f32 %v5590, %v3940
    %v5673 = vmul.f32 %v5592, %v3940
    %v5674 = vmul.f32 %v5435, %v3946
    %v5675 = vmul.f32 %v5437, %v3946
    %v5676 = vmul.f32 %v5596, %v3946
    %v5677 = vmul.f32 %v5598, %v3946
    %v5678 = vmul.f32 %v5441, %v3952
    %v5679 = vmul.f32 %v5443, %v3952
    %v5680 = vmul.f32 %v5602, %v3952
    %v5681 = vmul.f32 %v5604, %v3952
    %v5682 = vmul.f32 %v5447, %v3958
    %v5683 = vmul.f32 %v5449, %v3958
    %v5684 = vmul.f32 %v5608, %v3958
    %v5685 = vmul.f32 %v5610, %v3958
    %v5686 = vmul.f32 %v5453, %v3964
    %v5687 = vmul.f32 %v5455, %v3964
    %v5688 = vmul.f32 %v5614, %v3964
    %v5689 = vmul.f32 %v5616, %v3964
    %v5690 = vmul.f32 %v5459, %v3970
    %v5691 = vmul.f32 %v5461, %v3970
    %v5692 = vmul.f32 %v5620, %v3970
    %v5693 = vmul.f32 %v5622, %v3970
    %v5694 = vmul.f32 %v5465, %v3976
    %v5695 = vmul.f32 %v5467, %v3976
    %v5696 = vmul.f32 %v5626, %v3976
    %v5697 = vmul.f32 %v5628, %v3976
    %v5698 = vmul.f32 %v5471, %v3982
    %v5699 = vmul.f32 %v5473, %v3982
    %v5700 = vmul.f32 %v5632, %v3982
    %v5701 = vmul.f32 %v5634, %v3982
    %v5702 = vmul.f32 %v5477, %v3988
    %v5703 = vmul.f32 %v5479, %v3988
    %v5704 = vmul.f32 %v5638, %v3988
    %v5705 = vmul.f32 %v5640, %v3988
    %5706 = vmatprep.subr.mxu0 0.0
    %5707 = vmatpush1.msra.mxu0 %v223
    %5708 = vmatprep.subr.mxu0 0.0
    %5709 = vmatpush1.msra.mxu0 %v222
    %5710 = vmatprep.subr.mxu0 0.0
    %5711 = vmatpush1.msra.mxu0 %v221
    %5712 = vmatprep.subr.mxu0 0.0
    %5713 = vmatpush1.msra.mxu0 %v220
    %5714 = vmatprep.subr.mxu0 0.0
    %5715 = vmatpush1.msra.mxu0 %v219
    %5716 = vmatprep.subr.mxu0 0.0
    %5717 = vmatpush1.msra.mxu0 %v218
    %5718 = vmatprep.subr.mxu0 0.0
    %5719 = vmatpush1.msra.mxu0 %v217
    %5720 = vmatprep.subr.mxu0 0.0
    %5721 = vmatpush1.msra.mxu0 %v216
    %5722 = vmatprep.subr.mxu0 0.0
    %5723 = vmatpush1.msra.mxu0 %v215
    %5724 = vmatprep.subr.mxu0 0.0
    %5725 = vmatpush1.msra.mxu0 %v214
    %5726 = vmatprep.subr.mxu0 0.0
    %5727 = vmatpush1.msra.mxu0 %v213
    %5728 = vmatprep.subr.mxu0 0.0
    %5729 = vmatpush1.msra.mxu0 %v212
    %5730 = vmatprep.subr.mxu0 0.0
    %5731 = vmatpush1.msra.mxu0 %v211
    %5732 = vmatprep.subr.mxu0 0.0
    %5733 = vmatpush1.msra.mxu0 %v210
    %5734 = vmatprep.subr.mxu0 0.0
    %5735 = vmatpush1.msra.mxu0 %v209
    %5736 = vmatprep.subr.mxu0 0.0
    %5737 = vmatpush1.msra.mxu0 %v208
    %5738 = vmatprep.subr.mxu0 0.0
    %5739 = vmatpush2.msra.mxu0 %v239
    %5740 = vmatprep.subr.mxu0 0.0
    %5741 = vmatpush2.msra.mxu0 %v238
    %5742 = vmatprep.subr.mxu0 0.0
    %5743 = vmatpush2.msra.mxu0 %v237
    %5744 = vmatprep.subr.mxu0 0.0
    %5745 = vmatpush2.msra.mxu0 %v236
    %5746 = vmatprep.subr.mxu0 0.0
    %5747 = vmatpush2.msra.mxu0 %v235
    %5748 = vmatprep.subr.mxu0 0.0
    %5749 = vmatpush2.msra.mxu0 %v234
    %5750 = vmatprep.subr.mxu0 0.0
    %5751 = vmatpush2.msra.mxu0 %v233
    %5752 = vmatprep.subr.mxu0 0.0
    %5753 = vmatpush2.msra.mxu0 %v232
    %5754 = vmatprep.subr.mxu0 0.0
    %5755 = vmatpush2.msra.mxu0 %v231
    %5756 = vmatprep.subr.mxu0 0.0
    %5757 = vmatpush2.msra.mxu0 %v230
    %5758 = vmatprep.subr.mxu0 0.0
    %5759 = vmatpush2.msra.mxu0 %v229
    %5760 = vmatprep.subr.mxu0 0.0
    %5761 = vmatpush2.msra.mxu0 %v228
    %5762 = vmatprep.subr.mxu0 0.0
    %5763 = vmatpush2.msra.mxu0 %v227
    %5764 = vmatprep.subr.mxu0 0.0
    %5765 = vmatpush2.msra.mxu0 %v226
    %5766 = vmatprep.subr.mxu0 0.0
    %5767 = vmatpush2.msra.mxu0 %v225
    %5768 = vmatprep.subr.mxu0 0.0
    %5769 = vmatpush2.msra.mxu0 %v224
    %5770 = vmatprep.mubr.f32.mxu0 %v5643
    %5771 = vmatmul.mubr.f32.gmra.mxu0 %v5642
    %v5772 = vpop.f32.mrf.mxu0
    %v5773 = vadd.f32 0.0, %v5772
    %v5774 = vpop.f32.mrf.mxu0
    %5775 = vmatprep.mubr.f32.mxu0 %v5647
    %5776 = vmatmul.mubr.f32.gmra.mxu0 %v5646
    %v5777 = vpop.f32.mrf.mxu0
    %v5778 = vadd.f32 0.0, %v5777
    %v5779 = vpop.f32.mrf.mxu0
    %5780 = vmatprep.mubr.f32.mxu0 %v5651
    %5781 = vmatmul.mubr.f32.gmra.mxu0 %v5650
    %v5782 = vpop.f32.mrf.mxu0
    %v5783 = vadd.f32 0.0, %v5782
    %v5784 = vpop.f32.mrf.mxu0
    %5785 = vmatprep.mubr.f32.mxu0 %v5655
    %5786 = vmatmul.mubr.f32.gmra.mxu0 %v5654
    %v5787 = vpop.f32.mrf.mxu0
    %v5788 = vadd.f32 0.0, %v5787
    %v5789 = vpop.f32.mrf.mxu0
    %5790 = vmatprep.mubr.f32.mxu0 %v5659
    %5791 = vmatmul.mubr.f32.gmra.mxu0 %v5658
    %v5792 = vpop.f32.mrf.mxu0
    %v5793 = vadd.f32 0.0, %v5792
    %v5794 = vpop.f32.mrf.mxu0
    %5795 = vmatprep.mubr.f32.mxu0 %v5663
    %5796 = vmatmul.mubr.f32.gmra.mxu0 %v5662
    %v5797 = vpop.f32.mrf.mxu0
    %v5798 = vadd.f32 0.0, %v5797
    %v5799 = vpop.f32.mrf.mxu0
    %5800 = vmatprep.mubr.f32.mxu0 %v5667
    %5801 = vmatmul.mubr.f32.gmra.mxu0 %v5666
    %v5802 = vpop.f32.mrf.mxu0
    %v5803 = vadd.f32 0.0, %v5802
    %v5804 = vpop.f32.mrf.mxu0
    %5805 = vmatprep.mubr.f32.mxu0 %v5671
    %5806 = vmatmul.mubr.f32.gmra.mxu0 %v5670
    %v5807 = vpop.f32.mrf.mxu0
    %v5808 = vadd.f32 0.0, %v5807
    %v5809 = vpop.f32.mrf.mxu0
    %5810 = vmatprep.mubr.f32.mxu0 %v5675
    %5811 = vmatmul.mubr.f32.gmra.mxu0 %v5674
    %v5812 = vpop.f32.mrf.mxu0
    %v5813 = vadd.f32 0.0, %v5812
    %v5814 = vpop.f32.mrf.mxu0
    %5815 = vmatprep.mubr.f32.mxu0 %v5679
    %5816 = vmatmul.mubr.f32.gmra.mxu0 %v5678
    %v5817 = vpop.f32.mrf.mxu0
    %v5818 = vadd.f32 0.0, %v5817
    %v5819 = vpop.f32.mrf.mxu0
    %5820 = vmatprep.mubr.f32.mxu0 %v5683
    %5821 = vmatmul.mubr.f32.gmra.mxu0 %v5682
    %v5822 = vpop.f32.mrf.mxu0
    %v5823 = vadd.f32 0.0, %v5822
    %v5824 = vpop.f32.mrf.mxu0
    %5825 = vmatprep.mubr.f32.mxu0 %v5687
    %5826 = vmatmul.mubr.f32.gmra.mxu0 %v5686
    %v5827 = vpop.f32.mrf.mxu0
    %v5828 = vadd.f32 0.0, %v5827
    %v5829 = vpop.f32.mrf.mxu0
    %5830 = vmatprep.mubr.f32.mxu0 %v5691
    %5831 = vmatmul.mubr.f32.gmra.mxu0 %v5690
    %v5832 = vpop.f32.mrf.mxu0
    %v5833 = vadd.f32 0.0, %v5832
    %v5834 = vpop.f32.mrf.mxu0
    %5835 = vmatprep.mubr.f32.mxu0 %v5695
    %5836 = vmatmul.mubr.f32.gmra.mxu0 %v5694
    %v5837 = vpop.f32.mrf.mxu0
    %v5838 = vadd.f32 0.0, %v5837
    %v5839 = vpop.f32.mrf.mxu0
    %5840 = vmatprep.mubr.f32.mxu0 %v5699
    %5841 = vmatmul.mubr.f32.gmra.mxu0 %v5698
    %v5842 = vpop.f32.mrf.mxu0
    %v5843 = vadd.f32 0.0, %v5842
    %v5844 = vpop.f32.mrf.mxu0
    %5845 = vmatprep.mubr.f32.mxu0 %v5703
    %5846 = vmatmul.mubr.f32.gmra.mxu0 %v5702
    %v5847 = vpop.f32.mrf.mxu0
    %v5848 = vadd.f32 0.0, %v5847
    %v5849 = vpop.f32.mrf.mxu0
    %5850 = vdwg.mxu0
    %5851 = vmatprep.subr.mxu0 0.0
    %5852 = vmatpush1.msra.mxu0 %v255
    %5853 = vmatprep.subr.mxu0 0.0
    %5854 = vmatpush1.msra.mxu0 %v254
    %5855 = vmatprep.subr.mxu0 0.0
    %5856 = vmatpush1.msra.mxu0 %v253
    %5857 = vmatprep.subr.mxu0 0.0
    %5858 = vmatpush1.msra.mxu0 %v252
    %5859 = vmatprep.subr.mxu0 0.0
    %5860 = vmatpush1.msra.mxu0 %v251
    %5861 = vmatprep.subr.mxu0 0.0
    %5862 = vmatpush1.msra.mxu0 %v250
    %5863 = vmatprep.subr.mxu0 0.0
    %5864 = vmatpush1.msra.mxu0 %v249
    %5865 = vmatprep.subr.mxu0 0.0
    %5866 = vmatpush1.msra.mxu0 %v248
    %5867 = vmatprep.subr.mxu0 0.0
    %5868 = vmatpush1.msra.mxu0 %v247
    %5869 = vmatprep.subr.mxu0 0.0
    %5870 = vmatpush1.msra.mxu0 %v246
    %5871 = vmatprep.subr.mxu0 0.0
    %5872 = vmatpush1.msra.mxu0 %v245
    %5873 = vmatprep.subr.mxu0 0.0
    %5874 = vmatpush1.msra.mxu0 %v244
    %5875 = vmatprep.subr.mxu0 0.0
    %5876 = vmatpush1.msra.mxu0 %v243
    %5877 = vmatprep.subr.mxu0 0.0
    %5878 = vmatpush1.msra.mxu0 %v242
    %5879 = vmatprep.subr.mxu0 0.0
    %5880 = vmatpush1.msra.mxu0 %v241
    %5881 = vmatprep.subr.mxu0 0.0
    %5882 = vmatpush1.msra.mxu0 %v240
    %5883 = vmatprep.subr.mxu0 0.0
    %5884 = vmatpush2.msra.mxu0 %v271
    %5885 = vmatprep.subr.mxu0 0.0
    %5886 = vmatpush2.msra.mxu0 %v270
    %5887 = vmatprep.subr.mxu0 0.0
    %5888 = vmatpush2.msra.mxu0 %v269
    %5889 = vmatprep.subr.mxu0 0.0
    %5890 = vmatpush2.msra.mxu0 %v268
    %5891 = vmatprep.subr.mxu0 0.0
    %5892 = vmatpush2.msra.mxu0 %v267
    %5893 = vmatprep.subr.mxu0 0.0
    %5894 = vmatpush2.msra.mxu0 %v266
    %5895 = vmatprep.subr.mxu0 0.0
    %5896 = vmatpush2.msra.mxu0 %v265
    %5897 = vmatprep.subr.mxu0 0.0
    %5898 = vmatpush2.msra.mxu0 %v264
    %5899 = vmatprep.subr.mxu0 0.0
    %5900 = vmatpush2.msra.mxu0 %v263
    %5901 = vmatprep.subr.mxu0 0.0
    %5902 = vmatpush2.msra.mxu0 %v262
    %5903 = vmatprep.subr.mxu0 0.0
    %5904 = vmatpush2.msra.mxu0 %v261
    %5905 = vmatprep.subr.mxu0 0.0
    %5906 = vmatpush2.msra.mxu0 %v260
    %5907 = vmatprep.subr.mxu0 0.0
    %5908 = vmatpush2.msra.mxu0 %v259
    %5909 = vmatprep.subr.mxu0 0.0
    %5910 = vmatpush2.msra.mxu0 %v258
    %5911 = vmatprep.subr.mxu0 0.0
    %5912 = vmatpush2.msra.mxu0 %v257
    %5913 = vmatprep.subr.mxu0 0.0
    %5914 = vmatpush2.msra.mxu0 %v256
    %5915 = vmatprep.mubr.f32.mxu0 %v5645
    %5916 = vmatmul.mubr.f32.gmra.mxu0 %v5644
    %v5917 = vpop.f32.mrf.mxu0
    %v5918 = vadd.f32 %v5773, %v5917
    %v5919 = vpop.f32.mrf.mxu0
    %5920 = vmatprep.mubr.f32.mxu0 %v5649
    %5921 = vmatmul.mubr.f32.gmra.mxu0 %v5648
    %v5922 = vpop.f32.mrf.mxu0
    %v5923 = vadd.f32 %v5778, %v5922
    %v5924 = vpop.f32.mrf.mxu0
    %5925 = vmatprep.mubr.f32.mxu0 %v5653
    %5926 = vmatmul.mubr.f32.gmra.mxu0 %v5652
    %v5927 = vpop.f32.mrf.mxu0
    %v5928 = vadd.f32 %v5783, %v5927
    %v5929 = vpop.f32.mrf.mxu0
    %5930 = vmatprep.mubr.f32.mxu0 %v5657
    %5931 = vmatmul.mubr.f32.gmra.mxu0 %v5656
    %v5932 = vpop.f32.mrf.mxu0
    %v5933 = vadd.f32 %v5788, %v5932
    %v5934 = vpop.f32.mrf.mxu0
    %5935 = vmatprep.mubr.f32.mxu0 %v5661
    %5936 = vmatmul.mubr.f32.gmra.mxu0 %v5660
    %v5937 = vpop.f32.mrf.mxu0
    %v5938 = vadd.f32 %v5793, %v5937
    %v5939 = vpop.f32.mrf.mxu0
    %5940 = vmatprep.mubr.f32.mxu0 %v5665
    %5941 = vmatmul.mubr.f32.gmra.mxu0 %v5664
    %v5942 = vpop.f32.mrf.mxu0
    %v5943 = vadd.f32 %v5798, %v5942
    %v5944 = vpop.f32.mrf.mxu0
    %5945 = vmatprep.mubr.f32.mxu0 %v5669
    %5946 = vmatmul.mubr.f32.gmra.mxu0 %v5668
    %v5947 = vpop.f32.mrf.mxu0
    %v5948 = vadd.f32 %v5803, %v5947
    %v5949 = vpop.f32.mrf.mxu0
    %5950 = vmatprep.mubr.f32.mxu0 %v5673
    %5951 = vmatmul.mubr.f32.gmra.mxu0 %v5672
    %v5952 = vpop.f32.mrf.mxu0
    %v5953 = vadd.f32 %v5808, %v5952
    %v5954 = vpop.f32.mrf.mxu0
    %5955 = vmatprep.mubr.f32.mxu0 %v5677
    %5956 = vmatmul.mubr.f32.gmra.mxu0 %v5676
    %v5957 = vpop.f32.mrf.mxu0
    %v5958 = vadd.f32 %v5813, %v5957
    %v5959 = vpop.f32.mrf.mxu0
    %5960 = vmatprep.mubr.f32.mxu0 %v5681
    %5961 = vmatmul.mubr.f32.gmra.mxu0 %v5680
    %v5962 = vpop.f32.mrf.mxu0
    %v5963 = vadd.f32 %v5818, %v5962
    %v5964 = vpop.f32.mrf.mxu0
    %5965 = vmatprep.mubr.f32.mxu0 %v5685
    %5966 = vmatmul.mubr.f32.gmra.mxu0 %v5684
    %v5967 = vpop.f32.mrf.mxu0
    %v5968 = vadd.f32 %v5823, %v5967
    %v5969 = vpop.f32.mrf.mxu0
    %5970 = vmatprep.mubr.f32.mxu0 %v5689
    %5971 = vmatmul.mubr.f32.gmra.mxu0 %v5688
    %v5972 = vpop.f32.mrf.mxu0
    %v5973 = vadd.f32 %v5828, %v5972
    %v5974 = vpop.f32.mrf.mxu0
    %5975 = vmatprep.mubr.f32.mxu0 %v5693
    %5976 = vmatmul.mubr.f32.gmra.mxu0 %v5692
    %v5977 = vpop.f32.mrf.mxu0
    %v5978 = vadd.f32 %v5833, %v5977
    %v5979 = vpop.f32.mrf.mxu0
    %5980 = vmatprep.mubr.f32.mxu0 %v5697
    %5981 = vmatmul.mubr.f32.gmra.mxu0 %v5696
    %v5982 = vpop.f32.mrf.mxu0
    %v5983 = vadd.f32 %v5838, %v5982
    %v5984 = vpop.f32.mrf.mxu0
    %5985 = vmatprep.mubr.f32.mxu0 %v5701
    %5986 = vmatmul.mubr.f32.gmra.mxu0 %v5700
    %v5987 = vpop.f32.mrf.mxu0
    %v5988 = vadd.f32 %v5843, %v5987
    %v5989 = vpop.f32.mrf.mxu0
    %5990 = vmatprep.mubr.f32.mxu0 %v5705
    %5991 = vmatmul.mubr.f32.gmra.mxu0 %v5704
    %v5992 = vpop.f32.mrf.mxu0
    %v5993 = vadd.f32 %v5848, %v5992
    %v5994 = vpop.f32.mrf.mxu0
    %5995 = vdwg.mxu0
    %5996 = vmatprep.subr.mxu0 0.0
    %5997 = vmatpush1.msra.mxu0 %v5993
    %5998 = vmatprep.subr.mxu0 0.0
    %5999 = vmatpush1.msra.mxu0 %v5988
    %6000 = vmatprep.subr.mxu0 0.0
    %6001 = vmatpush1.msra.mxu0 %v5983
    %6002 = vmatprep.subr.mxu0 0.0
    %6003 = vmatpush1.msra.mxu0 %v5978
    %6004 = vmatprep.subr.mxu0 0.0
    %6005 = vmatpush1.msra.mxu0 %v5973
    %6006 = vmatprep.subr.mxu0 0.0
    %6007 = vmatpush1.msra.mxu0 %v5968
    %6008 = vmatprep.subr.mxu0 0.0
    %6009 = vmatpush1.msra.mxu0 %v5963
    %6010 = vmatprep.subr.mxu0 0.0
    %6011 = vmatpush1.msra.mxu0 %v5958
    %6012 = vmatprep.subr.mxu0 0.0
    %6013 = vmatpush1.msra.mxu0 %v5953
    %6014 = vmatprep.subr.mxu0 0.0
    %6015 = vmatpush1.msra.mxu0 %v5948
    %6016 = vmatprep.subr.mxu0 0.0
    %6017 = vmatpush1.msra.mxu0 %v5943
    %6018 = vmatprep.subr.mxu0 0.0
    %6019 = vmatpush1.msra.mxu0 %v5938
    %6020 = vmatprep.subr.mxu0 0.0
    %6021 = vmatpush1.msra.mxu0 %v5933
    %6022 = vmatprep.subr.mxu0 0.0
    %6023 = vmatpush1.msra.mxu0 %v5928
    %6024 = vmatprep.subr.mxu0 0.0
    %6025 = vmatpush1.msra.mxu0 %v5923
    %6026 = vmatprep.subr.mxu0 0.0
    %6027 = vmatpush1.msra.mxu0 %v5918
    %6028 = vmatprep.subr.mxu0 0.0
    %6029 = vmatpush2.msra.mxu0 0.0
    %6030 = vmatprep.subr.mxu0 0.0
    %6031 = vmatpush2.msra.mxu0 0.0
    %6032 = vmatprep.subr.mxu0 0.0
    %6033 = vmatpush2.msra.mxu0 0.0
    %6034 = vmatprep.subr.mxu0 0.0
    %6035 = vmatpush2.msra.mxu0 0.0
    %6036 = vmatprep.subr.mxu0 0.0
    %6037 = vmatpush2.msra.mxu0 0.0
    %6038 = vmatprep.subr.mxu0 0.0
    %6039 = vmatpush2.msra.mxu0 0.0
    %6040 = vmatprep.subr.mxu0 0.0
    %6041 = vmatpush2.msra.mxu0 0.0
    %6042 = vmatprep.subr.mxu0 0.0
    %6043 = vmatpush2.msra.mxu0 0.0
    %6044 = vmatprep.subr.mxu0 0.0
    %6045 = vmatpush2.msra.mxu0 0.0
    %6046 = vmatprep.subr.mxu0 0.0
    %6047 = vmatpush2.msra.mxu0 0.0
    %6048 = vmatprep.subr.mxu0 0.0
    %6049 = vmatpush2.msra.mxu0 0.0
    %6050 = vmatprep.subr.mxu0 0.0
    %6051 = vmatpush2.msra.mxu0 0.0
    %6052 = vmatprep.subr.mxu0 0.0
    %6053 = vmatpush2.msra.mxu0 0.0
    %6054 = vmatprep.subr.mxu0 0.0
    %6055 = vmatpush2.msra.mxu0 0.0
    %6056 = vmatprep.subr.mxu0 0.0
    %6057 = vmatpush2.msra.mxu0 0.0
    %6058 = vmatprep.subr.mxu0 0.0
    %6059 = vmatpush2.msra.mxu0 0.0
    %6060 = vmatprep.mubr.f32.mxu0 0.0
    %6061 = vmatmul.mubr.f32.gmra.mxu0 %v144
    %v6062 = vpop.f32.mrf.mxu0
    %v6063 = vadd.f32 0.0, %v6062
    %v6064 = vpop.f32.mrf.mxu0
    %6065 = vmatprep.mubr.f32.mxu0 0.0
    %6066 = vmatmul.mubr.f32.gmra.mxu0 %v145
    %v6067 = vpop.f32.mrf.mxu0
    %v6068 = vadd.f32 0.0, %v6067
    %v6069 = vpop.f32.mrf.mxu0
    %6070 = vmatprep.mubr.f32.mxu0 0.0
    %6071 = vmatmul.mubr.f32.gmra.mxu0 %v146
    %v6072 = vpop.f32.mrf.mxu0
    %v6073 = vadd.f32 0.0, %v6072
    %v6074 = vpop.f32.mrf.mxu0
    %6075 = vmatprep.mubr.f32.mxu0 0.0
    %6076 = vmatmul.mubr.f32.gmra.mxu0 %v147
    %v6077 = vpop.f32.mrf.mxu0
    %v6078 = vadd.f32 0.0, %v6077
    %v6079 = vpop.f32.mrf.mxu0
    %6080 = vmatprep.mubr.f32.mxu0 0.0
    %6081 = vmatmul.mubr.f32.gmra.mxu0 %v148
    %v6082 = vpop.f32.mrf.mxu0
    %v6083 = vadd.f32 0.0, %v6082
    %v6084 = vpop.f32.mrf.mxu0
    %6085 = vmatprep.mubr.f32.mxu0 0.0
    %6086 = vmatmul.mubr.f32.gmra.mxu0 %v149
    %v6087 = vpop.f32.mrf.mxu0
    %v6088 = vadd.f32 0.0, %v6087
    %v6089 = vpop.f32.mrf.mxu0
    %6090 = vmatprep.mubr.f32.mxu0 0.0
    %6091 = vmatmul.mubr.f32.gmra.mxu0 %v150
    %v6092 = vpop.f32.mrf.mxu0
    %v6093 = vadd.f32 0.0, %v6092
    %v6094 = vpop.f32.mrf.mxu0
    %6095 = vmatprep.mubr.f32.mxu0 0.0
    %6096 = vmatmul.mubr.f32.gmra.mxu0 %v151
    %v6097 = vpop.f32.mrf.mxu0
    %v6098 = vadd.f32 0.0, %v6097
    %v6099 = vpop.f32.mrf.mxu0
    %6100 = vmatprep.mubr.f32.mxu0 0.0
    %6101 = vmatmul.mubr.f32.gmra.mxu0 %v152
    %v6102 = vpop.f32.mrf.mxu0
    %v6103 = vadd.f32 0.0, %v6102
    %v6104 = vpop.f32.mrf.mxu0
    %6105 = vmatprep.mubr.f32.mxu0 0.0
    %6106 = vmatmul.mubr.f32.gmra.mxu0 %v153
    %v6107 = vpop.f32.mrf.mxu0
    %v6108 = vadd.f32 0.0, %v6107
    %v6109 = vpop.f32.mrf.mxu0
    %6110 = vmatprep.mubr.f32.mxu0 0.0
    %6111 = vmatmul.mubr.f32.gmra.mxu0 %v154
    %v6112 = vpop.f32.mrf.mxu0
    %v6113 = vadd.f32 0.0, %v6112
    %v6114 = vpop.f32.mrf.mxu0
    %6115 = vmatprep.mubr.f32.mxu0 0.0
    %6116 = vmatmul.mubr.f32.gmra.mxu0 %v155
    %v6117 = vpop.f32.mrf.mxu0
    %v6118 = vadd.f32 0.0, %v6117
    %v6119 = vpop.f32.mrf.mxu0
    %6120 = vmatprep.mubr.f32.mxu0 0.0
    %6121 = vmatmul.mubr.f32.gmra.mxu0 %v156
    %v6122 = vpop.f32.mrf.mxu0
    %v6123 = vadd.f32 0.0, %v6122
    %v6124 = vpop.f32.mrf.mxu0
    %6125 = vmatprep.mubr.f32.mxu0 0.0
    %6126 = vmatmul.mubr.f32.gmra.mxu0 %v157
    %v6127 = vpop.f32.mrf.mxu0
    %v6128 = vadd.f32 0.0, %v6127
    %v6129 = vpop.f32.mrf.mxu0
    %6130 = vmatprep.mubr.f32.mxu0 0.0
    %6131 = vmatmul.mubr.f32.gmra.mxu0 %v158
    %v6132 = vpop.f32.mrf.mxu0
    %v6133 = vadd.f32 0.0, %v6132
    %v6134 = vpop.f32.mrf.mxu0
    %6135 = vmatprep.mubr.f32.mxu0 0.0
    %6136 = vmatmul.mubr.f32.gmra.mxu0 %v159
    %v6137 = vpop.f32.mrf.mxu0
    %v6138 = vadd.f32 0.0, %v6137
    %v6139 = vpop.f32.mrf.mxu0
    %6140 = vdwg.mxu0
    %vm6141 = vcmp.ge.f32.partialorder %v6063, 0.0
    %vm6142 = vcmp.ge.f32.partialorder %v6068, 0.0
    %vm6143 = vcmp.ge.f32.partialorder %v6073, 0.0
    %vm6144 = vcmp.ge.f32.partialorder %v6078, 0.0
    %vm6145 = vcmp.ge.f32.partialorder %v6083, 0.0
    %vm6146 = vcmp.ge.f32.partialorder %v6088, 0.0
    %vm6147 = vcmp.ge.f32.partialorder %v6093, 0.0
    %vm6148 = vcmp.ge.f32.partialorder %v6098, 0.0
    %vm6149 = vcmp.ge.f32.partialorder %v6103, 0.0
    %vm6150 = vcmp.ge.f32.partialorder %v6108, 0.0
    %vm6151 = vcmp.ge.f32.partialorder %v6113, 0.0
    %vm6152 = vcmp.ge.f32.partialorder %v6118, 0.0
    %vm6153 = vcmp.ge.f32.partialorder %v6123, 0.0
    %vm6154 = vcmp.ge.f32.partialorder %v6128, 0.0
    %vm6155 = vcmp.ge.f32.partialorder %v6133, 0.0
    %vm6156 = vcmp.ge.f32.partialorder %v6138, 0.0
    %v6157 = vmul.f32 %v6063, 0.01
    %v6158 = vmul.f32 %v6068, 0.01
    %v6159 = vmul.f32 %v6073, 0.01
    %v6160 = vmul.f32 %v6078, 0.01
    %v6161 = vmul.f32 %v6083, 0.01
    %v6162 = vmul.f32 %v6088, 0.01
    %v6163 = vmul.f32 %v6093, 0.01
    %v6164 = vmul.f32 %v6098, 0.01
    %v6165 = vmul.f32 %v6103, 0.01
    %v6166 = vmul.f32 %v6108, 0.01
    %v6167 = vmul.f32 %v6113, 0.01
    %v6168 = vmul.f32 %v6118, 0.01
    %v6169 = vmul.f32 %v6123, 0.01
    %v6170 = vmul.f32 %v6128, 0.01
    %v6171 = vmul.f32 %v6133, 0.01
    %v6172 = vmul.f32 %v6138, 0.01
    %v6173 = vsel %vm6141, %v6063, %v6157
    %v6174 = vsel %vm6142, %v6068, %v6158
    %v6175 = vsel %vm6143, %v6073, %v6159
    %v6176 = vsel %vm6144, %v6078, %v6160
    %v6177 = vsel %vm6145, %v6083, %v6161
    %v6178 = vsel %vm6146, %v6088, %v6162
    %v6179 = vsel %vm6147, %v6093, %v6163
    %v6180 = vsel %vm6148, %v6098, %v6164
    %v6181 = vsel %vm6149, %v6103, %v6165
    %v6182 = vsel %vm6150, %v6108, %v6166
    %v6183 = vsel %vm6151, %v6113, %v6167
    %v6184 = vsel %vm6152, %v6118, %v6168
    %v6185 = vsel %vm6153, %v6123, %v6169
    %v6186 = vsel %vm6154, %v6128, %v6170
    %v6187 = vsel %vm6155, %v6133, %v6171
    %v6188 = vsel %vm6156, %v6138, %v6172
    %6189 = vmatprep.subr.mxu0 0.0
    %6190 = vmatpush1.msra.mxu0 %v6188
    %6191 = vmatprep.subr.mxu0 0.0
    %6192 = vmatpush1.msra.mxu0 %v6187
    %6193 = vmatprep.subr.mxu0 0.0
    %6194 = vmatpush1.msra.mxu0 %v6186
    %6195 = vmatprep.subr.mxu0 0.0
    %6196 = vmatpush1.msra.mxu0 %v6185
    %6197 = vmatprep.subr.mxu0 0.0
    %6198 = vmatpush1.msra.mxu0 %v6184
    %6199 = vmatprep.subr.mxu0 0.0
    %6200 = vmatpush1.msra.mxu0 %v6183
    %6201 = vmatprep.subr.mxu0 0.0
    %6202 = vmatpush1.msra.mxu0 %v6182
    %6203 = vmatprep.subr.mxu0 0.0
    %6204 = vmatpush1.msra.mxu0 %v6181
    %6205 = vmatprep.subr.mxu0 0.0
    %6206 = vmatpush1.msra.mxu0 %v6180
    %6207 = vmatprep.subr.mxu0 0.0
    %6208 = vmatpush1.msra.mxu0 %v6179
    %6209 = vmatprep.subr.mxu0 0.0
    %6210 = vmatpush1.msra.mxu0 %v6178
    %6211 = vmatprep.subr.mxu0 0.0
    %6212 = vmatpush1.msra.mxu0 %v6177
    %6213 = vmatprep.subr.mxu0 0.0
    %6214 = vmatpush1.msra.mxu0 %v6176
    %6215 = vmatprep.subr.mxu0 0.0
    %6216 = vmatpush1.msra.mxu0 %v6175
    %6217 = vmatprep.subr.mxu0 0.0
    %6218 = vmatpush1.msra.mxu0 %v6174
    %6219 = vmatprep.subr.mxu0 0.0
    %6220 = vmatpush1.msra.mxu0 %v6173
    %6221 = vmatprep.subr.mxu0 0.0
    %6222 = vmatpush2.msra.mxu0 0.0
    %6223 = vmatprep.subr.mxu0 0.0
    %6224 = vmatpush2.msra.mxu0 0.0
    %6225 = vmatprep.subr.mxu0 0.0
    %6226 = vmatpush2.msra.mxu0 0.0
    %6227 = vmatprep.subr.mxu0 0.0
    %6228 = vmatpush2.msra.mxu0 0.0
    %6229 = vmatprep.subr.mxu0 0.0
    %6230 = vmatpush2.msra.mxu0 0.0
    %6231 = vmatprep.subr.mxu0 0.0
    %6232 = vmatpush2.msra.mxu0 0.0
    %6233 = vmatprep.subr.mxu0 0.0
    %6234 = vmatpush2.msra.mxu0 0.0
    %6235 = vmatprep.subr.mxu0 0.0
    %6236 = vmatpush2.msra.mxu0 0.0
    %6237 = vmatprep.subr.mxu0 0.0
    %6238 = vmatpush2.msra.mxu0 0.0
    %6239 = vmatprep.subr.mxu0 0.0
    %6240 = vmatpush2.msra.mxu0 0.0
    %6241 = vmatprep.subr.mxu0 0.0
    %6242 = vmatpush2.msra.mxu0 0.0
    %6243 = vmatprep.subr.mxu0 0.0
    %6244 = vmatpush2.msra.mxu0 0.0
    %6245 = vmatprep.subr.mxu0 0.0
    %6246 = vmatpush2.msra.mxu0 0.0
    %6247 = vmatprep.subr.mxu0 0.0
    %6248 = vmatpush2.msra.mxu0 0.0
    %6249 = vmatprep.subr.mxu0 0.0
    %6250 = vmatpush2.msra.mxu0 0.0
    %6251 = vmatprep.subr.mxu0 0.0
    %6252 = vmatpush2.msra.mxu0 0.0
    %6253 = vmatprep.mubr.f32.mxu0 0.0
    %6254 = vmatmul.mubr.f32.gmra.mxu0 %v160
    %v6255 = vpop.f32.mrf.mxu0
    %v6256 = vadd.f32 0.0, %v6255
    %v6257 = vpop.f32.mrf.mxu0
    %6258 = vmatprep.mubr.f32.mxu0 0.0
    %6259 = vmatmul.mubr.f32.gmra.mxu0 %v161
    %v6260 = vpop.f32.mrf.mxu0
    %v6261 = vadd.f32 0.0, %v6260
    %v6262 = vpop.f32.mrf.mxu0
    %6263 = vmatprep.mubr.f32.mxu0 0.0
    %6264 = vmatmul.mubr.f32.gmra.mxu0 %v162
    %v6265 = vpop.f32.mrf.mxu0
    %v6266 = vadd.f32 0.0, %v6265
    %v6267 = vpop.f32.mrf.mxu0
    %6268 = vmatprep.mubr.f32.mxu0 0.0
    %6269 = vmatmul.mubr.f32.gmra.mxu0 %v163
    %v6270 = vpop.f32.mrf.mxu0
    %v6271 = vadd.f32 0.0, %v6270
    %v6272 = vpop.f32.mrf.mxu0
    %6273 = vmatprep.mubr.f32.mxu0 0.0
    %6274 = vmatmul.mubr.f32.gmra.mxu0 %v164
    %v6275 = vpop.f32.mrf.mxu0
    %v6276 = vadd.f32 0.0, %v6275
    %v6277 = vpop.f32.mrf.mxu0
    %6278 = vmatprep.mubr.f32.mxu0 0.0
    %6279 = vmatmul.mubr.f32.gmra.mxu0 %v165
    %v6280 = vpop.f32.mrf.mxu0
    %v6281 = vadd.f32 0.0, %v6280
    %v6282 = vpop.f32.mrf.mxu0
    %6283 = vmatprep.mubr.f32.mxu0 0.0
    %6284 = vmatmul.mubr.f32.gmra.mxu0 %v166
    %v6285 = vpop.f32.mrf.mxu0
    %v6286 = vadd.f32 0.0, %v6285
    %v6287 = vpop.f32.mrf.mxu0
    %6288 = vmatprep.mubr.f32.mxu0 0.0
    %6289 = vmatmul.mubr.f32.gmra.mxu0 %v167
    %v6290 = vpop.f32.mrf.mxu0
    %v6291 = vadd.f32 0.0, %v6290
    %v6292 = vpop.f32.mrf.mxu0
    %6293 = vmatprep.mubr.f32.mxu0 0.0
    %6294 = vmatmul.mubr.f32.gmra.mxu0 %v168
    %v6295 = vpop.f32.mrf.mxu0
    %v6296 = vadd.f32 0.0, %v6295
    %v6297 = vpop.f32.mrf.mxu0
    %6298 = vmatprep.mubr.f32.mxu0 0.0
    %6299 = vmatmul.mubr.f32.gmra.mxu0 %v169
    %v6300 = vpop.f32.mrf.mxu0
    %v6301 = vadd.f32 0.0, %v6300
    %v6302 = vpop.f32.mrf.mxu0
    %6303 = vmatprep.mubr.f32.mxu0 0.0
    %6304 = vmatmul.mubr.f32.gmra.mxu0 %v170
    %v6305 = vpop.f32.mrf.mxu0
    %v6306 = vadd.f32 0.0, %v6305
    %v6307 = vpop.f32.mrf.mxu0
    %6308 = vmatprep.mubr.f32.mxu0 0.0
    %6309 = vmatmul.mubr.f32.gmra.mxu0 %v171
    %v6310 = vpop.f32.mrf.mxu0
    %v6311 = vadd.f32 0.0, %v6310
    %v6312 = vpop.f32.mrf.mxu0
    %6313 = vmatprep.mubr.f32.mxu0 0.0
    %6314 = vmatmul.mubr.f32.gmra.mxu0 %v172
    %v6315 = vpop.f32.mrf.mxu0
    %v6316 = vadd.f32 0.0, %v6315
    %v6317 = vpop.f32.mrf.mxu0
    %6318 = vmatprep.mubr.f32.mxu0 0.0
    %6319 = vmatmul.mubr.f32.gmra.mxu0 %v173
    %v6320 = vpop.f32.mrf.mxu0
    %v6321 = vadd.f32 0.0, %v6320
    %v6322 = vpop.f32.mrf.mxu0
    %6323 = vmatprep.mubr.f32.mxu0 0.0
    %6324 = vmatmul.mubr.f32.gmra.mxu0 %v174
    %v6325 = vpop.f32.mrf.mxu0
    %v6326 = vadd.f32 0.0, %v6325
    %v6327 = vpop.f32.mrf.mxu0
    %6328 = vmatprep.mubr.f32.mxu0 0.0
    %6329 = vmatmul.mubr.f32.gmra.mxu0 %v175
    %v6330 = vpop.f32.mrf.mxu0
    %v6331 = vadd.f32 0.0, %v6330
    %v6332 = vpop.f32.mrf.mxu0
    %6333 = vdwg.mxu0
    %vm6334 = vcmp.ge.f32.partialorder %v6256, 0.0
    %vm6335 = vcmp.ge.f32.partialorder %v6261, 0.0
    %vm6336 = vcmp.ge.f32.partialorder %v6266, 0.0
    %vm6337 = vcmp.ge.f32.partialorder %v6271, 0.0
    %vm6338 = vcmp.ge.f32.partialorder %v6276, 0.0
    %vm6339 = vcmp.ge.f32.partialorder %v6281, 0.0
    %vm6340 = vcmp.ge.f32.partialorder %v6286, 0.0
    %vm6341 = vcmp.ge.f32.partialorder %v6291, 0.0
    %vm6342 = vcmp.ge.f32.partialorder %v6296, 0.0
    %vm6343 = vcmp.ge.f32.partialorder %v6301, 0.0
    %vm6344 = vcmp.ge.f32.partialorder %v6306, 0.0
    %vm6345 = vcmp.ge.f32.partialorder %v6311, 0.0
    %vm6346 = vcmp.ge.f32.partialorder %v6316, 0.0
    %vm6347 = vcmp.ge.f32.partialorder %v6321, 0.0
    %vm6348 = vcmp.ge.f32.partialorder %v6326, 0.0
    %vm6349 = vcmp.ge.f32.partialorder %v6331, 0.0
    %v6350 = vmul.f32 %v6256, 0.01
    %v6351 = vmul.f32 %v6261, 0.01
    %v6352 = vmul.f32 %v6266, 0.01
    %v6353 = vmul.f32 %v6271, 0.01
    %v6354 = vmul.f32 %v6276, 0.01
    %v6355 = vmul.f32 %v6281, 0.01
    %v6356 = vmul.f32 %v6286, 0.01
    %v6357 = vmul.f32 %v6291, 0.01
    %v6358 = vmul.f32 %v6296, 0.01
    %v6359 = vmul.f32 %v6301, 0.01
    %v6360 = vmul.f32 %v6306, 0.01
    %v6361 = vmul.f32 %v6311, 0.01
    %v6362 = vmul.f32 %v6316, 0.01
    %v6363 = vmul.f32 %v6321, 0.01
    %v6364 = vmul.f32 %v6326, 0.01
    %v6365 = vmul.f32 %v6331, 0.01
    %v6366 = vsel %vm6334, %v6256, %v6350
    %v6367 = vsel %vm6335, %v6261, %v6351
    %v6368 = vsel %vm6336, %v6266, %v6352
    %v6369 = vsel %vm6337, %v6271, %v6353
    %v6370 = vsel %vm6338, %v6276, %v6354
    %v6371 = vsel %vm6339, %v6281, %v6355
    %v6372 = vsel %vm6340, %v6286, %v6356
    %v6373 = vsel %vm6341, %v6291, %v6357
    %v6374 = vsel %vm6342, %v6296, %v6358
    %v6375 = vsel %vm6343, %v6301, %v6359
    %v6376 = vsel %vm6344, %v6306, %v6360
    %v6377 = vsel %vm6345, %v6311, %v6361
    %v6378 = vsel %vm6346, %v6316, %v6362
    %v6379 = vsel %vm6347, %v6321, %v6363
    %v6380 = vsel %vm6348, %v6326, %v6364
    %v6381 = vsel %vm6349, %v6331, %v6365
    %6382 = vmatprep.subr.mxu0 0.0
    %6383 = vmatpush1.msra.mxu0 %v6381
    %6384 = vmatprep.subr.mxu0 0.0
    %6385 = vmatpush1.msra.mxu0 %v6380
    %6386 = vmatprep.subr.mxu0 0.0
    %6387 = vmatpush1.msra.mxu0 %v6379
    %6388 = vmatprep.subr.mxu0 0.0
    %6389 = vmatpush1.msra.mxu0 %v6378
    %6390 = vmatprep.subr.mxu0 0.0
    %6391 = vmatpush1.msra.mxu0 %v6377
    %6392 = vmatprep.subr.mxu0 0.0
    %6393 = vmatpush1.msra.mxu0 %v6376
    %6394 = vmatprep.subr.mxu0 0.0
    %6395 = vmatpush1.msra.mxu0 %v6375
    %6396 = vmatprep.subr.mxu0 0.0
    %6397 = vmatpush1.msra.mxu0 %v6374
    %6398 = vmatprep.subr.mxu0 0.0
    %6399 = vmatpush1.msra.mxu0 %v6373
    %6400 = vmatprep.subr.mxu0 0.0
    %6401 = vmatpush1.msra.mxu0 %v6372
    %6402 = vmatprep.subr.mxu0 0.0
    %6403 = vmatpush1.msra.mxu0 %v6371
    %6404 = vmatprep.subr.mxu0 0.0
    %6405 = vmatpush1.msra.mxu0 %v6370
    %6406 = vmatprep.subr.mxu0 0.0
    %6407 = vmatpush1.msra.mxu0 %v6369
    %6408 = vmatprep.subr.mxu0 0.0
    %6409 = vmatpush1.msra.mxu0 %v6368
    %6410 = vmatprep.subr.mxu0 0.0
    %6411 = vmatpush1.msra.mxu0 %v6367
    %6412 = vmatprep.subr.mxu0 0.0
    %6413 = vmatpush1.msra.mxu0 %v6366
    %6414 = vmatprep.subr.mxu0 0.0
    %6415 = vmatpush2.msra.mxu0 0.0
    %6416 = vmatprep.subr.mxu0 0.0
    %6417 = vmatpush2.msra.mxu0 0.0
    %6418 = vmatprep.subr.mxu0 0.0
    %6419 = vmatpush2.msra.mxu0 0.0
    %6420 = vmatprep.subr.mxu0 0.0
    %6421 = vmatpush2.msra.mxu0 0.0
    %6422 = vmatprep.subr.mxu0 0.0
    %6423 = vmatpush2.msra.mxu0 0.0
    %6424 = vmatprep.subr.mxu0 0.0
    %6425 = vmatpush2.msra.mxu0 0.0
    %6426 = vmatprep.subr.mxu0 0.0
    %6427 = vmatpush2.msra.mxu0 0.0
    %6428 = vmatprep.subr.mxu0 0.0
    %6429 = vmatpush2.msra.mxu0 0.0
    %6430 = vmatprep.subr.mxu0 0.0
    %6431 = vmatpush2.msra.mxu0 0.0
    %6432 = vmatprep.subr.mxu0 0.0
    %6433 = vmatpush2.msra.mxu0 0.0
    %6434 = vmatprep.subr.mxu0 0.0
    %6435 = vmatpush2.msra.mxu0 0.0
    %6436 = vmatprep.subr.mxu0 0.0
    %6437 = vmatpush2.msra.mxu0 0.0
    %6438 = vmatprep.subr.mxu0 0.0
    %6439 = vmatpush2.msra.mxu0 0.0
    %6440 = vmatprep.subr.mxu0 0.0
    %6441 = vmatpush2.msra.mxu0 0.0
    %6442 = vmatprep.subr.mxu0 0.0
    %6443 = vmatpush2.msra.mxu0 0.0
    %6444 = vmatprep.subr.mxu0 0.0
    %6445 = vmatpush2.msra.mxu0 0.0
    %6446 = vmatprep.mubr.f32.mxu0 0.0
    %6447 = vmatmul.mubr.f32.gmra.mxu0 %v176
    %v6448 = vpop.f32.mrf.mxu0
    %v6449 = vadd.f32 0.0, %v6448
    %v6450 = vpop.f32.mrf.mxu0
    %6451 = vmatprep.mubr.f32.mxu0 0.0
    %6452 = vmatmul.mubr.f32.gmra.mxu0 %v177
    %v6453 = vpop.f32.mrf.mxu0
    %v6454 = vadd.f32 0.0, %v6453
    %v6455 = vpop.f32.mrf.mxu0
    %6456 = vmatprep.mubr.f32.mxu0 0.0
    %6457 = vmatmul.mubr.f32.gmra.mxu0 %v178
    %v6458 = vpop.f32.mrf.mxu0
    %v6459 = vadd.f32 0.0, %v6458
    %v6460 = vpop.f32.mrf.mxu0
    %6461 = vmatprep.mubr.f32.mxu0 0.0
    %6462 = vmatmul.mubr.f32.gmra.mxu0 %v179
    %v6463 = vpop.f32.mrf.mxu0
    %v6464 = vadd.f32 0.0, %v6463
    %v6465 = vpop.f32.mrf.mxu0
    %6466 = vmatprep.mubr.f32.mxu0 0.0
    %6467 = vmatmul.mubr.f32.gmra.mxu0 %v180
    %v6468 = vpop.f32.mrf.mxu0
    %v6469 = vadd.f32 0.0, %v6468
    %v6470 = vpop.f32.mrf.mxu0
    %6471 = vmatprep.mubr.f32.mxu0 0.0
    %6472 = vmatmul.mubr.f32.gmra.mxu0 %v181
    %v6473 = vpop.f32.mrf.mxu0
    %v6474 = vadd.f32 0.0, %v6473
    %v6475 = vpop.f32.mrf.mxu0
    %6476 = vmatprep.mubr.f32.mxu0 0.0
    %6477 = vmatmul.mubr.f32.gmra.mxu0 %v182
    %v6478 = vpop.f32.mrf.mxu0
    %v6479 = vadd.f32 0.0, %v6478
    %v6480 = vpop.f32.mrf.mxu0
    %6481 = vmatprep.mubr.f32.mxu0 0.0
    %6482 = vmatmul.mubr.f32.gmra.mxu0 %v183
    %v6483 = vpop.f32.mrf.mxu0
    %v6484 = vadd.f32 0.0, %v6483
    %v6485 = vpop.f32.mrf.mxu0
    %6486 = vmatprep.mubr.f32.mxu0 0.0
    %6487 = vmatmul.mubr.f32.gmra.mxu0 %v184
    %v6488 = vpop.f32.mrf.mxu0
    %v6489 = vadd.f32 0.0, %v6488
    %v6490 = vpop.f32.mrf.mxu0
    %6491 = vmatprep.mubr.f32.mxu0 0.0
    %6492 = vmatmul.mubr.f32.gmra.mxu0 %v185
    %v6493 = vpop.f32.mrf.mxu0
    %v6494 = vadd.f32 0.0, %v6493
    %v6495 = vpop.f32.mrf.mxu0
    %6496 = vmatprep.mubr.f32.mxu0 0.0
    %6497 = vmatmul.mubr.f32.gmra.mxu0 %v186
    %v6498 = vpop.f32.mrf.mxu0
    %v6499 = vadd.f32 0.0, %v6498
    %v6500 = vpop.f32.mrf.mxu0
    %6501 = vmatprep.mubr.f32.mxu0 0.0
    %6502 = vmatmul.mubr.f32.gmra.mxu0 %v187
    %v6503 = vpop.f32.mrf.mxu0
    %v6504 = vadd.f32 0.0, %v6503
    %v6505 = vpop.f32.mrf.mxu0
    %6506 = vmatprep.mubr.f32.mxu0 0.0
    %6507 = vmatmul.mubr.f32.gmra.mxu0 %v188
    %v6508 = vpop.f32.mrf.mxu0
    %v6509 = vadd.f32 0.0, %v6508
    %v6510 = vpop.f32.mrf.mxu0
    %6511 = vmatprep.mubr.f32.mxu0 0.0
    %6512 = vmatmul.mubr.f32.gmra.mxu0 %v189
    %v6513 = vpop.f32.mrf.mxu0
    %v6514 = vadd.f32 0.0, %v6513
    %v6515 = vpop.f32.mrf.mxu0
    %6516 = vmatprep.mubr.f32.mxu0 0.0
    %6517 = vmatmul.mubr.f32.gmra.mxu0 %v190
    %v6518 = vpop.f32.mrf.mxu0
    %v6519 = vadd.f32 0.0, %v6518
    %v6520 = vpop.f32.mrf.mxu0
    %6521 = vmatprep.mubr.f32.mxu0 0.0
    %6522 = vmatmul.mubr.f32.gmra.mxu0 %v191
    %v6523 = vpop.f32.mrf.mxu0
    %v6524 = vadd.f32 0.0, %v6523
    %v6525 = vpop.f32.mrf.mxu0
    %6526 = vdwg.mxu0
    %vm6527 = vcmp.ge.f32.partialorder %v6449, 0.0
    %vm6528 = vcmp.ge.f32.partialorder %v6454, 0.0
    %vm6529 = vcmp.ge.f32.partialorder %v6459, 0.0
    %vm6530 = vcmp.ge.f32.partialorder %v6464, 0.0
    %vm6531 = vcmp.ge.f32.partialorder %v6469, 0.0
    %vm6532 = vcmp.ge.f32.partialorder %v6474, 0.0
    %vm6533 = vcmp.ge.f32.partialorder %v6479, 0.0
    %vm6534 = vcmp.ge.f32.partialorder %v6484, 0.0
    %vm6535 = vcmp.ge.f32.partialorder %v6489, 0.0
    %vm6536 = vcmp.ge.f32.partialorder %v6494, 0.0
    %vm6537 = vcmp.ge.f32.partialorder %v6499, 0.0
    %vm6538 = vcmp.ge.f32.partialorder %v6504, 0.0
    %vm6539 = vcmp.ge.f32.partialorder %v6509, 0.0
    %vm6540 = vcmp.ge.f32.partialorder %v6514, 0.0
    %vm6541 = vcmp.ge.f32.partialorder %v6519, 0.0
    %vm6542 = vcmp.ge.f32.partialorder %v6524, 0.0
    %v6543 = vmul.f32 %v6449, 0.01
    %v6544 = vmul.f32 %v6454, 0.01
    %v6545 = vmul.f32 %v6459, 0.01
    %v6546 = vmul.f32 %v6464, 0.01
    %v6547 = vmul.f32 %v6469, 0.01
    %v6548 = vmul.f32 %v6474, 0.01
    %v6549 = vmul.f32 %v6479, 0.01
    %v6550 = vmul.f32 %v6484, 0.01
    %v6551 = vmul.f32 %v6489, 0.01
    %v6552 = vmul.f32 %v6494, 0.01
    %v6553 = vmul.f32 %v6499, 0.01
    %v6554 = vmul.f32 %v6504, 0.01
    %v6555 = vmul.f32 %v6509, 0.01
    %v6556 = vmul.f32 %v6514, 0.01
    %v6557 = vmul.f32 %v6519, 0.01
    %v6558 = vmul.f32 %v6524, 0.01
    %v6559 = vsel %vm6527, %v6449, %v6543
    %v6560 = vsel %vm6528, %v6454, %v6544
    %v6561 = vsel %vm6529, %v6459, %v6545
    %v6562 = vsel %vm6530, %v6464, %v6546
    %v6563 = vsel %vm6531, %v6469, %v6547
    %v6564 = vsel %vm6532, %v6474, %v6548
    %v6565 = vsel %vm6533, %v6479, %v6549
    %v6566 = vsel %vm6534, %v6484, %v6550
    %v6567 = vsel %vm6535, %v6489, %v6551
    %v6568 = vsel %vm6536, %v6494, %v6552
    %v6569 = vsel %vm6537, %v6499, %v6553
    %v6570 = vsel %vm6538, %v6504, %v6554
    %v6571 = vsel %vm6539, %v6509, %v6555
    %v6572 = vsel %vm6540, %v6514, %v6556
    %v6573 = vsel %vm6541, %v6519, %v6557
    %v6574 = vsel %vm6542, %v6524, %v6558
    %v6575 = vadd.f32 %v6559, %v6173
    %v6576 = vadd.f32 %v6560, %v6174
    %v6577 = vadd.f32 %v6561, %v6175
    %v6578 = vadd.f32 %v6562, %v6176
    %v6579 = vadd.f32 %v6563, %v6177
    %v6580 = vadd.f32 %v6564, %v6178
    %v6581 = vadd.f32 %v6565, %v6179
    %v6582 = vadd.f32 %v6566, %v6180
    %v6583 = vadd.f32 %v6567, %v6181
    %v6584 = vadd.f32 %v6568, %v6182
    %v6585 = vadd.f32 %v6569, %v6183
    %v6586 = vadd.f32 %v6570, %v6184
    %v6587 = vadd.f32 %v6571, %v6185
    %v6588 = vadd.f32 %v6572, %v6186
    %v6589 = vadd.f32 %v6573, %v6187
    %v6590 = vadd.f32 %v6574, %v6188
    %v6591 = vadd.f32 %v3491, %v6575
    %v6592 = vadd.f32 %v3492, %v6576
    %v6593 = vadd.f32 %v3493, %v6577
    %v6594 = vadd.f32 %v3494, %v6578
    %v6595 = vadd.f32 %v3495, %v6579
    %v6596 = vadd.f32 %v3496, %v6580
    %v6597 = vadd.f32 %v3497, %v6581
    %v6598 = vadd.f32 %v3498, %v6582
    %v6599 = vadd.f32 %v3499, %v6583
    %v6600 = vadd.f32 %v3500, %v6584
    %v6601 = vadd.f32 %v3501, %v6585
    %v6602 = vadd.f32 %v3502, %v6586
    %v6603 = vadd.f32 %v3503, %v6587
    %v6604 = vadd.f32 %v3504, %v6588
    %v6605 = vadd.f32 %v3505, %v6589
    %v6606 = vadd.f32 %v3506, %v6590
    %v6607 = vmul.f32 %v6591, 0.5
    %v6608 = vmul.f32 %v6592, 0.5
    %v6609 = vmul.f32 %v6593, 0.5
    %v6610 = vmul.f32 %v6594, 0.5
    %v6611 = vmul.f32 %v6595, 0.5
    %v6612 = vmul.f32 %v6596, 0.5
    %v6613 = vmul.f32 %v6597, 0.5
    %v6614 = vmul.f32 %v6598, 0.5
    %v6615 = vmul.f32 %v6599, 0.5
    %v6616 = vmul.f32 %v6600, 0.5
    %v6617 = vmul.f32 %v6601, 0.5
    %v6618 = vmul.f32 %v6602, 0.5
    %v6619 = vmul.f32 %v6603, 0.5
    %v6620 = vmul.f32 %v6604, 0.5
    %v6621 = vmul.f32 %v6605, 0.5
    %v6622 = vmul.f32 %v6606, 0.5
    %v6623 = vlaneseq
    %v6624 = vshrl.u32 %v6623, 7
    %v6625 = vadd.s32 %v6624, 8
    %v6626 = vadd.s32 %v6624, 16
    %v6627 = vadd.s32 %v6624, 24
    %v6628 = vadd.s32 %v6624, 32
    %v6629 = vadd.s32 %v6624, 40
    %v6630 = vadd.s32 %v6624, 48
    %v6631 = vadd.s32 %v6624, 56
    %v6632 = vadd.s32 %v6624, 64
    %v6633 = vadd.s32 %v6624, 72
    %v6634 = vadd.s32 %v6624, 80
    %v6635 = vadd.s32 %v6624, 88
    %v6636 = vadd.s32 %v6624, 96
    %v6637 = vadd.s32 %v6624, 104
    %v6638 = vadd.s32 %v6624, 112
    %v6639 = vadd.s32 %v6624, 120
    %vm6640 = vcmp.lt.s32.totalorder %v6624, 0
    %v6641 = vsub.s32 0, %v6624
    %v6642 = vsel %vm6640, %v6641, %v6624
    %v6643 = vshrl.u32 %v6642, 3
    %v6644 = vand.u32 %v6642, 7
    %v6645 = vsub.s32 0, %v6644
    %v6646 = vsel %vm6640, %v6645, %v6644
    %vm6647 = vcmp.lt.s32.totalorder %v6625, 0
    %v6648 = vsub.s32 0, %v6625
    %v6649 = vsel %vm6647, %v6648, %v6625
    %v6650 = vshrl.u32 %v6649, 3
    %v6651 = vand.u32 %v6649, 7
    %v6652 = vsub.s32 0, %v6651
    %v6653 = vsel %vm6647, %v6652, %v6651
    %vm6654 = vcmp.lt.s32.totalorder %v6626, 0
    %v6655 = vsub.s32 0, %v6626
    %v6656 = vsel %vm6654, %v6655, %v6626
    %v6657 = vshrl.u32 %v6656, 3
    %v6658 = vand.u32 %v6656, 7
    %v6659 = vsub.s32 0, %v6658
    %v6660 = vsel %vm6654, %v6659, %v6658
    %vm6661 = vcmp.lt.s32.totalorder %v6627, 0
    %v6662 = vsub.s32 0, %v6627
    %v6663 = vsel %vm6661, %v6662, %v6627
    %v6664 = vshrl.u32 %v6663, 3
    %v6665 = vand.u32 %v6663, 7
    %v6666 = vsub.s32 0, %v6665
    %v6667 = vsel %vm6661, %v6666, %v6665
    %vm6668 = vcmp.lt.s32.totalorder %v6628, 0
    %v6669 = vsub.s32 0, %v6628
    %v6670 = vsel %vm6668, %v6669, %v6628
    %v6671 = vshrl.u32 %v6670, 3
    %v6672 = vand.u32 %v6670, 7
    %v6673 = vsub.s32 0, %v6672
    %v6674 = vsel %vm6668, %v6673, %v6672
    %vm6675 = vcmp.lt.s32.totalorder %v6629, 0
    %v6676 = vsub.s32 0, %v6629
    %v6677 = vsel %vm6675, %v6676, %v6629
    %v6678 = vshrl.u32 %v6677, 3
    %v6679 = vand.u32 %v6677, 7
    %v6680 = vsub.s32 0, %v6679
    %v6681 = vsel %vm6675, %v6680, %v6679
    %vm6682 = vcmp.lt.s32.totalorder %v6630, 0
    %v6683 = vsub.s32 0, %v6630
    %v6684 = vsel %vm6682, %v6683, %v6630
    %v6685 = vshrl.u32 %v6684, 3
    %v6686 = vand.u32 %v6684, 7
    %v6687 = vsub.s32 0, %v6686
    %v6688 = vsel %vm6682, %v6687, %v6686
    %vm6689 = vcmp.lt.s32.totalorder %v6631, 0
    %v6690 = vsub.s32 0, %v6631
    %v6691 = vsel %vm6689, %v6690, %v6631
    %v6692 = vshrl.u32 %v6691, 3
    %v6693 = vand.u32 %v6691, 7
    %v6694 = vsub.s32 0, %v6693
    %v6695 = vsel %vm6689, %v6694, %v6693
    %vm6696 = vcmp.lt.s32.totalorder %v6632, 0
    %v6697 = vsub.s32 0, %v6632
    %v6698 = vsel %vm6696, %v6697, %v6632
    %v6699 = vshrl.u32 %v6698, 3
    %v6700 = vand.u32 %v6698, 7
    %v6701 = vsub.s32 0, %v6700
    %v6702 = vsel %vm6696, %v6701, %v6700
    %vm6703 = vcmp.lt.s32.totalorder %v6633, 0
    %v6704 = vsub.s32 0, %v6633
    %v6705 = vsel %vm6703, %v6704, %v6633
    %v6706 = vshrl.u32 %v6705, 3
    %v6707 = vand.u32 %v6705, 7
    %v6708 = vsub.s32 0, %v6707
    %v6709 = vsel %vm6703, %v6708, %v6707
    %vm6710 = vcmp.lt.s32.totalorder %v6634, 0
    %v6711 = vsub.s32 0, %v6634
    %v6712 = vsel %vm6710, %v6711, %v6634
    %v6713 = vshrl.u32 %v6712, 3
    %v6714 = vand.u32 %v6712, 7
    %v6715 = vsub.s32 0, %v6714
    %v6716 = vsel %vm6710, %v6715, %v6714
    %vm6717 = vcmp.lt.s32.totalorder %v6635, 0
    %v6718 = vsub.s32 0, %v6635
    %v6719 = vsel %vm6717, %v6718, %v6635
    %v6720 = vshrl.u32 %v6719, 3
    %v6721 = vand.u32 %v6719, 7
    %v6722 = vsub.s32 0, %v6721
    %v6723 = vsel %vm6717, %v6722, %v6721
    %vm6724 = vcmp.lt.s32.totalorder %v6636, 0
    %v6725 = vsub.s32 0, %v6636
    %v6726 = vsel %vm6724, %v6725, %v6636
    %v6727 = vshrl.u32 %v6726, 3
    %v6728 = vand.u32 %v6726, 7
    %v6729 = vsub.s32 0, %v6728
    %v6730 = vsel %vm6724, %v6729, %v6728
    %vm6731 = vcmp.lt.s32.totalorder %v6637, 0
    %v6732 = vsub.s32 0, %v6637
    %v6733 = vsel %vm6731, %v6732, %v6637
    %v6734 = vshrl.u32 %v6733, 3
    %v6735 = vand.u32 %v6733, 7
    %v6736 = vsub.s32 0, %v6735
    %v6737 = vsel %vm6731, %v6736, %v6735
    %vm6738 = vcmp.lt.s32.totalorder %v6638, 0
    %v6739 = vsub.s32 0, %v6638
    %v6740 = vsel %vm6738, %v6739, %v6638
    %v6741 = vshrl.u32 %v6740, 3
    %v6742 = vand.u32 %v6740, 7
    %v6743 = vsub.s32 0, %v6742
    %v6744 = vsel %vm6738, %v6743, %v6742
    %vm6745 = vcmp.lt.s32.totalorder %v6639, 0
    %v6746 = vsub.s32 0, %v6639
    %v6747 = vsel %vm6745, %v6746, %v6639
    %v6748 = vshrl.u32 %v6747, 3
    %v6749 = vand.u32 %v6747, 7
    %v6750 = vsub.s32 0, %v6749
    %v6751 = vsel %vm6745, %v6750, %v6749
    %vm6752 = vcmp.ne.s32.totalorder %v6646, 0
    %vm6753 = vcmp.ne.s32.totalorder %v6653, 0
    %vm6754 = vcmp.ne.s32.totalorder %v6660, 0
    %vm6755 = vcmp.ne.s32.totalorder %v6667, 0
    %vm6756 = vcmp.ne.s32.totalorder %v6674, 0
    %vm6757 = vcmp.ne.s32.totalorder %v6681, 0
    %vm6758 = vcmp.ne.s32.totalorder %v6688, 0
    %vm6759 = vcmp.ne.s32.totalorder %v6695, 0
    %vm6760 = vcmp.ne.s32.totalorder %v6702, 0
    %vm6761 = vcmp.ne.s32.totalorder %v6709, 0
    %vm6762 = vcmp.ne.s32.totalorder %v6716, 0
    %vm6763 = vcmp.ne.s32.totalorder %v6723, 0
    %vm6764 = vcmp.ne.s32.totalorder %v6730, 0
    %vm6765 = vcmp.ne.s32.totalorder %v6737, 0
    %vm6766 = vcmp.ne.s32.totalorder %v6744, 0
    %vm6767 = vcmp.ne.s32.totalorder %v6751, 0
    %vm6768 = vcmp.lt.s32.totalorder %v6646, 0
    %vm6769 = vcmp.lt.s32.totalorder %v6653, 0
    %vm6770 = vcmp.lt.s32.totalorder %v6660, 0
    %vm6771 = vcmp.lt.s32.totalorder %v6667, 0
    %vm6772 = vcmp.lt.s32.totalorder %v6674, 0
    %vm6773 = vcmp.lt.s32.totalorder %v6681, 0
    %vm6774 = vcmp.lt.s32.totalorder %v6688, 0
    %vm6775 = vcmp.lt.s32.totalorder %v6695, 0
    %vm6776 = vcmp.lt.s32.totalorder %v6702, 0
    %vm6777 = vcmp.lt.s32.totalorder %v6709, 0
    %vm6778 = vcmp.lt.s32.totalorder %v6716, 0
    %vm6779 = vcmp.lt.s32.totalorder %v6723, 0
    %vm6780 = vcmp.lt.s32.totalorder %v6730, 0
    %vm6781 = vcmp.lt.s32.totalorder %v6737, 0
    %vm6782 = vcmp.lt.s32.totalorder %v6744, 0
    %vm6783 = vcmp.lt.s32.totalorder %v6751, 0
    %vm6784 = vmand %vm6768, %vm6752
    %vm6785 = vmand %vm6769, %vm6753
    %vm6786 = vmand %vm6770, %vm6754
    %vm6787 = vmand %vm6771, %vm6755
    %vm6788 = vmand %vm6772, %vm6756
    %vm6789 = vmand %vm6773, %vm6757
    %vm6790 = vmand %vm6774, %vm6758
    %vm6791 = vmand %vm6775, %vm6759
    %vm6792 = vmand %vm6776, %vm6760
    %vm6793 = vmand %vm6777, %vm6761
    %vm6794 = vmand %vm6778, %vm6762
    %vm6795 = vmand %vm6779, %vm6763
    %vm6796 = vmand %vm6780, %vm6764
    %vm6797 = vmand %vm6781, %vm6765
    %vm6798 = vmand %vm6782, %vm6766
    %vm6799 = vmand %vm6783, %vm6767
    %v6800 = vadd.s32 %v6646, 8
    %v6801 = vadd.s32 %v6653, 8
    %v6802 = vadd.s32 %v6660, 8
    %v6803 = vadd.s32 %v6667, 8
    %v6804 = vadd.s32 %v6674, 8
    %v6805 = vadd.s32 %v6681, 8
    %v6806 = vadd.s32 %v6688, 8
    %v6807 = vadd.s32 %v6695, 8
    %v6808 = vadd.s32 %v6702, 8
    %v6809 = vadd.s32 %v6709, 8
    %v6810 = vadd.s32 %v6716, 8
    %v6811 = vadd.s32 %v6723, 8
    %v6812 = vadd.s32 %v6730, 8
    %v6813 = vadd.s32 %v6737, 8
    %v6814 = vadd.s32 %v6744, 8
    %v6815 = vadd.s32 %v6751, 8
    %v6816 = vsel %vm6784, %v6800, %v6646
    %v6817 = vsel %vm6785, %v6801, %v6653
    %v6818 = vsel %vm6786, %v6802, %v6660
    %v6819 = vsel %vm6787, %v6803, %v6667
    %v6820 = vsel %vm6788, %v6804, %v6674
    %v6821 = vsel %vm6789, %v6805, %v6681
    %v6822 = vsel %vm6790, %v6806, %v6688
    %v6823 = vsel %vm6791, %v6807, %v6695
    %v6824 = vsel %vm6792, %v6808, %v6702
    %v6825 = vsel %vm6793, %v6809, %v6709
    %v6826 = vsel %vm6794, %v6810, %v6716
    %v6827 = vsel %vm6795, %v6811, %v6723
    %v6828 = vsel %vm6796, %v6812, %v6730
    %v6829 = vsel %vm6797, %v6813, %v6737
    %v6830 = vsel %vm6798, %v6814, %v6744
    %v6831 = vsel %vm6799, %v6815, %v6751
    %vm6832 = vcmp.eq.s32.totalorder %v6816, 0
    %vm6833 = vcmp.eq.s32.totalorder %v6817, 0
    %vm6834 = vcmp.eq.s32.totalorder %v6818, 0
    %vm6835 = vcmp.eq.s32.totalorder %v6819, 0
    %vm6836 = vcmp.eq.s32.totalorder %v6820, 0
    %vm6837 = vcmp.eq.s32.totalorder %v6821, 0
    %vm6838 = vcmp.eq.s32.totalorder %v6822, 0
    %vm6839 = vcmp.eq.s32.totalorder %v6823, 0
    %vm6840 = vcmp.eq.s32.totalorder %v6824, 0
    %vm6841 = vcmp.eq.s32.totalorder %v6825, 0
    %vm6842 = vcmp.eq.s32.totalorder %v6826, 0
    %vm6843 = vcmp.eq.s32.totalorder %v6827, 0
    %vm6844 = vcmp.eq.s32.totalorder %v6828, 0
    %vm6845 = vcmp.eq.s32.totalorder %v6829, 0
    %vm6846 = vcmp.eq.s32.totalorder %v6830, 0
    %vm6847 = vcmp.eq.s32.totalorder %v6831, 0
    %6848 = vmatprep.subr.mxu0 0.0
    %6849 = vmatpush1.msra.mxu0 %v6622
    %6850 = vmatprep.subr.mxu0 0.0
    %6851 = vmatpush1.msra.mxu0 %v6621
    %6852 = vmatprep.subr.mxu0 0.0
    %6853 = vmatpush1.msra.mxu0 %v6620
    %6854 = vmatprep.subr.mxu0 0.0
    %6855 = vmatpush1.msra.mxu0 %v6619
    %6856 = vmatprep.subr.mxu0 0.0
    %6857 = vmatpush1.msra.mxu0 %v6618
    %6858 = vmatprep.subr.mxu0 0.0
    %6859 = vmatpush1.msra.mxu0 %v6617
    %6860 = vmatprep.subr.mxu0 0.0
    %6861 = vmatpush1.msra.mxu0 %v6616
    %6862 = vmatprep.subr.mxu0 0.0
    %6863 = vmatpush1.msra.mxu0 %v6615
    %6864 = vmatprep.subr.mxu0 0.0
    %6865 = vmatpush1.msra.mxu0 %v6614
    %6866 = vmatprep.subr.mxu0 0.0
    %6867 = vmatpush1.msra.mxu0 %v6613
    %6868 = vmatprep.subr.mxu0 0.0
    %6869 = vmatpush1.msra.mxu0 %v6612
    %6870 = vmatprep.subr.mxu0 0.0
    %6871 = vmatpush1.msra.mxu0 %v6611
    %6872 = vmatprep.subr.mxu0 0.0
    %6873 = vmatpush1.msra.mxu0 %v6610
    %6874 = vmatprep.subr.mxu0 0.0
    %6875 = vmatpush1.msra.mxu0 %v6609
    %6876 = vmatprep.subr.mxu0 0.0
    %6877 = vmatpush1.msra.mxu0 %v6608
    %6878 = vmatprep.subr.mxu0 0.0
    %6879 = vmatpush1.msra.mxu0 %v6607
    %6880 = vmatprep.subr.mxu0 0.0
    %6881 = vmatpush2.msra.mxu0 0.0
    %6882 = vmatprep.subr.mxu0 0.0
    %6883 = vmatpush2.msra.mxu0 0.0
    %6884 = vmatprep.subr.mxu0 0.0
    %6885 = vmatpush2.msra.mxu0 0.0
    %6886 = vmatprep.subr.mxu0 0.0
    %6887 = vmatpush2.msra.mxu0 0.0
    %6888 = vmatprep.subr.mxu0 0.0
    %6889 = vmatpush2.msra.mxu0 0.0
    %6890 = vmatprep.subr.mxu0 0.0
    %6891 = vmatpush2.msra.mxu0 0.0
    %6892 = vmatprep.subr.mxu0 0.0
    %6893 = vmatpush2.msra.mxu0 0.0
    %6894 = vmatprep.subr.mxu0 0.0
    %6895 = vmatpush2.msra.mxu0 0.0
    %6896 = vmatprep.subr.mxu0 0.0
    %6897 = vmatpush2.msra.mxu0 0.0
    %6898 = vmatprep.subr.mxu0 0.0
    %6899 = vmatpush2.msra.mxu0 0.0
    %6900 = vmatprep.subr.mxu0 0.0
    %6901 = vmatpush2.msra.mxu0 0.0
    %6902 = vmatprep.subr.mxu0 0.0
    %6903 = vmatpush2.msra.mxu0 0.0
    %6904 = vmatprep.subr.mxu0 0.0
    %6905 = vmatpush2.msra.mxu0 0.0
    %6906 = vmatprep.subr.mxu0 0.0
    %6907 = vmatpush2.msra.mxu0 0.0
    %6908 = vmatprep.subr.mxu0 0.0
    %6909 = vmatpush2.msra.mxu0 0.0
    %6910 = vmatprep.subr.mxu0 0.0
    %6911 = vmatpush2.msra.mxu0 0.0
    %6912 = vmatprep.mubr.f32.mxu0 0.0
    %6913 = vmatmul.mubr.f32.gmra.mxu0 %v192
    %v6914 = vpop.f32.mrf.mxu0
    %v6915 = vadd.f32 0.0, %v6914
    %v6916 = vpop.f32.mrf.mxu0
    %6917 = vmatprep.mubr.f32.mxu0 0.0
    %6918 = vmatmul.mubr.f32.gmra.mxu0 %v193
    %v6919 = vpop.f32.mrf.mxu0
    %v6920 = vadd.f32 0.0, %v6919
    %v6921 = vpop.f32.mrf.mxu0
    %6922 = vmatprep.mubr.f32.mxu0 0.0
    %6923 = vmatmul.mubr.f32.gmra.mxu0 %v194
    %v6924 = vpop.f32.mrf.mxu0
    %v6925 = vadd.f32 0.0, %v6924
    %v6926 = vpop.f32.mrf.mxu0
    %6927 = vmatprep.mubr.f32.mxu0 0.0
    %6928 = vmatmul.mubr.f32.gmra.mxu0 %v195
    %v6929 = vpop.f32.mrf.mxu0
    %v6930 = vadd.f32 0.0, %v6929
    %v6931 = vpop.f32.mrf.mxu0
    %6932 = vmatprep.mubr.f32.mxu0 0.0
    %6933 = vmatmul.mubr.f32.gmra.mxu0 %v196
    %v6934 = vpop.f32.mrf.mxu0
    %v6935 = vadd.f32 0.0, %v6934
    %v6936 = vpop.f32.mrf.mxu0
    %6937 = vmatprep.mubr.f32.mxu0 0.0
    %6938 = vmatmul.mubr.f32.gmra.mxu0 %v197
    %v6939 = vpop.f32.mrf.mxu0
    %v6940 = vadd.f32 0.0, %v6939
    %v6941 = vpop.f32.mrf.mxu0
    %6942 = vmatprep.mubr.f32.mxu0 0.0
    %6943 = vmatmul.mubr.f32.gmra.mxu0 %v198
    %v6944 = vpop.f32.mrf.mxu0
    %v6945 = vadd.f32 0.0, %v6944
    %v6946 = vpop.f32.mrf.mxu0
    %6947 = vmatprep.mubr.f32.mxu0 0.0
    %6948 = vmatmul.mubr.f32.gmra.mxu0 %v199
    %v6949 = vpop.f32.mrf.mxu0
    %v6950 = vadd.f32 0.0, %v6949
    %v6951 = vpop.f32.mrf.mxu0
    %6952 = vmatprep.mubr.f32.mxu0 0.0
    %6953 = vmatmul.mubr.f32.gmra.mxu0 %v200
    %v6954 = vpop.f32.mrf.mxu0
    %v6955 = vadd.f32 0.0, %v6954
    %v6956 = vpop.f32.mrf.mxu0
    %6957 = vmatprep.mubr.f32.mxu0 0.0
    %6958 = vmatmul.mubr.f32.gmra.mxu0 %v201
    %v6959 = vpop.f32.mrf.mxu0
    %v6960 = vadd.f32 0.0, %v6959
    %v6961 = vpop.f32.mrf.mxu0
    %6962 = vmatprep.mubr.f32.mxu0 0.0
    %6963 = vmatmul.mubr.f32.gmra.mxu0 %v202
    %v6964 = vpop.f32.mrf.mxu0
    %v6965 = vadd.f32 0.0, %v6964
    %v6966 = vpop.f32.mrf.mxu0
    %6967 = vmatprep.mubr.f32.mxu0 0.0
    %6968 = vmatmul.mubr.f32.gmra.mxu0 %v203
    %v6969 = vpop.f32.mrf.mxu0
    %v6970 = vadd.f32 0.0, %v6969
    %v6971 = vpop.f32.mrf.mxu0
    %6972 = vmatprep.mubr.f32.mxu0 0.0
    %6973 = vmatmul.mubr.f32.gmra.mxu0 %v204
    %v6974 = vpop.f32.mrf.mxu0
    %v6975 = vadd.f32 0.0, %v6974
    %v6976 = vpop.f32.mrf.mxu0
    %6977 = vmatprep.mubr.f32.mxu0 0.0
    %6978 = vmatmul.mubr.f32.gmra.mxu0 %v205
    %v6979 = vpop.f32.mrf.mxu0
    %v6980 = vadd.f32 0.0, %v6979
    %v6981 = vpop.f32.mrf.mxu0
    %6982 = vmatprep.mubr.f32.mxu0 0.0
    %6983 = vmatmul.mubr.f32.gmra.mxu0 %v206
    %v6984 = vpop.f32.mrf.mxu0
    %v6985 = vadd.f32 0.0, %v6984
    %v6986 = vpop.f32.mrf.mxu0
    %6987 = vmatprep.mubr.f32.mxu0 0.0
    %6988 = vmatmul.mubr.f32.gmra.mxu0 %v207
    %v6989 = vpop.f32.mrf.mxu0
    %v6990 = vadd.f32 0.0, %v6989
    %v6991 = vpop.f32.mrf.mxu0
    %6992 = vdwg.mxu0
    %v6993 = vld [vmem:[%s1 + $0x300] sm:$0xff]
    %v6994 = vld [vmem:[%s1 + $0x308] sm:$0xff]
    %v6995 = vld [vmem:[%s1 + $0x310] sm:$0xff]
    %v6996 = vld [vmem:[%s1 + $0x318] sm:$0xff]
    %v6997 = vld [vmem:[%s1 + $0x330] sm:$0xff]
    %v6998 = vld [vmem:[%s1 + $0x338] sm:$0xff]
    %v6999 = vld [vmem:[%s1 + $0x340] sm:$0xff]
    %v7000 = vld [vmem:[%s1 + $0x348] sm:$0xff]
    %v7001 = vld [vmem:[%s1 + $0x360] sm:$0xff]
    %v7002 = vld [vmem:[%s1 + $0x368] sm:$0xff]
    %v7003 = vld [vmem:[%s1 + $0x370] sm:$0xff]
    %v7004 = vld [vmem:[%s1 + $0x378] sm:$0xff]
    %v7005 = vld [vmem:[%s1 + $0x390] sm:$0xff]
    %v7006 = vld [vmem:[%s1 + $0x398] sm:$0xff]
    %v7007 = vld [vmem:[%s1 + $0x3a0] sm:$0xff]
    %v7008 = vld [vmem:[%s1 + $0x3a8] sm:$0xff]
    %v7009 = vld [vmem:[%s1 + $0x3c0] sm:$0xff]
    %v7010 = vld [vmem:[%s1 + $0x3c8] sm:$0xff]
    %v7011 = vld [vmem:[%s1 + $0x3d0] sm:$0xff]
    %v7012 = vld [vmem:[%s1 + $0x3d8] sm:$0xff]
    %v7013 = vld [vmem:[%s1 + $0x3f0] sm:$0xff]
    %v7014 = vld [vmem:[%s1 + $0x3f8] sm:$0xff]
    %v7015 = vld [vmem:[%s1 + $0x400] sm:$0xff]
    %v7016 = vld [vmem:[%s1 + $0x408] sm:$0xff]
    %v7017 = vld [vmem:[%s1 + $0x420] sm:$0xff]
    %v7018 = vld [vmem:[%s1 + $0x428] sm:$0xff]
    %v7019 = vld [vmem:[%s1 + $0x430] sm:$0xff]
    %v7020 = vld [vmem:[%s1 + $0x438] sm:$0xff]
    %v7021 = vld [vmem:[%s1 + $0x450] sm:$0xff]
    %v7022 = vld [vmem:[%s1 + $0x458] sm:$0xff]
    %v7023 = vld [vmem:[%s1 + $0x460] sm:$0xff]
    %v7024 = vld [vmem:[%s1 + $0x468] sm:$0xff]
    %v7025 = vld [vmem:[%s1 + $0x480] sm:$0xff]
    %v7026 = vld [vmem:[%s1 + $0x488] sm:$0xff]
    %v7027 = vld [vmem:[%s1 + $0x490] sm:$0xff]
    %v7028 = vld [vmem:[%s1 + $0x498] sm:$0xff]
    %v7029 = vld [vmem:[%s1 + $0x4b0] sm:$0xff]
    %v7030 = vld [vmem:[%s1 + $0x4b8] sm:$0xff]
    %v7031 = vld [vmem:[%s1 + $0x4c0] sm:$0xff]
    %v7032 = vld [vmem:[%s1 + $0x4c8] sm:$0xff]
    %v7033 = vld [vmem:[%s1 + $0x4e0] sm:$0xff]
    %v7034 = vld [vmem:[%s1 + $0x4e8] sm:$0xff]
    %v7035 = vld [vmem:[%s1 + $0x4f0] sm:$0xff]
    %v7036 = vld [vmem:[%s1 + $0x4f8] sm:$0xff]
    %v7037 = vld [vmem:[%s1 + $0x510] sm:$0xff]
    %v7038 = vld [vmem:[%s1 + $0x518] sm:$0xff]
    %v7039 = vld [vmem:[%s1 + $0x520] sm:$0xff]
    %v7040 = vld [vmem:[%s1 + $0x528] sm:$0xff]
    %v7041 = vld [vmem:[%s1 + $0x540] sm:$0xff]
    %v7042 = vld [vmem:[%s1 + $0x548] sm:$0xff]
    %v7043 = vld [vmem:[%s1 + $0x550] sm:$0xff]
    %v7044 = vld [vmem:[%s1 + $0x558] sm:$0xff]
    %v7045 = vld [vmem:[%s1 + $0x570] sm:$0xff]
    %v7046 = vld [vmem:[%s1 + $0x578] sm:$0xff]
    %v7047 = vld [vmem:[%s1 + $0x580] sm:$0xff]
    %v7048 = vld [vmem:[%s1 + $0x588] sm:$0xff]
    %v7049 = vld [vmem:[%s1 + $0x5a0] sm:$0xff]
    %v7050 = vld [vmem:[%s1 + $0x5a8] sm:$0xff]
    %v7051 = vld [vmem:[%s1 + $0x5b0] sm:$0xff]
    %v7052 = vld [vmem:[%s1 + $0x5b8] sm:$0xff]
    %v7053 = vld [vmem:[%s1 + $0x5d0] sm:$0xff]
    %v7054 = vld [vmem:[%s1 + $0x5d8] sm:$0xff]
    %v7055 = vld [vmem:[%s1 + $0x5e0] sm:$0xff]
    %v7056 = vld [vmem:[%s1 + $0x5e8] sm:$0xff]
    %7057 = vmatprep.subr.mxu0 %v7054
    %7058 = vmatpush1.msra.mxu0 %v7053
    %7059 = vmatprep.subr.mxu0 %v7050
    %7060 = vmatpush1.msra.mxu0 %v7049
    %7061 = vmatprep.subr.mxu0 %v7046
    %7062 = vmatpush1.msra.mxu0 %v7045
    %7063 = vmatprep.subr.mxu0 %v7042
    %7064 = vmatpush1.msra.mxu0 %v7041
    %7065 = vmatprep.subr.mxu0 %v7038
    %7066 = vmatpush1.msra.mxu0 %v7037
    %7067 = vmatprep.subr.mxu0 %v7034
    %7068 = vmatpush1.msra.mxu0 %v7033
    %7069 = vmatprep.subr.mxu0 %v7030
    %7070 = vmatpush1.msra.mxu0 %v7029
    %7071 = vmatprep.subr.mxu0 %v7026
    %7072 = vmatpush1.msra.mxu0 %v7025
    %7073 = vmatprep.subr.mxu0 %v7022
    %7074 = vmatpush1.msra.mxu0 %v7021
    %7075 = vmatprep.subr.mxu0 %v7018
    %7076 = vmatpush1.msra.mxu0 %v7017
    %7077 = vmatprep.subr.mxu0 %v7014
    %7078 = vmatpush1.msra.mxu0 %v7013
    %7079 = vmatprep.subr.mxu0 %v7010
    %7080 = vmatpush1.msra.mxu0 %v7009
    %7081 = vmatprep.subr.mxu0 %v7006
    %7082 = vmatpush1.msra.mxu0 %v7005
    %7083 = vmatprep.subr.mxu0 %v7002
    %7084 = vmatpush1.msra.mxu0 %v7001
    %7085 = vmatprep.subr.mxu0 %v6998
    %7086 = vmatpush1.msra.mxu0 %v6997
    %7087 = vmatprep.subr.mxu0 %v6994
    %7088 = vmatpush1.msra.mxu0 %v6993
    %7089 = vmatprep.subr.mxu0 0.0
    %7090 = vmatpush2.msra.mxu0 0.0
    %7091 = vmatprep.subr.mxu0 0.0
    %7092 = vmatpush2.msra.mxu0 0.0
    %7093 = vmatprep.subr.mxu0 0.0
    %7094 = vmatpush2.msra.mxu0 0.0
    %7095 = vmatprep.subr.mxu0 0.0
    %7096 = vmatpush2.msra.mxu0 0.0
    %7097 = vmatprep.subr.mxu0 0.0
    %7098 = vmatpush2.msra.mxu0 0.0
    %7099 = vmatprep.subr.mxu0 0.0
    %7100 = vmatpush2.msra.mxu0 0.0
    %7101 = vmatprep.subr.mxu0 0.0
    %7102 = vmatpush2.msra.mxu0 0.0
    %7103 = vmatprep.subr.mxu0 0.0
    %7104 = vmatpush2.msra.mxu0 0.0
    %7105 = vmatprep.subr.mxu0 0.0
    %7106 = vmatpush2.msra.mxu0 0.0
    %7107 = vmatprep.subr.mxu0 0.0
    %7108 = vmatpush2.msra.mxu0 0.0
    %7109 = vmatprep.subr.mxu0 0.0
    %7110 = vmatpush2.msra.mxu0 0.0
    %7111 = vmatprep.subr.mxu0 0.0
    %7112 = vmatpush2.msra.mxu0 0.0
    %7113 = vmatprep.subr.mxu0 0.0
    %7114 = vmatpush2.msra.mxu0 0.0
    %7115 = vmatprep.subr.mxu0 0.0
    %7116 = vmatpush2.msra.mxu0 0.0
    %7117 = vmatprep.subr.mxu0 0.0
    %7118 = vmatpush2.msra.mxu0 0.0
    %7119 = vmatprep.subr.mxu0 0.0
    %7120 = vmatpush2.msra.mxu0 0.0
    %7121 = vmatprep.mubr.f32.mxu0 0.0
    %7122 = vmatmul.mubr.f32.gmra.mxu0 %v6607
    %v7123 = vpop.f32.mrf.mxu0
    %v7124 = vadd.f32 0.0, %v7123
    %v7125 = vpop.f32.mrf.mxu0
    %v7126 = vadd.f32 0.0, %v7125
    %7127 = vmatprep.mubr.f32.mxu0 0.0
    %7128 = vmatmul.mubr.f32.gmra.mxu0 %v6608
    %v7129 = vpop.f32.mrf.mxu0
    %v7130 = vadd.f32 0.0, %v7129
    %v7131 = vpop.f32.mrf.mxu0
    %v7132 = vadd.f32 0.0, %v7131
    %7133 = vmatprep.mubr.f32.mxu0 0.0
    %7134 = vmatmul.mubr.f32.gmra.mxu0 %v6609
    %v7135 = vpop.f32.mrf.mxu0
    %v7136 = vadd.f32 0.0, %v7135
    %v7137 = vpop.f32.mrf.mxu0
    %v7138 = vadd.f32 0.0, %v7137
    %7139 = vmatprep.mubr.f32.mxu0 0.0
    %7140 = vmatmul.mubr.f32.gmra.mxu0 %v6610
    %v7141 = vpop.f32.mrf.mxu0
    %v7142 = vadd.f32 0.0, %v7141
    %v7143 = vpop.f32.mrf.mxu0
    %v7144 = vadd.f32 0.0, %v7143
    %7145 = vmatprep.mubr.f32.mxu0 0.0
    %7146 = vmatmul.mubr.f32.gmra.mxu0 %v6611
    %v7147 = vpop.f32.mrf.mxu0
    %v7148 = vadd.f32 0.0, %v7147
    %v7149 = vpop.f32.mrf.mxu0
    %v7150 = vadd.f32 0.0, %v7149
    %7151 = vmatprep.mubr.f32.mxu0 0.0
    %7152 = vmatmul.mubr.f32.gmra.mxu0 %v6612
    %v7153 = vpop.f32.mrf.mxu0
    %v7154 = vadd.f32 0.0, %v7153
    %v7155 = vpop.f32.mrf.mxu0
    %v7156 = vadd.f32 0.0, %v7155
    %7157 = vmatprep.mubr.f32.mxu0 0.0
    %7158 = vmatmul.mubr.f32.gmra.mxu0 %v6613
    %v7159 = vpop.f32.mrf.mxu0
    %v7160 = vadd.f32 0.0, %v7159
    %v7161 = vpop.f32.mrf.mxu0
    %v7162 = vadd.f32 0.0, %v7161
    %7163 = vmatprep.mubr.f32.mxu0 0.0
    %7164 = vmatmul.mubr.f32.gmra.mxu0 %v6614
    %v7165 = vpop.f32.mrf.mxu0
    %v7166 = vadd.f32 0.0, %v7165
    %v7167 = vpop.f32.mrf.mxu0
    %v7168 = vadd.f32 0.0, %v7167
    %7169 = vmatprep.mubr.f32.mxu0 0.0
    %7170 = vmatmul.mubr.f32.gmra.mxu0 %v6615
    %v7171 = vpop.f32.mrf.mxu0
    %v7172 = vadd.f32 0.0, %v7171
    %v7173 = vpop.f32.mrf.mxu0
    %v7174 = vadd.f32 0.0, %v7173
    %7175 = vmatprep.mubr.f32.mxu0 0.0
    %7176 = vmatmul.mubr.f32.gmra.mxu0 %v6616
    %v7177 = vpop.f32.mrf.mxu0
    %v7178 = vadd.f32 0.0, %v7177
    %v7179 = vpop.f32.mrf.mxu0
    %v7180 = vadd.f32 0.0, %v7179
    %7181 = vmatprep.mubr.f32.mxu0 0.0
    %7182 = vmatmul.mubr.f32.gmra.mxu0 %v6617
    %v7183 = vpop.f32.mrf.mxu0
    %v7184 = vadd.f32 0.0, %v7183
    %v7185 = vpop.f32.mrf.mxu0
    %v7186 = vadd.f32 0.0, %v7185
    %7187 = vmatprep.mubr.f32.mxu0 0.0
    %7188 = vmatmul.mubr.f32.gmra.mxu0 %v6618
    %v7189 = vpop.f32.mrf.mxu0
    %v7190 = vadd.f32 0.0, %v7189
    %v7191 = vpop.f32.mrf.mxu0
    %v7192 = vadd.f32 0.0, %v7191
    %7193 = vmatprep.mubr.f32.mxu0 0.0
    %7194 = vmatmul.mubr.f32.gmra.mxu0 %v6619
    %v7195 = vpop.f32.mrf.mxu0
    %v7196 = vadd.f32 0.0, %v7195
    %v7197 = vpop.f32.mrf.mxu0
    %v7198 = vadd.f32 0.0, %v7197
    %7199 = vmatprep.mubr.f32.mxu0 0.0
    %7200 = vmatmul.mubr.f32.gmra.mxu0 %v6620
    %v7201 = vpop.f32.mrf.mxu0
    %v7202 = vadd.f32 0.0, %v7201
    %v7203 = vpop.f32.mrf.mxu0
    %v7204 = vadd.f32 0.0, %v7203
    %7205 = vmatprep.mubr.f32.mxu0 0.0
    %7206 = vmatmul.mubr.f32.gmra.mxu0 %v6621
    %v7207 = vpop.f32.mrf.mxu0
    %v7208 = vadd.f32 0.0, %v7207
    %v7209 = vpop.f32.mrf.mxu0
    %v7210 = vadd.f32 0.0, %v7209
    %7211 = vmatprep.mubr.f32.mxu0 0.0
    %7212 = vmatmul.mubr.f32.gmra.mxu0 %v6622
    %v7213 = vpop.f32.mrf.mxu0
    %v7214 = vadd.f32 0.0, %v7213
    %v7215 = vpop.f32.mrf.mxu0
    %v7216 = vadd.f32 0.0, %v7215
    %7217 = vdwg.mxu0
    %7218 = vmatprep.subr.mxu0 %v7056
    %7219 = vmatpush1.msra.mxu0 %v7055
    %7220 = vmatprep.subr.mxu0 %v7052
    %7221 = vmatpush1.msra.mxu0 %v7051
    %7222 = vmatprep.subr.mxu0 %v7048
    %7223 = vmatpush1.msra.mxu0 %v7047
    %7224 = vmatprep.subr.mxu0 %v7044
    %7225 = vmatpush1.msra.mxu0 %v7043
    %7226 = vmatprep.subr.mxu0 %v7040
    %7227 = vmatpush1.msra.mxu0 %v7039
    %7228 = vmatprep.subr.mxu0 %v7036
    %7229 = vmatpush1.msra.mxu0 %v7035
    %7230 = vmatprep.subr.mxu0 %v7032
    %7231 = vmatpush1.msra.mxu0 %v7031
    %7232 = vmatprep.subr.mxu0 %v7028
    %7233 = vmatpush1.msra.mxu0 %v7027
    %7234 = vmatprep.subr.mxu0 %v7024
    %7235 = vmatpush1.msra.mxu0 %v7023
    %7236 = vmatprep.subr.mxu0 %v7020
    %7237 = vmatpush1.msra.mxu0 %v7019
    %7238 = vmatprep.subr.mxu0 %v7016
    %7239 = vmatpush1.msra.mxu0 %v7015
    %7240 = vmatprep.subr.mxu0 %v7012
    %7241 = vmatpush1.msra.mxu0 %v7011
    %7242 = vmatprep.subr.mxu0 %v7008
    %7243 = vmatpush1.msra.mxu0 %v7007
    %7244 = vmatprep.subr.mxu0 %v7004
    %7245 = vmatpush1.msra.mxu0 %v7003
    %7246 = vmatprep.subr.mxu0 %v7000
    %7247 = vmatpush1.msra.mxu0 %v6999
    %7248 = vmatprep.subr.mxu0 %v6996
    %7249 = vmatpush1.msra.mxu0 %v6995
    %7250 = vmatprep.subr.mxu0 0.0
    %7251 = vmatpush2.msra.mxu0 0.0
    %7252 = vmatprep.subr.mxu0 0.0
    %7253 = vmatpush2.msra.mxu0 0.0
    %7254 = vmatprep.subr.mxu0 0.0
    %7255 = vmatpush2.msra.mxu0 0.0
    %7256 = vmatprep.subr.mxu0 0.0
    %7257 = vmatpush2.msra.mxu0 0.0
    %7258 = vmatprep.subr.mxu0 0.0
    %7259 = vmatpush2.msra.mxu0 0.0
    %7260 = vmatprep.subr.mxu0 0.0
    %7261 = vmatpush2.msra.mxu0 0.0
    %7262 = vmatprep.subr.mxu0 0.0
    %7263 = vmatpush2.msra.mxu0 0.0
    %7264 = vmatprep.subr.mxu0 0.0
    %7265 = vmatpush2.msra.mxu0 0.0
    %7266 = vmatprep.subr.mxu0 0.0
    %7267 = vmatpush2.msra.mxu0 0.0
    %7268 = vmatprep.subr.mxu0 0.0
    %7269 = vmatpush2.msra.mxu0 0.0
    %7270 = vmatprep.subr.mxu0 0.0
    %7271 = vmatpush2.msra.mxu0 0.0
    %7272 = vmatprep.subr.mxu0 0.0
    %7273 = vmatpush2.msra.mxu0 0.0
    %7274 = vmatprep.subr.mxu0 0.0
    %7275 = vmatpush2.msra.mxu0 0.0
    %7276 = vmatprep.subr.mxu0 0.0
    %7277 = vmatpush2.msra.mxu0 0.0
    %7278 = vmatprep.subr.mxu0 0.0
    %7279 = vmatpush2.msra.mxu0 0.0
    %7280 = vmatprep.subr.mxu0 0.0
    %7281 = vmatpush2.msra.mxu0 0.0
    %7282 = vmatprep.mubr.f32.mxu0 0.0
    %7283 = vmatmul.mubr.f32.gmra.mxu0 %v6607
    %v7284 = vpop.f32.mrf.mxu0
    %v7285 = vadd.f32 0.0, %v7284
    %v7286 = vpop.f32.mrf.mxu0
    %v7287 = vadd.f32 0.0, %v7286
    %7288 = vmatprep.mubr.f32.mxu0 0.0
    %7289 = vmatmul.mubr.f32.gmra.mxu0 %v6608
    %v7290 = vpop.f32.mrf.mxu0
    %v7291 = vadd.f32 0.0, %v7290
    %v7292 = vpop.f32.mrf.mxu0
    %v7293 = vadd.f32 0.0, %v7292
    %7294 = vmatprep.mubr.f32.mxu0 0.0
    %7295 = vmatmul.mubr.f32.gmra.mxu0 %v6609
    %v7296 = vpop.f32.mrf.mxu0
    %v7297 = vadd.f32 0.0, %v7296
    %v7298 = vpop.f32.mrf.mxu0
    %v7299 = vadd.f32 0.0, %v7298
    %7300 = vmatprep.mubr.f32.mxu0 0.0
    %7301 = vmatmul.mubr.f32.gmra.mxu0 %v6610
    %v7302 = vpop.f32.mrf.mxu0
    %v7303 = vadd.f32 0.0, %v7302
    %v7304 = vpop.f32.mrf.mxu0
    %v7305 = vadd.f32 0.0, %v7304
    %7306 = vmatprep.mubr.f32.mxu0 0.0
    %7307 = vmatmul.mubr.f32.gmra.mxu0 %v6611
    %v7308 = vpop.f32.mrf.mxu0
    %v7309 = vadd.f32 0.0, %v7308
    %v7310 = vpop.f32.mrf.mxu0
    %v7311 = vadd.f32 0.0, %v7310
    %7312 = vmatprep.mubr.f32.mxu0 0.0
    %7313 = vmatmul.mubr.f32.gmra.mxu0 %v6612
    %v7314 = vpop.f32.mrf.mxu0
    %v7315 = vadd.f32 0.0, %v7314
    %v7316 = vpop.f32.mrf.mxu0
    %v7317 = vadd.f32 0.0, %v7316
    %7318 = vmatprep.mubr.f32.mxu0 0.0
    %7319 = vmatmul.mubr.f32.gmra.mxu0 %v6613
    %v7320 = vpop.f32.mrf.mxu0
    %v7321 = vadd.f32 0.0, %v7320
    %v7322 = vpop.f32.mrf.mxu0
    %v7323 = vadd.f32 0.0, %v7322
    %7324 = vmatprep.mubr.f32.mxu0 0.0
    %7325 = vmatmul.mubr.f32.gmra.mxu0 %v6614
    %v7326 = vpop.f32.mrf.mxu0
    %v7327 = vadd.f32 0.0, %v7326
    %v7328 = vpop.f32.mrf.mxu0
    %v7329 = vadd.f32 0.0, %v7328
    %7330 = vmatprep.mubr.f32.mxu0 0.0
    %7331 = vmatmul.mubr.f32.gmra.mxu0 %v6615
    %v7332 = vpop.f32.mrf.mxu0
    %v7333 = vadd.f32 0.0, %v7332
    %v7334 = vpop.f32.mrf.mxu0
    %v7335 = vadd.f32 0.0, %v7334
    %7336 = vmatprep.mubr.f32.mxu0 0.0
    %7337 = vmatmul.mubr.f32.gmra.mxu0 %v6616
    %v7338 = vpop.f32.mrf.mxu0
    %v7339 = vadd.f32 0.0, %v7338
    %v7340 = vpop.f32.mrf.mxu0
    %v7341 = vadd.f32 0.0, %v7340
    %7342 = vmatprep.mubr.f32.mxu0 0.0
    %7343 = vmatmul.mubr.f32.gmra.mxu0 %v6617
    %v7344 = vpop.f32.mrf.mxu0
    %v7345 = vadd.f32 0.0, %v7344
    %v7346 = vpop.f32.mrf.mxu0
    %v7347 = vadd.f32 0.0, %v7346
    %7348 = vmatprep.mubr.f32.mxu0 0.0
    %7349 = vmatmul.mubr.f32.gmra.mxu0 %v6618
    %v7350 = vpop.f32.mrf.mxu0
    %v7351 = vadd.f32 0.0, %v7350
    %v7352 = vpop.f32.mrf.mxu0
    %v7353 = vadd.f32 0.0, %v7352
    %7354 = vmatprep.mubr.f32.mxu0 0.0
    %7355 = vmatmul.mubr.f32.gmra.mxu0 %v6619
    %v7356 = vpop.f32.mrf.mxu0
    %v7357 = vadd.f32 0.0, %v7356
    %v7358 = vpop.f32.mrf.mxu0
    %v7359 = vadd.f32 0.0, %v7358
    %7360 = vmatprep.mubr.f32.mxu0 0.0
    %7361 = vmatmul.mubr.f32.gmra.mxu0 %v6620
    %v7362 = vpop.f32.mrf.mxu0
    %v7363 = vadd.f32 0.0, %v7362
    %v7364 = vpop.f32.mrf.mxu0
    %v7365 = vadd.f32 0.0, %v7364
    %7366 = vmatprep.mubr.f32.mxu0 0.0
    %7367 = vmatmul.mubr.f32.gmra.mxu0 %v6621
    %v7368 = vpop.f32.mrf.mxu0
    %v7369 = vadd.f32 0.0, %v7368
    %v7370 = vpop.f32.mrf.mxu0
    %v7371 = vadd.f32 0.0, %v7370
    %7372 = vmatprep.mubr.f32.mxu0 0.0
    %7373 = vmatmul.mubr.f32.gmra.mxu0 %v6622
    %v7374 = vpop.f32.mrf.mxu0
    %v7375 = vadd.f32 0.0, %v7374
    %v7376 = vpop.f32.mrf.mxu0
    %v7377 = vadd.f32 0.0, %v7376
    %7378 = vdwg.mxu0
    %v7379 = vld [vmem:[%s1 + $0x320] sm:$0xff]
    %v7380 = vld [vmem:[%s1 + $0x328] sm:$0xff]
    %v7381 = vld [vmem:[%s1 + $0x350] sm:$0xff]
    %v7382 = vld [vmem:[%s1 + $0x358] sm:$0xff]
    %v7383 = vld [vmem:[%s1 + $0x380] sm:$0xff]
    %v7384 = vld [vmem:[%s1 + $0x388] sm:$0xff]
    %v7385 = vld [vmem:[%s1 + $0x3b0] sm:$0xff]
    %v7386 = vld [vmem:[%s1 + $0x3b8] sm:$0xff]
    %v7387 = vld [vmem:[%s1 + $0x3e0] sm:$0xff]
    %v7388 = vld [vmem:[%s1 + $0x3e8] sm:$0xff]
    %v7389 = vld [vmem:[%s1 + $0x410] sm:$0xff]
    %v7390 = vld [vmem:[%s1 + $0x418] sm:$0xff]
    %v7391 = vld [vmem:[%s1 + $0x440] sm:$0xff]
    %v7392 = vld [vmem:[%s1 + $0x448] sm:$0xff]
    %v7393 = vld [vmem:[%s1 + $0x470] sm:$0xff]
    %v7394 = vld [vmem:[%s1 + $0x478] sm:$0xff]
    %v7395 = vld [vmem:[%s1 + $0x4a0] sm:$0xff]
    %v7396 = vld [vmem:[%s1 + $0x4a8] sm:$0xff]
    %v7397 = vld [vmem:[%s1 + $0x4d0] sm:$0xff]
    %v7398 = vld [vmem:[%s1 + $0x4d8] sm:$0xff]
    %v7399 = vld [vmem:[%s1 + $0x500] sm:$0xff]
    %v7400 = vld [vmem:[%s1 + $0x508] sm:$0xff]
    %v7401 = vld [vmem:[%s1 + $0x530] sm:$0xff]
    %v7402 = vld [vmem:[%s1 + $0x538] sm:$0xff]
    %v7403 = vld [vmem:[%s1 + $0x560] sm:$0xff]
    %v7404 = vld [vmem:[%s1 + $0x568] sm:$0xff]
    %v7405 = vld [vmem:[%s1 + $0x590] sm:$0xff]
    %v7406 = vld [vmem:[%s1 + $0x598] sm:$0xff]
    %v7407 = vld [vmem:[%s1 + $0x5c0] sm:$0xff]
    %v7408 = vld [vmem:[%s1 + $0x5c8] sm:$0xff]
    %v7409 = vld [vmem:[%s1 + $0x5f0] sm:$0xff]
    %v7410 = vld [vmem:[%s1 + $0x5f8] sm:$0xff]
    %7411 = vmatprep.subr.mxu0 %v7410
    %7412 = vmatpush1.msra.mxu0 %v7409
    %7413 = vmatprep.subr.mxu0 %v7408
    %7414 = vmatpush1.msra.mxu0 %v7407
    %7415 = vmatprep.subr.mxu0 %v7406
    %7416 = vmatpush1.msra.mxu0 %v7405
    %7417 = vmatprep.subr.mxu0 %v7404
    %7418 = vmatpush1.msra.mxu0 %v7403
    %7419 = vmatprep.subr.mxu0 %v7402
    %7420 = vmatpush1.msra.mxu0 %v7401
    %7421 = vmatprep.subr.mxu0 %v7400
    %7422 = vmatpush1.msra.mxu0 %v7399
    %7423 = vmatprep.subr.mxu0 %v7398
    %7424 = vmatpush1.msra.mxu0 %v7397
    %7425 = vmatprep.subr.mxu0 %v7396
    %7426 = vmatpush1.msra.mxu0 %v7395
    %7427 = vmatprep.subr.mxu0 %v7394
    %7428 = vmatpush1.msra.mxu0 %v7393
    %7429 = vmatprep.subr.mxu0 %v7392
    %7430 = vmatpush1.msra.mxu0 %v7391
    %7431 = vmatprep.subr.mxu0 %v7390
    %7432 = vmatpush1.msra.mxu0 %v7389
    %7433 = vmatprep.subr.mxu0 %v7388
    %7434 = vmatpush1.msra.mxu0 %v7387
    %7435 = vmatprep.subr.mxu0 %v7386
    %7436 = vmatpush1.msra.mxu0 %v7385
    %7437 = vmatprep.subr.mxu0 %v7384
    %7438 = vmatpush1.msra.mxu0 %v7383
    %7439 = vmatprep.subr.mxu0 %v7382
    %7440 = vmatpush1.msra.mxu0 %v7381
    %7441 = vmatprep.subr.mxu0 %v7380
    %7442 = vmatpush1.msra.mxu0 %v7379
    %7443 = vmatprep.subr.mxu0 0.0
    %7444 = vmatpush2.msra.mxu0 0.0
    %7445 = vmatprep.subr.mxu0 0.0
    %7446 = vmatpush2.msra.mxu0 0.0
    %7447 = vmatprep.subr.mxu0 0.0
    %7448 = vmatpush2.msra.mxu0 0.0
    %7449 = vmatprep.subr.mxu0 0.0
    %7450 = vmatpush2.msra.mxu0 0.0
    %7451 = vmatprep.subr.mxu0 0.0
    %7452 = vmatpush2.msra.mxu0 0.0
    %7453 = vmatprep.subr.mxu0 0.0
    %7454 = vmatpush2.msra.mxu0 0.0
    %7455 = vmatprep.subr.mxu0 0.0
    %7456 = vmatpush2.msra.mxu0 0.0
    %7457 = vmatprep.subr.mxu0 0.0
    %7458 = vmatpush2.msra.mxu0 0.0
    %7459 = vmatprep.subr.mxu0 0.0
    %7460 = vmatpush2.msra.mxu0 0.0
    %7461 = vmatprep.subr.mxu0 0.0
    %7462 = vmatpush2.msra.mxu0 0.0
    %7463 = vmatprep.subr.mxu0 0.0
    %7464 = vmatpush2.msra.mxu0 0.0
    %7465 = vmatprep.subr.mxu0 0.0
    %7466 = vmatpush2.msra.mxu0 0.0
    %7467 = vmatprep.subr.mxu0 0.0
    %7468 = vmatpush2.msra.mxu0 0.0
    %7469 = vmatprep.subr.mxu0 0.0
    %7470 = vmatpush2.msra.mxu0 0.0
    %7471 = vmatprep.subr.mxu0 0.0
    %7472 = vmatpush2.msra.mxu0 0.0
    %7473 = vmatprep.subr.mxu0 0.0
    %7474 = vmatpush2.msra.mxu0 0.0
    %7475 = vmatprep.mubr.f32.mxu0 0.0
    %7476 = vmatmul.mubr.f32.gmra.mxu0 %v6915
    %v7477 = vpop.f32.mrf.mxu0
    %v7478 = vadd.f32 0.0, %v7477
    %v7479 = vpop.f32.mrf.mxu0
    %v7480 = vadd.f32 0.0, %v7479
    %7481 = vmatprep.mubr.f32.mxu0 0.0
    %7482 = vmatmul.mubr.f32.gmra.mxu0 %v6920
    %v7483 = vpop.f32.mrf.mxu0
    %v7484 = vadd.f32 0.0, %v7483
    %v7485 = vpop.f32.mrf.mxu0
    %v7486 = vadd.f32 0.0, %v7485
    %7487 = vmatprep.mubr.f32.mxu0 0.0
    %7488 = vmatmul.mubr.f32.gmra.mxu0 %v6925
    %v7489 = vpop.f32.mrf.mxu0
    %v7490 = vadd.f32 0.0, %v7489
    %v7491 = vpop.f32.mrf.mxu0
    %v7492 = vadd.f32 0.0, %v7491
    %7493 = vmatprep.mubr.f32.mxu0 0.0
    %7494 = vmatmul.mubr.f32.gmra.mxu0 %v6930
    %v7495 = vpop.f32.mrf.mxu0
    %v7496 = vadd.f32 0.0, %v7495
    %v7497 = vpop.f32.mrf.mxu0
    %v7498 = vadd.f32 0.0, %v7497
    %7499 = vmatprep.mubr.f32.mxu0 0.0
    %7500 = vmatmul.mubr.f32.gmra.mxu0 %v6935
    %v7501 = vpop.f32.mrf.mxu0
    %v7502 = vadd.f32 0.0, %v7501
    %v7503 = vpop.f32.mrf.mxu0
    %v7504 = vadd.f32 0.0, %v7503
    %7505 = vmatprep.mubr.f32.mxu0 0.0
    %7506 = vmatmul.mubr.f32.gmra.mxu0 %v6940
    %v7507 = vpop.f32.mrf.mxu0
    %v7508 = vadd.f32 0.0, %v7507
    %v7509 = vpop.f32.mrf.mxu0
    %v7510 = vadd.f32 0.0, %v7509
    %7511 = vmatprep.mubr.f32.mxu0 0.0
    %7512 = vmatmul.mubr.f32.gmra.mxu0 %v6945
    %v7513 = vpop.f32.mrf.mxu0
    %v7514 = vadd.f32 0.0, %v7513
    %v7515 = vpop.f32.mrf.mxu0
    %v7516 = vadd.f32 0.0, %v7515
    %7517 = vmatprep.mubr.f32.mxu0 0.0
    %7518 = vmatmul.mubr.f32.gmra.mxu0 %v6950
    %v7519 = vpop.f32.mrf.mxu0
    %v7520 = vadd.f32 0.0, %v7519
    %v7521 = vpop.f32.mrf.mxu0
    %v7522 = vadd.f32 0.0, %v7521
    %7523 = vmatprep.mubr.f32.mxu0 0.0
    %7524 = vmatmul.mubr.f32.gmra.mxu0 %v6955
    %v7525 = vpop.f32.mrf.mxu0
    %v7526 = vadd.f32 0.0, %v7525
    %v7527 = vpop.f32.mrf.mxu0
    %v7528 = vadd.f32 0.0, %v7527
    %7529 = vmatprep.mubr.f32.mxu0 0.0
    %7530 = vmatmul.mubr.f32.gmra.mxu0 %v6960
    %v7531 = vpop.f32.mrf.mxu0
    %v7532 = vadd.f32 0.0, %v7531
    %v7533 = vpop.f32.mrf.mxu0
    %v7534 = vadd.f32 0.0, %v7533
    %7535 = vmatprep.mubr.f32.mxu0 0.0
    %7536 = vmatmul.mubr.f32.gmra.mxu0 %v6965
    %v7537 = vpop.f32.mrf.mxu0
    %v7538 = vadd.f32 0.0, %v7537
    %v7539 = vpop.f32.mrf.mxu0
    %v7540 = vadd.f32 0.0, %v7539
    %7541 = vmatprep.mubr.f32.mxu0 0.0
    %7542 = vmatmul.mubr.f32.gmra.mxu0 %v6970
    %v7543 = vpop.f32.mrf.mxu0
    %v7544 = vadd.f32 0.0, %v7543
    %v7545 = vpop.f32.mrf.mxu0
    %v7546 = vadd.f32 0.0, %v7545
    %7547 = vmatprep.mubr.f32.mxu0 0.0
    %7548 = vmatmul.mubr.f32.gmra.mxu0 %v6975
    %v7549 = vpop.f32.mrf.mxu0
    %v7550 = vadd.f32 0.0, %v7549
    %v7551 = vpop.f32.mrf.mxu0
    %v7552 = vadd.f32 0.0, %v7551
    %7553 = vmatprep.mubr.f32.mxu0 0.0
    %7554 = vmatmul.mubr.f32.gmra.mxu0 %v6980
    %v7555 = vpop.f32.mrf.mxu0
    %v7556 = vadd.f32 0.0, %v7555
    %v7557 = vpop.f32.mrf.mxu0
    %v7558 = vadd.f32 0.0, %v7557
    %7559 = vmatprep.mubr.f32.mxu0 0.0
    %7560 = vmatmul.mubr.f32.gmra.mxu0 %v6985
    %v7561 = vpop.f32.mrf.mxu0
    %v7562 = vadd.f32 0.0, %v7561
    %v7563 = vpop.f32.mrf.mxu0
    %v7564 = vadd.f32 0.0, %v7563
    %7565 = vmatprep.mubr.f32.mxu0 0.0
    %7566 = vmatmul.mubr.f32.gmra.mxu0 %v6990
    %v7567 = vpop.f32.mrf.mxu0
    %v7568 = vadd.f32 0.0, %v7567
    %v7569 = vpop.f32.mrf.mxu0
    %v7570 = vadd.f32 0.0, %v7569
    %7571 = vdwg.mxu0
    %v7572 = vmul.f32 %v7124, %v7478
    %v7573 = vmul.f32 %v7126, %v7478
    %v7574 = vmul.f32 %v7285, %v7478
    %v7575 = vmul.f32 %v7287, %v7478
    %v7576 = vmul.f32 %v7130, %v7484
    %v7577 = vmul.f32 %v7132, %v7484
    %v7578 = vmul.f32 %v7291, %v7484
    %v7579 = vmul.f32 %v7293, %v7484
    %v7580 = vmul.f32 %v7136, %v7490
    %v7581 = vmul.f32 %v7138, %v7490
    %v7582 = vmul.f32 %v7297, %v7490
    %v7583 = vmul.f32 %v7299, %v7490
    %v7584 = vmul.f32 %v7142, %v7496
    %v7585 = vmul.f32 %v7144, %v7496
    %v7586 = vmul.f32 %v7303, %v7496
    %v7587 = vmul.f32 %v7305, %v7496
    %v7588 = vmul.f32 %v7148, %v7502
    %v7589 = vmul.f32 %v7150, %v7502
    %v7590 = vmul.f32 %v7309, %v7502
    %v7591 = vmul.f32 %v7311, %v7502
    %v7592 = vmul.f32 %v7154, %v7508
    %v7593 = vmul.f32 %v7156, %v7508
    %v7594 = vmul.f32 %v7315, %v7508
    %v7595 = vmul.f32 %v7317, %v7508
    %v7596 = vmul.f32 %v7160, %v7514
    %v7597 = vmul.f32 %v7162, %v7514
    %v7598 = vmul.f32 %v7321, %v7514
    %v7599 = vmul.f32 %v7323, %v7514
    %v7600 = vmul.f32 %v7166, %v7520
    %v7601 = vmul.f32 %v7168, %v7520
    %v7602 = vmul.f32 %v7327, %v7520
    %v7603 = vmul.f32 %v7329, %v7520
    %v7604 = vmul.f32 %v7172, %v7526
    %v7605 = vmul.f32 %v7174, %v7526
    %v7606 = vmul.f32 %v7333, %v7526
    %v7607 = vmul.f32 %v7335, %v7526
    %v7608 = vmul.f32 %v7178, %v7532
    %v7609 = vmul.f32 %v7180, %v7532
    %v7610 = vmul.f32 %v7339, %v7532
    %v7611 = vmul.f32 %v7341, %v7532
    %v7612 = vmul.f32 %v7184, %v7538
    %v7613 = vmul.f32 %v7186, %v7538
    %v7614 = vmul.f32 %v7345, %v7538
    %v7615 = vmul.f32 %v7347, %v7538
    %v7616 = vmul.f32 %v7190, %v7544
    %v7617 = vmul.f32 %v7192, %v7544
    %v7618 = vmul.f32 %v7351, %v7544
    %v7619 = vmul.f32 %v7353, %v7544
    %v7620 = vmul.f32 %v7196, %v7550
    %v7621 = vmul.f32 %v7198, %v7550
    %v7622 = vmul.f32 %v7357, %v7550
    %v7623 = vmul.f32 %v7359, %v7550
    %v7624 = vmul.f32 %v7202, %v7556
    %v7625 = vmul.f32 %v7204, %v7556
    %v7626 = vmul.f32 %v7363, %v7556
    %v7627 = vmul.f32 %v7365, %v7556
    %v7628 = vmul.f32 %v7208, %v7562
    %v7629 = vmul.f32 %v7210, %v7562
    %v7630 = vmul.f32 %v7369, %v7562
    %v7631 = vmul.f32 %v7371, %v7562
    %v7632 = vmul.f32 %v7214, %v7568
    %v7633 = vmul.f32 %v7216, %v7568
    %v7634 = vmul.f32 %v7375, %v7568
    %v7635 = vmul.f32 %v7377, %v7568
    %7636 = vmatprep.subr.mxu0 0.0
    %7637 = vmatpush1.msra.mxu0 %v63
    %7638 = vmatprep.subr.mxu0 0.0
    %7639 = vmatpush1.msra.mxu0 %v62
    %7640 = vmatprep.subr.mxu0 0.0
    %7641 = vmatpush1.msra.mxu0 %v61
    %7642 = vmatprep.subr.mxu0 0.0
    %7643 = vmatpush1.msra.mxu0 %v60
    %7644 = vmatprep.subr.mxu0 0.0
    %7645 = vmatpush1.msra.mxu0 %v59
    %7646 = vmatprep.subr.mxu0 0.0
    %7647 = vmatpush1.msra.mxu0 %v58
    %7648 = vmatprep.subr.mxu0 0.0
    %7649 = vmatpush1.msra.mxu0 %v57
    %7650 = vmatprep.subr.mxu0 0.0
    %7651 = vmatpush1.msra.mxu0 %v56
    %7652 = vmatprep.subr.mxu0 0.0
    %7653 = vmatpush1.msra.mxu0 %v55
    %7654 = vmatprep.subr.mxu0 0.0
    %7655 = vmatpush1.msra.mxu0 %v54
    %7656 = vmatprep.subr.mxu0 0.0
    %7657 = vmatpush1.msra.mxu0 %v53
    %7658 = vmatprep.subr.mxu0 0.0
    %7659 = vmatpush1.msra.mxu0 %v52
    %7660 = vmatprep.subr.mxu0 0.0
    %7661 = vmatpush1.msra.mxu0 %v51
    %7662 = vmatprep.subr.mxu0 0.0
    %7663 = vmatpush1.msra.mxu0 %v50
    %7664 = vmatprep.subr.mxu0 0.0
    %7665 = vmatpush1.msra.mxu0 %v49
    %7666 = vmatprep.subr.mxu0 0.0
    %7667 = vmatpush1.msra.mxu0 %v48
    %7668 = vmatprep.subr.mxu0 0.0
    %7669 = vmatpush2.msra.mxu0 %v79
    %7670 = vmatprep.subr.mxu0 0.0
    %7671 = vmatpush2.msra.mxu0 %v78
    %7672 = vmatprep.subr.mxu0 0.0
    %7673 = vmatpush2.msra.mxu0 %v77
    %7674 = vmatprep.subr.mxu0 0.0
    %7675 = vmatpush2.msra.mxu0 %v76
    %7676 = vmatprep.subr.mxu0 0.0
    %7677 = vmatpush2.msra.mxu0 %v75
    %7678 = vmatprep.subr.mxu0 0.0
    %7679 = vmatpush2.msra.mxu0 %v74
    %7680 = vmatprep.subr.mxu0 0.0
    %7681 = vmatpush2.msra.mxu0 %v73
    %7682 = vmatprep.subr.mxu0 0.0
    %7683 = vmatpush2.msra.mxu0 %v72
    %7684 = vmatprep.subr.mxu0 0.0
    %7685 = vmatpush2.msra.mxu0 %v71
    %7686 = vmatprep.subr.mxu0 0.0
    %7687 = vmatpush2.msra.mxu0 %v70
    %7688 = vmatprep.subr.mxu0 0.0
    %7689 = vmatpush2.msra.mxu0 %v69
    %7690 = vmatprep.subr.mxu0 0.0
    %7691 = vmatpush2.msra.mxu0 %v68
    %7692 = vmatprep.subr.mxu0 0.0
    %7693 = vmatpush2.msra.mxu0 %v67
    %7694 = vmatprep.subr.mxu0 0.0
    %7695 = vmatpush2.msra.mxu0 %v66
    %7696 = vmatprep.subr.mxu0 0.0
    %7697 = vmatpush2.msra.mxu0 %v65
    %7698 = vmatprep.subr.mxu0 0.0
    %7699 = vmatpush2.msra.mxu0 %v64
    %7700 = vmatprep.mubr.f32.mxu0 %v7573
    %7701 = vmatmul.mubr.f32.gmra.mxu0 %v7572
    %v7702 = vpop.f32.mrf.mxu0
    %v7703 = vadd.f32 0.0, %v7702
    %v7704 = vpop.f32.mrf.mxu0
    %7705 = vmatprep.mubr.f32.mxu0 %v7577
    %7706 = vmatmul.mubr.f32.gmra.mxu0 %v7576
    %v7707 = vpop.f32.mrf.mxu0
    %v7708 = vadd.f32 0.0, %v7707
    %v7709 = vpop.f32.mrf.mxu0
    %7710 = vmatprep.mubr.f32.mxu0 %v7581
    %7711 = vmatmul.mubr.f32.gmra.mxu0 %v7580
    %v7712 = vpop.f32.mrf.mxu0
    %v7713 = vadd.f32 0.0, %v7712
    %v7714 = vpop.f32.mrf.mxu0
    %7715 = vmatprep.mubr.f32.mxu0 %v7585
    %7716 = vmatmul.mubr.f32.gmra.mxu0 %v7584
    %v7717 = vpop.f32.mrf.mxu0
    %v7718 = vadd.f32 0.0, %v7717
    %v7719 = vpop.f32.mrf.mxu0
    %7720 = vmatprep.mubr.f32.mxu0 %v7589
    %7721 = vmatmul.mubr.f32.gmra.mxu0 %v7588
    %v7722 = vpop.f32.mrf.mxu0
    %v7723 = vadd.f32 0.0, %v7722
    %v7724 = vpop.f32.mrf.mxu0
    %7725 = vmatprep.mubr.f32.mxu0 %v7593
    %7726 = vmatmul.mubr.f32.gmra.mxu0 %v7592
    %v7727 = vpop.f32.mrf.mxu0
    %v7728 = vadd.f32 0.0, %v7727
    %v7729 = vpop.f32.mrf.mxu0
    %7730 = vmatprep.mubr.f32.mxu0 %v7597
    %7731 = vmatmul.mubr.f32.gmra.mxu0 %v7596
    %v7732 = vpop.f32.mrf.mxu0
    %v7733 = vadd.f32 0.0, %v7732
    %v7734 = vpop.f32.mrf.mxu0
    %7735 = vmatprep.mubr.f32.mxu0 %v7601
    %7736 = vmatmul.mubr.f32.gmra.mxu0 %v7600
    %v7737 = vpop.f32.mrf.mxu0
    %v7738 = vadd.f32 0.0, %v7737
    %v7739 = vpop.f32.mrf.mxu0
    %7740 = vmatprep.mubr.f32.mxu0 %v7605
    %7741 = vmatmul.mubr.f32.gmra.mxu0 %v7604
    %v7742 = vpop.f32.mrf.mxu0
    %v7743 = vadd.f32 0.0, %v7742
    %v7744 = vpop.f32.mrf.mxu0
    %7745 = vmatprep.mubr.f32.mxu0 %v7609
    %7746 = vmatmul.mubr.f32.gmra.mxu0 %v7608
    %v7747 = vpop.f32.mrf.mxu0
    %v7748 = vadd.f32 0.0, %v7747
    %v7749 = vpop.f32.mrf.mxu0
    %7750 = vmatprep.mubr.f32.mxu0 %v7613
    %7751 = vmatmul.mubr.f32.gmra.mxu0 %v7612
    %v7752 = vpop.f32.mrf.mxu0
    %v7753 = vadd.f32 0.0, %v7752
    %v7754 = vpop.f32.mrf.mxu0
    %7755 = vmatprep.mubr.f32.mxu0 %v7617
    %7756 = vmatmul.mubr.f32.gmra.mxu0 %v7616
    %v7757 = vpop.f32.mrf.mxu0
    %v7758 = vadd.f32 0.0, %v7757
    %v7759 = vpop.f32.mrf.mxu0
    %7760 = vmatprep.mubr.f32.mxu0 %v7621
    %7761 = vmatmul.mubr.f32.gmra.mxu0 %v7620
    %v7762 = vpop.f32.mrf.mxu0
    %v7763 = vadd.f32 0.0, %v7762
    %v7764 = vpop.f32.mrf.mxu0
    %7765 = vmatprep.mubr.f32.mxu0 %v7625
    %7766 = vmatmul.mubr.f32.gmra.mxu0 %v7624
    %v7767 = vpop.f32.mrf.mxu0
    %v7768 = vadd.f32 0.0, %v7767
    %v7769 = vpop.f32.mrf.mxu0
    %7770 = vmatprep.mubr.f32.mxu0 %v7629
    %7771 = vmatmul.mubr.f32.gmra.mxu0 %v7628
    %v7772 = vpop.f32.mrf.mxu0
    %v7773 = vadd.f32 0.0, %v7772
    %v7774 = vpop.f32.mrf.mxu0
    %7775 = vmatprep.mubr.f32.mxu0 %v7633
    %7776 = vmatmul.mubr.f32.gmra.mxu0 %v7632
    %v7777 = vpop.f32.mrf.mxu0
    %v7778 = vadd.f32 0.0, %v7777
    %v7779 = vpop.f32.mrf.mxu0
    %7780 = vdwg.mxu0
    %7781 = vmatprep.subr.mxu0 0.0
    %7782 = vmatpush1.msra.mxu0 %v95
    %7783 = vmatprep.subr.mxu0 0.0
    %7784 = vmatpush1.msra.mxu0 %v94
    %7785 = vmatprep.subr.mxu0 0.0
    %7786 = vmatpush1.msra.mxu0 %v93
    %7787 = vmatprep.subr.mxu0 0.0
    %7788 = vmatpush1.msra.mxu0 %v92
    %7789 = vmatprep.subr.mxu0 0.0
    %7790 = vmatpush1.msra.mxu0 %v91
    %7791 = vmatprep.subr.mxu0 0.0
    %7792 = vmatpush1.msra.mxu0 %v90
    %7793 = vmatprep.subr.mxu0 0.0
    %7794 = vmatpush1.msra.mxu0 %v89
    %7795 = vmatprep.subr.mxu0 0.0
    %7796 = vmatpush1.msra.mxu0 %v88
    %7797 = vmatprep.subr.mxu0 0.0
    %7798 = vmatpush1.msra.mxu0 %v87
    %7799 = vmatprep.subr.mxu0 0.0
    %7800 = vmatpush1.msra.mxu0 %v86
    %7801 = vmatprep.subr.mxu0 0.0
    %7802 = vmatpush1.msra.mxu0 %v85
    %7803 = vmatprep.subr.mxu0 0.0
    %7804 = vmatpush1.msra.mxu0 %v84
    %7805 = vmatprep.subr.mxu0 0.0
    %7806 = vmatpush1.msra.mxu0 %v83
    %7807 = vmatprep.subr.mxu0 0.0
    %7808 = vmatpush1.msra.mxu0 %v82
    %7809 = vmatprep.subr.mxu0 0.0
    %7810 = vmatpush1.msra.mxu0 %v81
    %7811 = vmatprep.subr.mxu0 0.0
    %7812 = vmatpush1.msra.mxu0 %v80
    %7813 = vmatprep.subr.mxu0 0.0
    %7814 = vmatpush2.msra.mxu0 %v111
    %7815 = vmatprep.subr.mxu0 0.0
    %7816 = vmatpush2.msra.mxu0 %v110
    %7817 = vmatprep.subr.mxu0 0.0
    %7818 = vmatpush2.msra.mxu0 %v109
    %7819 = vmatprep.subr.mxu0 0.0
    %7820 = vmatpush2.msra.mxu0 %v108
    %7821 = vmatprep.subr.mxu0 0.0
    %7822 = vmatpush2.msra.mxu0 %v107
    %7823 = vmatprep.subr.mxu0 0.0
    %7824 = vmatpush2.msra.mxu0 %v106
    %7825 = vmatprep.subr.mxu0 0.0
    %7826 = vmatpush2.msra.mxu0 %v105
    %7827 = vmatprep.subr.mxu0 0.0
    %7828 = vmatpush2.msra.mxu0 %v104
    %7829 = vmatprep.subr.mxu0 0.0
    %7830 = vmatpush2.msra.mxu0 %v103
    %7831 = vmatprep.subr.mxu0 0.0
    %7832 = vmatpush2.msra.mxu0 %v102
    %7833 = vmatprep.subr.mxu0 0.0
    %7834 = vmatpush2.msra.mxu0 %v101
    %7835 = vmatprep.subr.mxu0 0.0
    %7836 = vmatpush2.msra.mxu0 %v100
    %7837 = vmatprep.subr.mxu0 0.0
    %7838 = vmatpush2.msra.mxu0 %v99
    %7839 = vmatprep.subr.mxu0 0.0
    %7840 = vmatpush2.msra.mxu0 %v98
    %7841 = vmatprep.subr.mxu0 0.0
    %7842 = vmatpush2.msra.mxu0 %v97
    %7843 = vmatprep.subr.mxu0 0.0
    %7844 = vmatpush2.msra.mxu0 %v96
    %7845 = vmatprep.mubr.f32.mxu0 %v7575
    %7846 = vmatmul.mubr.f32.gmra.mxu0 %v7574
    %v7847 = vpop.f32.mrf.mxu0
    %v7848 = vadd.f32 %v7703, %v7847
    %v7849 = vpop.f32.mrf.mxu0
    %7850 = vmatprep.mubr.f32.mxu0 %v7579
    %7851 = vmatmul.mubr.f32.gmra.mxu0 %v7578
    %v7852 = vpop.f32.mrf.mxu0
    %v7853 = vadd.f32 %v7708, %v7852
    %v7854 = vpop.f32.mrf.mxu0
    %7855 = vmatprep.mubr.f32.mxu0 %v7583
    %7856 = vmatmul.mubr.f32.gmra.mxu0 %v7582
    %v7857 = vpop.f32.mrf.mxu0
    %v7858 = vadd.f32 %v7713, %v7857
    %v7859 = vpop.f32.mrf.mxu0
    %7860 = vmatprep.mubr.f32.mxu0 %v7587
    %7861 = vmatmul.mubr.f32.gmra.mxu0 %v7586
    %v7862 = vpop.f32.mrf.mxu0
    %v7863 = vadd.f32 %v7718, %v7862
    %v7864 = vpop.f32.mrf.mxu0
    %7865 = vmatprep.mubr.f32.mxu0 %v7591
    %7866 = vmatmul.mubr.f32.gmra.mxu0 %v7590
    %v7867 = vpop.f32.mrf.mxu0
    %v7868 = vadd.f32 %v7723, %v7867
    %v7869 = vpop.f32.mrf.mxu0
    %7870 = vmatprep.mubr.f32.mxu0 %v7595
    %7871 = vmatmul.mubr.f32.gmra.mxu0 %v7594
    %v7872 = vpop.f32.mrf.mxu0
    %v7873 = vadd.f32 %v7728, %v7872
    %v7874 = vpop.f32.mrf.mxu0
    %7875 = vmatprep.mubr.f32.mxu0 %v7599
    %7876 = vmatmul.mubr.f32.gmra.mxu0 %v7598
    %v7877 = vpop.f32.mrf.mxu0
    %v7878 = vadd.f32 %v7733, %v7877
    %v7879 = vpop.f32.mrf.mxu0
    %7880 = vmatprep.mubr.f32.mxu0 %v7603
    %7881 = vmatmul.mubr.f32.gmra.mxu0 %v7602
    %v7882 = vpop.f32.mrf.mxu0
    %v7883 = vadd.f32 %v7738, %v7882
    %v7884 = vpop.f32.mrf.mxu0
    %7885 = vmatprep.mubr.f32.mxu0 %v7607
    %7886 = vmatmul.mubr.f32.gmra.mxu0 %v7606
    %v7887 = vpop.f32.mrf.mxu0
    %v7888 = vadd.f32 %v7743, %v7887
    %v7889 = vpop.f32.mrf.mxu0
    %7890 = vmatprep.mubr.f32.mxu0 %v7611
    %7891 = vmatmul.mubr.f32.gmra.mxu0 %v7610
    %v7892 = vpop.f32.mrf.mxu0
    %v7893 = vadd.f32 %v7748, %v7892
    %v7894 = vpop.f32.mrf.mxu0
    %7895 = vmatprep.mubr.f32.mxu0 %v7615
    %7896 = vmatmul.mubr.f32.gmra.mxu0 %v7614
    %v7897 = vpop.f32.mrf.mxu0
    %v7898 = vadd.f32 %v7753, %v7897
    %v7899 = vpop.f32.mrf.mxu0
    %7900 = vmatprep.mubr.f32.mxu0 %v7619
    %7901 = vmatmul.mubr.f32.gmra.mxu0 %v7618
    %v7902 = vpop.f32.mrf.mxu0
    %v7903 = vadd.f32 %v7758, %v7902
    %v7904 = vpop.f32.mrf.mxu0
    %7905 = vmatprep.mubr.f32.mxu0 %v7623
    %7906 = vmatmul.mubr.f32.gmra.mxu0 %v7622
    %v7907 = vpop.f32.mrf.mxu0
    %v7908 = vadd.f32 %v7763, %v7907
    %v7909 = vpop.f32.mrf.mxu0
    %7910 = vmatprep.mubr.f32.mxu0 %v7627
    %7911 = vmatmul.mubr.f32.gmra.mxu0 %v7626
    %v7912 = vpop.f32.mrf.mxu0
    %v7913 = vadd.f32 %v7768, %v7912
    %v7914 = vpop.f32.mrf.mxu0
    %7915 = vmatprep.mubr.f32.mxu0 %v7631
    %7916 = vmatmul.mubr.f32.gmra.mxu0 %v7630
    %v7917 = vpop.f32.mrf.mxu0
    %v7918 = vadd.f32 %v7773, %v7917
    %v7919 = vpop.f32.mrf.mxu0
    %7920 = vmatprep.mubr.f32.mxu0 %v7635
    %7921 = vmatmul.mubr.f32.gmra.mxu0 %v7634
    %v7922 = vpop.f32.mrf.mxu0
    %v7923 = vadd.f32 %v7778, %v7922
    %v7924 = vpop.f32.mrf.mxu0
    %7925 = vdwg.mxu0
    %7942 = vrot.lane.b32.xlu0 %v7848, 112
    %v7943 = vpop.permute.xlu0 %7942
    %7944 = vrot.lane.b32.xlu0 %v7853, 112
    %v7945 = vpop.permute.xlu0 %7944
    %7946 = vrot.lane.b32.xlu0 %v7858, 112
    %v7947 = vpop.permute.xlu0 %7946
    %7948 = vrot.lane.b32.xlu0 %v7863, 112
    %v7949 = vpop.permute.xlu0 %7948
    %7950 = vrot.lane.b32.xlu0 %v7868, 112
    %v7951 = vpop.permute.xlu0 %7950
    %7952 = vrot.lane.b32.xlu0 %v7873, 112
    %v7953 = vpop.permute.xlu0 %7952
    %7954 = vrot.lane.b32.xlu0 %v7878, 112
    %v7955 = vpop.permute.xlu0 %7954
    %7956 = vrot.lane.b32.xlu0 %v7883, 112
    %v7957 = vpop.permute.xlu0 %7956
    %7958 = vrot.lane.b32.xlu0 %v7888, 112
    %v7959 = vpop.permute.xlu0 %7958
    %7960 = vrot.lane.b32.xlu0 %v7893, 112
    %v7961 = vpop.permute.xlu0 %7960
    %7962 = vrot.lane.b32.xlu0 %v7898, 112
    %v7963 = vpop.permute.xlu0 %7962
    %7964 = vrot.lane.b32.xlu0 %v7903, 112
    %v7965 = vpop.permute.xlu0 %7964
    %7966 = vrot.lane.b32.xlu0 %v7908, 112
    %v7967 = vpop.permute.xlu0 %7966
    %7968 = vrot.lane.b32.xlu0 %v7913, 112
    %v7969 = vpop.permute.xlu0 %7968
    %7970 = vrot.lane.b32.xlu0 %v7918, 112
    %v7971 = vpop.permute.xlu0 %7970
    %7972 = vrot.lane.b32.xlu0 %v7923, 112
    %v7973 = vpop.permute.xlu0 %7972
    %v7990 = vmax.f32 %v7848, %v7943
    %v7991 = vmax.f32 %v7853, %v7945
    %v7992 = vmax.f32 %v7858, %v7947
    %v7993 = vmax.f32 %v7863, %v7949
    %v7994 = vmax.f32 %v7868, %v7951
    %v7995 = vmax.f32 %v7873, %v7953
    %v7996 = vmax.f32 %v7878, %v7955
    %v7997 = vmax.f32 %v7883, %v7957
    %v7998 = vmax.f32 %v7888, %v7959
    %v7999 = vmax.f32 %v7893, %v7961
    %v8000 = vmax.f32 %v7898, %v7963
    %v8001 = vmax.f32 %v7903, %v7965
    %v8002 = vmax.f32 %v7908, %v7967
    %v8003 = vmax.f32 %v7913, %v7969
    %v8004 = vmax.f32 %v7918, %v7971
    %v8005 = vmax.f32 %v7923, %v7973
    %8006 = vrot.lane.b32.xlu0 %v7848, 96
    %v8007 = vpop.permute.xlu0 %8006
    %8008 = vrot.lane.b32.xlu0 %v7853, 96
    %v8009 = vpop.permute.xlu0 %8008
    %8010 = vrot.lane.b32.xlu0 %v7858, 96
    %v8011 = vpop.permute.xlu0 %8010
    %8012 = vrot.lane.b32.xlu0 %v7863, 96
    %v8013 = vpop.permute.xlu0 %8012
    %8014 = vrot.lane.b32.xlu0 %v7868, 96
    %v8015 = vpop.permute.xlu0 %8014
    %8016 = vrot.lane.b32.xlu0 %v7873, 96
    %v8017 = vpop.permute.xlu0 %8016
    %8018 = vrot.lane.b32.xlu0 %v7878, 96
    %v8019 = vpop.permute.xlu0 %8018
    %8020 = vrot.lane.b32.xlu0 %v7883, 96
    %v8021 = vpop.permute.xlu0 %8020
    %8022 = vrot.lane.b32.xlu0 %v7888, 96
    %v8023 = vpop.permute.xlu0 %8022
    %8024 = vrot.lane.b32.xlu0 %v7893, 96
    %v8025 = vpop.permute.xlu0 %8024
    %8026 = vrot.lane.b32.xlu0 %v7898, 96
    %v8027 = vpop.permute.xlu0 %8026
    %8028 = vrot.lane.b32.xlu0 %v7903, 96
    %v8029 = vpop.permute.xlu0 %8028
    %8030 = vrot.lane.b32.xlu0 %v7908, 96
    %v8031 = vpop.permute.xlu0 %8030
    %8032 = vrot.lane.b32.xlu0 %v7913, 96
    %v8033 = vpop.permute.xlu0 %8032
    %8034 = vrot.lane.b32.xlu0 %v7918, 96
    %v8035 = vpop.permute.xlu0 %8034
    %8036 = vrot.lane.b32.xlu0 %v7923, 96
    %v8037 = vpop.permute.xlu0 %8036
    %v8054 = vmax.f32 %v7990, %v8007
    %v8055 = vmax.f32 %v7991, %v8009
    %v8056 = vmax.f32 %v7992, %v8011
    %v8057 = vmax.f32 %v7993, %v8013
    %v8058 = vmax.f32 %v7994, %v8015
    %v8059 = vmax.f32 %v7995, %v8017
    %v8060 = vmax.f32 %v7996, %v8019
    %v8061 = vmax.f32 %v7997, %v8021
    %v8062 = vmax.f32 %v7998, %v8023
    %v8063 = vmax.f32 %v7999, %v8025
    %v8064 = vmax.f32 %v8000, %v8027
    %v8065 = vmax.f32 %v8001, %v8029
    %v8066 = vmax.f32 %v8002, %v8031
    %v8067 = vmax.f32 %v8003, %v8033
    %v8068 = vmax.f32 %v8004, %v8035
    %v8069 = vmax.f32 %v8005, %v8037
    %8070 = vrot.lane.b32.xlu0 %v7848, 80
    %v8071 = vpop.permute.xlu0 %8070
    %8072 = vrot.lane.b32.xlu0 %v7853, 80
    %v8073 = vpop.permute.xlu0 %8072
    %8074 = vrot.lane.b32.xlu0 %v7858, 80
    %v8075 = vpop.permute.xlu0 %8074
    %8076 = vrot.lane.b32.xlu0 %v7863, 80
    %v8077 = vpop.permute.xlu0 %8076
    %8078 = vrot.lane.b32.xlu0 %v7868, 80
    %v8079 = vpop.permute.xlu0 %8078
    %8080 = vrot.lane.b32.xlu0 %v7873, 80
    %v8081 = vpop.permute.xlu0 %8080
    %8082 = vrot.lane.b32.xlu0 %v7878, 80
    %v8083 = vpop.permute.xlu0 %8082
    %8084 = vrot.lane.b32.xlu0 %v7883, 80
    %v8085 = vpop.permute.xlu0 %8084
    %8086 = vrot.lane.b32.xlu0 %v7888, 80
    %v8087 = vpop.permute.xlu0 %8086
    %8088 = vrot.lane.b32.xlu0 %v7893, 80
    %v8089 = vpop.permute.xlu0 %8088
    %8090 = vrot.lane.b32.xlu0 %v7898, 80
    %v8091 = vpop.permute.xlu0 %8090
    %8092 = vrot.lane.b32.xlu0 %v7903, 80
    %v8093 = vpop.permute.xlu0 %8092
    %8094 = vrot.lane.b32.xlu0 %v7908, 80
    %v8095 = vpop.permute.xlu0 %8094
    %8096 = vrot.lane.b32.xlu0 %v7913, 80
    %v8097 = vpop.permute.xlu0 %8096
    %8098 = vrot.lane.b32.xlu0 %v7918, 80
    %v8099 = vpop.permute.xlu0 %8098
    %8100 = vrot.lane.b32.xlu0 %v7923, 80
    %v8101 = vpop.permute.xlu0 %8100
    %v8118 = vmax.f32 %v8054, %v8071
    %v8119 = vmax.f32 %v8055, %v8073
    %v8120 = vmax.f32 %v8056, %v8075
    %v8121 = vmax.f32 %v8057, %v8077
    %v8122 = vmax.f32 %v8058, %v8079
    %v8123 = vmax.f32 %v8059, %v8081
    %v8124 = vmax.f32 %v8060, %v8083
    %v8125 = vmax.f32 %v8061, %v8085
    %v8126 = vmax.f32 %v8062, %v8087
    %v8127 = vmax.f32 %v8063, %v8089
    %v8128 = vmax.f32 %v8064, %v8091
    %v8129 = vmax.f32 %v8065, %v8093
    %v8130 = vmax.f32 %v8066, %v8095
    %v8131 = vmax.f32 %v8067, %v8097
    %v8132 = vmax.f32 %v8068, %v8099
    %v8133 = vmax.f32 %v8069, %v8101
    %8150 = vrot.lane.b32.xlu0 %v8118, 16
    %v8151 = vpop.permute.xlu0 %8150
    %8152 = vrot.lane.b32.xlu0 %v8119, 16
    %v8153 = vpop.permute.xlu0 %8152
    %8154 = vrot.lane.b32.xlu0 %v8120, 16
    %v8155 = vpop.permute.xlu0 %8154
    %8156 = vrot.lane.b32.xlu0 %v8121, 16
    %v8157 = vpop.permute.xlu0 %8156
    %8158 = vrot.lane.b32.xlu0 %v8122, 16
    %v8159 = vpop.permute.xlu0 %8158
    %8160 = vrot.lane.b32.xlu0 %v8123, 16
    %v8161 = vpop.permute.xlu0 %8160
    %8162 = vrot.lane.b32.xlu0 %v8124, 16
    %v8163 = vpop.permute.xlu0 %8162
    %8164 = vrot.lane.b32.xlu0 %v8125, 16
    %v8165 = vpop.permute.xlu0 %8164
    %8166 = vrot.lane.b32.xlu0 %v8126, 16
    %v8167 = vpop.permute.xlu0 %8166
    %8168 = vrot.lane.b32.xlu0 %v8127, 16
    %v8169 = vpop.permute.xlu0 %8168
    %8170 = vrot.lane.b32.xlu0 %v8128, 16
    %v8171 = vpop.permute.xlu0 %8170
    %8172 = vrot.lane.b32.xlu0 %v8129, 16
    %v8173 = vpop.permute.xlu0 %8172
    %8174 = vrot.lane.b32.xlu0 %v8130, 16
    %v8175 = vpop.permute.xlu0 %8174
    %8176 = vrot.lane.b32.xlu0 %v8131, 16
    %v8177 = vpop.permute.xlu0 %8176
    %8178 = vrot.lane.b32.xlu0 %v8132, 16
    %v8179 = vpop.permute.xlu0 %8178
    %8180 = vrot.lane.b32.xlu0 %v8133, 16
    %v8181 = vpop.permute.xlu0 %8180
    %8198 = vrot.lane.b32.xlu0 %v8118, 32
    %v8199 = vpop.permute.xlu0 %8198
    %8200 = vrot.lane.b32.xlu0 %v8119, 32
    %v8201 = vpop.permute.xlu0 %8200
    %8202 = vrot.lane.b32.xlu0 %v8120, 32
    %v8203 = vpop.permute.xlu0 %8202
    %8204 = vrot.lane.b32.xlu0 %v8121, 32
    %v8205 = vpop.permute.xlu0 %8204
    %8206 = vrot.lane.b32.xlu0 %v8122, 32
    %v8207 = vpop.permute.xlu0 %8206
    %8208 = vrot.lane.b32.xlu0 %v8123, 32
    %v8209 = vpop.permute.xlu0 %8208
    %8210 = vrot.lane.b32.xlu0 %v8124, 32
    %v8211 = vpop.permute.xlu0 %8210
    %8212 = vrot.lane.b32.xlu0 %v8125, 32
    %v8213 = vpop.permute.xlu0 %8212
    %8214 = vrot.lane.b32.xlu0 %v8126, 32
    %v8215 = vpop.permute.xlu0 %8214
    %8216 = vrot.lane.b32.xlu0 %v8127, 32
    %v8217 = vpop.permute.xlu0 %8216
    %8218 = vrot.lane.b32.xlu0 %v8128, 32
    %v8219 = vpop.permute.xlu0 %8218
    %8220 = vrot.lane.b32.xlu0 %v8129, 32
    %v8221 = vpop.permute.xlu0 %8220
    %8222 = vrot.lane.b32.xlu0 %v8130, 32
    %v8223 = vpop.permute.xlu0 %8222
    %8224 = vrot.lane.b32.xlu0 %v8131, 32
    %v8225 = vpop.permute.xlu0 %8224
    %8226 = vrot.lane.b32.xlu0 %v8132, 32
    %v8227 = vpop.permute.xlu0 %8226
    %8228 = vrot.lane.b32.xlu0 %v8133, 32
    %v8229 = vpop.permute.xlu0 %8228
    %8246 = vrot.lane.b32.xlu0 %v8118, 48
    %v8247 = vpop.permute.xlu0 %8246
    %8248 = vrot.lane.b32.xlu0 %v8119, 48
    %v8249 = vpop.permute.xlu0 %8248
    %8250 = vrot.lane.b32.xlu0 %v8120, 48
    %v8251 = vpop.permute.xlu0 %8250
    %8252 = vrot.lane.b32.xlu0 %v8121, 48
    %v8253 = vpop.permute.xlu0 %8252
    %8254 = vrot.lane.b32.xlu0 %v8122, 48
    %v8255 = vpop.permute.xlu0 %8254
    %8256 = vrot.lane.b32.xlu0 %v8123, 48
    %v8257 = vpop.permute.xlu0 %8256
    %8258 = vrot.lane.b32.xlu0 %v8124, 48
    %v8259 = vpop.permute.xlu0 %8258
    %8260 = vrot.lane.b32.xlu0 %v8125, 48
    %v8261 = vpop.permute.xlu0 %8260
    %8262 = vrot.lane.b32.xlu0 %v8126, 48
    %v8263 = vpop.permute.xlu0 %8262
    %8264 = vrot.lane.b32.xlu0 %v8127, 48
    %v8265 = vpop.permute.xlu0 %8264
    %8266 = vrot.lane.b32.xlu0 %v8128, 48
    %v8267 = vpop.permute.xlu0 %8266
    %8268 = vrot.lane.b32.xlu0 %v8129, 48
    %v8269 = vpop.permute.xlu0 %8268
    %8270 = vrot.lane.b32.xlu0 %v8130, 48
    %v8271 = vpop.permute.xlu0 %8270
    %8272 = vrot.lane.b32.xlu0 %v8131, 48
    %v8273 = vpop.permute.xlu0 %8272
    %8274 = vrot.lane.b32.xlu0 %v8132, 48
    %v8275 = vpop.permute.xlu0 %8274
    %8276 = vrot.lane.b32.xlu0 %v8133, 48
    %v8277 = vpop.permute.xlu0 %8276
    %v8294 = vsel %vm1608, %v8118, %v8151
    %v8295 = vsel %vm1608, %v8119, %v8153
    %v8296 = vsel %vm1608, %v8120, %v8155
    %v8297 = vsel %vm1608, %v8121, %v8157
    %v8298 = vsel %vm1608, %v8122, %v8159
    %v8299 = vsel %vm1608, %v8123, %v8161
    %v8300 = vsel %vm1608, %v8124, %v8163
    %v8301 = vsel %vm1608, %v8125, %v8165
    %v8302 = vsel %vm1608, %v8126, %v8167
    %v8303 = vsel %vm1608, %v8127, %v8169
    %v8304 = vsel %vm1608, %v8128, %v8171
    %v8305 = vsel %vm1608, %v8129, %v8173
    %v8306 = vsel %vm1608, %v8130, %v8175
    %v8307 = vsel %vm1608, %v8131, %v8177
    %v8308 = vsel %vm1608, %v8132, %v8179
    %v8309 = vsel %vm1608, %v8133, %v8181
    %v8310 = vsel %vm1625, %v8294, %v8199
    %v8311 = vsel %vm1625, %v8295, %v8201
    %v8312 = vsel %vm1625, %v8296, %v8203
    %v8313 = vsel %vm1625, %v8297, %v8205
    %v8314 = vsel %vm1625, %v8298, %v8207
    %v8315 = vsel %vm1625, %v8299, %v8209
    %v8316 = vsel %vm1625, %v8300, %v8211
    %v8317 = vsel %vm1625, %v8301, %v8213
    %v8318 = vsel %vm1625, %v8302, %v8215
    %v8319 = vsel %vm1625, %v8303, %v8217
    %v8320 = vsel %vm1625, %v8304, %v8219
    %v8321 = vsel %vm1625, %v8305, %v8221
    %v8322 = vsel %vm1625, %v8306, %v8223
    %v8323 = vsel %vm1625, %v8307, %v8225
    %v8324 = vsel %vm1625, %v8308, %v8227
    %v8325 = vsel %vm1625, %v8309, %v8229
    %v8326 = vsel %vm1642, %v8310, %v8247
    %v8327 = vsel %vm1642, %v8311, %v8249
    %v8328 = vsel %vm1642, %v8312, %v8251
    %v8329 = vsel %vm1642, %v8313, %v8253
    %v8330 = vsel %vm1642, %v8314, %v8255
    %v8331 = vsel %vm1642, %v8315, %v8257
    %v8332 = vsel %vm1642, %v8316, %v8259
    %v8333 = vsel %vm1642, %v8317, %v8261
    %v8334 = vsel %vm1642, %v8318, %v8263
    %v8335 = vsel %vm1642, %v8319, %v8265
    %v8336 = vsel %vm1642, %v8320, %v8267
    %v8337 = vsel %vm1642, %v8321, %v8269
    %v8338 = vsel %vm1642, %v8322, %v8271
    %v8339 = vsel %vm1642, %v8323, %v8273
    %v8340 = vsel %vm1642, %v8324, %v8275
    %v8341 = vsel %vm1642, %v8325, %v8277
    %v8342 = vsub.f32 %v7848, %v8326
    %v8343 = vsub.f32 %v7853, %v8327
    %v8344 = vsub.f32 %v7858, %v8328
    %v8345 = vsub.f32 %v7863, %v8329
    %v8346 = vsub.f32 %v7868, %v8330
    %v8347 = vsub.f32 %v7873, %v8331
    %v8348 = vsub.f32 %v7878, %v8332
    %v8349 = vsub.f32 %v7883, %v8333
    %v8350 = vsub.f32 %v7888, %v8334
    %v8351 = vsub.f32 %v7893, %v8335
    %v8352 = vsub.f32 %v7898, %v8336
    %v8353 = vsub.f32 %v7903, %v8337
    %v8354 = vsub.f32 %v7908, %v8338
    %v8355 = vsub.f32 %v7913, %v8339
    %v8356 = vsub.f32 %v7918, %v8340
    %v8357 = vsub.f32 %v7923, %v8341
    %v8358 = vmul.f32 %v8342, 1.442695
    %v8359 = vpow.pop %v8358
    %v8360 = vmul.f32 %v8343, 1.442695
    %v8361 = vpow.pop %v8360
    %v8362 = vmul.f32 %v8344, 1.442695
    %v8363 = vpow.pop %v8362
    %v8364 = vmul.f32 %v8345, 1.442695
    %v8365 = vpow.pop %v8364
    %v8366 = vmul.f32 %v8346, 1.442695
    %v8367 = vpow.pop %v8366
    %v8368 = vmul.f32 %v8347, 1.442695
    %v8369 = vpow.pop %v8368
    %v8370 = vmul.f32 %v8348, 1.442695
    %v8371 = vpow.pop %v8370
    %v8372 = vmul.f32 %v8349, 1.442695
    %v8373 = vpow.pop %v8372
    %v8374 = vmul.f32 %v8350, 1.442695
    %v8375 = vpow.pop %v8374
    %v8376 = vmul.f32 %v8351, 1.442695
    %v8377 = vpow.pop %v8376
    %v8378 = vmul.f32 %v8352, 1.442695
    %v8379 = vpow.pop %v8378
    %v8380 = vmul.f32 %v8353, 1.442695
    %v8381 = vpow.pop %v8380
    %v8382 = vmul.f32 %v8354, 1.442695
    %v8383 = vpow.pop %v8382
    %v8384 = vmul.f32 %v8355, 1.442695
    %v8385 = vpow.pop %v8384
    %v8386 = vmul.f32 %v8356, 1.442695
    %v8387 = vpow.pop %v8386
    %v8388 = vmul.f32 %v8357, 1.442695
    %v8389 = vpow.pop %v8388
    %8406 = vrot.lane.b32.xlu0 %v8359, 112
    %v8407 = vpop.permute.xlu0 %8406
    %8408 = vrot.lane.b32.xlu0 %v8361, 112
    %v8409 = vpop.permute.xlu0 %8408
    %8410 = vrot.lane.b32.xlu0 %v8363, 112
    %v8411 = vpop.permute.xlu0 %8410
    %8412 = vrot.lane.b32.xlu0 %v8365, 112
    %v8413 = vpop.permute.xlu0 %8412
    %8414 = vrot.lane.b32.xlu0 %v8367, 112
    %v8415 = vpop.permute.xlu0 %8414
    %8416 = vrot.lane.b32.xlu0 %v8369, 112
    %v8417 = vpop.permute.xlu0 %8416
    %8418 = vrot.lane.b32.xlu0 %v8371, 112
    %v8419 = vpop.permute.xlu0 %8418
    %8420 = vrot.lane.b32.xlu0 %v8373, 112
    %v8421 = vpop.permute.xlu0 %8420
    %8422 = vrot.lane.b32.xlu0 %v8375, 112
    %v8423 = vpop.permute.xlu0 %8422
    %8424 = vrot.lane.b32.xlu0 %v8377, 112
    %v8425 = vpop.permute.xlu0 %8424
    %8426 = vrot.lane.b32.xlu0 %v8379, 112
    %v8427 = vpop.permute.xlu0 %8426
    %8428 = vrot.lane.b32.xlu0 %v8381, 112
    %v8429 = vpop.permute.xlu0 %8428
    %8430 = vrot.lane.b32.xlu0 %v8383, 112
    %v8431 = vpop.permute.xlu0 %8430
    %8432 = vrot.lane.b32.xlu0 %v8385, 112
    %v8433 = vpop.permute.xlu0 %8432
    %8434 = vrot.lane.b32.xlu0 %v8387, 112
    %v8435 = vpop.permute.xlu0 %8434
    %8436 = vrot.lane.b32.xlu0 %v8389, 112
    %v8437 = vpop.permute.xlu0 %8436
    %v8454 = vadd.f32 %v8359, %v8407
    %v8455 = vadd.f32 %v8361, %v8409
    %v8456 = vadd.f32 %v8363, %v8411
    %v8457 = vadd.f32 %v8365, %v8413
    %v8458 = vadd.f32 %v8367, %v8415
    %v8459 = vadd.f32 %v8369, %v8417
    %v8460 = vadd.f32 %v8371, %v8419
    %v8461 = vadd.f32 %v8373, %v8421
    %v8462 = vadd.f32 %v8375, %v8423
    %v8463 = vadd.f32 %v8377, %v8425
    %v8464 = vadd.f32 %v8379, %v8427
    %v8465 = vadd.f32 %v8381, %v8429
    %v8466 = vadd.f32 %v8383, %v8431
    %v8467 = vadd.f32 %v8385, %v8433
    %v8468 = vadd.f32 %v8387, %v8435
    %v8469 = vadd.f32 %v8389, %v8437
    %8470 = vrot.lane.b32.xlu0 %v8359, 96
    %v8471 = vpop.permute.xlu0 %8470
    %8472 = vrot.lane.b32.xlu0 %v8361, 96
    %v8473 = vpop.permute.xlu0 %8472
    %8474 = vrot.lane.b32.xlu0 %v8363, 96
    %v8475 = vpop.permute.xlu0 %8474
    %8476 = vrot.lane.b32.xlu0 %v8365, 96
    %v8477 = vpop.permute.xlu0 %8476
    %8478 = vrot.lane.b32.xlu0 %v8367, 96
    %v8479 = vpop.permute.xlu0 %8478
    %8480 = vrot.lane.b32.xlu0 %v8369, 96
    %v8481 = vpop.permute.xlu0 %8480
    %8482 = vrot.lane.b32.xlu0 %v8371, 96
    %v8483 = vpop.permute.xlu0 %8482
    %8484 = vrot.lane.b32.xlu0 %v8373, 96
    %v8485 = vpop.permute.xlu0 %8484
    %8486 = vrot.lane.b32.xlu0 %v8375, 96
    %v8487 = vpop.permute.xlu0 %8486
    %8488 = vrot.lane.b32.xlu0 %v8377, 96
    %v8489 = vpop.permute.xlu0 %8488
    %8490 = vrot.lane.b32.xlu0 %v8379, 96
    %v8491 = vpop.permute.xlu0 %8490
    %8492 = vrot.lane.b32.xlu0 %v8381, 96
    %v8493 = vpop.permute.xlu0 %8492
    %8494 = vrot.lane.b32.xlu0 %v8383, 96
    %v8495 = vpop.permute.xlu0 %8494
    %8496 = vrot.lane.b32.xlu0 %v8385, 96
    %v8497 = vpop.permute.xlu0 %8496
    %8498 = vrot.lane.b32.xlu0 %v8387, 96
    %v8499 = vpop.permute.xlu0 %8498
    %8500 = vrot.lane.b32.xlu0 %v8389, 96
    %v8501 = vpop.permute.xlu0 %8500
    %v8518 = vadd.f32 %v8454, %v8471
    %v8519 = vadd.f32 %v8455, %v8473
    %v8520 = vadd.f32 %v8456, %v8475
    %v8521 = vadd.f32 %v8457, %v8477
    %v8522 = vadd.f32 %v8458, %v8479
    %v8523 = vadd.f32 %v8459, %v8481
    %v8524 = vadd.f32 %v8460, %v8483
    %v8525 = vadd.f32 %v8461, %v8485
    %v8526 = vadd.f32 %v8462, %v8487
    %v8527 = vadd.f32 %v8463, %v8489
    %v8528 = vadd.f32 %v8464, %v8491
    %v8529 = vadd.f32 %v8465, %v8493
    %v8530 = vadd.f32 %v8466, %v8495
    %v8531 = vadd.f32 %v8467, %v8497
    %v8532 = vadd.f32 %v8468, %v8499
    %v8533 = vadd.f32 %v8469, %v8501
    %8534 = vrot.lane.b32.xlu0 %v8359, 80
    %v8535 = vpop.permute.xlu0 %8534
    %8536 = vrot.lane.b32.xlu0 %v8361, 80
    %v8537 = vpop.permute.xlu0 %8536
    %8538 = vrot.lane.b32.xlu0 %v8363, 80
    %v8539 = vpop.permute.xlu0 %8538
    %8540 = vrot.lane.b32.xlu0 %v8365, 80
    %v8541 = vpop.permute.xlu0 %8540
    %8542 = vrot.lane.b32.xlu0 %v8367, 80
    %v8543 = vpop.permute.xlu0 %8542
    %8544 = vrot.lane.b32.xlu0 %v8369, 80
    %v8545 = vpop.permute.xlu0 %8544
    %8546 = vrot.lane.b32.xlu0 %v8371, 80
    %v8547 = vpop.permute.xlu0 %8546
    %8548 = vrot.lane.b32.xlu0 %v8373, 80
    %v8549 = vpop.permute.xlu0 %8548
    %8550 = vrot.lane.b32.xlu0 %v8375, 80
    %v8551 = vpop.permute.xlu0 %8550
    %8552 = vrot.lane.b32.xlu0 %v8377, 80
    %v8553 = vpop.permute.xlu0 %8552
    %8554 = vrot.lane.b32.xlu0 %v8379, 80
    %v8555 = vpop.permute.xlu0 %8554
    %8556 = vrot.lane.b32.xlu0 %v8381, 80
    %v8557 = vpop.permute.xlu0 %8556
    %8558 = vrot.lane.b32.xlu0 %v8383, 80
    %v8559 = vpop.permute.xlu0 %8558
    %8560 = vrot.lane.b32.xlu0 %v8385, 80
    %v8561 = vpop.permute.xlu0 %8560
    %8562 = vrot.lane.b32.xlu0 %v8387, 80
    %v8563 = vpop.permute.xlu0 %8562
    %8564 = vrot.lane.b32.xlu0 %v8389, 80
    %v8565 = vpop.permute.xlu0 %8564
    %v8582 = vadd.f32 %v8518, %v8535
    %v8583 = vadd.f32 %v8519, %v8537
    %v8584 = vadd.f32 %v8520, %v8539
    %v8585 = vadd.f32 %v8521, %v8541
    %v8586 = vadd.f32 %v8522, %v8543
    %v8587 = vadd.f32 %v8523, %v8545
    %v8588 = vadd.f32 %v8524, %v8547
    %v8589 = vadd.f32 %v8525, %v8549
    %v8590 = vadd.f32 %v8526, %v8551
    %v8591 = vadd.f32 %v8527, %v8553
    %v8592 = vadd.f32 %v8528, %v8555
    %v8593 = vadd.f32 %v8529, %v8557
    %v8594 = vadd.f32 %v8530, %v8559
    %v8595 = vadd.f32 %v8531, %v8561
    %v8596 = vadd.f32 %v8532, %v8563
    %v8597 = vadd.f32 %v8533, %v8565
    %v8598 = vrcp.pop %v8582
    %v8599 = vmul.f32 1.0, %v8598
    %v8600 = vrcp.pop %v8583
    %v8601 = vmul.f32 1.0, %v8600
    %v8602 = vrcp.pop %v8584
    %v8603 = vmul.f32 1.0, %v8602
    %v8604 = vrcp.pop %v8585
    %v8605 = vmul.f32 1.0, %v8604
    %v8606 = vrcp.pop %v8586
    %v8607 = vmul.f32 1.0, %v8606
    %v8608 = vrcp.pop %v8587
    %v8609 = vmul.f32 1.0, %v8608
    %v8610 = vrcp.pop %v8588
    %v8611 = vmul.f32 1.0, %v8610
    %v8612 = vrcp.pop %v8589
    %v8613 = vmul.f32 1.0, %v8612
    %v8614 = vrcp.pop %v8590
    %v8615 = vmul.f32 1.0, %v8614
    %v8616 = vrcp.pop %v8591
    %v8617 = vmul.f32 1.0, %v8616
    %v8618 = vrcp.pop %v8592
    %v8619 = vmul.f32 1.0, %v8618
    %v8620 = vrcp.pop %v8593
    %v8621 = vmul.f32 1.0, %v8620
    %v8622 = vrcp.pop %v8594
    %v8623 = vmul.f32 1.0, %v8622
    %v8624 = vrcp.pop %v8595
    %v8625 = vmul.f32 1.0, %v8624
    %v8626 = vrcp.pop %v8596
    %v8627 = vmul.f32 1.0, %v8626
    %v8628 = vrcp.pop %v8597
    %v8629 = vmul.f32 1.0, %v8628
    %8646 = vrot.lane.b32.xlu0 %v8599, 16
    %v8647 = vpop.permute.xlu0 %8646
    %8648 = vrot.lane.b32.xlu0 %v8601, 16
    %v8649 = vpop.permute.xlu0 %8648
    %8650 = vrot.lane.b32.xlu0 %v8603, 16
    %v8651 = vpop.permute.xlu0 %8650
    %8652 = vrot.lane.b32.xlu0 %v8605, 16
    %v8653 = vpop.permute.xlu0 %8652
    %8654 = vrot.lane.b32.xlu0 %v8607, 16
    %v8655 = vpop.permute.xlu0 %8654
    %8656 = vrot.lane.b32.xlu0 %v8609, 16
    %v8657 = vpop.permute.xlu0 %8656
    %8658 = vrot.lane.b32.xlu0 %v8611, 16
    %v8659 = vpop.permute.xlu0 %8658
    %8660 = vrot.lane.b32.xlu0 %v8613, 16
    %v8661 = vpop.permute.xlu0 %8660
    %8662 = vrot.lane.b32.xlu0 %v8615, 16
    %v8663 = vpop.permute.xlu0 %8662
    %8664 = vrot.lane.b32.xlu0 %v8617, 16
    %v8665 = vpop.permute.xlu0 %8664
    %8666 = vrot.lane.b32.xlu0 %v8619, 16
    %v8667 = vpop.permute.xlu0 %8666
    %8668 = vrot.lane.b32.xlu0 %v8621, 16
    %v8669 = vpop.permute.xlu0 %8668
    %8670 = vrot.lane.b32.xlu0 %v8623, 16
    %v8671 = vpop.permute.xlu0 %8670
    %8672 = vrot.lane.b32.xlu0 %v8625, 16
    %v8673 = vpop.permute.xlu0 %8672
    %8674 = vrot.lane.b32.xlu0 %v8627, 16
    %v8675 = vpop.permute.xlu0 %8674
    %8676 = vrot.lane.b32.xlu0 %v8629, 16
    %v8677 = vpop.permute.xlu0 %8676
    %8694 = vrot.lane.b32.xlu0 %v8599, 32
    %v8695 = vpop.permute.xlu0 %8694
    %8696 = vrot.lane.b32.xlu0 %v8601, 32
    %v8697 = vpop.permute.xlu0 %8696
    %8698 = vrot.lane.b32.xlu0 %v8603, 32
    %v8699 = vpop.permute.xlu0 %8698
    %8700 = vrot.lane.b32.xlu0 %v8605, 32
    %v8701 = vpop.permute.xlu0 %8700
    %8702 = vrot.lane.b32.xlu0 %v8607, 32
    %v8703 = vpop.permute.xlu0 %8702
    %8704 = vrot.lane.b32.xlu0 %v8609, 32
    %v8705 = vpop.permute.xlu0 %8704
    %8706 = vrot.lane.b32.xlu0 %v8611, 32
    %v8707 = vpop.permute.xlu0 %8706
    %8708 = vrot.lane.b32.xlu0 %v8613, 32
    %v8709 = vpop.permute.xlu0 %8708
    %8710 = vrot.lane.b32.xlu0 %v8615, 32
    %v8711 = vpop.permute.xlu0 %8710
    %8712 = vrot.lane.b32.xlu0 %v8617, 32
    %v8713 = vpop.permute.xlu0 %8712
    %8714 = vrot.lane.b32.xlu0 %v8619, 32
    %v8715 = vpop.permute.xlu0 %8714
    %8716 = vrot.lane.b32.xlu0 %v8621, 32
    %v8717 = vpop.permute.xlu0 %8716
    %8718 = vrot.lane.b32.xlu0 %v8623, 32
    %v8719 = vpop.permute.xlu0 %8718
    %8720 = vrot.lane.b32.xlu0 %v8625, 32
    %v8721 = vpop.permute.xlu0 %8720
    %8722 = vrot.lane.b32.xlu0 %v8627, 32
    %v8723 = vpop.permute.xlu0 %8722
    %8724 = vrot.lane.b32.xlu0 %v8629, 32
    %v8725 = vpop.permute.xlu0 %8724
    %8742 = vrot.lane.b32.xlu0 %v8599, 48
    %v8743 = vpop.permute.xlu0 %8742
    %8744 = vrot.lane.b32.xlu0 %v8601, 48
    %v8745 = vpop.permute.xlu0 %8744
    %8746 = vrot.lane.b32.xlu0 %v8603, 48
    %v8747 = vpop.permute.xlu0 %8746
    %8748 = vrot.lane.b32.xlu0 %v8605, 48
    %v8749 = vpop.permute.xlu0 %8748
    %8750 = vrot.lane.b32.xlu0 %v8607, 48
    %v8751 = vpop.permute.xlu0 %8750
    %8752 = vrot.lane.b32.xlu0 %v8609, 48
    %v8753 = vpop.permute.xlu0 %8752
    %8754 = vrot.lane.b32.xlu0 %v8611, 48
    %v8755 = vpop.permute.xlu0 %8754
    %8756 = vrot.lane.b32.xlu0 %v8613, 48
    %v8757 = vpop.permute.xlu0 %8756
    %8758 = vrot.lane.b32.xlu0 %v8615, 48
    %v8759 = vpop.permute.xlu0 %8758
    %8760 = vrot.lane.b32.xlu0 %v8617, 48
    %v8761 = vpop.permute.xlu0 %8760
    %8762 = vrot.lane.b32.xlu0 %v8619, 48
    %v8763 = vpop.permute.xlu0 %8762
    %8764 = vrot.lane.b32.xlu0 %v8621, 48
    %v8765 = vpop.permute.xlu0 %8764
    %8766 = vrot.lane.b32.xlu0 %v8623, 48
    %v8767 = vpop.permute.xlu0 %8766
    %8768 = vrot.lane.b32.xlu0 %v8625, 48
    %v8769 = vpop.permute.xlu0 %8768
    %8770 = vrot.lane.b32.xlu0 %v8627, 48
    %v8771 = vpop.permute.xlu0 %8770
    %8772 = vrot.lane.b32.xlu0 %v8629, 48
    %v8773 = vpop.permute.xlu0 %8772
    %v8790 = vsel %vm1608, %v8599, %v8647
    %v8791 = vsel %vm1608, %v8601, %v8649
    %v8792 = vsel %vm1608, %v8603, %v8651
    %v8793 = vsel %vm1608, %v8605, %v8653
    %v8794 = vsel %vm1608, %v8607, %v8655
    %v8795 = vsel %vm1608, %v8609, %v8657
    %v8796 = vsel %vm1608, %v8611, %v8659
    %v8797 = vsel %vm1608, %v8613, %v8661
    %v8798 = vsel %vm1608, %v8615, %v8663
    %v8799 = vsel %vm1608, %v8617, %v8665
    %v8800 = vsel %vm1608, %v8619, %v8667
    %v8801 = vsel %vm1608, %v8621, %v8669
    %v8802 = vsel %vm1608, %v8623, %v8671
    %v8803 = vsel %vm1608, %v8625, %v8673
    %v8804 = vsel %vm1608, %v8627, %v8675
    %v8805 = vsel %vm1608, %v8629, %v8677
    %v8806 = vsel %vm1625, %v8790, %v8695
    %v8807 = vsel %vm1625, %v8791, %v8697
    %v8808 = vsel %vm1625, %v8792, %v8699
    %v8809 = vsel %vm1625, %v8793, %v8701
    %v8810 = vsel %vm1625, %v8794, %v8703
    %v8811 = vsel %vm1625, %v8795, %v8705
    %v8812 = vsel %vm1625, %v8796, %v8707
    %v8813 = vsel %vm1625, %v8797, %v8709
    %v8814 = vsel %vm1625, %v8798, %v8711
    %v8815 = vsel %vm1625, %v8799, %v8713
    %v8816 = vsel %vm1625, %v8800, %v8715
    %v8817 = vsel %vm1625, %v8801, %v8717
    %v8818 = vsel %vm1625, %v8802, %v8719
    %v8819 = vsel %vm1625, %v8803, %v8721
    %v8820 = vsel %vm1625, %v8804, %v8723
    %v8821 = vsel %vm1625, %v8805, %v8725
    %v8822 = vsel %vm1642, %v8806, %v8743
    %v8823 = vsel %vm1642, %v8807, %v8745
    %v8824 = vsel %vm1642, %v8808, %v8747
    %v8825 = vsel %vm1642, %v8809, %v8749
    %v8826 = vsel %vm1642, %v8810, %v8751
    %v8827 = vsel %vm1642, %v8811, %v8753
    %v8828 = vsel %vm1642, %v8812, %v8755
    %v8829 = vsel %vm1642, %v8813, %v8757
    %v8830 = vsel %vm1642, %v8814, %v8759
    %v8831 = vsel %vm1642, %v8815, %v8761
    %v8832 = vsel %vm1642, %v8816, %v8763
    %v8833 = vsel %vm1642, %v8817, %v8765
    %v8834 = vsel %vm1642, %v8818, %v8767
    %v8835 = vsel %vm1642, %v8819, %v8769
    %v8836 = vsel %vm1642, %v8820, %v8771
    %v8837 = vsel %vm1642, %v8821, %v8773
    %v8838 = vmul.f32 %v8359, %v8822
    %v8839 = vmul.f32 %v8361, %v8823
    %v8840 = vmul.f32 %v8363, %v8824
    %v8841 = vmul.f32 %v8365, %v8825
    %v8842 = vmul.f32 %v8367, %v8826
    %v8843 = vmul.f32 %v8369, %v8827
    %v8844 = vmul.f32 %v8371, %v8828
    %v8845 = vmul.f32 %v8373, %v8829
    %v8846 = vmul.f32 %v8375, %v8830
    %v8847 = vmul.f32 %v8377, %v8831
    %v8848 = vmul.f32 %v8379, %v8832
    %v8849 = vmul.f32 %v8381, %v8833
    %v8850 = vmul.f32 %v8383, %v8834
    %v8851 = vmul.f32 %v8385, %v8835
    %v8852 = vmul.f32 %v8387, %v8836
    %v8853 = vmul.f32 %v8389, %v8837
    %v8855 = vsel %vm2171, %v8838, 0
    %v8858 = vsel %vm2171, %v8839, 0
    %v8861 = vsel %vm2171, %v8840, 0
    %v8864 = vsel %vm2171, %v8841, 0
    %v8867 = vsel %vm2171, %v8842, 0
    %v8870 = vsel %vm2171, %v8843, 0
    %v8873 = vsel %vm2171, %v8844, 0
    %v8876 = vsel %vm2171, %v8845, 0
    %v8879 = vsel %vm2171, %v8846, 0
    %v8882 = vsel %vm2171, %v8847, 0
    %v8885 = vsel %vm2171, %v8848, 0
    %v8888 = vsel %vm2171, %v8849, 0
    %v8891 = vsel %vm2171, %v8850, 0
    %v8894 = vsel %vm2171, %v8851, 0
    %v8897 = vsel %vm2171, %v8852, 0
    %v8900 = vsel %vm2171, %v8853, 0
    %8902 = vmatprep.subr.mxu0 0.0
    %8903 = vmatpush1.msra.mxu0 0.0
    %8904 = vmatprep.subr.mxu0 0.0
    %8905 = vmatpush1.msra.mxu0 0.0
    %8906 = vmatprep.subr.mxu0 0.0
    %8907 = vmatpush1.msra.mxu0 0.0
    %8908 = vmatprep.subr.mxu0 0.0
    %8909 = vmatpush1.msra.mxu0 0.0
    %8910 = vmatprep.subr.mxu0 0.0
    %8911 = vmatpush1.msra.mxu0 0.0
    %8912 = vmatprep.subr.mxu0 0.0
    %8913 = vmatpush1.msra.mxu0 0.0
    %8914 = vmatprep.subr.mxu0 0.0
    %8915 = vmatpush1.msra.mxu0 0.0
    %8916 = vmatprep.subr.mxu0 0.0
    %8917 = vmatpush1.msra.mxu0 0.0
    %8918 = vmatprep.subr.mxu0 %v141
    %8919 = vmatpush1.msra.mxu0 %v140
    %8920 = vmatprep.subr.mxu0 %v137
    %8921 = vmatpush1.msra.mxu0 %v136
    %8922 = vmatprep.subr.mxu0 %v133
    %8923 = vmatpush1.msra.mxu0 %v132
    %8924 = vmatprep.subr.mxu0 %v129
    %8925 = vmatpush1.msra.mxu0 %v128
    %8926 = vmatprep.subr.mxu0 %v125
    %8927 = vmatpush1.msra.mxu0 %v124
    %8928 = vmatprep.subr.mxu0 %v121
    %8929 = vmatpush1.msra.mxu0 %v120
    %8930 = vmatprep.subr.mxu0 %v117
    %8931 = vmatpush1.msra.mxu0 %v116
    %8932 = vmatprep.subr.mxu0 %v113
    %8933 = vmatpush1.msra.mxu0 %v112
    %8934 = vmatprep.subr.mxu0 0.0
    %8935 = vmatpush2.msra.mxu0 0.0
    %8936 = vmatprep.subr.mxu0 0.0
    %8937 = vmatpush2.msra.mxu0 0.0
    %8938 = vmatprep.subr.mxu0 0.0
    %8939 = vmatpush2.msra.mxu0 0.0
    %8940 = vmatprep.subr.mxu0 0.0
    %8941 = vmatpush2.msra.mxu0 0.0
    %8942 = vmatprep.subr.mxu0 0.0
    %8943 = vmatpush2.msra.mxu0 0.0
    %8944 = vmatprep.subr.mxu0 0.0
    %8945 = vmatpush2.msra.mxu0 0.0
    %8946 = vmatprep.subr.mxu0 0.0
    %8947 = vmatpush2.msra.mxu0 0.0
    %8948 = vmatprep.subr.mxu0 0.0
    %8949 = vmatpush2.msra.mxu0 0.0
    %8950 = vmatprep.subr.mxu0 0.0
    %8951 = vmatpush2.msra.mxu0 0.0
    %8952 = vmatprep.subr.mxu0 0.0
    %8953 = vmatpush2.msra.mxu0 0.0
    %8954 = vmatprep.subr.mxu0 0.0
    %8955 = vmatpush2.msra.mxu0 0.0
    %8956 = vmatprep.subr.mxu0 0.0
    %8957 = vmatpush2.msra.mxu0 0.0
    %8958 = vmatprep.subr.mxu0 0.0
    %8959 = vmatpush2.msra.mxu0 0.0
    %8960 = vmatprep.subr.mxu0 0.0
    %8961 = vmatpush2.msra.mxu0 0.0
    %8962 = vmatprep.subr.mxu0 0.0
    %8963 = vmatpush2.msra.mxu0 0.0
    %8964 = vmatprep.subr.mxu0 0.0
    %8965 = vmatpush2.msra.mxu0 0.0
    %8966 = vmatprep.mubr.f32.mxu0 0.0
    %8967 = vmatmul.mubr.f32.gmra.mxu0 %v8855
    %v8968 = vpop.f32.mrf.mxu0
    %v8969 = vadd.f32 0.0, %v8968
    %v8970 = vpop.f32.mrf.mxu0
    %v8971 = vadd.f32 0.0, %v8970
    %8972 = vmatprep.mubr.f32.mxu0 0.0
    %8973 = vmatmul.mubr.f32.gmra.mxu0 %v8858
    %v8974 = vpop.f32.mrf.mxu0
    %v8975 = vadd.f32 0.0, %v8974
    %v8976 = vpop.f32.mrf.mxu0
    %v8977 = vadd.f32 0.0, %v8976
    %8978 = vmatprep.mubr.f32.mxu0 0.0
    %8979 = vmatmul.mubr.f32.gmra.mxu0 %v8861
    %v8980 = vpop.f32.mrf.mxu0
    %v8981 = vadd.f32 0.0, %v8980
    %v8982 = vpop.f32.mrf.mxu0
    %v8983 = vadd.f32 0.0, %v8982
    %8984 = vmatprep.mubr.f32.mxu0 0.0
    %8985 = vmatmul.mubr.f32.gmra.mxu0 %v8864
    %v8986 = vpop.f32.mrf.mxu0
    %v8987 = vadd.f32 0.0, %v8986
    %v8988 = vpop.f32.mrf.mxu0
    %v8989 = vadd.f32 0.0, %v8988
    %8990 = vmatprep.mubr.f32.mxu0 0.0
    %8991 = vmatmul.mubr.f32.gmra.mxu0 %v8867
    %v8992 = vpop.f32.mrf.mxu0
    %v8993 = vadd.f32 0.0, %v8992
    %v8994 = vpop.f32.mrf.mxu0
    %v8995 = vadd.f32 0.0, %v8994
    %8996 = vmatprep.mubr.f32.mxu0 0.0
    %8997 = vmatmul.mubr.f32.gmra.mxu0 %v8870
    %v8998 = vpop.f32.mrf.mxu0
    %v8999 = vadd.f32 0.0, %v8998
    %v9000 = vpop.f32.mrf.mxu0
    %v9001 = vadd.f32 0.0, %v9000
    %9002 = vmatprep.mubr.f32.mxu0 0.0
    %9003 = vmatmul.mubr.f32.gmra.mxu0 %v8873
    %v9004 = vpop.f32.mrf.mxu0
    %v9005 = vadd.f32 0.0, %v9004
    %v9006 = vpop.f32.mrf.mxu0
    %v9007 = vadd.f32 0.0, %v9006
    %9008 = vmatprep.mubr.f32.mxu0 0.0
    %9009 = vmatmul.mubr.f32.gmra.mxu0 %v8876
    %v9010 = vpop.f32.mrf.mxu0
    %v9011 = vadd.f32 0.0, %v9010
    %v9012 = vpop.f32.mrf.mxu0
    %v9013 = vadd.f32 0.0, %v9012
    %9014 = vmatprep.mubr.f32.mxu0 0.0
    %9015 = vmatmul.mubr.f32.gmra.mxu0 %v8879
    %v9016 = vpop.f32.mrf.mxu0
    %v9017 = vadd.f32 0.0, %v9016
    %v9018 = vpop.f32.mrf.mxu0
    %v9019 = vadd.f32 0.0, %v9018
    %9020 = vmatprep.mubr.f32.mxu0 0.0
    %9021 = vmatmul.mubr.f32.gmra.mxu0 %v8882
    %v9022 = vpop.f32.mrf.mxu0
    %v9023 = vadd.f32 0.0, %v9022
    %v9024 = vpop.f32.mrf.mxu0
    %v9025 = vadd.f32 0.0, %v9024
    %9026 = vmatprep.mubr.f32.mxu0 0.0
    %9027 = vmatmul.mubr.f32.gmra.mxu0 %v8885
    %v9028 = vpop.f32.mrf.mxu0
    %v9029 = vadd.f32 0.0, %v9028
    %v9030 = vpop.f32.mrf.mxu0
    %v9031 = vadd.f32 0.0, %v9030
    %9032 = vmatprep.mubr.f32.mxu0 0.0
    %9033 = vmatmul.mubr.f32.gmra.mxu0 %v8888
    %v9034 = vpop.f32.mrf.mxu0
    %v9035 = vadd.f32 0.0, %v9034
    %v9036 = vpop.f32.mrf.mxu0
    %v9037 = vadd.f32 0.0, %v9036
    %9038 = vmatprep.mubr.f32.mxu0 0.0
    %9039 = vmatmul.mubr.f32.gmra.mxu0 %v8891
    %v9040 = vpop.f32.mrf.mxu0
    %v9041 = vadd.f32 0.0, %v9040
    %v9042 = vpop.f32.mrf.mxu0
    %v9043 = vadd.f32 0.0, %v9042
    %9044 = vmatprep.mubr.f32.mxu0 0.0
    %9045 = vmatmul.mubr.f32.gmra.mxu0 %v8894
    %v9046 = vpop.f32.mrf.mxu0
    %v9047 = vadd.f32 0.0, %v9046
    %v9048 = vpop.f32.mrf.mxu0
    %v9049 = vadd.f32 0.0, %v9048
    %9050 = vmatprep.mubr.f32.mxu0 0.0
    %9051 = vmatmul.mubr.f32.gmra.mxu0 %v8897
    %v9052 = vpop.f32.mrf.mxu0
    %v9053 = vadd.f32 0.0, %v9052
    %v9054 = vpop.f32.mrf.mxu0
    %v9055 = vadd.f32 0.0, %v9054
    %9056 = vmatprep.mubr.f32.mxu0 0.0
    %9057 = vmatmul.mubr.f32.gmra.mxu0 %v8900
    %v9058 = vpop.f32.mrf.mxu0
    %v9059 = vadd.f32 0.0, %v9058
    %v9060 = vpop.f32.mrf.mxu0
    %v9061 = vadd.f32 0.0, %v9060
    %9062 = vdwg.mxu0
    %9063 = vmatprep.subr.mxu0 0.0
    %9064 = vmatpush1.msra.mxu0 0.0
    %9065 = vmatprep.subr.mxu0 0.0
    %9066 = vmatpush1.msra.mxu0 0.0
    %9067 = vmatprep.subr.mxu0 0.0
    %9068 = vmatpush1.msra.mxu0 0.0
    %9069 = vmatprep.subr.mxu0 0.0
    %9070 = vmatpush1.msra.mxu0 0.0
    %9071 = vmatprep.subr.mxu0 0.0
    %9072 = vmatpush1.msra.mxu0 0.0
    %9073 = vmatprep.subr.mxu0 0.0
    %9074 = vmatpush1.msra.mxu0 0.0
    %9075 = vmatprep.subr.mxu0 0.0
    %9076 = vmatpush1.msra.mxu0 0.0
    %9077 = vmatprep.subr.mxu0 0.0
    %9078 = vmatpush1.msra.mxu0 0.0
    %9079 = vmatprep.subr.mxu0 %v143
    %9080 = vmatpush1.msra.mxu0 %v142
    %9081 = vmatprep.subr.mxu0 %v139
    %9082 = vmatpush1.msra.mxu0 %v138
    %9083 = vmatprep.subr.mxu0 %v135
    %9084 = vmatpush1.msra.mxu0 %v134
    %9085 = vmatprep.subr.mxu0 %v131
    %9086 = vmatpush1.msra.mxu0 %v130
    %9087 = vmatprep.subr.mxu0 %v127
    %9088 = vmatpush1.msra.mxu0 %v126
    %9089 = vmatprep.subr.mxu0 %v123
    %9090 = vmatpush1.msra.mxu0 %v122
    %9091 = vmatprep.subr.mxu0 %v119
    %9092 = vmatpush1.msra.mxu0 %v118
    %9093 = vmatprep.subr.mxu0 %v115
    %9094 = vmatpush1.msra.mxu0 %v114
    %9095 = vmatprep.subr.mxu0 0.0
    %9096 = vmatpush2.msra.mxu0 0.0
    %9097 = vmatprep.subr.mxu0 0.0
    %9098 = vmatpush2.msra.mxu0 0.0
    %9099 = vmatprep.subr.mxu0 0.0
    %9100 = vmatpush2.msra.mxu0 0.0
    %9101 = vmatprep.subr.mxu0 0.0
    %9102 = vmatpush2.msra.mxu0 0.0
    %9103 = vmatprep.subr.mxu0 0.0
    %9104 = vmatpush2.msra.mxu0 0.0
    %9105 = vmatprep.subr.mxu0 0.0
    %9106 = vmatpush2.msra.mxu0 0.0
    %9107 = vmatprep.subr.mxu0 0.0
    %9108 = vmatpush2.msra.mxu0 0.0
    %9109 = vmatprep.subr.mxu0 0.0
    %9110 = vmatpush2.msra.mxu0 0.0
    %9111 = vmatprep.subr.mxu0 0.0
    %9112 = vmatpush2.msra.mxu0 0.0
    %9113 = vmatprep.subr.mxu0 0.0
    %9114 = vmatpush2.msra.mxu0 0.0
    %9115 = vmatprep.subr.mxu0 0.0
    %9116 = vmatpush2.msra.mxu0 0.0
    %9117 = vmatprep.subr.mxu0 0.0
    %9118 = vmatpush2.msra.mxu0 0.0
    %9119 = vmatprep.subr.mxu0 0.0
    %9120 = vmatpush2.msra.mxu0 0.0
    %9121 = vmatprep.subr.mxu0 0.0
    %9122 = vmatpush2.msra.mxu0 0.0
    %9123 = vmatprep.subr.mxu0 0.0
    %9124 = vmatpush2.msra.mxu0 0.0
    %9125 = vmatprep.subr.mxu0 0.0
    %9126 = vmatpush2.msra.mxu0 0.0
    %9127 = vmatprep.mubr.f32.mxu0 0.0
    %9128 = vmatmul.mubr.f32.gmra.mxu0 %v8855
    %v9129 = vpop.f32.mrf.mxu0
    %v9130 = vadd.f32 0.0, %v9129
    %v9131 = vpop.f32.mrf.mxu0
    %v9132 = vadd.f32 0.0, %v9131
    %9133 = vmatprep.mubr.f32.mxu0 0.0
    %9134 = vmatmul.mubr.f32.gmra.mxu0 %v8858
    %v9135 = vpop.f32.mrf.mxu0
    %v9136 = vadd.f32 0.0, %v9135
    %v9137 = vpop.f32.mrf.mxu0
    %v9138 = vadd.f32 0.0, %v9137
    %9139 = vmatprep.mubr.f32.mxu0 0.0
    %9140 = vmatmul.mubr.f32.gmra.mxu0 %v8861
    %v9141 = vpop.f32.mrf.mxu0
    %v9142 = vadd.f32 0.0, %v9141
    %v9143 = vpop.f32.mrf.mxu0
    %v9144 = vadd.f32 0.0, %v9143
    %9145 = vmatprep.mubr.f32.mxu0 0.0
    %9146 = vmatmul.mubr.f32.gmra.mxu0 %v8864
    %v9147 = vpop.f32.mrf.mxu0
    %v9148 = vadd.f32 0.0, %v9147
    %v9149 = vpop.f32.mrf.mxu0
    %v9150 = vadd.f32 0.0, %v9149
    %9151 = vmatprep.mubr.f32.mxu0 0.0
    %9152 = vmatmul.mubr.f32.gmra.mxu0 %v8867
    %v9153 = vpop.f32.mrf.mxu0
    %v9154 = vadd.f32 0.0, %v9153
    %v9155 = vpop.f32.mrf.mxu0
    %v9156 = vadd.f32 0.0, %v9155
    %9157 = vmatprep.mubr.f32.mxu0 0.0
    %9158 = vmatmul.mubr.f32.gmra.mxu0 %v8870
    %v9159 = vpop.f32.mrf.mxu0
    %v9160 = vadd.f32 0.0, %v9159
    %v9161 = vpop.f32.mrf.mxu0
    %v9162 = vadd.f32 0.0, %v9161
    %9163 = vmatprep.mubr.f32.mxu0 0.0
    %9164 = vmatmul.mubr.f32.gmra.mxu0 %v8873
    %v9165 = vpop.f32.mrf.mxu0
    %v9166 = vadd.f32 0.0, %v9165
    %v9167 = vpop.f32.mrf.mxu0
    %v9168 = vadd.f32 0.0, %v9167
    %9169 = vmatprep.mubr.f32.mxu0 0.0
    %9170 = vmatmul.mubr.f32.gmra.mxu0 %v8876
    %v9171 = vpop.f32.mrf.mxu0
    %v9172 = vadd.f32 0.0, %v9171
    %v9173 = vpop.f32.mrf.mxu0
    %v9174 = vadd.f32 0.0, %v9173
    %9175 = vmatprep.mubr.f32.mxu0 0.0
    %9176 = vmatmul.mubr.f32.gmra.mxu0 %v8879
    %v9177 = vpop.f32.mrf.mxu0
    %v9178 = vadd.f32 0.0, %v9177
    %v9179 = vpop.f32.mrf.mxu0
    %v9180 = vadd.f32 0.0, %v9179
    %9181 = vmatprep.mubr.f32.mxu0 0.0
    %9182 = vmatmul.mubr.f32.gmra.mxu0 %v8882
    %v9183 = vpop.f32.mrf.mxu0
    %v9184 = vadd.f32 0.0, %v9183
    %v9185 = vpop.f32.mrf.mxu0
    %v9186 = vadd.f32 0.0, %v9185
    %9187 = vmatprep.mubr.f32.mxu0 0.0
    %9188 = vmatmul.mubr.f32.gmra.mxu0 %v8885
    %v9189 = vpop.f32.mrf.mxu0
    %v9190 = vadd.f32 0.0, %v9189
    %v9191 = vpop.f32.mrf.mxu0
    %v9192 = vadd.f32 0.0, %v9191
    %9193 = vmatprep.mubr.f32.mxu0 0.0
    %9194 = vmatmul.mubr.f32.gmra.mxu0 %v8888
    %v9195 = vpop.f32.mrf.mxu0
    %v9196 = vadd.f32 0.0, %v9195
    %v9197 = vpop.f32.mrf.mxu0
    %v9198 = vadd.f32 0.0, %v9197
    %9199 = vmatprep.mubr.f32.mxu0 0.0
    %9200 = vmatmul.mubr.f32.gmra.mxu0 %v8891
    %v9201 = vpop.f32.mrf.mxu0
    %v9202 = vadd.f32 0.0, %v9201
    %v9203 = vpop.f32.mrf.mxu0
    %v9204 = vadd.f32 0.0, %v9203
    %9205 = vmatprep.mubr.f32.mxu0 0.0
    %9206 = vmatmul.mubr.f32.gmra.mxu0 %v8894
    %v9207 = vpop.f32.mrf.mxu0
    %v9208 = vadd.f32 0.0, %v9207
    %v9209 = vpop.f32.mrf.mxu0
    %v9210 = vadd.f32 0.0, %v9209
    %9211 = vmatprep.mubr.f32.mxu0 0.0
    %9212 = vmatmul.mubr.f32.gmra.mxu0 %v8897
    %v9213 = vpop.f32.mrf.mxu0
    %v9214 = vadd.f32 0.0, %v9213
    %v9215 = vpop.f32.mrf.mxu0
    %v9216 = vadd.f32 0.0, %v9215
    %9217 = vmatprep.mubr.f32.mxu0 0.0
    %9218 = vmatmul.mubr.f32.gmra.mxu0 %v8900
    %v9219 = vpop.f32.mrf.mxu0
    %v9220 = vadd.f32 0.0, %v9219
    %v9221 = vpop.f32.mrf.mxu0
    %v9222 = vadd.f32 0.0, %v9221
    %9223 = vdwg.mxu0
    %v9224 = vmul.f32 %v8969, %v7480
    %v9225 = vmul.f32 %v8971, %v7480
    %v9226 = vmul.f32 %v9130, %v7480
    %v9227 = vmul.f32 %v9132, %v7480
    %v9228 = vmul.f32 %v8975, %v7486
    %v9229 = vmul.f32 %v8977, %v7486
    %v9230 = vmul.f32 %v9136, %v7486
    %v9231 = vmul.f32 %v9138, %v7486
    %v9232 = vmul.f32 %v8981, %v7492
    %v9233 = vmul.f32 %v8983, %v7492
    %v9234 = vmul.f32 %v9142, %v7492
    %v9235 = vmul.f32 %v9144, %v7492
    %v9236 = vmul.f32 %v8987, %v7498
    %v9237 = vmul.f32 %v8989, %v7498
    %v9238 = vmul.f32 %v9148, %v7498
    %v9239 = vmul.f32 %v9150, %v7498
    %v9240 = vmul.f32 %v8993, %v7504
    %v9241 = vmul.f32 %v8995, %v7504
    %v9242 = vmul.f32 %v9154, %v7504
    %v9243 = vmul.f32 %v9156, %v7504
    %v9244 = vmul.f32 %v8999, %v7510
    %v9245 = vmul.f32 %v9001, %v7510
    %v9246 = vmul.f32 %v9160, %v7510
    %v9247 = vmul.f32 %v9162, %v7510
    %v9248 = vmul.f32 %v9005, %v7516
    %v9249 = vmul.f32 %v9007, %v7516
    %v9250 = vmul.f32 %v9166, %v7516
    %v9251 = vmul.f32 %v9168, %v7516
    %v9252 = vmul.f32 %v9011, %v7522
    %v9253 = vmul.f32 %v9013, %v7522
    %v9254 = vmul.f32 %v9172, %v7522
    %v9255 = vmul.f32 %v9174, %v7522
    %v9256 = vmul.f32 %v9017, %v7528
    %v9257 = vmul.f32 %v9019, %v7528
    %v9258 = vmul.f32 %v9178, %v7528
    %v9259 = vmul.f32 %v9180, %v7528
    %v9260 = vmul.f32 %v9023, %v7534
    %v9261 = vmul.f32 %v9025, %v7534
    %v9262 = vmul.f32 %v9184, %v7534
    %v9263 = vmul.f32 %v9186, %v7534
    %v9264 = vmul.f32 %v9029, %v7540
    %v9265 = vmul.f32 %v9031, %v7540
    %v9266 = vmul.f32 %v9190, %v7540
    %v9267 = vmul.f32 %v9192, %v7540
    %v9268 = vmul.f32 %v9035, %v7546
    %v9269 = vmul.f32 %v9037, %v7546
    %v9270 = vmul.f32 %v9196, %v7546
    %v9271 = vmul.f32 %v9198, %v7546
    %v9272 = vmul.f32 %v9041, %v7552
    %v9273 = vmul.f32 %v9043, %v7552
    %v9274 = vmul.f32 %v9202, %v7552
    %v9275 = vmul.f32 %v9204, %v7552
    %v9276 = vmul.f32 %v9047, %v7558
    %v9277 = vmul.f32 %v9049, %v7558
    %v9278 = vmul.f32 %v9208, %v7558
    %v9279 = vmul.f32 %v9210, %v7558
    %v9280 = vmul.f32 %v9053, %v7564
    %v9281 = vmul.f32 %v9055, %v7564
    %v9282 = vmul.f32 %v9214, %v7564
    %v9283 = vmul.f32 %v9216, %v7564
    %v9284 = vmul.f32 %v9059, %v7570
    %v9285 = vmul.f32 %v9061, %v7570
    %v9286 = vmul.f32 %v9220, %v7570
    %v9287 = vmul.f32 %v9222, %v7570
    %9288 = vmatprep.subr.mxu0 0.0
    %9289 = vmatpush1.msra.mxu0 %v223
    %9290 = vmatprep.subr.mxu0 0.0
    %9291 = vmatpush1.msra.mxu0 %v222
    %9292 = vmatprep.subr.mxu0 0.0
    %9293 = vmatpush1.msra.mxu0 %v221
    %9294 = vmatprep.subr.mxu0 0.0
    %9295 = vmatpush1.msra.mxu0 %v220
    %9296 = vmatprep.subr.mxu0 0.0
    %9297 = vmatpush1.msra.mxu0 %v219
    %9298 = vmatprep.subr.mxu0 0.0
    %9299 = vmatpush1.msra.mxu0 %v218
    %9300 = vmatprep.subr.mxu0 0.0
    %9301 = vmatpush1.msra.mxu0 %v217
    %9302 = vmatprep.subr.mxu0 0.0
    %9303 = vmatpush1.msra.mxu0 %v216
    %9304 = vmatprep.subr.mxu0 0.0
    %9305 = vmatpush1.msra.mxu0 %v215
    %9306 = vmatprep.subr.mxu0 0.0
    %9307 = vmatpush1.msra.mxu0 %v214
    %9308 = vmatprep.subr.mxu0 0.0
    %9309 = vmatpush1.msra.mxu0 %v213
    %9310 = vmatprep.subr.mxu0 0.0
    %9311 = vmatpush1.msra.mxu0 %v212
    %9312 = vmatprep.subr.mxu0 0.0
    %9313 = vmatpush1.msra.mxu0 %v211
    %9314 = vmatprep.subr.mxu0 0.0
    %9315 = vmatpush1.msra.mxu0 %v210
    %9316 = vmatprep.subr.mxu0 0.0
    %9317 = vmatpush1.msra.mxu0 %v209
    %9318 = vmatprep.subr.mxu0 0.0
    %9319 = vmatpush1.msra.mxu0 %v208
    %9320 = vmatprep.subr.mxu0 0.0
    %9321 = vmatpush2.msra.mxu0 %v239
    %9322 = vmatprep.subr.mxu0 0.0
    %9323 = vmatpush2.msra.mxu0 %v238
    %9324 = vmatprep.subr.mxu0 0.0
    %9325 = vmatpush2.msra.mxu0 %v237
    %9326 = vmatprep.subr.mxu0 0.0
    %9327 = vmatpush2.msra.mxu0 %v236
    %9328 = vmatprep.subr.mxu0 0.0
    %9329 = vmatpush2.msra.mxu0 %v235
    %9330 = vmatprep.subr.mxu0 0.0
    %9331 = vmatpush2.msra.mxu0 %v234
    %9332 = vmatprep.subr.mxu0 0.0
    %9333 = vmatpush2.msra.mxu0 %v233
    %9334 = vmatprep.subr.mxu0 0.0
    %9335 = vmatpush2.msra.mxu0 %v232
    %9336 = vmatprep.subr.mxu0 0.0
    %9337 = vmatpush2.msra.mxu0 %v231
    %9338 = vmatprep.subr.mxu0 0.0
    %9339 = vmatpush2.msra.mxu0 %v230
    %9340 = vmatprep.subr.mxu0 0.0
    %9341 = vmatpush2.msra.mxu0 %v229
    %9342 = vmatprep.subr.mxu0 0.0
    %9343 = vmatpush2.msra.mxu0 %v228
    %9344 = vmatprep.subr.mxu0 0.0
    %9345 = vmatpush2.msra.mxu0 %v227
    %9346 = vmatprep.subr.mxu0 0.0
    %9347 = vmatpush2.msra.mxu0 %v226
    %9348 = vmatprep.subr.mxu0 0.0
    %9349 = vmatpush2.msra.mxu0 %v225
    %9350 = vmatprep.subr.mxu0 0.0
    %9351 = vmatpush2.msra.mxu0 %v224
    %9352 = vmatprep.mubr.f32.mxu0 %v9225
    %9353 = vmatmul.mubr.f32.gmra.mxu0 %v9224
    %v9354 = vpop.f32.mrf.mxu0
    %v9355 = vadd.f32 0.0, %v9354
    %v9356 = vpop.f32.mrf.mxu0
    %9357 = vmatprep.mubr.f32.mxu0 %v9229
    %9358 = vmatmul.mubr.f32.gmra.mxu0 %v9228
    %v9359 = vpop.f32.mrf.mxu0
    %v9360 = vadd.f32 0.0, %v9359
    %v9361 = vpop.f32.mrf.mxu0
    %9362 = vmatprep.mubr.f32.mxu0 %v9233
    %9363 = vmatmul.mubr.f32.gmra.mxu0 %v9232
    %v9364 = vpop.f32.mrf.mxu0
    %v9365 = vadd.f32 0.0, %v9364
    %v9366 = vpop.f32.mrf.mxu0
    %9367 = vmatprep.mubr.f32.mxu0 %v9237
    %9368 = vmatmul.mubr.f32.gmra.mxu0 %v9236
    %v9369 = vpop.f32.mrf.mxu0
    %v9370 = vadd.f32 0.0, %v9369
    %v9371 = vpop.f32.mrf.mxu0
    %9372 = vmatprep.mubr.f32.mxu0 %v9241
    %9373 = vmatmul.mubr.f32.gmra.mxu0 %v9240
    %v9374 = vpop.f32.mrf.mxu0
    %v9375 = vadd.f32 0.0, %v9374
    %v9376 = vpop.f32.mrf.mxu0
    %9377 = vmatprep.mubr.f32.mxu0 %v9245
    %9378 = vmatmul.mubr.f32.gmra.mxu0 %v9244
    %v9379 = vpop.f32.mrf.mxu0
    %v9380 = vadd.f32 0.0, %v9379
    %v9381 = vpop.f32.mrf.mxu0
    %9382 = vmatprep.mubr.f32.mxu0 %v9249
    %9383 = vmatmul.mubr.f32.gmra.mxu0 %v9248
    %v9384 = vpop.f32.mrf.mxu0
    %v9385 = vadd.f32 0.0, %v9384
    %v9386 = vpop.f32.mrf.mxu0
    %9387 = vmatprep.mubr.f32.mxu0 %v9253
    %9388 = vmatmul.mubr.f32.gmra.mxu0 %v9252
    %v9389 = vpop.f32.mrf.mxu0
    %v9390 = vadd.f32 0.0, %v9389
    %v9391 = vpop.f32.mrf.mxu0
    %9392 = vmatprep.mubr.f32.mxu0 %v9257
    %9393 = vmatmul.mubr.f32.gmra.mxu0 %v9256
    %v9394 = vpop.f32.mrf.mxu0
    %v9395 = vadd.f32 0.0, %v9394
    %v9396 = vpop.f32.mrf.mxu0
    %9397 = vmatprep.mubr.f32.mxu0 %v9261
    %9398 = vmatmul.mubr.f32.gmra.mxu0 %v9260
    %v9399 = vpop.f32.mrf.mxu0
    %v9400 = vadd.f32 0.0, %v9399
    %v9401 = vpop.f32.mrf.mxu0
    %9402 = vmatprep.mubr.f32.mxu0 %v9265
    %9403 = vmatmul.mubr.f32.gmra.mxu0 %v9264
    %v9404 = vpop.f32.mrf.mxu0
    %v9405 = vadd.f32 0.0, %v9404
    %v9406 = vpop.f32.mrf.mxu0
    %9407 = vmatprep.mubr.f32.mxu0 %v9269
    %9408 = vmatmul.mubr.f32.gmra.mxu0 %v9268
    %v9409 = vpop.f32.mrf.mxu0
    %v9410 = vadd.f32 0.0, %v9409
    %v9411 = vpop.f32.mrf.mxu0
    %9412 = vmatprep.mubr.f32.mxu0 %v9273
    %9413 = vmatmul.mubr.f32.gmra.mxu0 %v9272
    %v9414 = vpop.f32.mrf.mxu0
    %v9415 = vadd.f32 0.0, %v9414
    %v9416 = vpop.f32.mrf.mxu0
    %9417 = vmatprep.mubr.f32.mxu0 %v9277
    %9418 = vmatmul.mubr.f32.gmra.mxu0 %v9276
    %v9419 = vpop.f32.mrf.mxu0
    %v9420 = vadd.f32 0.0, %v9419
    %v9421 = vpop.f32.mrf.mxu0
    %9422 = vmatprep.mubr.f32.mxu0 %v9281
    %9423 = vmatmul.mubr.f32.gmra.mxu0 %v9280
    %v9424 = vpop.f32.mrf.mxu0
    %v9425 = vadd.f32 0.0, %v9424
    %v9426 = vpop.f32.mrf.mxu0
    %9427 = vmatprep.mubr.f32.mxu0 %v9285
    %9428 = vmatmul.mubr.f32.gmra.mxu0 %v9284
    %v9429 = vpop.f32.mrf.mxu0
    %v9430 = vadd.f32 0.0, %v9429
    %v9431 = vpop.f32.mrf.mxu0
    %9432 = vdwg.mxu0
    %9433 = vmatprep.subr.mxu0 0.0
    %9434 = vmatpush1.msra.mxu0 %v255
    %9435 = vmatprep.subr.mxu0 0.0
    %9436 = vmatpush1.msra.mxu0 %v254
    %9437 = vmatprep.subr.mxu0 0.0
    %9438 = vmatpush1.msra.mxu0 %v253
    %9439 = vmatprep.subr.mxu0 0.0
    %9440 = vmatpush1.msra.mxu0 %v252
    %9441 = vmatprep.subr.mxu0 0.0
    %9442 = vmatpush1.msra.mxu0 %v251
    %9443 = vmatprep.subr.mxu0 0.0
    %9444 = vmatpush1.msra.mxu0 %v250
    %9445 = vmatprep.subr.mxu0 0.0
    %9446 = vmatpush1.msra.mxu0 %v249
    %9447 = vmatprep.subr.mxu0 0.0
    %9448 = vmatpush1.msra.mxu0 %v248
    %9449 = vmatprep.subr.mxu0 0.0
    %9450 = vmatpush1.msra.mxu0 %v247
    %9451 = vmatprep.subr.mxu0 0.0
    %9452 = vmatpush1.msra.mxu0 %v246
    %9453 = vmatprep.subr.mxu0 0.0
    %9454 = vmatpush1.msra.mxu0 %v245
    %9455 = vmatprep.subr.mxu0 0.0
    %9456 = vmatpush1.msra.mxu0 %v244
    %9457 = vmatprep.subr.mxu0 0.0
    %9458 = vmatpush1.msra.mxu0 %v243
    %9459 = vmatprep.subr.mxu0 0.0
    %9460 = vmatpush1.msra.mxu0 %v242
    %9461 = vmatprep.subr.mxu0 0.0
    %9462 = vmatpush1.msra.mxu0 %v241
    %9463 = vmatprep.subr.mxu0 0.0
    %9464 = vmatpush1.msra.mxu0 %v240
    %9465 = vmatprep.subr.mxu0 0.0
    %9466 = vmatpush2.msra.mxu0 %v271
    %9467 = vmatprep.subr.mxu0 0.0
    %9468 = vmatpush2.msra.mxu0 %v270
    %9469 = vmatprep.subr.mxu0 0.0
    %9470 = vmatpush2.msra.mxu0 %v269
    %9471 = vmatprep.subr.mxu0 0.0
    %9472 = vmatpush2.msra.mxu0 %v268
    %9473 = vmatprep.subr.mxu0 0.0
    %9474 = vmatpush2.msra.mxu0 %v267
    %9475 = vmatprep.subr.mxu0 0.0
    %9476 = vmatpush2.msra.mxu0 %v266
    %9477 = vmatprep.subr.mxu0 0.0
    %9478 = vmatpush2.msra.mxu0 %v265
    %9479 = vmatprep.subr.mxu0 0.0
    %9480 = vmatpush2.msra.mxu0 %v264
    %9481 = vmatprep.subr.mxu0 0.0
    %9482 = vmatpush2.msra.mxu0 %v263
    %9483 = vmatprep.subr.mxu0 0.0
    %9484 = vmatpush2.msra.mxu0 %v262
    %9485 = vmatprep.subr.mxu0 0.0
    %9486 = vmatpush2.msra.mxu0 %v261
    %9487 = vmatprep.subr.mxu0 0.0
    %9488 = vmatpush2.msra.mxu0 %v260
    %9489 = vmatprep.subr.mxu0 0.0
    %9490 = vmatpush2.msra.mxu0 %v259
    %9491 = vmatprep.subr.mxu0 0.0
    %9492 = vmatpush2.msra.mxu0 %v258
    %9493 = vmatprep.subr.mxu0 0.0
    %9494 = vmatpush2.msra.mxu0 %v257
    %9495 = vmatprep.subr.mxu0 0.0
    %9496 = vmatpush2.msra.mxu0 %v256
    %9497 = vmatprep.mubr.f32.mxu0 %v9227
    %9498 = vmatmul.mubr.f32.gmra.mxu0 %v9226
    %v9499 = vpop.f32.mrf.mxu0
    %v9500 = vadd.f32 %v9355, %v9499
    %v9501 = vpop.f32.mrf.mxu0
    %9502 = vmatprep.mubr.f32.mxu0 %v9231
    %9503 = vmatmul.mubr.f32.gmra.mxu0 %v9230
    %v9504 = vpop.f32.mrf.mxu0
    %v9505 = vadd.f32 %v9360, %v9504
    %v9506 = vpop.f32.mrf.mxu0
    %9507 = vmatprep.mubr.f32.mxu0 %v9235
    %9508 = vmatmul.mubr.f32.gmra.mxu0 %v9234
    %v9509 = vpop.f32.mrf.mxu0
    %v9510 = vadd.f32 %v9365, %v9509
    %v9511 = vpop.f32.mrf.mxu0
    %9512 = vmatprep.mubr.f32.mxu0 %v9239
    %9513 = vmatmul.mubr.f32.gmra.mxu0 %v9238
    %v9514 = vpop.f32.mrf.mxu0
    %v9515 = vadd.f32 %v9370, %v9514
    %v9516 = vpop.f32.mrf.mxu0
    %9517 = vmatprep.mubr.f32.mxu0 %v9243
    %9518 = vmatmul.mubr.f32.gmra.mxu0 %v9242
    %v9519 = vpop.f32.mrf.mxu0
    %v9520 = vadd.f32 %v9375, %v9519
    %v9521 = vpop.f32.mrf.mxu0
    %9522 = vmatprep.mubr.f32.mxu0 %v9247
    %9523 = vmatmul.mubr.f32.gmra.mxu0 %v9246
    %v9524 = vpop.f32.mrf.mxu0
    %v9525 = vadd.f32 %v9380, %v9524
    %v9526 = vpop.f32.mrf.mxu0
    %9527 = vmatprep.mubr.f32.mxu0 %v9251
    %9528 = vmatmul.mubr.f32.gmra.mxu0 %v9250
    %v9529 = vpop.f32.mrf.mxu0
    %v9530 = vadd.f32 %v9385, %v9529
    %v9531 = vpop.f32.mrf.mxu0
    %9532 = vmatprep.mubr.f32.mxu0 %v9255
    %9533 = vmatmul.mubr.f32.gmra.mxu0 %v9254
    %v9534 = vpop.f32.mrf.mxu0
    %v9535 = vadd.f32 %v9390, %v9534
    %v9536 = vpop.f32.mrf.mxu0
    %9537 = vmatprep.mubr.f32.mxu0 %v9259
    %9538 = vmatmul.mubr.f32.gmra.mxu0 %v9258
    %v9539 = vpop.f32.mrf.mxu0
    %v9540 = vadd.f32 %v9395, %v9539
    %v9541 = vpop.f32.mrf.mxu0
    %9542 = vmatprep.mubr.f32.mxu0 %v9263
    %9543 = vmatmul.mubr.f32.gmra.mxu0 %v9262
    %v9544 = vpop.f32.mrf.mxu0
    %v9545 = vadd.f32 %v9400, %v9544
    %v9546 = vpop.f32.mrf.mxu0
    %9547 = vmatprep.mubr.f32.mxu0 %v9267
    %9548 = vmatmul.mubr.f32.gmra.mxu0 %v9266
    %v9549 = vpop.f32.mrf.mxu0
    %v9550 = vadd.f32 %v9405, %v9549
    %v9551 = vpop.f32.mrf.mxu0
    %9552 = vmatprep.mubr.f32.mxu0 %v9271
    %9553 = vmatmul.mubr.f32.gmra.mxu0 %v9270
    %v9554 = vpop.f32.mrf.mxu0
    %v9555 = vadd.f32 %v9410, %v9554
    %v9556 = vpop.f32.mrf.mxu0
    %9557 = vmatprep.mubr.f32.mxu0 %v9275
    %9558 = vmatmul.mubr.f32.gmra.mxu0 %v9274
    %v9559 = vpop.f32.mrf.mxu0
    %v9560 = vadd.f32 %v9415, %v9559
    %v9561 = vpop.f32.mrf.mxu0
    %9562 = vmatprep.mubr.f32.mxu0 %v9279
    %9563 = vmatmul.mubr.f32.gmra.mxu0 %v9278
    %v9564 = vpop.f32.mrf.mxu0
    %v9565 = vadd.f32 %v9420, %v9564
    %v9566 = vpop.f32.mrf.mxu0
    %9567 = vmatprep.mubr.f32.mxu0 %v9283
    %9568 = vmatmul.mubr.f32.gmra.mxu0 %v9282
    %v9569 = vpop.f32.mrf.mxu0
    %v9570 = vadd.f32 %v9425, %v9569
    %v9571 = vpop.f32.mrf.mxu0
    %9572 = vmatprep.mubr.f32.mxu0 %v9287
    %9573 = vmatmul.mubr.f32.gmra.mxu0 %v9286
    %v9574 = vpop.f32.mrf.mxu0
    %v9575 = vadd.f32 %v9430, %v9574
    %v9576 = vpop.f32.mrf.mxu0
    %9577 = vdwg.mxu0
    %v9578 = vsel %vm6832, %v6607, %v9500
    %v9579 = vsel %vm6833, %v6608, %v9505
    %v9580 = vsel %vm6834, %v6609, %v9510
    %v9581 = vsel %vm6835, %v6610, %v9515
    %v9582 = vsel %vm6836, %v6611, %v9520
    %v9583 = vsel %vm6837, %v6612, %v9525
    %v9584 = vsel %vm6838, %v6613, %v9530
    %v9585 = vsel %vm6839, %v6614, %v9535
    %v9586 = vsel %vm6840, %v6615, %v9540
    %v9587 = vsel %vm6841, %v6616, %v9545
    %v9588 = vsel %vm6842, %v6617, %v9550
    %v9589 = vsel %vm6843, %v6618, %v9555
    %v9590 = vsel %vm6844, %v6619, %v9560
    %v9591 = vsel %vm6845, %v6620, %v9565
    %v9592 = vsel %vm6846, %v6621, %v9570
    %v9593 = vsel %vm6847, %v6622, %v9575
    %vm9594 = vcmp.ge.f32.partialorder %v9578, 0.0
    %vm9595 = vcmp.ge.f32.partialorder %v9579, 0.0
    %vm9596 = vcmp.ge.f32.partialorder %v9580, 0.0
    %vm9597 = vcmp.ge.f32.partialorder %v9581, 0.0
    %vm9598 = vcmp.ge.f32.partialorder %v9582, 0.0
    %vm9599 = vcmp.ge.f32.partialorder %v9583, 0.0
    %vm9600 = vcmp.ge.f32.partialorder %v9584, 0.0
    %vm9601 = vcmp.ge.f32.partialorder %v9585, 0.0
    %vm9602 = vcmp.ge.f32.partialorder %v9586, 0.0
    %vm9603 = vcmp.ge.f32.partialorder %v9587, 0.0
    %vm9604 = vcmp.ge.f32.partialorder %v9588, 0.0
    %vm9605 = vcmp.ge.f32.partialorder %v9589, 0.0
    %vm9606 = vcmp.ge.f32.partialorder %v9590, 0.0
    %vm9607 = vcmp.ge.f32.partialorder %v9591, 0.0
    %vm9608 = vcmp.ge.f32.partialorder %v9592, 0.0
    %vm9609 = vcmp.ge.f32.partialorder %v9593, 0.0
    %v9610 = vmul.f32 %v9578, 0.01
    %v9611 = vmul.f32 %v9579, 0.01
    %v9612 = vmul.f32 %v9580, 0.01
    %v9613 = vmul.f32 %v9581, 0.01
    %v9614 = vmul.f32 %v9582, 0.01
    %v9615 = vmul.f32 %v9583, 0.01
    %v9616 = vmul.f32 %v9584, 0.01
    %v9617 = vmul.f32 %v9585, 0.01
    %v9618 = vmul.f32 %v9586, 0.01
    %v9619 = vmul.f32 %v9587, 0.01
    %v9620 = vmul.f32 %v9588, 0.01
    %v9621 = vmul.f32 %v9589, 0.01
    %v9622 = vmul.f32 %v9590, 0.01
    %v9623 = vmul.f32 %v9591, 0.01
    %v9624 = vmul.f32 %v9592, 0.01
    %v9625 = vmul.f32 %v9593, 0.01
    %v9626 = vsel %vm9594, %v9578, %v9610
    %v9627 = vsel %vm9595, %v9579, %v9611
    %v9628 = vsel %vm9596, %v9580, %v9612
    %v9629 = vsel %vm9597, %v9581, %v9613
    %v9630 = vsel %vm9598, %v9582, %v9614
    %v9631 = vsel %vm9599, %v9583, %v9615
    %v9632 = vsel %vm9600, %v9584, %v9616
    %v9633 = vsel %vm9601, %v9585, %v9617
    %v9634 = vsel %vm9602, %v9586, %v9618
    %v9635 = vsel %vm9603, %v9587, %v9619
    %v9636 = vsel %vm9604, %v9588, %v9620
    %v9637 = vsel %vm9605, %v9589, %v9621
    %v9638 = vsel %vm9606, %v9590, %v9622
    %v9639 = vsel %vm9607, %v9591, %v9623
    %v9640 = vsel %vm9608, %v9592, %v9624
    %v9641 = vsel %vm9609, %v9593, %v9625
    %v9642 = vadd.f32 %v6607, %v9626
    %v9643 = vadd.f32 %v6608, %v9627
    %v9644 = vadd.f32 %v6609, %v9628
    %v9645 = vadd.f32 %v6610, %v9629
    %v9646 = vadd.f32 %v6611, %v9630
    %v9647 = vadd.f32 %v6612, %v9631
    %v9648 = vadd.f32 %v6613, %v9632
    %v9649 = vadd.f32 %v6614, %v9633
    %v9650 = vadd.f32 %v6615, %v9634
    %v9651 = vadd.f32 %v6616, %v9635
    %v9652 = vadd.f32 %v6617, %v9636
    %v9653 = vadd.f32 %v6618, %v9637
    %v9654 = vadd.f32 %v6619, %v9638
    %v9655 = vadd.f32 %v6620, %v9639
    %v9656 = vadd.f32 %v6621, %v9640
    %v9657 = vadd.f32 %v6622, %v9641
    %9658 = vmatprep.subr.mxu0 0.0
    %9659 = vmatpush1.msra.mxu0 %v9641
    %9660 = vmatprep.subr.mxu0 0.0
    %9661 = vmatpush1.msra.mxu0 %v9640
    %9662 = vmatprep.subr.mxu0 0.0
    %9663 = vmatpush1.msra.mxu0 %v9639
    %9664 = vmatprep.subr.mxu0 0.0
    %9665 = vmatpush1.msra.mxu0 %v9638
    %9666 = vmatprep.subr.mxu0 0.0
    %9667 = vmatpush1.msra.mxu0 %v9637
    %9668 = vmatprep.subr.mxu0 0.0
    %9669 = vmatpush1.msra.mxu0 %v9636
    %9670 = vmatprep.subr.mxu0 0.0
    %9671 = vmatpush1.msra.mxu0 %v9635
    %9672 = vmatprep.subr.mxu0 0.0
    %9673 = vmatpush1.msra.mxu0 %v9634
    %9674 = vmatprep.subr.mxu0 0.0
    %9675 = vmatpush1.msra.mxu0 %v9633
    %9676 = vmatprep.subr.mxu0 0.0
    %9677 = vmatpush1.msra.mxu0 %v9632
    %9678 = vmatprep.subr.mxu0 0.0
    %9679 = vmatpush1.msra.mxu0 %v9631
    %9680 = vmatprep.subr.mxu0 0.0
    %9681 = vmatpush1.msra.mxu0 %v9630
    %9682 = vmatprep.subr.mxu0 0.0
    %9683 = vmatpush1.msra.mxu0 %v9629
    %9684 = vmatprep.subr.mxu0 0.0
    %9685 = vmatpush1.msra.mxu0 %v9628
    %9686 = vmatprep.subr.mxu0 0.0
    %9687 = vmatpush1.msra.mxu0 %v9627
    %9688 = vmatprep.subr.mxu0 0.0
    %9689 = vmatpush1.msra.mxu0 %v9626
    %9690 = vmatprep.subr.mxu0 0.0
    %9691 = vmatpush2.msra.mxu0 0.0
    %9692 = vmatprep.subr.mxu0 0.0
    %9693 = vmatpush2.msra.mxu0 0.0
    %9694 = vmatprep.subr.mxu0 0.0
    %9695 = vmatpush2.msra.mxu0 0.0
    %9696 = vmatprep.subr.mxu0 0.0
    %9697 = vmatpush2.msra.mxu0 0.0
    %9698 = vmatprep.subr.mxu0 0.0
    %9699 = vmatpush2.msra.mxu0 0.0
    %9700 = vmatprep.subr.mxu0 0.0
    %9701 = vmatpush2.msra.mxu0 0.0
    %9702 = vmatprep.subr.mxu0 0.0
    %9703 = vmatpush2.msra.mxu0 0.0
    %9704 = vmatprep.subr.mxu0 0.0
    %9705 = vmatpush2.msra.mxu0 0.0
    %9706 = vmatprep.subr.mxu0 0.0
    %9707 = vmatpush2.msra.mxu0 0.0
    %9708 = vmatprep.subr.mxu0 0.0
    %9709 = vmatpush2.msra.mxu0 0.0
    %9710 = vmatprep.subr.mxu0 0.0
    %9711 = vmatpush2.msra.mxu0 0.0
    %9712 = vmatprep.subr.mxu0 0.0
    %9713 = vmatpush2.msra.mxu0 0.0
    %9714 = vmatprep.subr.mxu0 0.0
    %9715 = vmatpush2.msra.mxu0 0.0
    %9716 = vmatprep.subr.mxu0 0.0
    %9717 = vmatpush2.msra.mxu0 0.0
    %9718 = vmatprep.subr.mxu0 0.0
    %9719 = vmatpush2.msra.mxu0 0.0
    %9720 = vmatprep.subr.mxu0 0.0
    %9721 = vmatpush2.msra.mxu0 0.0
    %9722 = vmatprep.mubr.f32.mxu0 0.0
    %9723 = vmatmul.mubr.f32.gmra.mxu0 %v192
    %v9724 = vpop.f32.mrf.mxu0
    %v9725 = vadd.f32 0.0, %v9724
    %v9726 = vpop.f32.mrf.mxu0
    %9727 = vmatprep.mubr.f32.mxu0 0.0
    %9728 = vmatmul.mubr.f32.gmra.mxu0 %v193
    %v9729 = vpop.f32.mrf.mxu0
    %v9730 = vadd.f32 0.0, %v9729
    %v9731 = vpop.f32.mrf.mxu0
    %9732 = vmatprep.mubr.f32.mxu0 0.0
    %9733 = vmatmul.mubr.f32.gmra.mxu0 %v194
    %v9734 = vpop.f32.mrf.mxu0
    %v9735 = vadd.f32 0.0, %v9734
    %v9736 = vpop.f32.mrf.mxu0
    %9737 = vmatprep.mubr.f32.mxu0 0.0
    %9738 = vmatmul.mubr.f32.gmra.mxu0 %v195
    %v9739 = vpop.f32.mrf.mxu0
    %v9740 = vadd.f32 0.0, %v9739
    %v9741 = vpop.f32.mrf.mxu0
    %9742 = vmatprep.mubr.f32.mxu0 0.0
    %9743 = vmatmul.mubr.f32.gmra.mxu0 %v196
    %v9744 = vpop.f32.mrf.mxu0
    %v9745 = vadd.f32 0.0, %v9744
    %v9746 = vpop.f32.mrf.mxu0
    %9747 = vmatprep.mubr.f32.mxu0 0.0
    %9748 = vmatmul.mubr.f32.gmra.mxu0 %v197
    %v9749 = vpop.f32.mrf.mxu0
    %v9750 = vadd.f32 0.0, %v9749
    %v9751 = vpop.f32.mrf.mxu0
    %9752 = vmatprep.mubr.f32.mxu0 0.0
    %9753 = vmatmul.mubr.f32.gmra.mxu0 %v198
    %v9754 = vpop.f32.mrf.mxu0
    %v9755 = vadd.f32 0.0, %v9754
    %v9756 = vpop.f32.mrf.mxu0
    %9757 = vmatprep.mubr.f32.mxu0 0.0
    %9758 = vmatmul.mubr.f32.gmra.mxu0 %v199
    %v9759 = vpop.f32.mrf.mxu0
    %v9760 = vadd.f32 0.0, %v9759
    %v9761 = vpop.f32.mrf.mxu0
    %9762 = vmatprep.mubr.f32.mxu0 0.0
    %9763 = vmatmul.mubr.f32.gmra.mxu0 %v200
    %v9764 = vpop.f32.mrf.mxu0
    %v9765 = vadd.f32 0.0, %v9764
    %v9766 = vpop.f32.mrf.mxu0
    %9767 = vmatprep.mubr.f32.mxu0 0.0
    %9768 = vmatmul.mubr.f32.gmra.mxu0 %v201
    %v9769 = vpop.f32.mrf.mxu0
    %v9770 = vadd.f32 0.0, %v9769
    %v9771 = vpop.f32.mrf.mxu0
    %9772 = vmatprep.mubr.f32.mxu0 0.0
    %9773 = vmatmul.mubr.f32.gmra.mxu0 %v202
    %v9774 = vpop.f32.mrf.mxu0
    %v9775 = vadd.f32 0.0, %v9774
    %v9776 = vpop.f32.mrf.mxu0
    %9777 = vmatprep.mubr.f32.mxu0 0.0
    %9778 = vmatmul.mubr.f32.gmra.mxu0 %v203
    %v9779 = vpop.f32.mrf.mxu0
    %v9780 = vadd.f32 0.0, %v9779
    %v9781 = vpop.f32.mrf.mxu0
    %9782 = vmatprep.mubr.f32.mxu0 0.0
    %9783 = vmatmul.mubr.f32.gmra.mxu0 %v204
    %v9784 = vpop.f32.mrf.mxu0
    %v9785 = vadd.f32 0.0, %v9784
    %v9786 = vpop.f32.mrf.mxu0
    %9787 = vmatprep.mubr.f32.mxu0 0.0
    %9788 = vmatmul.mubr.f32.gmra.mxu0 %v205
    %v9789 = vpop.f32.mrf.mxu0
    %v9790 = vadd.f32 0.0, %v9789
    %v9791 = vpop.f32.mrf.mxu0
    %9792 = vmatprep.mubr.f32.mxu0 0.0
    %9793 = vmatmul.mubr.f32.gmra.mxu0 %v206
    %v9794 = vpop.f32.mrf.mxu0
    %v9795 = vadd.f32 0.0, %v9794
    %v9796 = vpop.f32.mrf.mxu0
    %9797 = vmatprep.mubr.f32.mxu0 0.0
    %9798 = vmatmul.mubr.f32.gmra.mxu0 %v207
    %v9799 = vpop.f32.mrf.mxu0
    %v9800 = vadd.f32 0.0, %v9799
    %v9801 = vpop.f32.mrf.mxu0
    %9802 = vdwg.mxu0
    %9803 = vmatprep.subr.mxu0 %v7054
    %9804 = vmatpush1.msra.mxu0 %v7053
    %9805 = vmatprep.subr.mxu0 %v7050
    %9806 = vmatpush1.msra.mxu0 %v7049
    %9807 = vmatprep.subr.mxu0 %v7046
    %9808 = vmatpush1.msra.mxu0 %v7045
    %9809 = vmatprep.subr.mxu0 %v7042
    %9810 = vmatpush1.msra.mxu0 %v7041
    %9811 = vmatprep.subr.mxu0 %v7038
    %9812 = vmatpush1.msra.mxu0 %v7037
    %9813 = vmatprep.subr.mxu0 %v7034
    %9814 = vmatpush1.msra.mxu0 %v7033
    %9815 = vmatprep.subr.mxu0 %v7030
    %9816 = vmatpush1.msra.mxu0 %v7029
    %9817 = vmatprep.subr.mxu0 %v7026
    %9818 = vmatpush1.msra.mxu0 %v7025
    %9819 = vmatprep.subr.mxu0 %v7022
    %9820 = vmatpush1.msra.mxu0 %v7021
    %9821 = vmatprep.subr.mxu0 %v7018
    %9822 = vmatpush1.msra.mxu0 %v7017
    %9823 = vmatprep.subr.mxu0 %v7014
    %9824 = vmatpush1.msra.mxu0 %v7013
    %9825 = vmatprep.subr.mxu0 %v7010
    %9826 = vmatpush1.msra.mxu0 %v7009
    %9827 = vmatprep.subr.mxu0 %v7006
    %9828 = vmatpush1.msra.mxu0 %v7005
    %9829 = vmatprep.subr.mxu0 %v7002
    %9830 = vmatpush1.msra.mxu0 %v7001
    %9831 = vmatprep.subr.mxu0 %v6998
    %9832 = vmatpush1.msra.mxu0 %v6997
    %9833 = vmatprep.subr.mxu0 %v6994
    %9834 = vmatpush1.msra.mxu0 %v6993
    %9835 = vmatprep.subr.mxu0 0.0
    %9836 = vmatpush2.msra.mxu0 0.0
    %9837 = vmatprep.subr.mxu0 0.0
    %9838 = vmatpush2.msra.mxu0 0.0
    %9839 = vmatprep.subr.mxu0 0.0
    %9840 = vmatpush2.msra.mxu0 0.0
    %9841 = vmatprep.subr.mxu0 0.0
    %9842 = vmatpush2.msra.mxu0 0.0
    %9843 = vmatprep.subr.mxu0 0.0
    %9844 = vmatpush2.msra.mxu0 0.0
    %9845 = vmatprep.subr.mxu0 0.0
    %9846 = vmatpush2.msra.mxu0 0.0
    %9847 = vmatprep.subr.mxu0 0.0
    %9848 = vmatpush2.msra.mxu0 0.0
    %9849 = vmatprep.subr.mxu0 0.0
    %9850 = vmatpush2.msra.mxu0 0.0
    %9851 = vmatprep.subr.mxu0 0.0
    %9852 = vmatpush2.msra.mxu0 0.0
    %9853 = vmatprep.subr.mxu0 0.0
    %9854 = vmatpush2.msra.mxu0 0.0
    %9855 = vmatprep.subr.mxu0 0.0
    %9856 = vmatpush2.msra.mxu0 0.0
    %9857 = vmatprep.subr.mxu0 0.0
    %9858 = vmatpush2.msra.mxu0 0.0
    %9859 = vmatprep.subr.mxu0 0.0
    %9860 = vmatpush2.msra.mxu0 0.0
    %9861 = vmatprep.subr.mxu0 0.0
    %9862 = vmatpush2.msra.mxu0 0.0
    %9863 = vmatprep.subr.mxu0 0.0
    %9864 = vmatpush2.msra.mxu0 0.0
    %9865 = vmatprep.subr.mxu0 0.0
    %9866 = vmatpush2.msra.mxu0 0.0
    %9867 = vmatprep.mubr.f32.mxu0 0.0
    %9868 = vmatmul.mubr.f32.gmra.mxu0 %v9626
    %v9869 = vpop.f32.mrf.mxu0
    %v9870 = vadd.f32 0.0, %v9869
    %v9871 = vpop.f32.mrf.mxu0
    %v9872 = vadd.f32 0.0, %v9871
    %9873 = vmatprep.mubr.f32.mxu0 0.0
    %9874 = vmatmul.mubr.f32.gmra.mxu0 %v9627
    %v9875 = vpop.f32.mrf.mxu0
    %v9876 = vadd.f32 0.0, %v9875
    %v9877 = vpop.f32.mrf.mxu0
    %v9878 = vadd.f32 0.0, %v9877
    %9879 = vmatprep.mubr.f32.mxu0 0.0
    %9880 = vmatmul.mubr.f32.gmra.mxu0 %v9628
    %v9881 = vpop.f32.mrf.mxu0
    %v9882 = vadd.f32 0.0, %v9881
    %v9883 = vpop.f32.mrf.mxu0
    %v9884 = vadd.f32 0.0, %v9883
    %9885 = vmatprep.mubr.f32.mxu0 0.0
    %9886 = vmatmul.mubr.f32.gmra.mxu0 %v9629
    %v9887 = vpop.f32.mrf.mxu0
    %v9888 = vadd.f32 0.0, %v9887
    %v9889 = vpop.f32.mrf.mxu0
    %v9890 = vadd.f32 0.0, %v9889
    %9891 = vmatprep.mubr.f32.mxu0 0.0
    %9892 = vmatmul.mubr.f32.gmra.mxu0 %v9630
    %v9893 = vpop.f32.mrf.mxu0
    %v9894 = vadd.f32 0.0, %v9893
    %v9895 = vpop.f32.mrf.mxu0
    %v9896 = vadd.f32 0.0, %v9895
    %9897 = vmatprep.mubr.f32.mxu0 0.0
    %9898 = vmatmul.mubr.f32.gmra.mxu0 %v9631
    %v9899 = vpop.f32.mrf.mxu0
    %v9900 = vadd.f32 0.0, %v9899
    %v9901 = vpop.f32.mrf.mxu0
    %v9902 = vadd.f32 0.0, %v9901
    %9903 = vmatprep.mubr.f32.mxu0 0.0
    %9904 = vmatmul.mubr.f32.gmra.mxu0 %v9632
    %v9905 = vpop.f32.mrf.mxu0
    %v9906 = vadd.f32 0.0, %v9905
    %v9907 = vpop.f32.mrf.mxu0
    %v9908 = vadd.f32 0.0, %v9907
    %9909 = vmatprep.mubr.f32.mxu0 0.0
    %9910 = vmatmul.mubr.f32.gmra.mxu0 %v9633
    %v9911 = vpop.f32.mrf.mxu0
    %v9912 = vadd.f32 0.0, %v9911
    %v9913 = vpop.f32.mrf.mxu0
    %v9914 = vadd.f32 0.0, %v9913
    %9915 = vmatprep.mubr.f32.mxu0 0.0
    %9916 = vmatmul.mubr.f32.gmra.mxu0 %v9634
    %v9917 = vpop.f32.mrf.mxu0
    %v9918 = vadd.f32 0.0, %v9917
    %v9919 = vpop.f32.mrf.mxu0
    %v9920 = vadd.f32 0.0, %v9919
    %9921 = vmatprep.mubr.f32.mxu0 0.0
    %9922 = vmatmul.mubr.f32.gmra.mxu0 %v9635
    %v9923 = vpop.f32.mrf.mxu0
    %v9924 = vadd.f32 0.0, %v9923
    %v9925 = vpop.f32.mrf.mxu0
    %v9926 = vadd.f32 0.0, %v9925
    %9927 = vmatprep.mubr.f32.mxu0 0.0
    %9928 = vmatmul.mubr.f32.gmra.mxu0 %v9636
    %v9929 = vpop.f32.mrf.mxu0
    %v9930 = vadd.f32 0.0, %v9929
    %v9931 = vpop.f32.mrf.mxu0
    %v9932 = vadd.f32 0.0, %v9931
    %9933 = vmatprep.mubr.f32.mxu0 0.0
    %9934 = vmatmul.mubr.f32.gmra.mxu0 %v9637
    %v9935 = vpop.f32.mrf.mxu0
    %v9936 = vadd.f32 0.0, %v9935
    %v9937 = vpop.f32.mrf.mxu0
    %v9938 = vadd.f32 0.0, %v9937
    %9939 = vmatprep.mubr.f32.mxu0 0.0
    %9940 = vmatmul.mubr.f32.gmra.mxu0 %v9638
    %v9941 = vpop.f32.mrf.mxu0
    %v9942 = vadd.f32 0.0, %v9941
    %v9943 = vpop.f32.mrf.mxu0
    %v9944 = vadd.f32 0.0, %v9943
    %9945 = vmatprep.mubr.f32.mxu0 0.0
    %9946 = vmatmul.mubr.f32.gmra.mxu0 %v9639
    %v9947 = vpop.f32.mrf.mxu0
    %v9948 = vadd.f32 0.0, %v9947
    %v9949 = vpop.f32.mrf.mxu0
    %v9950 = vadd.f32 0.0, %v9949
    %9951 = vmatprep.mubr.f32.mxu0 0.0
    %9952 = vmatmul.mubr.f32.gmra.mxu0 %v9640
    %v9953 = vpop.f32.mrf.mxu0
    %v9954 = vadd.f32 0.0, %v9953
    %v9955 = vpop.f32.mrf.mxu0
    %v9956 = vadd.f32 0.0, %v9955
    %9957 = vmatprep.mubr.f32.mxu0 0.0
    %9958 = vmatmul.mubr.f32.gmra.mxu0 %v9641
    %v9959 = vpop.f32.mrf.mxu0
    %v9960 = vadd.f32 0.0, %v9959
    %v9961 = vpop.f32.mrf.mxu0
    %v9962 = vadd.f32 0.0, %v9961
    %9963 = vdwg.mxu0
    %9964 = vmatprep.subr.mxu0 %v7056
    %9965 = vmatpush1.msra.mxu0 %v7055
    %9966 = vmatprep.subr.mxu0 %v7052
    %9967 = vmatpush1.msra.mxu0 %v7051
    %9968 = vmatprep.subr.mxu0 %v7048
    %9969 = vmatpush1.msra.mxu0 %v7047
    %9970 = vmatprep.subr.mxu0 %v7044
    %9971 = vmatpush1.msra.mxu0 %v7043
    %9972 = vmatprep.subr.mxu0 %v7040
    %9973 = vmatpush1.msra.mxu0 %v7039
    %9974 = vmatprep.subr.mxu0 %v7036
    %9975 = vmatpush1.msra.mxu0 %v7035
    %9976 = vmatprep.subr.mxu0 %v7032
    %9977 = vmatpush1.msra.mxu0 %v7031
    %9978 = vmatprep.subr.mxu0 %v7028
    %9979 = vmatpush1.msra.mxu0 %v7027
    %9980 = vmatprep.subr.mxu0 %v7024
    %9981 = vmatpush1.msra.mxu0 %v7023
    %9982 = vmatprep.subr.mxu0 %v7020
    %9983 = vmatpush1.msra.mxu0 %v7019
    %9984 = vmatprep.subr.mxu0 %v7016
    %9985 = vmatpush1.msra.mxu0 %v7015
    %9986 = vmatprep.subr.mxu0 %v7012
    %9987 = vmatpush1.msra.mxu0 %v7011
    %9988 = vmatprep.subr.mxu0 %v7008
    %9989 = vmatpush1.msra.mxu0 %v7007
    %9990 = vmatprep.subr.mxu0 %v7004
    %9991 = vmatpush1.msra.mxu0 %v7003
    %9992 = vmatprep.subr.mxu0 %v7000
    %9993 = vmatpush1.msra.mxu0 %v6999
    %9994 = vmatprep.subr.mxu0 %v6996
    %9995 = vmatpush1.msra.mxu0 %v6995
    %9996 = vmatprep.subr.mxu0 0.0
    %9997 = vmatpush2.msra.mxu0 0.0
    %9998 = vmatprep.subr.mxu0 0.0
    %9999 = vmatpush2.msra.mxu0 0.0
    %10000 = vmatprep.subr.mxu0 0.0
    %10001 = vmatpush2.msra.mxu0 0.0
    %10002 = vmatprep.subr.mxu0 0.0
    %10003 = vmatpush2.msra.mxu0 0.0
    %10004 = vmatprep.subr.mxu0 0.0
    %10005 = vmatpush2.msra.mxu0 0.0
    %10006 = vmatprep.subr.mxu0 0.0
    %10007 = vmatpush2.msra.mxu0 0.0
    %10008 = vmatprep.subr.mxu0 0.0
    %10009 = vmatpush2.msra.mxu0 0.0
    %10010 = vmatprep.subr.mxu0 0.0
    %10011 = vmatpush2.msra.mxu0 0.0
    %10012 = vmatprep.subr.mxu0 0.0
    %10013 = vmatpush2.msra.mxu0 0.0
    %10014 = vmatprep.subr.mxu0 0.0
    %10015 = vmatpush2.msra.mxu0 0.0
    %10016 = vmatprep.subr.mxu0 0.0
    %10017 = vmatpush2.msra.mxu0 0.0
    %10018 = vmatprep.subr.mxu0 0.0
    %10019 = vmatpush2.msra.mxu0 0.0
    %10020 = vmatprep.subr.mxu0 0.0
    %10021 = vmatpush2.msra.mxu0 0.0
    %10022 = vmatprep.subr.mxu0 0.0
    %10023 = vmatpush2.msra.mxu0 0.0
    %10024 = vmatprep.subr.mxu0 0.0
    %10025 = vmatpush2.msra.mxu0 0.0
    %10026 = vmatprep.subr.mxu0 0.0
    %10027 = vmatpush2.msra.mxu0 0.0
    %10028 = vmatprep.mubr.f32.mxu0 0.0
    %10029 = vmatmul.mubr.f32.gmra.mxu0 %v9626
    %v10030 = vpop.f32.mrf.mxu0
    %v10031 = vadd.f32 0.0, %v10030
    %v10032 = vpop.f32.mrf.mxu0
    %v10033 = vadd.f32 0.0, %v10032
    %10034 = vmatprep.mubr.f32.mxu0 0.0
    %10035 = vmatmul.mubr.f32.gmra.mxu0 %v9627
    %v10036 = vpop.f32.mrf.mxu0
    %v10037 = vadd.f32 0.0, %v10036
    %v10038 = vpop.f32.mrf.mxu0
    %v10039 = vadd.f32 0.0, %v10038
    %10040 = vmatprep.mubr.f32.mxu0 0.0
    %10041 = vmatmul.mubr.f32.gmra.mxu0 %v9628
    %v10042 = vpop.f32.mrf.mxu0
    %v10043 = vadd.f32 0.0, %v10042
    %v10044 = vpop.f32.mrf.mxu0
    %v10045 = vadd.f32 0.0, %v10044
    %10046 = vmatprep.mubr.f32.mxu0 0.0
    %10047 = vmatmul.mubr.f32.gmra.mxu0 %v9629
    %v10048 = vpop.f32.mrf.mxu0
    %v10049 = vadd.f32 0.0, %v10048
    %v10050 = vpop.f32.mrf.mxu0
    %v10051 = vadd.f32 0.0, %v10050
    %10052 = vmatprep.mubr.f32.mxu0 0.0
    %10053 = vmatmul.mubr.f32.gmra.mxu0 %v9630
    %v10054 = vpop.f32.mrf.mxu0
    %v10055 = vadd.f32 0.0, %v10054
    %v10056 = vpop.f32.mrf.mxu0
    %v10057 = vadd.f32 0.0, %v10056
    %10058 = vmatprep.mubr.f32.mxu0 0.0
    %10059 = vmatmul.mubr.f32.gmra.mxu0 %v9631
    %v10060 = vpop.f32.mrf.mxu0
    %v10061 = vadd.f32 0.0, %v10060
    %v10062 = vpop.f32.mrf.mxu0
    %v10063 = vadd.f32 0.0, %v10062
    %10064 = vmatprep.mubr.f32.mxu0 0.0
    %10065 = vmatmul.mubr.f32.gmra.mxu0 %v9632
    %v10066 = vpop.f32.mrf.mxu0
    %v10067 = vadd.f32 0.0, %v10066
    %v10068 = vpop.f32.mrf.mxu0
    %v10069 = vadd.f32 0.0, %v10068
    %10070 = vmatprep.mubr.f32.mxu0 0.0
    %10071 = vmatmul.mubr.f32.gmra.mxu0 %v9633
    %v10072 = vpop.f32.mrf.mxu0
    %v10073 = vadd.f32 0.0, %v10072
    %v10074 = vpop.f32.mrf.mxu0
    %v10075 = vadd.f32 0.0, %v10074
    %10076 = vmatprep.mubr.f32.mxu0 0.0
    %10077 = vmatmul.mubr.f32.gmra.mxu0 %v9634
    %v10078 = vpop.f32.mrf.mxu0
    %v10079 = vadd.f32 0.0, %v10078
    %v10080 = vpop.f32.mrf.mxu0
    %v10081 = vadd.f32 0.0, %v10080
    %10082 = vmatprep.mubr.f32.mxu0 0.0
    %10083 = vmatmul.mubr.f32.gmra.mxu0 %v9635
    %v10084 = vpop.f32.mrf.mxu0
    %v10085 = vadd.f32 0.0, %v10084
    %v10086 = vpop.f32.mrf.mxu0
    %v10087 = vadd.f32 0.0, %v10086
    %10088 = vmatprep.mubr.f32.mxu0 0.0
    %10089 = vmatmul.mubr.f32.gmra.mxu0 %v9636
    %v10090 = vpop.f32.mrf.mxu0
    %v10091 = vadd.f32 0.0, %v10090
    %v10092 = vpop.f32.mrf.mxu0
    %v10093 = vadd.f32 0.0, %v10092
    %10094 = vmatprep.mubr.f32.mxu0 0.0
    %10095 = vmatmul.mubr.f32.gmra.mxu0 %v9637
    %v10096 = vpop.f32.mrf.mxu0
    %v10097 = vadd.f32 0.0, %v10096
    %v10098 = vpop.f32.mrf.mxu0
    %v10099 = vadd.f32 0.0, %v10098
    %10100 = vmatprep.mubr.f32.mxu0 0.0
    %10101 = vmatmul.mubr.f32.gmra.mxu0 %v9638
    %v10102 = vpop.f32.mrf.mxu0
    %v10103 = vadd.f32 0.0, %v10102
    %v10104 = vpop.f32.mrf.mxu0
    %v10105 = vadd.f32 0.0, %v10104
    %10106 = vmatprep.mubr.f32.mxu0 0.0
    %10107 = vmatmul.mubr.f32.gmra.mxu0 %v9639
    %v10108 = vpop.f32.mrf.mxu0
    %v10109 = vadd.f32 0.0, %v10108
    %v10110 = vpop.f32.mrf.mxu0
    %v10111 = vadd.f32 0.0, %v10110
    %10112 = vmatprep.mubr.f32.mxu0 0.0
    %10113 = vmatmul.mubr.f32.gmra.mxu0 %v9640
    %v10114 = vpop.f32.mrf.mxu0
    %v10115 = vadd.f32 0.0, %v10114
    %v10116 = vpop.f32.mrf.mxu0
    %v10117 = vadd.f32 0.0, %v10116
    %10118 = vmatprep.mubr.f32.mxu0 0.0
    %10119 = vmatmul.mubr.f32.gmra.mxu0 %v9641
    %v10120 = vpop.f32.mrf.mxu0
    %v10121 = vadd.f32 0.0, %v10120
    %v10122 = vpop.f32.mrf.mxu0
    %v10123 = vadd.f32 0.0, %v10122
    %10124 = vdwg.mxu0
    %10125 = vmatprep.subr.mxu0 %v7410
    %10126 = vmatpush1.msra.mxu0 %v7409
    %10127 = vmatprep.subr.mxu0 %v7408
    %10128 = vmatpush1.msra.mxu0 %v7407
    %10129 = vmatprep.subr.mxu0 %v7406
    %10130 = vmatpush1.msra.mxu0 %v7405
    %10131 = vmatprep.subr.mxu0 %v7404
    %10132 = vmatpush1.msra.mxu0 %v7403
    %10133 = vmatprep.subr.mxu0 %v7402
    %10134 = vmatpush1.msra.mxu0 %v7401
    %10135 = vmatprep.subr.mxu0 %v7400
    %10136 = vmatpush1.msra.mxu0 %v7399
    %10137 = vmatprep.subr.mxu0 %v7398
    %10138 = vmatpush1.msra.mxu0 %v7397
    %10139 = vmatprep.subr.mxu0 %v7396
    %10140 = vmatpush1.msra.mxu0 %v7395
    %10141 = vmatprep.subr.mxu0 %v7394
    %10142 = vmatpush1.msra.mxu0 %v7393
    %10143 = vmatprep.subr.mxu0 %v7392
    %10144 = vmatpush1.msra.mxu0 %v7391
    %10145 = vmatprep.subr.mxu0 %v7390
    %10146 = vmatpush1.msra.mxu0 %v7389
    %10147 = vmatprep.subr.mxu0 %v7388
    %10148 = vmatpush1.msra.mxu0 %v7387
    %10149 = vmatprep.subr.mxu0 %v7386
    %10150 = vmatpush1.msra.mxu0 %v7385
    %10151 = vmatprep.subr.mxu0 %v7384
    %10152 = vmatpush1.msra.mxu0 %v7383
    %10153 = vmatprep.subr.mxu0 %v7382
    %10154 = vmatpush1.msra.mxu0 %v7381
    %10155 = vmatprep.subr.mxu0 %v7380
    %10156 = vmatpush1.msra.mxu0 %v7379
    %10157 = vmatprep.subr.mxu0 0.0
    %10158 = vmatpush2.msra.mxu0 0.0
    %10159 = vmatprep.subr.mxu0 0.0
    %10160 = vmatpush2.msra.mxu0 0.0
    %10161 = vmatprep.subr.mxu0 0.0
    %10162 = vmatpush2.msra.mxu0 0.0
    %10163 = vmatprep.subr.mxu0 0.0
    %10164 = vmatpush2.msra.mxu0 0.0
    %10165 = vmatprep.subr.mxu0 0.0
    %10166 = vmatpush2.msra.mxu0 0.0
    %10167 = vmatprep.subr.mxu0 0.0
    %10168 = vmatpush2.msra.mxu0 0.0
    %10169 = vmatprep.subr.mxu0 0.0
    %10170 = vmatpush2.msra.mxu0 0.0
    %10171 = vmatprep.subr.mxu0 0.0
    %10172 = vmatpush2.msra.mxu0 0.0
    %10173 = vmatprep.subr.mxu0 0.0
    %10174 = vmatpush2.msra.mxu0 0.0
    %10175 = vmatprep.subr.mxu0 0.0
    %10176 = vmatpush2.msra.mxu0 0.0
    %10177 = vmatprep.subr.mxu0 0.0
    %10178 = vmatpush2.msra.mxu0 0.0
    %10179 = vmatprep.subr.mxu0 0.0
    %10180 = vmatpush2.msra.mxu0 0.0
    %10181 = vmatprep.subr.mxu0 0.0
    %10182 = vmatpush2.msra.mxu0 0.0
    %10183 = vmatprep.subr.mxu0 0.0
    %10184 = vmatpush2.msra.mxu0 0.0
    %10185 = vmatprep.subr.mxu0 0.0
    %10186 = vmatpush2.msra.mxu0 0.0
    %10187 = vmatprep.subr.mxu0 0.0
    %10188 = vmatpush2.msra.mxu0 0.0
    %10189 = vmatprep.mubr.f32.mxu0 0.0
    %10190 = vmatmul.mubr.f32.gmra.mxu0 %v9725
    %v10191 = vpop.f32.mrf.mxu0
    %v10192 = vadd.f32 0.0, %v10191
    %v10193 = vpop.f32.mrf.mxu0
    %v10194 = vadd.f32 0.0, %v10193
    %10195 = vmatprep.mubr.f32.mxu0 0.0
    %10196 = vmatmul.mubr.f32.gmra.mxu0 %v9730
    %v10197 = vpop.f32.mrf.mxu0
    %v10198 = vadd.f32 0.0, %v10197
    %v10199 = vpop.f32.mrf.mxu0
    %v10200 = vadd.f32 0.0, %v10199
    %10201 = vmatprep.mubr.f32.mxu0 0.0
    %10202 = vmatmul.mubr.f32.gmra.mxu0 %v9735
    %v10203 = vpop.f32.mrf.mxu0
    %v10204 = vadd.f32 0.0, %v10203
    %v10205 = vpop.f32.mrf.mxu0
    %v10206 = vadd.f32 0.0, %v10205
    %10207 = vmatprep.mubr.f32.mxu0 0.0
    %10208 = vmatmul.mubr.f32.gmra.mxu0 %v9740
    %v10209 = vpop.f32.mrf.mxu0
    %v10210 = vadd.f32 0.0, %v10209
    %v10211 = vpop.f32.mrf.mxu0
    %v10212 = vadd.f32 0.0, %v10211
    %10213 = vmatprep.mubr.f32.mxu0 0.0
    %10214 = vmatmul.mubr.f32.gmra.mxu0 %v9745
    %v10215 = vpop.f32.mrf.mxu0
    %v10216 = vadd.f32 0.0, %v10215
    %v10217 = vpop.f32.mrf.mxu0
    %v10218 = vadd.f32 0.0, %v10217
    %10219 = vmatprep.mubr.f32.mxu0 0.0
    %10220 = vmatmul.mubr.f32.gmra.mxu0 %v9750
    %v10221 = vpop.f32.mrf.mxu0
    %v10222 = vadd.f32 0.0, %v10221
    %v10223 = vpop.f32.mrf.mxu0
    %v10224 = vadd.f32 0.0, %v10223
    %10225 = vmatprep.mubr.f32.mxu0 0.0
    %10226 = vmatmul.mubr.f32.gmra.mxu0 %v9755
    %v10227 = vpop.f32.mrf.mxu0
    %v10228 = vadd.f32 0.0, %v10227
    %v10229 = vpop.f32.mrf.mxu0
    %v10230 = vadd.f32 0.0, %v10229
    %10231 = vmatprep.mubr.f32.mxu0 0.0
    %10232 = vmatmul.mubr.f32.gmra.mxu0 %v9760
    %v10233 = vpop.f32.mrf.mxu0
    %v10234 = vadd.f32 0.0, %v10233
    %v10235 = vpop.f32.mrf.mxu0
    %v10236 = vadd.f32 0.0, %v10235
    %10237 = vmatprep.mubr.f32.mxu0 0.0
    %10238 = vmatmul.mubr.f32.gmra.mxu0 %v9765
    %v10239 = vpop.f32.mrf.mxu0
    %v10240 = vadd.f32 0.0, %v10239
    %v10241 = vpop.f32.mrf.mxu0
    %v10242 = vadd.f32 0.0, %v10241
    %10243 = vmatprep.mubr.f32.mxu0 0.0
    %10244 = vmatmul.mubr.f32.gmra.mxu0 %v9770
    %v10245 = vpop.f32.mrf.mxu0
    %v10246 = vadd.f32 0.0, %v10245
    %v10247 = vpop.f32.mrf.mxu0
    %v10248 = vadd.f32 0.0, %v10247
    %10249 = vmatprep.mubr.f32.mxu0 0.0
    %10250 = vmatmul.mubr.f32.gmra.mxu0 %v9775
    %v10251 = vpop.f32.mrf.mxu0
    %v10252 = vadd.f32 0.0, %v10251
    %v10253 = vpop.f32.mrf.mxu0
    %v10254 = vadd.f32 0.0, %v10253
    %10255 = vmatprep.mubr.f32.mxu0 0.0
    %10256 = vmatmul.mubr.f32.gmra.mxu0 %v9780
    %v10257 = vpop.f32.mrf.mxu0
    %v10258 = vadd.f32 0.0, %v10257
    %v10259 = vpop.f32.mrf.mxu0
    %v10260 = vadd.f32 0.0, %v10259
    %10261 = vmatprep.mubr.f32.mxu0 0.0
    %10262 = vmatmul.mubr.f32.gmra.mxu0 %v9785
    %v10263 = vpop.f32.mrf.mxu0
    %v10264 = vadd.f32 0.0, %v10263
    %v10265 = vpop.f32.mrf.mxu0
    %v10266 = vadd.f32 0.0, %v10265
    %10267 = vmatprep.mubr.f32.mxu0 0.0
    %10268 = vmatmul.mubr.f32.gmra.mxu0 %v9790
    %v10269 = vpop.f32.mrf.mxu0
    %v10270 = vadd.f32 0.0, %v10269
    %v10271 = vpop.f32.mrf.mxu0
    %v10272 = vadd.f32 0.0, %v10271
    %10273 = vmatprep.mubr.f32.mxu0 0.0
    %10274 = vmatmul.mubr.f32.gmra.mxu0 %v9795
    %v10275 = vpop.f32.mrf.mxu0
    %v10276 = vadd.f32 0.0, %v10275
    %v10277 = vpop.f32.mrf.mxu0
    %v10278 = vadd.f32 0.0, %v10277
    %10279 = vmatprep.mubr.f32.mxu0 0.0
    %10280 = vmatmul.mubr.f32.gmra.mxu0 %v9800
    %v10281 = vpop.f32.mrf.mxu0
    %v10282 = vadd.f32 0.0, %v10281
    %v10283 = vpop.f32.mrf.mxu0
    %v10284 = vadd.f32 0.0, %v10283
    %10285 = vdwg.mxu0
    %v10286 = vmul.f32 %v9870, %v10192
    %v10287 = vmul.f32 %v9872, %v10192
    %v10288 = vmul.f32 %v10031, %v10192
    %v10289 = vmul.f32 %v10033, %v10192
    %v10290 = vmul.f32 %v9876, %v10198
    %v10291 = vmul.f32 %v9878, %v10198
    %v10292 = vmul.f32 %v10037, %v10198
    %v10293 = vmul.f32 %v10039, %v10198
    %v10294 = vmul.f32 %v9882, %v10204
    %v10295 = vmul.f32 %v9884, %v10204
    %v10296 = vmul.f32 %v10043, %v10204
    %v10297 = vmul.f32 %v10045, %v10204
    %v10298 = vmul.f32 %v9888, %v10210
    %v10299 = vmul.f32 %v9890, %v10210
    %v10300 = vmul.f32 %v10049, %v10210
    %v10301 = vmul.f32 %v10051, %v10210
    %v10302 = vmul.f32 %v9894, %v10216
    %v10303 = vmul.f32 %v9896, %v10216
    %v10304 = vmul.f32 %v10055, %v10216
    %v10305 = vmul.f32 %v10057, %v10216
    %v10306 = vmul.f32 %v9900, %v10222
    %v10307 = vmul.f32 %v9902, %v10222
    %v10308 = vmul.f32 %v10061, %v10222
    %v10309 = vmul.f32 %v10063, %v10222
    %v10310 = vmul.f32 %v9906, %v10228
    %v10311 = vmul.f32 %v9908, %v10228
    %v10312 = vmul.f32 %v10067, %v10228
    %v10313 = vmul.f32 %v10069, %v10228
    %v10314 = vmul.f32 %v9912, %v10234
    %v10315 = vmul.f32 %v9914, %v10234
    %v10316 = vmul.f32 %v10073, %v10234
    %v10317 = vmul.f32 %v10075, %v10234
    %v10318 = vmul.f32 %v9918, %v10240
    %v10319 = vmul.f32 %v9920, %v10240
    %v10320 = vmul.f32 %v10079, %v10240
    %v10321 = vmul.f32 %v10081, %v10240
    %v10322 = vmul.f32 %v9924, %v10246
    %v10323 = vmul.f32 %v9926, %v10246
    %v10324 = vmul.f32 %v10085, %v10246
    %v10325 = vmul.f32 %v10087, %v10246
    %v10326 = vmul.f32 %v9930, %v10252
    %v10327 = vmul.f32 %v9932, %v10252
    %v10328 = vmul.f32 %v10091, %v10252
    %v10329 = vmul.f32 %v10093, %v10252
    %v10330 = vmul.f32 %v9936, %v10258
    %v10331 = vmul.f32 %v9938, %v10258
    %v10332 = vmul.f32 %v10097, %v10258
    %v10333 = vmul.f32 %v10099, %v10258
    %v10334 = vmul.f32 %v9942, %v10264
    %v10335 = vmul.f32 %v9944, %v10264
    %v10336 = vmul.f32 %v10103, %v10264
    %v10337 = vmul.f32 %v10105, %v10264
    %v10338 = vmul.f32 %v9948, %v10270
    %v10339 = vmul.f32 %v9950, %v10270
    %v10340 = vmul.f32 %v10109, %v10270
    %v10341 = vmul.f32 %v10111, %v10270
    %v10342 = vmul.f32 %v9954, %v10276
    %v10343 = vmul.f32 %v9956, %v10276
    %v10344 = vmul.f32 %v10115, %v10276
    %v10345 = vmul.f32 %v10117, %v10276
    %v10346 = vmul.f32 %v9960, %v10282
    %v10347 = vmul.f32 %v9962, %v10282
    %v10348 = vmul.f32 %v10121, %v10282
    %v10349 = vmul.f32 %v10123, %v10282
    %10350 = vmatprep.subr.mxu0 0.0
    %10351 = vmatpush1.msra.mxu0 %v63
    %10352 = vmatprep.subr.mxu0 0.0
    %10353 = vmatpush1.msra.mxu0 %v62
    %10354 = vmatprep.subr.mxu0 0.0
    %10355 = vmatpush1.msra.mxu0 %v61
    %10356 = vmatprep.subr.mxu0 0.0
    %10357 = vmatpush1.msra.mxu0 %v60
    %10358 = vmatprep.subr.mxu0 0.0
    %10359 = vmatpush1.msra.mxu0 %v59
    %10360 = vmatprep.subr.mxu0 0.0
    %10361 = vmatpush1.msra.mxu0 %v58
    %10362 = vmatprep.subr.mxu0 0.0
    %10363 = vmatpush1.msra.mxu0 %v57
    %10364 = vmatprep.subr.mxu0 0.0
    %10365 = vmatpush1.msra.mxu0 %v56
    %10366 = vmatprep.subr.mxu0 0.0
    %10367 = vmatpush1.msra.mxu0 %v55
    %10368 = vmatprep.subr.mxu0 0.0
    %10369 = vmatpush1.msra.mxu0 %v54
    %10370 = vmatprep.subr.mxu0 0.0
    %10371 = vmatpush1.msra.mxu0 %v53
    %10372 = vmatprep.subr.mxu0 0.0
    %10373 = vmatpush1.msra.mxu0 %v52
    %10374 = vmatprep.subr.mxu0 0.0
    %10375 = vmatpush1.msra.mxu0 %v51
    %10376 = vmatprep.subr.mxu0 0.0
    %10377 = vmatpush1.msra.mxu0 %v50
    %10378 = vmatprep.subr.mxu0 0.0
    %10379 = vmatpush1.msra.mxu0 %v49
    %10380 = vmatprep.subr.mxu0 0.0
    %10381 = vmatpush1.msra.mxu0 %v48
    %10382 = vmatprep.subr.mxu0 0.0
    %10383 = vmatpush2.msra.mxu0 %v79
    %10384 = vmatprep.subr.mxu0 0.0
    %10385 = vmatpush2.msra.mxu0 %v78
    %10386 = vmatprep.subr.mxu0 0.0
    %10387 = vmatpush2.msra.mxu0 %v77
    %10388 = vmatprep.subr.mxu0 0.0
    %10389 = vmatpush2.msra.mxu0 %v76
    %10390 = vmatprep.subr.mxu0 0.0
    %10391 = vmatpush2.msra.mxu0 %v75
    %10392 = vmatprep.subr.mxu0 0.0
    %10393 = vmatpush2.msra.mxu0 %v74
    %10394 = vmatprep.subr.mxu0 0.0
    %10395 = vmatpush2.msra.mxu0 %v73
    %10396 = vmatprep.subr.mxu0 0.0
    %10397 = vmatpush2.msra.mxu0 %v72
    %10398 = vmatprep.subr.mxu0 0.0
    %10399 = vmatpush2.msra.mxu0 %v71
    %10400 = vmatprep.subr.mxu0 0.0
    %10401 = vmatpush2.msra.mxu0 %v70
    %10402 = vmatprep.subr.mxu0 0.0
    %10403 = vmatpush2.msra.mxu0 %v69
    %10404 = vmatprep.subr.mxu0 0.0
    %10405 = vmatpush2.msra.mxu0 %v68
    %10406 = vmatprep.subr.mxu0 0.0
    %10407 = vmatpush2.msra.mxu0 %v67
    %10408 = vmatprep.subr.mxu0 0.0
    %10409 = vmatpush2.msra.mxu0 %v66
    %10410 = vmatprep.subr.mxu0 0.0
    %10411 = vmatpush2.msra.mxu0 %v65
    %10412 = vmatprep.subr.mxu0 0.0
    %10413 = vmatpush2.msra.mxu0 %v64
    %10414 = vmatprep.mubr.f32.mxu0 %v10287
    %10415 = vmatmul.mubr.f32.gmra.mxu0 %v10286
    %v10416 = vpop.f32.mrf.mxu0
    %v10417 = vadd.f32 0.0, %v10416
    %v10418 = vpop.f32.mrf.mxu0
    %10419 = vmatprep.mubr.f32.mxu0 %v10291
    %10420 = vmatmul.mubr.f32.gmra.mxu0 %v10290
    %v10421 = vpop.f32.mrf.mxu0
    %v10422 = vadd.f32 0.0, %v10421
    %v10423 = vpop.f32.mrf.mxu0
    %10424 = vmatprep.mubr.f32.mxu0 %v10295
    %10425 = vmatmul.mubr.f32.gmra.mxu0 %v10294
    %v10426 = vpop.f32.mrf.mxu0
    %v10427 = vadd.f32 0.0, %v10426
    %v10428 = vpop.f32.mrf.mxu0
    %10429 = vmatprep.mubr.f32.mxu0 %v10299
    %10430 = vmatmul.mubr.f32.gmra.mxu0 %v10298
    %v10431 = vpop.f32.mrf.mxu0
    %v10432 = vadd.f32 0.0, %v10431
    %v10433 = vpop.f32.mrf.mxu0
    %10434 = vmatprep.mubr.f32.mxu0 %v10303
    %10435 = vmatmul.mubr.f32.gmra.mxu0 %v10302
    %v10436 = vpop.f32.mrf.mxu0
    %v10437 = vadd.f32 0.0, %v10436
    %v10438 = vpop.f32.mrf.mxu0
    %10439 = vmatprep.mubr.f32.mxu0 %v10307
    %10440 = vmatmul.mubr.f32.gmra.mxu0 %v10306
    %v10441 = vpop.f32.mrf.mxu0
    %v10442 = vadd.f32 0.0, %v10441
    %v10443 = vpop.f32.mrf.mxu0
    %10444 = vmatprep.mubr.f32.mxu0 %v10311
    %10445 = vmatmul.mubr.f32.gmra.mxu0 %v10310
    %v10446 = vpop.f32.mrf.mxu0
    %v10447 = vadd.f32 0.0, %v10446
    %v10448 = vpop.f32.mrf.mxu0
    %10449 = vmatprep.mubr.f32.mxu0 %v10315
    %10450 = vmatmul.mubr.f32.gmra.mxu0 %v10314
    %v10451 = vpop.f32.mrf.mxu0
    %v10452 = vadd.f32 0.0, %v10451
    %v10453 = vpop.f32.mrf.mxu0
    %10454 = vmatprep.mubr.f32.mxu0 %v10319
    %10455 = vmatmul.mubr.f32.gmra.mxu0 %v10318
    %v10456 = vpop.f32.mrf.mxu0
    %v10457 = vadd.f32 0.0, %v10456
    %v10458 = vpop.f32.mrf.mxu0
    %10459 = vmatprep.mubr.f32.mxu0 %v10323
    %10460 = vmatmul.mubr.f32.gmra.mxu0 %v10322
    %v10461 = vpop.f32.mrf.mxu0
    %v10462 = vadd.f32 0.0, %v10461
    %v10463 = vpop.f32.mrf.mxu0
    %10464 = vmatprep.mubr.f32.mxu0 %v10327
    %10465 = vmatmul.mubr.f32.gmra.mxu0 %v10326
    %v10466 = vpop.f32.mrf.mxu0
    %v10467 = vadd.f32 0.0, %v10466
    %v10468 = vpop.f32.mrf.mxu0
    %10469 = vmatprep.mubr.f32.mxu0 %v10331
    %10470 = vmatmul.mubr.f32.gmra.mxu0 %v10330
    %v10471 = vpop.f32.mrf.mxu0
    %v10472 = vadd.f32 0.0, %v10471
    %v10473 = vpop.f32.mrf.mxu0
    %10474 = vmatprep.mubr.f32.mxu0 %v10335
    %10475 = vmatmul.mubr.f32.gmra.mxu0 %v10334
    %v10476 = vpop.f32.mrf.mxu0
    %v10477 = vadd.f32 0.0, %v10476
    %v10478 = vpop.f32.mrf.mxu0
    %10479 = vmatprep.mubr.f32.mxu0 %v10339
    %10480 = vmatmul.mubr.f32.gmra.mxu0 %v10338
    %v10481 = vpop.f32.mrf.mxu0
    %v10482 = vadd.f32 0.0, %v10481
    %v10483 = vpop.f32.mrf.mxu0
    %10484 = vmatprep.mubr.f32.mxu0 %v10343
    %10485 = vmatmul.mubr.f32.gmra.mxu0 %v10342
    %v10486 = vpop.f32.mrf.mxu0
    %v10487 = vadd.f32 0.0, %v10486
    %v10488 = vpop.f32.mrf.mxu0
    %10489 = vmatprep.mubr.f32.mxu0 %v10347
    %10490 = vmatmul.mubr.f32.gmra.mxu0 %v10346
    %v10491 = vpop.f32.mrf.mxu0
    %v10492 = vadd.f32 0.0, %v10491
    %v10493 = vpop.f32.mrf.mxu0
    %10494 = vdwg.mxu0
    %10495 = vmatprep.subr.mxu0 0.0
    %10496 = vmatpush1.msra.mxu0 %v95
    %10497 = vmatprep.subr.mxu0 0.0
    %10498 = vmatpush1.msra.mxu0 %v94
    %10499 = vmatprep.subr.mxu0 0.0
    %10500 = vmatpush1.msra.mxu0 %v93
    %10501 = vmatprep.subr.mxu0 0.0
    %10502 = vmatpush1.msra.mxu0 %v92
    %10503 = vmatprep.subr.mxu0 0.0
    %10504 = vmatpush1.msra.mxu0 %v91
    %10505 = vmatprep.subr.mxu0 0.0
    %10506 = vmatpush1.msra.mxu0 %v90
    %10507 = vmatprep.subr.mxu0 0.0
    %10508 = vmatpush1.msra.mxu0 %v89
    %10509 = vmatprep.subr.mxu0 0.0
    %10510 = vmatpush1.msra.mxu0 %v88
    %10511 = vmatprep.subr.mxu0 0.0
    %10512 = vmatpush1.msra.mxu0 %v87
    %10513 = vmatprep.subr.mxu0 0.0
    %10514 = vmatpush1.msra.mxu0 %v86
    %10515 = vmatprep.subr.mxu0 0.0
    %10516 = vmatpush1.msra.mxu0 %v85
    %10517 = vmatprep.subr.mxu0 0.0
    %10518 = vmatpush1.msra.mxu0 %v84
    %10519 = vmatprep.subr.mxu0 0.0
    %10520 = vmatpush1.msra.mxu0 %v83
    %10521 = vmatprep.subr.mxu0 0.0
    %10522 = vmatpush1.msra.mxu0 %v82
    %10523 = vmatprep.subr.mxu0 0.0
    %10524 = vmatpush1.msra.mxu0 %v81
    %10525 = vmatprep.subr.mxu0 0.0
    %10526 = vmatpush1.msra.mxu0 %v80
    %10527 = vmatprep.subr.mxu0 0.0
    %10528 = vmatpush2.msra.mxu0 %v111
    %10529 = vmatprep.subr.mxu0 0.0
    %10530 = vmatpush2.msra.mxu0 %v110
    %10531 = vmatprep.subr.mxu0 0.0
    %10532 = vmatpush2.msra.mxu0 %v109
    %10533 = vmatprep.subr.mxu0 0.0
    %10534 = vmatpush2.msra.mxu0 %v108
    %10535 = vmatprep.subr.mxu0 0.0
    %10536 = vmatpush2.msra.mxu0 %v107
    %10537 = vmatprep.subr.mxu0 0.0
    %10538 = vmatpush2.msra.mxu0 %v106
    %10539 = vmatprep.subr.mxu0 0.0
    %10540 = vmatpush2.msra.mxu0 %v105
    %10541 = vmatprep.subr.mxu0 0.0
    %10542 = vmatpush2.msra.mxu0 %v104
    %10543 = vmatprep.subr.mxu0 0.0
    %10544 = vmatpush2.msra.mxu0 %v103
    %10545 = vmatprep.subr.mxu0 0.0
    %10546 = vmatpush2.msra.mxu0 %v102
    %10547 = vmatprep.subr.mxu0 0.0
    %10548 = vmatpush2.msra.mxu0 %v101
    %10549 = vmatprep.subr.mxu0 0.0
    %10550 = vmatpush2.msra.mxu0 %v100
    %10551 = vmatprep.subr.mxu0 0.0
    %10552 = vmatpush2.msra.mxu0 %v99
    %10553 = vmatprep.subr.mxu0 0.0
    %10554 = vmatpush2.msra.mxu0 %v98
    %10555 = vmatprep.subr.mxu0 0.0
    %10556 = vmatpush2.msra.mxu0 %v97
    %10557 = vmatprep.subr.mxu0 0.0
    %10558 = vmatpush2.msra.mxu0 %v96
    %10559 = vmatprep.mubr.f32.mxu0 %v10289
    %10560 = vmatmul.mubr.f32.gmra.mxu0 %v10288
    %v10561 = vpop.f32.mrf.mxu0
    %v10562 = vadd.f32 %v10417, %v10561
    %v10563 = vpop.f32.mrf.mxu0
    %10564 = vmatprep.mubr.f32.mxu0 %v10293
    %10565 = vmatmul.mubr.f32.gmra.mxu0 %v10292
    %v10566 = vpop.f32.mrf.mxu0
    %v10567 = vadd.f32 %v10422, %v10566
    %v10568 = vpop.f32.mrf.mxu0
    %10569 = vmatprep.mubr.f32.mxu0 %v10297
    %10570 = vmatmul.mubr.f32.gmra.mxu0 %v10296
    %v10571 = vpop.f32.mrf.mxu0
    %v10572 = vadd.f32 %v10427, %v10571
    %v10573 = vpop.f32.mrf.mxu0
    %10574 = vmatprep.mubr.f32.mxu0 %v10301
    %10575 = vmatmul.mubr.f32.gmra.mxu0 %v10300
    %v10576 = vpop.f32.mrf.mxu0
    %v10577 = vadd.f32 %v10432, %v10576
    %v10578 = vpop.f32.mrf.mxu0
    %10579 = vmatprep.mubr.f32.mxu0 %v10305
    %10580 = vmatmul.mubr.f32.gmra.mxu0 %v10304
    %v10581 = vpop.f32.mrf.mxu0
    %v10582 = vadd.f32 %v10437, %v10581
    %v10583 = vpop.f32.mrf.mxu0
    %10584 = vmatprep.mubr.f32.mxu0 %v10309
    %10585 = vmatmul.mubr.f32.gmra.mxu0 %v10308
    %v10586 = vpop.f32.mrf.mxu0
    %v10587 = vadd.f32 %v10442, %v10586
    %v10588 = vpop.f32.mrf.mxu0
    %10589 = vmatprep.mubr.f32.mxu0 %v10313
    %10590 = vmatmul.mubr.f32.gmra.mxu0 %v10312
    %v10591 = vpop.f32.mrf.mxu0
    %v10592 = vadd.f32 %v10447, %v10591
    %v10593 = vpop.f32.mrf.mxu0
    %10594 = vmatprep.mubr.f32.mxu0 %v10317
    %10595 = vmatmul.mubr.f32.gmra.mxu0 %v10316
    %v10596 = vpop.f32.mrf.mxu0
    %v10597 = vadd.f32 %v10452, %v10596
    %v10598 = vpop.f32.mrf.mxu0
    %10599 = vmatprep.mubr.f32.mxu0 %v10321
    %10600 = vmatmul.mubr.f32.gmra.mxu0 %v10320
    %v10601 = vpop.f32.mrf.mxu0
    %v10602 = vadd.f32 %v10457, %v10601
    %v10603 = vpop.f32.mrf.mxu0
    %10604 = vmatprep.mubr.f32.mxu0 %v10325
    %10605 = vmatmul.mubr.f32.gmra.mxu0 %v10324
    %v10606 = vpop.f32.mrf.mxu0
    %v10607 = vadd.f32 %v10462, %v10606
    %v10608 = vpop.f32.mrf.mxu0
    %10609 = vmatprep.mubr.f32.mxu0 %v10329
    %10610 = vmatmul.mubr.f32.gmra.mxu0 %v10328
    %v10611 = vpop.f32.mrf.mxu0
    %v10612 = vadd.f32 %v10467, %v10611
    %v10613 = vpop.f32.mrf.mxu0
    %10614 = vmatprep.mubr.f32.mxu0 %v10333
    %10615 = vmatmul.mubr.f32.gmra.mxu0 %v10332
    %v10616 = vpop.f32.mrf.mxu0
    %v10617 = vadd.f32 %v10472, %v10616
    %v10618 = vpop.f32.mrf.mxu0
    %10619 = vmatprep.mubr.f32.mxu0 %v10337
    %10620 = vmatmul.mubr.f32.gmra.mxu0 %v10336
    %v10621 = vpop.f32.mrf.mxu0
    %v10622 = vadd.f32 %v10477, %v10621
    %v10623 = vpop.f32.mrf.mxu0
    %10624 = vmatprep.mubr.f32.mxu0 %v10341
    %10625 = vmatmul.mubr.f32.gmra.mxu0 %v10340
    %v10626 = vpop.f32.mrf.mxu0
    %v10627 = vadd.f32 %v10482, %v10626
    %v10628 = vpop.f32.mrf.mxu0
    %10629 = vmatprep.mubr.f32.mxu0 %v10345
    %10630 = vmatmul.mubr.f32.gmra.mxu0 %v10344
    %v10631 = vpop.f32.mrf.mxu0
    %v10632 = vadd.f32 %v10487, %v10631
    %v10633 = vpop.f32.mrf.mxu0
    %10634 = vmatprep.mubr.f32.mxu0 %v10349
    %10635 = vmatmul.mubr.f32.gmra.mxu0 %v10348
    %v10636 = vpop.f32.mrf.mxu0
    %v10637 = vadd.f32 %v10492, %v10636
    %v10638 = vpop.f32.mrf.mxu0
    %10639 = vdwg.mxu0
    %10656 = vrot.lane.b32.xlu0 %v10562, 112
    %v10657 = vpop.permute.xlu0 %10656
    %10658 = vrot.lane.b32.xlu0 %v10567, 112
    %v10659 = vpop.permute.xlu0 %10658
    %10660 = vrot.lane.b32.xlu0 %v10572, 112
    %v10661 = vpop.permute.xlu0 %10660
    %10662 = vrot.lane.b32.xlu0 %v10577, 112
    %v10663 = vpop.permute.xlu0 %10662
    %10664 = vrot.lane.b32.xlu0 %v10582, 112
    %v10665 = vpop.permute.xlu0 %10664
    %10666 = vrot.lane.b32.xlu0 %v10587, 112
    %v10667 = vpop.permute.xlu0 %10666
    %10668 = vrot.lane.b32.xlu0 %v10592, 112
    %v10669 = vpop.permute.xlu0 %10668
    %10670 = vrot.lane.b32.xlu0 %v10597, 112
    %v10671 = vpop.permute.xlu0 %10670
    %10672 = vrot.lane.b32.xlu0 %v10602, 112
    %v10673 = vpop.permute.xlu0 %10672
    %10674 = vrot.lane.b32.xlu0 %v10607, 112
    %v10675 = vpop.permute.xlu0 %10674
    %10676 = vrot.lane.b32.xlu0 %v10612, 112
    %v10677 = vpop.permute.xlu0 %10676
    %10678 = vrot.lane.b32.xlu0 %v10617, 112
    %v10679 = vpop.permute.xlu0 %10678
    %10680 = vrot.lane.b32.xlu0 %v10622, 112
    %v10681 = vpop.permute.xlu0 %10680
    %10682 = vrot.lane.b32.xlu0 %v10627, 112
    %v10683 = vpop.permute.xlu0 %10682
    %10684 = vrot.lane.b32.xlu0 %v10632, 112
    %v10685 = vpop.permute.xlu0 %10684
    %10686 = vrot.lane.b32.xlu0 %v10637, 112
    %v10687 = vpop.permute.xlu0 %10686
    %v10704 = vmax.f32 %v10562, %v10657
    %v10705 = vmax.f32 %v10567, %v10659
    %v10706 = vmax.f32 %v10572, %v10661
    %v10707 = vmax.f32 %v10577, %v10663
    %v10708 = vmax.f32 %v10582, %v10665
    %v10709 = vmax.f32 %v10587, %v10667
    %v10710 = vmax.f32 %v10592, %v10669
    %v10711 = vmax.f32 %v10597, %v10671
    %v10712 = vmax.f32 %v10602, %v10673
    %v10713 = vmax.f32 %v10607, %v10675
    %v10714 = vmax.f32 %v10612, %v10677
    %v10715 = vmax.f32 %v10617, %v10679
    %v10716 = vmax.f32 %v10622, %v10681
    %v10717 = vmax.f32 %v10627, %v10683
    %v10718 = vmax.f32 %v10632, %v10685
    %v10719 = vmax.f32 %v10637, %v10687
    %10720 = vrot.lane.b32.xlu0 %v10562, 96
    %v10721 = vpop.permute.xlu0 %10720
    %10722 = vrot.lane.b32.xlu0 %v10567, 96
    %v10723 = vpop.permute.xlu0 %10722
    %10724 = vrot.lane.b32.xlu0 %v10572, 96
    %v10725 = vpop.permute.xlu0 %10724
    %10726 = vrot.lane.b32.xlu0 %v10577, 96
    %v10727 = vpop.permute.xlu0 %10726
    %10728 = vrot.lane.b32.xlu0 %v10582, 96
    %v10729 = vpop.permute.xlu0 %10728
    %10730 = vrot.lane.b32.xlu0 %v10587, 96
    %v10731 = vpop.permute.xlu0 %10730
    %10732 = vrot.lane.b32.xlu0 %v10592, 96
    %v10733 = vpop.permute.xlu0 %10732
    %10734 = vrot.lane.b32.xlu0 %v10597, 96
    %v10735 = vpop.permute.xlu0 %10734
    %10736 = vrot.lane.b32.xlu0 %v10602, 96
    %v10737 = vpop.permute.xlu0 %10736
    %10738 = vrot.lane.b32.xlu0 %v10607, 96
    %v10739 = vpop.permute.xlu0 %10738
    %10740 = vrot.lane.b32.xlu0 %v10612, 96
    %v10741 = vpop.permute.xlu0 %10740
    %10742 = vrot.lane.b32.xlu0 %v10617, 96
    %v10743 = vpop.permute.xlu0 %10742
    %10744 = vrot.lane.b32.xlu0 %v10622, 96
    %v10745 = vpop.permute.xlu0 %10744
    %10746 = vrot.lane.b32.xlu0 %v10627, 96
    %v10747 = vpop.permute.xlu0 %10746
    %10748 = vrot.lane.b32.xlu0 %v10632, 96
    %v10749 = vpop.permute.xlu0 %10748
    %10750 = vrot.lane.b32.xlu0 %v10637, 96
    %v10751 = vpop.permute.xlu0 %10750
    %v10768 = vmax.f32 %v10704, %v10721
    %v10769 = vmax.f32 %v10705, %v10723
    %v10770 = vmax.f32 %v10706, %v10725
    %v10771 = vmax.f32 %v10707, %v10727
    %v10772 = vmax.f32 %v10708, %v10729
    %v10773 = vmax.f32 %v10709, %v10731
    %v10774 = vmax.f32 %v10710, %v10733
    %v10775 = vmax.f32 %v10711, %v10735
    %v10776 = vmax.f32 %v10712, %v10737
    %v10777 = vmax.f32 %v10713, %v10739
    %v10778 = vmax.f32 %v10714, %v10741
    %v10779 = vmax.f32 %v10715, %v10743
    %v10780 = vmax.f32 %v10716, %v10745
    %v10781 = vmax.f32 %v10717, %v10747
    %v10782 = vmax.f32 %v10718, %v10749
    %v10783 = vmax.f32 %v10719, %v10751
    %10784 = vrot.lane.b32.xlu0 %v10562, 80
    %v10785 = vpop.permute.xlu0 %10784
    %10786 = vrot.lane.b32.xlu0 %v10567, 80
    %v10787 = vpop.permute.xlu0 %10786
    %10788 = vrot.lane.b32.xlu0 %v10572, 80
    %v10789 = vpop.permute.xlu0 %10788
    %10790 = vrot.lane.b32.xlu0 %v10577, 80
    %v10791 = vpop.permute.xlu0 %10790
    %10792 = vrot.lane.b32.xlu0 %v10582, 80
    %v10793 = vpop.permute.xlu0 %10792
    %10794 = vrot.lane.b32.xlu0 %v10587, 80
    %v10795 = vpop.permute.xlu0 %10794
    %10796 = vrot.lane.b32.xlu0 %v10592, 80
    %v10797 = vpop.permute.xlu0 %10796
    %10798 = vrot.lane.b32.xlu0 %v10597, 80
    %v10799 = vpop.permute.xlu0 %10798
    %10800 = vrot.lane.b32.xlu0 %v10602, 80
    %v10801 = vpop.permute.xlu0 %10800
    %10802 = vrot.lane.b32.xlu0 %v10607, 80
    %v10803 = vpop.permute.xlu0 %10802
    %10804 = vrot.lane.b32.xlu0 %v10612, 80
    %v10805 = vpop.permute.xlu0 %10804
    %10806 = vrot.lane.b32.xlu0 %v10617, 80
    %v10807 = vpop.permute.xlu0 %10806
    %10808 = vrot.lane.b32.xlu0 %v10622, 80
    %v10809 = vpop.permute.xlu0 %10808
    %10810 = vrot.lane.b32.xlu0 %v10627, 80
    %v10811 = vpop.permute.xlu0 %10810
    %10812 = vrot.lane.b32.xlu0 %v10632, 80
    %v10813 = vpop.permute.xlu0 %10812
    %10814 = vrot.lane.b32.xlu0 %v10637, 80
    %v10815 = vpop.permute.xlu0 %10814
    %v10832 = vmax.f32 %v10768, %v10785
    %v10833 = vmax.f32 %v10769, %v10787
    %v10834 = vmax.f32 %v10770, %v10789
    %v10835 = vmax.f32 %v10771, %v10791
    %v10836 = vmax.f32 %v10772, %v10793
    %v10837 = vmax.f32 %v10773, %v10795
    %v10838 = vmax.f32 %v10774, %v10797
    %v10839 = vmax.f32 %v10775, %v10799
    %v10840 = vmax.f32 %v10776, %v10801
    %v10841 = vmax.f32 %v10777, %v10803
    %v10842 = vmax.f32 %v10778, %v10805
    %v10843 = vmax.f32 %v10779, %v10807
    %v10844 = vmax.f32 %v10780, %v10809
    %v10845 = vmax.f32 %v10781, %v10811
    %v10846 = vmax.f32 %v10782, %v10813
    %v10847 = vmax.f32 %v10783, %v10815
    %10864 = vrot.lane.b32.xlu0 %v10832, 16
    %v10865 = vpop.permute.xlu0 %10864
    %10866 = vrot.lane.b32.xlu0 %v10833, 16
    %v10867 = vpop.permute.xlu0 %10866
    %10868 = vrot.lane.b32.xlu0 %v10834, 16
    %v10869 = vpop.permute.xlu0 %10868
    %10870 = vrot.lane.b32.xlu0 %v10835, 16
    %v10871 = vpop.permute.xlu0 %10870
    %10872 = vrot.lane.b32.xlu0 %v10836, 16
    %v10873 = vpop.permute.xlu0 %10872
    %10874 = vrot.lane.b32.xlu0 %v10837, 16
    %v10875 = vpop.permute.xlu0 %10874
    %10876 = vrot.lane.b32.xlu0 %v10838, 16
    %v10877 = vpop.permute.xlu0 %10876
    %10878 = vrot.lane.b32.xlu0 %v10839, 16
    %v10879 = vpop.permute.xlu0 %10878
    %10880 = vrot.lane.b32.xlu0 %v10840, 16
    %v10881 = vpop.permute.xlu0 %10880
    %10882 = vrot.lane.b32.xlu0 %v10841, 16
    %v10883 = vpop.permute.xlu0 %10882
    %10884 = vrot.lane.b32.xlu0 %v10842, 16
    %v10885 = vpop.permute.xlu0 %10884
    %10886 = vrot.lane.b32.xlu0 %v10843, 16
    %v10887 = vpop.permute.xlu0 %10886
    %10888 = vrot.lane.b32.xlu0 %v10844, 16
    %v10889 = vpop.permute.xlu0 %10888
    %10890 = vrot.lane.b32.xlu0 %v10845, 16
    %v10891 = vpop.permute.xlu0 %10890
    %10892 = vrot.lane.b32.xlu0 %v10846, 16
    %v10893 = vpop.permute.xlu0 %10892
    %10894 = vrot.lane.b32.xlu0 %v10847, 16
    %v10895 = vpop.permute.xlu0 %10894
    %10912 = vrot.lane.b32.xlu0 %v10832, 32
    %v10913 = vpop.permute.xlu0 %10912
    %10914 = vrot.lane.b32.xlu0 %v10833, 32
    %v10915 = vpop.permute.xlu0 %10914
    %10916 = vrot.lane.b32.xlu0 %v10834, 32
    %v10917 = vpop.permute.xlu0 %10916
    %10918 = vrot.lane.b32.xlu0 %v10835, 32
    %v10919 = vpop.permute.xlu0 %10918
    %10920 = vrot.lane.b32.xlu0 %v10836, 32
    %v10921 = vpop.permute.xlu0 %10920
    %10922 = vrot.lane.b32.xlu0 %v10837, 32
    %v10923 = vpop.permute.xlu0 %10922
    %10924 = vrot.lane.b32.xlu0 %v10838, 32
    %v10925 = vpop.permute.xlu0 %10924
    %10926 = vrot.lane.b32.xlu0 %v10839, 32
    %v10927 = vpop.permute.xlu0 %10926
    %10928 = vrot.lane.b32.xlu0 %v10840, 32
    %v10929 = vpop.permute.xlu0 %10928
    %10930 = vrot.lane.b32.xlu0 %v10841, 32
    %v10931 = vpop.permute.xlu0 %10930
    %10932 = vrot.lane.b32.xlu0 %v10842, 32
    %v10933 = vpop.permute.xlu0 %10932
    %10934 = vrot.lane.b32.xlu0 %v10843, 32
    %v10935 = vpop.permute.xlu0 %10934
    %10936 = vrot.lane.b32.xlu0 %v10844, 32
    %v10937 = vpop.permute.xlu0 %10936
    %10938 = vrot.lane.b32.xlu0 %v10845, 32
    %v10939 = vpop.permute.xlu0 %10938
    %10940 = vrot.lane.b32.xlu0 %v10846, 32
    %v10941 = vpop.permute.xlu0 %10940
    %10942 = vrot.lane.b32.xlu0 %v10847, 32
    %v10943 = vpop.permute.xlu0 %10942
    %10960 = vrot.lane.b32.xlu0 %v10832, 48
    %v10961 = vpop.permute.xlu0 %10960
    %10962 = vrot.lane.b32.xlu0 %v10833, 48
    %v10963 = vpop.permute.xlu0 %10962
    %10964 = vrot.lane.b32.xlu0 %v10834, 48
    %v10965 = vpop.permute.xlu0 %10964
    %10966 = vrot.lane.b32.xlu0 %v10835, 48
    %v10967 = vpop.permute.xlu0 %10966
    %10968 = vrot.lane.b32.xlu0 %v10836, 48
    %v10969 = vpop.permute.xlu0 %10968
    %10970 = vrot.lane.b32.xlu0 %v10837, 48
    %v10971 = vpop.permute.xlu0 %10970
    %10972 = vrot.lane.b32.xlu0 %v10838, 48
    %v10973 = vpop.permute.xlu0 %10972
    %10974 = vrot.lane.b32.xlu0 %v10839, 48
    %v10975 = vpop.permute.xlu0 %10974
    %10976 = vrot.lane.b32.xlu0 %v10840, 48
    %v10977 = vpop.permute.xlu0 %10976
    %10978 = vrot.lane.b32.xlu0 %v10841, 48
    %v10979 = vpop.permute.xlu0 %10978
    %10980 = vrot.lane.b32.xlu0 %v10842, 48
    %v10981 = vpop.permute.xlu0 %10980
    %10982 = vrot.lane.b32.xlu0 %v10843, 48
    %v10983 = vpop.permute.xlu0 %10982
    %10984 = vrot.lane.b32.xlu0 %v10844, 48
    %v10985 = vpop.permute.xlu0 %10984
    %10986 = vrot.lane.b32.xlu0 %v10845, 48
    %v10987 = vpop.permute.xlu0 %10986
    %10988 = vrot.lane.b32.xlu0 %v10846, 48
    %v10989 = vpop.permute.xlu0 %10988
    %10990 = vrot.lane.b32.xlu0 %v10847, 48
    %v10991 = vpop.permute.xlu0 %10990
    %v11008 = vsel %vm1608, %v10832, %v10865
    %v11009 = vsel %vm1608, %v10833, %v10867
    %v11010 = vsel %vm1608, %v10834, %v10869
    %v11011 = vsel %vm1608, %v10835, %v10871
    %v11012 = vsel %vm1608, %v10836, %v10873
    %v11013 = vsel %vm1608, %v10837, %v10875
    %v11014 = vsel %vm1608, %v10838, %v10877
    %v11015 = vsel %vm1608, %v10839, %v10879
    %v11016 = vsel %vm1608, %v10840, %v10881
    %v11017 = vsel %vm1608, %v10841, %v10883
    %v11018 = vsel %vm1608, %v10842, %v10885
    %v11019 = vsel %vm1608, %v10843, %v10887
    %v11020 = vsel %vm1608, %v10844, %v10889
    %v11021 = vsel %vm1608, %v10845, %v10891
    %v11022 = vsel %vm1608, %v10846, %v10893
    %v11023 = vsel %vm1608, %v10847, %v10895
    %v11024 = vsel %vm1625, %v11008, %v10913
    %v11025 = vsel %vm1625, %v11009, %v10915
    %v11026 = vsel %vm1625, %v11010, %v10917
    %v11027 = vsel %vm1625, %v11011, %v10919
    %v11028 = vsel %vm1625, %v11012, %v10921
    %v11029 = vsel %vm1625, %v11013, %v10923
    %v11030 = vsel %vm1625, %v11014, %v10925
    %v11031 = vsel %vm1625, %v11015, %v10927
    %v11032 = vsel %vm1625, %v11016, %v10929
    %v11033 = vsel %vm1625, %v11017, %v10931
    %v11034 = vsel %vm1625, %v11018, %v10933
    %v11035 = vsel %vm1625, %v11019, %v10935
    %v11036 = vsel %vm1625, %v11020, %v10937
    %v11037 = vsel %vm1625, %v11021, %v10939
    %v11038 = vsel %vm1625, %v11022, %v10941
    %v11039 = vsel %vm1625, %v11023, %v10943
    %v11040 = vsel %vm1642, %v11024, %v10961
    %v11041 = vsel %vm1642, %v11025, %v10963
    %v11042 = vsel %vm1642, %v11026, %v10965
    %v11043 = vsel %vm1642, %v11027, %v10967
    %v11044 = vsel %vm1642, %v11028, %v10969
    %v11045 = vsel %vm1642, %v11029, %v10971
    %v11046 = vsel %vm1642, %v11030, %v10973
    %v11047 = vsel %vm1642, %v11031, %v10975
    %v11048 = vsel %vm1642, %v11032, %v10977
    %v11049 = vsel %vm1642, %v11033, %v10979
    %v11050 = vsel %vm1642, %v11034, %v10981
    %v11051 = vsel %vm1642, %v11035, %v10983
    %v11052 = vsel %vm1642, %v11036, %v10985
    %v11053 = vsel %vm1642, %v11037, %v10987
    %v11054 = vsel %vm1642, %v11038, %v10989
    %v11055 = vsel %vm1642, %v11039, %v10991
    %v11056 = vsub.f32 %v10562, %v11040
    %v11057 = vsub.f32 %v10567, %v11041
    %v11058 = vsub.f32 %v10572, %v11042
    %v11059 = vsub.f32 %v10577, %v11043
    %v11060 = vsub.f32 %v10582, %v11044
    %v11061 = vsub.f32 %v10587, %v11045
    %v11062 = vsub.f32 %v10592, %v11046
    %v11063 = vsub.f32 %v10597, %v11047
    %v11064 = vsub.f32 %v10602, %v11048
    %v11065 = vsub.f32 %v10607, %v11049
    %v11066 = vsub.f32 %v10612, %v11050
    %v11067 = vsub.f32 %v10617, %v11051
    %v11068 = vsub.f32 %v10622, %v11052
    %v11069 = vsub.f32 %v10627, %v11053
    %v11070 = vsub.f32 %v10632, %v11054
    %v11071 = vsub.f32 %v10637, %v11055
    %v11072 = vmul.f32 %v11056, 1.442695
    %v11073 = vpow.pop %v11072
    %v11074 = vmul.f32 %v11057, 1.442695
    %v11075 = vpow.pop %v11074
    %v11076 = vmul.f32 %v11058, 1.442695
    %v11077 = vpow.pop %v11076
    %v11078 = vmul.f32 %v11059, 1.442695
    %v11079 = vpow.pop %v11078
    %v11080 = vmul.f32 %v11060, 1.442695
    %v11081 = vpow.pop %v11080
    %v11082 = vmul.f32 %v11061, 1.442695
    %v11083 = vpow.pop %v11082
    %v11084 = vmul.f32 %v11062, 1.442695
    %v11085 = vpow.pop %v11084
    %v11086 = vmul.f32 %v11063, 1.442695
    %v11087 = vpow.pop %v11086
    %v11088 = vmul.f32 %v11064, 1.442695
    %v11089 = vpow.pop %v11088
    %v11090 = vmul.f32 %v11065, 1.442695
    %v11091 = vpow.pop %v11090
    %v11092 = vmul.f32 %v11066, 1.442695
    %v11093 = vpow.pop %v11092
    %v11094 = vmul.f32 %v11067, 1.442695
    %v11095 = vpow.pop %v11094
    %v11096 = vmul.f32 %v11068, 1.442695
    %v11097 = vpow.pop %v11096
    %v11098 = vmul.f32 %v11069, 1.442695
    %v11099 = vpow.pop %v11098
    %v11100 = vmul.f32 %v11070, 1.442695
    %v11101 = vpow.pop %v11100
    %v11102 = vmul.f32 %v11071, 1.442695
    %v11103 = vpow.pop %v11102
    %11120 = vrot.lane.b32.xlu0 %v11073, 112
    %v11121 = vpop.permute.xlu0 %11120
    %11122 = vrot.lane.b32.xlu0 %v11075, 112
    %v11123 = vpop.permute.xlu0 %11122
    %11124 = vrot.lane.b32.xlu0 %v11077, 112
    %v11125 = vpop.permute.xlu0 %11124
    %11126 = vrot.lane.b32.xlu0 %v11079, 112
    %v11127 = vpop.permute.xlu0 %11126
    %11128 = vrot.lane.b32.xlu0 %v11081, 112
    %v11129 = vpop.permute.xlu0 %11128
    %11130 = vrot.lane.b32.xlu0 %v11083, 112
    %v11131 = vpop.permute.xlu0 %11130
    %11132 = vrot.lane.b32.xlu0 %v11085, 112
    %v11133 = vpop.permute.xlu0 %11132
    %11134 = vrot.lane.b32.xlu0 %v11087, 112
    %v11135 = vpop.permute.xlu0 %11134
    %11136 = vrot.lane.b32.xlu0 %v11089, 112
    %v11137 = vpop.permute.xlu0 %11136
    %11138 = vrot.lane.b32.xlu0 %v11091, 112
    %v11139 = vpop.permute.xlu0 %11138
    %11140 = vrot.lane.b32.xlu0 %v11093, 112
    %v11141 = vpop.permute.xlu0 %11140
    %11142 = vrot.lane.b32.xlu0 %v11095, 112
    %v11143 = vpop.permute.xlu0 %11142
    %11144 = vrot.lane.b32.xlu0 %v11097, 112
    %v11145 = vpop.permute.xlu0 %11144
    %11146 = vrot.lane.b32.xlu0 %v11099, 112
    %v11147 = vpop.permute.xlu0 %11146
    %11148 = vrot.lane.b32.xlu0 %v11101, 112
    %v11149 = vpop.permute.xlu0 %11148
    %11150 = vrot.lane.b32.xlu0 %v11103, 112
    %v11151 = vpop.permute.xlu0 %11150
    %v11168 = vadd.f32 %v11073, %v11121
    %v11169 = vadd.f32 %v11075, %v11123
    %v11170 = vadd.f32 %v11077, %v11125
    %v11171 = vadd.f32 %v11079, %v11127
    %v11172 = vadd.f32 %v11081, %v11129
    %v11173 = vadd.f32 %v11083, %v11131
    %v11174 = vadd.f32 %v11085, %v11133
    %v11175 = vadd.f32 %v11087, %v11135
    %v11176 = vadd.f32 %v11089, %v11137
    %v11177 = vadd.f32 %v11091, %v11139
    %v11178 = vadd.f32 %v11093, %v11141
    %v11179 = vadd.f32 %v11095, %v11143
    %v11180 = vadd.f32 %v11097, %v11145
    %v11181 = vadd.f32 %v11099, %v11147
    %v11182 = vadd.f32 %v11101, %v11149
    %v11183 = vadd.f32 %v11103, %v11151
    %11184 = vrot.lane.b32.xlu0 %v11073, 96
    %v11185 = vpop.permute.xlu0 %11184
    %11186 = vrot.lane.b32.xlu0 %v11075, 96
    %v11187 = vpop.permute.xlu0 %11186
    %11188 = vrot.lane.b32.xlu0 %v11077, 96
    %v11189 = vpop.permute.xlu0 %11188
    %11190 = vrot.lane.b32.xlu0 %v11079, 96
    %v11191 = vpop.permute.xlu0 %11190
    %11192 = vrot.lane.b32.xlu0 %v11081, 96
    %v11193 = vpop.permute.xlu0 %11192
    %11194 = vrot.lane.b32.xlu0 %v11083, 96
    %v11195 = vpop.permute.xlu0 %11194
    %11196 = vrot.lane.b32.xlu0 %v11085, 96
    %v11197 = vpop.permute.xlu0 %11196
    %11198 = vrot.lane.b32.xlu0 %v11087, 96
    %v11199 = vpop.permute.xlu0 %11198
    %11200 = vrot.lane.b32.xlu0 %v11089, 96
    %v11201 = vpop.permute.xlu0 %11200
    %11202 = vrot.lane.b32.xlu0 %v11091, 96
    %v11203 = vpop.permute.xlu0 %11202
    %11204 = vrot.lane.b32.xlu0 %v11093, 96
    %v11205 = vpop.permute.xlu0 %11204
    %11206 = vrot.lane.b32.xlu0 %v11095, 96
    %v11207 = vpop.permute.xlu0 %11206
    %11208 = vrot.lane.b32.xlu0 %v11097, 96
    %v11209 = vpop.permute.xlu0 %11208
    %11210 = vrot.lane.b32.xlu0 %v11099, 96
    %v11211 = vpop.permute.xlu0 %11210
    %11212 = vrot.lane.b32.xlu0 %v11101, 96
    %v11213 = vpop.permute.xlu0 %11212
    %11214 = vrot.lane.b32.xlu0 %v11103, 96
    %v11215 = vpop.permute.xlu0 %11214
    %v11232 = vadd.f32 %v11168, %v11185
    %v11233 = vadd.f32 %v11169, %v11187
    %v11234 = vadd.f32 %v11170, %v11189
    %v11235 = vadd.f32 %v11171, %v11191
    %v11236 = vadd.f32 %v11172, %v11193
    %v11237 = vadd.f32 %v11173, %v11195
    %v11238 = vadd.f32 %v11174, %v11197
    %v11239 = vadd.f32 %v11175, %v11199
    %v11240 = vadd.f32 %v11176, %v11201
    %v11241 = vadd.f32 %v11177, %v11203
    %v11242 = vadd.f32 %v11178, %v11205
    %v11243 = vadd.f32 %v11179, %v11207
    %v11244 = vadd.f32 %v11180, %v11209
    %v11245 = vadd.f32 %v11181, %v11211
    %v11246 = vadd.f32 %v11182, %v11213
    %v11247 = vadd.f32 %v11183, %v11215
    %11248 = vrot.lane.b32.xlu0 %v11073, 80
    %v11249 = vpop.permute.xlu0 %11248
    %11250 = vrot.lane.b32.xlu0 %v11075, 80
    %v11251 = vpop.permute.xlu0 %11250
    %11252 = vrot.lane.b32.xlu0 %v11077, 80
    %v11253 = vpop.permute.xlu0 %11252
    %11254 = vrot.lane.b32.xlu0 %v11079, 80
    %v11255 = vpop.permute.xlu0 %11254
    %11256 = vrot.lane.b32.xlu0 %v11081, 80
    %v11257 = vpop.permute.xlu0 %11256
    %11258 = vrot.lane.b32.xlu0 %v11083, 80
    %v11259 = vpop.permute.xlu0 %11258
    %11260 = vrot.lane.b32.xlu0 %v11085, 80
    %v11261 = vpop.permute.xlu0 %11260
    %11262 = vrot.lane.b32.xlu0 %v11087, 80
    %v11263 = vpop.permute.xlu0 %11262
    %11264 = vrot.lane.b32.xlu0 %v11089, 80
    %v11265 = vpop.permute.xlu0 %11264
    %11266 = vrot.lane.b32.xlu0 %v11091, 80
    %v11267 = vpop.permute.xlu0 %11266
    %11268 = vrot.lane.b32.xlu0 %v11093, 80
    %v11269 = vpop.permute.xlu0 %11268
    %11270 = vrot.lane.b32.xlu0 %v11095, 80
    %v11271 = vpop.permute.xlu0 %11270
    %11272 = vrot.lane.b32.xlu0 %v11097, 80
    %v11273 = vpop.permute.xlu0 %11272
    %11274 = vrot.lane.b32.xlu0 %v11099, 80
    %v11275 = vpop.permute.xlu0 %11274
    %11276 = vrot.lane.b32.xlu0 %v11101, 80
    %v11277 = vpop.permute.xlu0 %11276
    %11278 = vrot.lane.b32.xlu0 %v11103, 80
    %v11279 = vpop.permute.xlu0 %11278
    %v11296 = vadd.f32 %v11232, %v11249
    %v11297 = vadd.f32 %v11233, %v11251
    %v11298 = vadd.f32 %v11234, %v11253
    %v11299 = vadd.f32 %v11235, %v11255
    %v11300 = vadd.f32 %v11236, %v11257
    %v11301 = vadd.f32 %v11237, %v11259
    %v11302 = vadd.f32 %v11238, %v11261
    %v11303 = vadd.f32 %v11239, %v11263
    %v11304 = vadd.f32 %v11240, %v11265
    %v11305 = vadd.f32 %v11241, %v11267
    %v11306 = vadd.f32 %v11242, %v11269
    %v11307 = vadd.f32 %v11243, %v11271
    %v11308 = vadd.f32 %v11244, %v11273
    %v11309 = vadd.f32 %v11245, %v11275
    %v11310 = vadd.f32 %v11246, %v11277
    %v11311 = vadd.f32 %v11247, %v11279
    %v11312 = vrcp.pop %v11296
    %v11313 = vmul.f32 1.0, %v11312
    %v11314 = vrcp.pop %v11297
    %v11315 = vmul.f32 1.0, %v11314
    %v11316 = vrcp.pop %v11298
    %v11317 = vmul.f32 1.0, %v11316
    %v11318 = vrcp.pop %v11299
    %v11319 = vmul.f32 1.0, %v11318
    %v11320 = vrcp.pop %v11300
    %v11321 = vmul.f32 1.0, %v11320
    %v11322 = vrcp.pop %v11301
    %v11323 = vmul.f32 1.0, %v11322
    %v11324 = vrcp.pop %v11302
    %v11325 = vmul.f32 1.0, %v11324
    %v11326 = vrcp.pop %v11303
    %v11327 = vmul.f32 1.0, %v11326
    %v11328 = vrcp.pop %v11304
    %v11329 = vmul.f32 1.0, %v11328
    %v11330 = vrcp.pop %v11305
    %v11331 = vmul.f32 1.0, %v11330
    %v11332 = vrcp.pop %v11306
    %v11333 = vmul.f32 1.0, %v11332
    %v11334 = vrcp.pop %v11307
    %v11335 = vmul.f32 1.0, %v11334
    %v11336 = vrcp.pop %v11308
    %v11337 = vmul.f32 1.0, %v11336
    %v11338 = vrcp.pop %v11309
    %v11339 = vmul.f32 1.0, %v11338
    %v11340 = vrcp.pop %v11310
    %v11341 = vmul.f32 1.0, %v11340
    %v11342 = vrcp.pop %v11311
    %v11343 = vmul.f32 1.0, %v11342
    %11360 = vrot.lane.b32.xlu0 %v11313, 16
    %v11361 = vpop.permute.xlu0 %11360
    %11362 = vrot.lane.b32.xlu0 %v11315, 16
    %v11363 = vpop.permute.xlu0 %11362
    %11364 = vrot.lane.b32.xlu0 %v11317, 16
    %v11365 = vpop.permute.xlu0 %11364
    %11366 = vrot.lane.b32.xlu0 %v11319, 16
    %v11367 = vpop.permute.xlu0 %11366
    %11368 = vrot.lane.b32.xlu0 %v11321, 16
    %v11369 = vpop.permute.xlu0 %11368
    %11370 = vrot.lane.b32.xlu0 %v11323, 16
    %v11371 = vpop.permute.xlu0 %11370
    %11372 = vrot.lane.b32.xlu0 %v11325, 16
    %v11373 = vpop.permute.xlu0 %11372
    %11374 = vrot.lane.b32.xlu0 %v11327, 16
    %v11375 = vpop.permute.xlu0 %11374
    %11376 = vrot.lane.b32.xlu0 %v11329, 16
    %v11377 = vpop.permute.xlu0 %11376
    %11378 = vrot.lane.b32.xlu0 %v11331, 16
    %v11379 = vpop.permute.xlu0 %11378
    %11380 = vrot.lane.b32.xlu0 %v11333, 16
    %v11381 = vpop.permute.xlu0 %11380
    %11382 = vrot.lane.b32.xlu0 %v11335, 16
    %v11383 = vpop.permute.xlu0 %11382
    %11384 = vrot.lane.b32.xlu0 %v11337, 16
    %v11385 = vpop.permute.xlu0 %11384
    %11386 = vrot.lane.b32.xlu0 %v11339, 16
    %v11387 = vpop.permute.xlu0 %11386
    %11388 = vrot.lane.b32.xlu0 %v11341, 16
    %v11389 = vpop.permute.xlu0 %11388
    %11390 = vrot.lane.b32.xlu0 %v11343, 16
    %v11391 = vpop.permute.xlu0 %11390
    %11408 = vrot.lane.b32.xlu0 %v11313, 32
    %v11409 = vpop.permute.xlu0 %11408
    %11410 = vrot.lane.b32.xlu0 %v11315, 32
    %v11411 = vpop.permute.xlu0 %11410
    %11412 = vrot.lane.b32.xlu0 %v11317, 32
    %v11413 = vpop.permute.xlu0 %11412
    %11414 = vrot.lane.b32.xlu0 %v11319, 32
    %v11415 = vpop.permute.xlu0 %11414
    %11416 = vrot.lane.b32.xlu0 %v11321, 32
    %v11417 = vpop.permute.xlu0 %11416
    %11418 = vrot.lane.b32.xlu0 %v11323, 32
    %v11419 = vpop.permute.xlu0 %11418
    %11420 = vrot.lane.b32.xlu0 %v11325, 32
    %v11421 = vpop.permute.xlu0 %11420
    %11422 = vrot.lane.b32.xlu0 %v11327, 32
    %v11423 = vpop.permute.xlu0 %11422
    %11424 = vrot.lane.b32.xlu0 %v11329, 32
    %v11425 = vpop.permute.xlu0 %11424
    %11426 = vrot.lane.b32.xlu0 %v11331, 32
    %v11427 = vpop.permute.xlu0 %11426
    %11428 = vrot.lane.b32.xlu0 %v11333, 32
    %v11429 = vpop.permute.xlu0 %11428
    %11430 = vrot.lane.b32.xlu0 %v11335, 32
    %v11431 = vpop.permute.xlu0 %11430
    %11432 = vrot.lane.b32.xlu0 %v11337, 32
    %v11433 = vpop.permute.xlu0 %11432
    %11434 = vrot.lane.b32.xlu0 %v11339, 32
    %v11435 = vpop.permute.xlu0 %11434
    %11436 = vrot.lane.b32.xlu0 %v11341, 32
    %v11437 = vpop.permute.xlu0 %11436
    %11438 = vrot.lane.b32.xlu0 %v11343, 32
    %v11439 = vpop.permute.xlu0 %11438
    %11456 = vrot.lane.b32.xlu0 %v11313, 48
    %v11457 = vpop.permute.xlu0 %11456
    %11458 = vrot.lane.b32.xlu0 %v11315, 48
    %v11459 = vpop.permute.xlu0 %11458
    %11460 = vrot.lane.b32.xlu0 %v11317, 48
    %v11461 = vpop.permute.xlu0 %11460
    %11462 = vrot.lane.b32.xlu0 %v11319, 48
    %v11463 = vpop.permute.xlu0 %11462
    %11464 = vrot.lane.b32.xlu0 %v11321, 48
    %v11465 = vpop.permute.xlu0 %11464
    %11466 = vrot.lane.b32.xlu0 %v11323, 48
    %v11467 = vpop.permute.xlu0 %11466
    %11468 = vrot.lane.b32.xlu0 %v11325, 48
    %v11469 = vpop.permute.xlu0 %11468
    %11470 = vrot.lane.b32.xlu0 %v11327, 48
    %v11471 = vpop.permute.xlu0 %11470
    %11472 = vrot.lane.b32.xlu0 %v11329, 48
    %v11473 = vpop.permute.xlu0 %11472
    %11474 = vrot.lane.b32.xlu0 %v11331, 48
    %v11475 = vpop.permute.xlu0 %11474
    %11476 = vrot.lane.b32.xlu0 %v11333, 48
    %v11477 = vpop.permute.xlu0 %11476
    %11478 = vrot.lane.b32.xlu0 %v11335, 48
    %v11479 = vpop.permute.xlu0 %11478
    %11480 = vrot.lane.b32.xlu0 %v11337, 48
    %v11481 = vpop.permute.xlu0 %11480
    %11482 = vrot.lane.b32.xlu0 %v11339, 48
    %v11483 = vpop.permute.xlu0 %11482
    %11484 = vrot.lane.b32.xlu0 %v11341, 48
    %v11485 = vpop.permute.xlu0 %11484
    %11486 = vrot.lane.b32.xlu0 %v11343, 48
    %v11487 = vpop.permute.xlu0 %11486
    %v11504 = vsel %vm1608, %v11313, %v11361
    %v11505 = vsel %vm1608, %v11315, %v11363
    %v11506 = vsel %vm1608, %v11317, %v11365
    %v11507 = vsel %vm1608, %v11319, %v11367
    %v11508 = vsel %vm1608, %v11321, %v11369
    %v11509 = vsel %vm1608, %v11323, %v11371
    %v11510 = vsel %vm1608, %v11325, %v11373
    %v11511 = vsel %vm1608, %v11327, %v11375
    %v11512 = vsel %vm1608, %v11329, %v11377
    %v11513 = vsel %vm1608, %v11331, %v11379
    %v11514 = vsel %vm1608, %v11333, %v11381
    %v11515 = vsel %vm1608, %v11335, %v11383
    %v11516 = vsel %vm1608, %v11337, %v11385
    %v11517 = vsel %vm1608, %v11339, %v11387
    %v11518 = vsel %vm1608, %v11341, %v11389
    %v11519 = vsel %vm1608, %v11343, %v11391
    %v11520 = vsel %vm1625, %v11504, %v11409
    %v11521 = vsel %vm1625, %v11505, %v11411
    %v11522 = vsel %vm1625, %v11506, %v11413
    %v11523 = vsel %vm1625, %v11507, %v11415
    %v11524 = vsel %vm1625, %v11508, %v11417
    %v11525 = vsel %vm1625, %v11509, %v11419
    %v11526 = vsel %vm1625, %v11510, %v11421
    %v11527 = vsel %vm1625, %v11511, %v11423
    %v11528 = vsel %vm1625, %v11512, %v11425
    %v11529 = vsel %vm1625, %v11513, %v11427
    %v11530 = vsel %vm1625, %v11514, %v11429
    %v11531 = vsel %vm1625, %v11515, %v11431
    %v11532 = vsel %vm1625, %v11516, %v11433
    %v11533 = vsel %vm1625, %v11517, %v11435
    %v11534 = vsel %vm1625, %v11518, %v11437
    %v11535 = vsel %vm1625, %v11519, %v11439
    %v11536 = vsel %vm1642, %v11520, %v11457
    %v11537 = vsel %vm1642, %v11521, %v11459
    %v11538 = vsel %vm1642, %v11522, %v11461
    %v11539 = vsel %vm1642, %v11523, %v11463
    %v11540 = vsel %vm1642, %v11524, %v11465
    %v11541 = vsel %vm1642, %v11525, %v11467
    %v11542 = vsel %vm1642, %v11526, %v11469
    %v11543 = vsel %vm1642, %v11527, %v11471
    %v11544 = vsel %vm1642, %v11528, %v11473
    %v11545 = vsel %vm1642, %v11529, %v11475
    %v11546 = vsel %vm1642, %v11530, %v11477
    %v11547 = vsel %vm1642, %v11531, %v11479
    %v11548 = vsel %vm1642, %v11532, %v11481
    %v11549 = vsel %vm1642, %v11533, %v11483
    %v11550 = vsel %vm1642, %v11534, %v11485
    %v11551 = vsel %vm1642, %v11535, %v11487
    %v11552 = vmul.f32 %v11073, %v11536
    %v11553 = vmul.f32 %v11075, %v11537
    %v11554 = vmul.f32 %v11077, %v11538
    %v11555 = vmul.f32 %v11079, %v11539
    %v11556 = vmul.f32 %v11081, %v11540
    %v11557 = vmul.f32 %v11083, %v11541
    %v11558 = vmul.f32 %v11085, %v11542
    %v11559 = vmul.f32 %v11087, %v11543
    %v11560 = vmul.f32 %v11089, %v11544
    %v11561 = vmul.f32 %v11091, %v11545
    %v11562 = vmul.f32 %v11093, %v11546
    %v11563 = vmul.f32 %v11095, %v11547
    %v11564 = vmul.f32 %v11097, %v11548
    %v11565 = vmul.f32 %v11099, %v11549
    %v11566 = vmul.f32 %v11101, %v11550
    %v11567 = vmul.f32 %v11103, %v11551
    %v11569 = vsel %vm2171, %v11552, 0
    %v11572 = vsel %vm2171, %v11553, 0
    %v11575 = vsel %vm2171, %v11554, 0
    %v11578 = vsel %vm2171, %v11555, 0
    %v11581 = vsel %vm2171, %v11556, 0
    %v11584 = vsel %vm2171, %v11557, 0
    %v11587 = vsel %vm2171, %v11558, 0
    %v11590 = vsel %vm2171, %v11559, 0
    %v11593 = vsel %vm2171, %v11560, 0
    %v11596 = vsel %vm2171, %v11561, 0
    %v11599 = vsel %vm2171, %v11562, 0
    %v11602 = vsel %vm2171, %v11563, 0
    %v11605 = vsel %vm2171, %v11564, 0
    %v11608 = vsel %vm2171, %v11565, 0
    %v11611 = vsel %vm2171, %v11566, 0
    %v11614 = vsel %vm2171, %v11567, 0
    %11616 = vmatprep.subr.mxu0 0.0
    %11617 = vmatpush1.msra.mxu0 0.0
    %11618 = vmatprep.subr.mxu0 0.0
    %11619 = vmatpush1.msra.mxu0 0.0
    %11620 = vmatprep.subr.mxu0 0.0
    %11621 = vmatpush1.msra.mxu0 0.0
    %11622 = vmatprep.subr.mxu0 0.0
    %11623 = vmatpush1.msra.mxu0 0.0
    %11624 = vmatprep.subr.mxu0 0.0
    %11625 = vmatpush1.msra.mxu0 0.0
    %11626 = vmatprep.subr.mxu0 0.0
    %11627 = vmatpush1.msra.mxu0 0.0
    %11628 = vmatprep.subr.mxu0 0.0
    %11629 = vmatpush1.msra.mxu0 0.0
    %11630 = vmatprep.subr.mxu0 0.0
    %11631 = vmatpush1.msra.mxu0 0.0
    %11632 = vmatprep.subr.mxu0 %v141
    %11633 = vmatpush1.msra.mxu0 %v140
    %11634 = vmatprep.subr.mxu0 %v137
    %11635 = vmatpush1.msra.mxu0 %v136
    %11636 = vmatprep.subr.mxu0 %v133
    %11637 = vmatpush1.msra.mxu0 %v132
    %11638 = vmatprep.subr.mxu0 %v129
    %11639 = vmatpush1.msra.mxu0 %v128
    %11640 = vmatprep.subr.mxu0 %v125
    %11641 = vmatpush1.msra.mxu0 %v124
    %11642 = vmatprep.subr.mxu0 %v121
    %11643 = vmatpush1.msra.mxu0 %v120
    %11644 = vmatprep.subr.mxu0 %v117
    %11645 = vmatpush1.msra.mxu0 %v116
    %11646 = vmatprep.subr.mxu0 %v113
    %11647 = vmatpush1.msra.mxu0 %v112
    %11648 = vmatprep.subr.mxu0 0.0
    %11649 = vmatpush2.msra.mxu0 0.0
    %11650 = vmatprep.subr.mxu0 0.0
    %11651 = vmatpush2.msra.mxu0 0.0
    %11652 = vmatprep.subr.mxu0 0.0
    %11653 = vmatpush2.msra.mxu0 0.0
    %11654 = vmatprep.subr.mxu0 0.0
    %11655 = vmatpush2.msra.mxu0 0.0
    %11656 = vmatprep.subr.mxu0 0.0
    %11657 = vmatpush2.msra.mxu0 0.0
    %11658 = vmatprep.subr.mxu0 0.0
    %11659 = vmatpush2.msra.mxu0 0.0
    %11660 = vmatprep.subr.mxu0 0.0
    %11661 = vmatpush2.msra.mxu0 0.0
    %11662 = vmatprep.subr.mxu0 0.0
    %11663 = vmatpush2.msra.mxu0 0.0
    %11664 = vmatprep.subr.mxu0 0.0
    %11665 = vmatpush2.msra.mxu0 0.0
    %11666 = vmatprep.subr.mxu0 0.0
    %11667 = vmatpush2.msra.mxu0 0.0
    %11668 = vmatprep.subr.mxu0 0.0
    %11669 = vmatpush2.msra.mxu0 0.0
    %11670 = vmatprep.subr.mxu0 0.0
    %11671 = vmatpush2.msra.mxu0 0.0
    %11672 = vmatprep.subr.mxu0 0.0
    %11673 = vmatpush2.msra.mxu0 0.0
    %11674 = vmatprep.subr.mxu0 0.0
    %11675 = vmatpush2.msra.mxu0 0.0
    %11676 = vmatprep.subr.mxu0 0.0
    %11677 = vmatpush2.msra.mxu0 0.0
    %11678 = vmatprep.subr.mxu0 0.0
    %11679 = vmatpush2.msra.mxu0 0.0
    %11680 = vmatprep.mubr.f32.mxu0 0.0
    %11681 = vmatmul.mubr.f32.gmra.mxu0 %v11569
    %v11682 = vpop.f32.mrf.mxu0
    %v11683 = vadd.f32 0.0, %v11682
    %v11684 = vpop.f32.mrf.mxu0
    %v11685 = vadd.f32 0.0, %v11684
    %11686 = vmatprep.mubr.f32.mxu0 0.0
    %11687 = vmatmul.mubr.f32.gmra.mxu0 %v11572
    %v11688 = vpop.f32.mrf.mxu0
    %v11689 = vadd.f32 0.0, %v11688
    %v11690 = vpop.f32.mrf.mxu0
    %v11691 = vadd.f32 0.0, %v11690
    %11692 = vmatprep.mubr.f32.mxu0 0.0
    %11693 = vmatmul.mubr.f32.gmra.mxu0 %v11575
    %v11694 = vpop.f32.mrf.mxu0
    %v11695 = vadd.f32 0.0, %v11694
    %v11696 = vpop.f32.mrf.mxu0
    %v11697 = vadd.f32 0.0, %v11696
    %11698 = vmatprep.mubr.f32.mxu0 0.0
    %11699 = vmatmul.mubr.f32.gmra.mxu0 %v11578
    %v11700 = vpop.f32.mrf.mxu0
    %v11701 = vadd.f32 0.0, %v11700
    %v11702 = vpop.f32.mrf.mxu0
    %v11703 = vadd.f32 0.0, %v11702
    %11704 = vmatprep.mubr.f32.mxu0 0.0
    %11705 = vmatmul.mubr.f32.gmra.mxu0 %v11581
    %v11706 = vpop.f32.mrf.mxu0
    %v11707 = vadd.f32 0.0, %v11706
    %v11708 = vpop.f32.mrf.mxu0
    %v11709 = vadd.f32 0.0, %v11708
    %11710 = vmatprep.mubr.f32.mxu0 0.0
    %11711 = vmatmul.mubr.f32.gmra.mxu0 %v11584
    %v11712 = vpop.f32.mrf.mxu0
    %v11713 = vadd.f32 0.0, %v11712
    %v11714 = vpop.f32.mrf.mxu0
    %v11715 = vadd.f32 0.0, %v11714
    %11716 = vmatprep.mubr.f32.mxu0 0.0
    %11717 = vmatmul.mubr.f32.gmra.mxu0 %v11587
    %v11718 = vpop.f32.mrf.mxu0
    %v11719 = vadd.f32 0.0, %v11718
    %v11720 = vpop.f32.mrf.mxu0
    %v11721 = vadd.f32 0.0, %v11720
    %11722 = vmatprep.mubr.f32.mxu0 0.0
    %11723 = vmatmul.mubr.f32.gmra.mxu0 %v11590
    %v11724 = vpop.f32.mrf.mxu0
    %v11725 = vadd.f32 0.0, %v11724
    %v11726 = vpop.f32.mrf.mxu0
    %v11727 = vadd.f32 0.0, %v11726
    %11728 = vmatprep.mubr.f32.mxu0 0.0
    %11729 = vmatmul.mubr.f32.gmra.mxu0 %v11593
    %v11730 = vpop.f32.mrf.mxu0
    %v11731 = vadd.f32 0.0, %v11730
    %v11732 = vpop.f32.mrf.mxu0
    %v11733 = vadd.f32 0.0, %v11732
    %11734 = vmatprep.mubr.f32.mxu0 0.0
    %11735 = vmatmul.mubr.f32.gmra.mxu0 %v11596
    %v11736 = vpop.f32.mrf.mxu0
    %v11737 = vadd.f32 0.0, %v11736
    %v11738 = vpop.f32.mrf.mxu0
    %v11739 = vadd.f32 0.0, %v11738
    %11740 = vmatprep.mubr.f32.mxu0 0.0
    %11741 = vmatmul.mubr.f32.gmra.mxu0 %v11599
    %v11742 = vpop.f32.mrf.mxu0
    %v11743 = vadd.f32 0.0, %v11742
    %v11744 = vpop.f32.mrf.mxu0
    %v11745 = vadd.f32 0.0, %v11744
    %11746 = vmatprep.mubr.f32.mxu0 0.0
    %11747 = vmatmul.mubr.f32.gmra.mxu0 %v11602
    %v11748 = vpop.f32.mrf.mxu0
    %v11749 = vadd.f32 0.0, %v11748
    %v11750 = vpop.f32.mrf.mxu0
    %v11751 = vadd.f32 0.0, %v11750
    %11752 = vmatprep.mubr.f32.mxu0 0.0
    %11753 = vmatmul.mubr.f32.gmra.mxu0 %v11605
    %v11754 = vpop.f32.mrf.mxu0
    %v11755 = vadd.f32 0.0, %v11754
    %v11756 = vpop.f32.mrf.mxu0
    %v11757 = vadd.f32 0.0, %v11756
    %11758 = vmatprep.mubr.f32.mxu0 0.0
    %11759 = vmatmul.mubr.f32.gmra.mxu0 %v11608
    %v11760 = vpop.f32.mrf.mxu0
    %v11761 = vadd.f32 0.0, %v11760
    %v11762 = vpop.f32.mrf.mxu0
    %v11763 = vadd.f32 0.0, %v11762
    %11764 = vmatprep.mubr.f32.mxu0 0.0
    %11765 = vmatmul.mubr.f32.gmra.mxu0 %v11611
    %v11766 = vpop.f32.mrf.mxu0
    %v11767 = vadd.f32 0.0, %v11766
    %v11768 = vpop.f32.mrf.mxu0
    %v11769 = vadd.f32 0.0, %v11768
    %11770 = vmatprep.mubr.f32.mxu0 0.0
    %11771 = vmatmul.mubr.f32.gmra.mxu0 %v11614
    %v11772 = vpop.f32.mrf.mxu0
    %v11773 = vadd.f32 0.0, %v11772
    %v11774 = vpop.f32.mrf.mxu0
    %v11775 = vadd.f32 0.0, %v11774
    %11776 = vdwg.mxu0
    %11777 = vmatprep.subr.mxu0 0.0
    %11778 = vmatpush1.msra.mxu0 0.0
    %11779 = vmatprep.subr.mxu0 0.0
    %11780 = vmatpush1.msra.mxu0 0.0
    %11781 = vmatprep.subr.mxu0 0.0
    %11782 = vmatpush1.msra.mxu0 0.0
    %11783 = vmatprep.subr.mxu0 0.0
    %11784 = vmatpush1.msra.mxu0 0.0
    %11785 = vmatprep.subr.mxu0 0.0
    %11786 = vmatpush1.msra.mxu0 0.0
    %11787 = vmatprep.subr.mxu0 0.0
    %11788 = vmatpush1.msra.mxu0 0.0
    %11789 = vmatprep.subr.mxu0 0.0
    %11790 = vmatpush1.msra.mxu0 0.0
    %11791 = vmatprep.subr.mxu0 0.0
    %11792 = vmatpush1.msra.mxu0 0.0
    %11793 = vmatprep.subr.mxu0 %v143
    %11794 = vmatpush1.msra.mxu0 %v142
    %11795 = vmatprep.subr.mxu0 %v139
    %11796 = vmatpush1.msra.mxu0 %v138
    %11797 = vmatprep.subr.mxu0 %v135
    %11798 = vmatpush1.msra.mxu0 %v134
    %11799 = vmatprep.subr.mxu0 %v131
    %11800 = vmatpush1.msra.mxu0 %v130
    %11801 = vmatprep.subr.mxu0 %v127
    %11802 = vmatpush1.msra.mxu0 %v126
    %11803 = vmatprep.subr.mxu0 %v123
    %11804 = vmatpush1.msra.mxu0 %v122
    %11805 = vmatprep.subr.mxu0 %v119
    %11806 = vmatpush1.msra.mxu0 %v118
    %11807 = vmatprep.subr.mxu0 %v115
    %11808 = vmatpush1.msra.mxu0 %v114
    %11809 = vmatprep.subr.mxu0 0.0
    %11810 = vmatpush2.msra.mxu0 0.0
    %11811 = vmatprep.subr.mxu0 0.0
    %11812 = vmatpush2.msra.mxu0 0.0
    %11813 = vmatprep.subr.mxu0 0.0
    %11814 = vmatpush2.msra.mxu0 0.0
    %11815 = vmatprep.subr.mxu0 0.0
    %11816 = vmatpush2.msra.mxu0 0.0
    %11817 = vmatprep.subr.mxu0 0.0
    %11818 = vmatpush2.msra.mxu0 0.0
    %11819 = vmatprep.subr.mxu0 0.0
    %11820 = vmatpush2.msra.mxu0 0.0
    %11821 = vmatprep.subr.mxu0 0.0
    %11822 = vmatpush2.msra.mxu0 0.0
    %11823 = vmatprep.subr.mxu0 0.0
    %11824 = vmatpush2.msra.mxu0 0.0
    %11825 = vmatprep.subr.mxu0 0.0
    %11826 = vmatpush2.msra.mxu0 0.0
    %11827 = vmatprep.subr.mxu0 0.0
    %11828 = vmatpush2.msra.mxu0 0.0
    %11829 = vmatprep.subr.mxu0 0.0
    %11830 = vmatpush2.msra.mxu0 0.0
    %11831 = vmatprep.subr.mxu0 0.0
    %11832 = vmatpush2.msra.mxu0 0.0
    %11833 = vmatprep.subr.mxu0 0.0
    %11834 = vmatpush2.msra.mxu0 0.0
    %11835 = vmatprep.subr.mxu0 0.0
    %11836 = vmatpush2.msra.mxu0 0.0
    %11837 = vmatprep.subr.mxu0 0.0
    %11838 = vmatpush2.msra.mxu0 0.0
    %11839 = vmatprep.subr.mxu0 0.0
    %11840 = vmatpush2.msra.mxu0 0.0
    %11841 = vmatprep.mubr.f32.mxu0 0.0
    %11842 = vmatmul.mubr.f32.gmra.mxu0 %v11569
    %v11843 = vpop.f32.mrf.mxu0
    %v11844 = vadd.f32 0.0, %v11843
    %v11845 = vpop.f32.mrf.mxu0
    %v11846 = vadd.f32 0.0, %v11845
    %11847 = vmatprep.mubr.f32.mxu0 0.0
    %11848 = vmatmul.mubr.f32.gmra.mxu0 %v11572
    %v11849 = vpop.f32.mrf.mxu0
    %v11850 = vadd.f32 0.0, %v11849
    %v11851 = vpop.f32.mrf.mxu0
    %v11852 = vadd.f32 0.0, %v11851
    %11853 = vmatprep.mubr.f32.mxu0 0.0
    %11854 = vmatmul.mubr.f32.gmra.mxu0 %v11575
    %v11855 = vpop.f32.mrf.mxu0
    %v11856 = vadd.f32 0.0, %v11855
    %v11857 = vpop.f32.mrf.mxu0
    %v11858 = vadd.f32 0.0, %v11857
    %11859 = vmatprep.mubr.f32.mxu0 0.0
    %11860 = vmatmul.mubr.f32.gmra.mxu0 %v11578
    %v11861 = vpop.f32.mrf.mxu0
    %v11862 = vadd.f32 0.0, %v11861
    %v11863 = vpop.f32.mrf.mxu0
    %v11864 = vadd.f32 0.0, %v11863
    %11865 = vmatprep.mubr.f32.mxu0 0.0
    %11866 = vmatmul.mubr.f32.gmra.mxu0 %v11581
    %v11867 = vpop.f32.mrf.mxu0
    %v11868 = vadd.f32 0.0, %v11867
    %v11869 = vpop.f32.mrf.mxu0
    %v11870 = vadd.f32 0.0, %v11869
    %11871 = vmatprep.mubr.f32.mxu0 0.0
    %11872 = vmatmul.mubr.f32.gmra.mxu0 %v11584
    %v11873 = vpop.f32.mrf.mxu0
    %v11874 = vadd.f32 0.0, %v11873
    %v11875 = vpop.f32.mrf.mxu0
    %v11876 = vadd.f32 0.0, %v11875
    %11877 = vmatprep.mubr.f32.mxu0 0.0
    %11878 = vmatmul.mubr.f32.gmra.mxu0 %v11587
    %v11879 = vpop.f32.mrf.mxu0
    %v11880 = vadd.f32 0.0, %v11879
    %v11881 = vpop.f32.mrf.mxu0
    %v11882 = vadd.f32 0.0, %v11881
    %11883 = vmatprep.mubr.f32.mxu0 0.0
    %11884 = vmatmul.mubr.f32.gmra.mxu0 %v11590
    %v11885 = vpop.f32.mrf.mxu0
    %v11886 = vadd.f32 0.0, %v11885
    %v11887 = vpop.f32.mrf.mxu0
    %v11888 = vadd.f32 0.0, %v11887
    %11889 = vmatprep.mubr.f32.mxu0 0.0
    %11890 = vmatmul.mubr.f32.gmra.mxu0 %v11593
    %v11891 = vpop.f32.mrf.mxu0
    %v11892 = vadd.f32 0.0, %v11891
    %v11893 = vpop.f32.mrf.mxu0
    %v11894 = vadd.f32 0.0, %v11893
    %11895 = vmatprep.mubr.f32.mxu0 0.0
    %11896 = vmatmul.mubr.f32.gmra.mxu0 %v11596
    %v11897 = vpop.f32.mrf.mxu0
    %v11898 = vadd.f32 0.0, %v11897
    %v11899 = vpop.f32.mrf.mxu0
    %v11900 = vadd.f32 0.0, %v11899
    %11901 = vmatprep.mubr.f32.mxu0 0.0
    %11902 = vmatmul.mubr.f32.gmra.mxu0 %v11599
    %v11903 = vpop.f32.mrf.mxu0
    %v11904 = vadd.f32 0.0, %v11903
    %v11905 = vpop.f32.mrf.mxu0
    %v11906 = vadd.f32 0.0, %v11905
    %11907 = vmatprep.mubr.f32.mxu0 0.0
    %11908 = vmatmul.mubr.f32.gmra.mxu0 %v11602
    %v11909 = vpop.f32.mrf.mxu0
    %v11910 = vadd.f32 0.0, %v11909
    %v11911 = vpop.f32.mrf.mxu0
    %v11912 = vadd.f32 0.0, %v11911
    %11913 = vmatprep.mubr.f32.mxu0 0.0
    %11914 = vmatmul.mubr.f32.gmra.mxu0 %v11605
    %v11915 = vpop.f32.mrf.mxu0
    %v11916 = vadd.f32 0.0, %v11915
    %v11917 = vpop.f32.mrf.mxu0
    %v11918 = vadd.f32 0.0, %v11917
    %11919 = vmatprep.mubr.f32.mxu0 0.0
    %11920 = vmatmul.mubr.f32.gmra.mxu0 %v11608
    %v11921 = vpop.f32.mrf.mxu0
    %v11922 = vadd.f32 0.0, %v11921
    %v11923 = vpop.f32.mrf.mxu0
    %v11924 = vadd.f32 0.0, %v11923
    %11925 = vmatprep.mubr.f32.mxu0 0.0
    %11926 = vmatmul.mubr.f32.gmra.mxu0 %v11611
    %v11927 = vpop.f32.mrf.mxu0
    %v11928 = vadd.f32 0.0, %v11927
    %v11929 = vpop.f32.mrf.mxu0
    %v11930 = vadd.f32 0.0, %v11929
    %11931 = vmatprep.mubr.f32.mxu0 0.0
    %11932 = vmatmul.mubr.f32.gmra.mxu0 %v11614
    %v11933 = vpop.f32.mrf.mxu0
    %v11934 = vadd.f32 0.0, %v11933
    %v11935 = vpop.f32.mrf.mxu0
    %v11936 = vadd.f32 0.0, %v11935
    %11937 = vdwg.mxu0
    %v11938 = vmul.f32 %v11683, %v10194
    %v11939 = vmul.f32 %v11685, %v10194
    %v11940 = vmul.f32 %v11844, %v10194
    %v11941 = vmul.f32 %v11846, %v10194
    %v11942 = vmul.f32 %v11689, %v10200
    %v11943 = vmul.f32 %v11691, %v10200
    %v11944 = vmul.f32 %v11850, %v10200
    %v11945 = vmul.f32 %v11852, %v10200
    %v11946 = vmul.f32 %v11695, %v10206
    %v11947 = vmul.f32 %v11697, %v10206
    %v11948 = vmul.f32 %v11856, %v10206
    %v11949 = vmul.f32 %v11858, %v10206
    %v11950 = vmul.f32 %v11701, %v10212
    %v11951 = vmul.f32 %v11703, %v10212
    %v11952 = vmul.f32 %v11862, %v10212
    %v11953 = vmul.f32 %v11864, %v10212
    %v11954 = vmul.f32 %v11707, %v10218
    %v11955 = vmul.f32 %v11709, %v10218
    %v11956 = vmul.f32 %v11868, %v10218
    %v11957 = vmul.f32 %v11870, %v10218
    %v11958 = vmul.f32 %v11713, %v10224
    %v11959 = vmul.f32 %v11715, %v10224
    %v11960 = vmul.f32 %v11874, %v10224
    %v11961 = vmul.f32 %v11876, %v10224
    %v11962 = vmul.f32 %v11719, %v10230
    %v11963 = vmul.f32 %v11721, %v10230
    %v11964 = vmul.f32 %v11880, %v10230
    %v11965 = vmul.f32 %v11882, %v10230
    %v11966 = vmul.f32 %v11725, %v10236
    %v11967 = vmul.f32 %v11727, %v10236
    %v11968 = vmul.f32 %v11886, %v10236
    %v11969 = vmul.f32 %v11888, %v10236
    %v11970 = vmul.f32 %v11731, %v10242
    %v11971 = vmul.f32 %v11733, %v10242
    %v11972 = vmul.f32 %v11892, %v10242
    %v11973 = vmul.f32 %v11894, %v10242
    %v11974 = vmul.f32 %v11737, %v10248
    %v11975 = vmul.f32 %v11739, %v10248
    %v11976 = vmul.f32 %v11898, %v10248
    %v11977 = vmul.f32 %v11900, %v10248
    %v11978 = vmul.f32 %v11743, %v10254
    %v11979 = vmul.f32 %v11745, %v10254
    %v11980 = vmul.f32 %v11904, %v10254
    %v11981 = vmul.f32 %v11906, %v10254
    %v11982 = vmul.f32 %v11749, %v10260
    %v11983 = vmul.f32 %v11751, %v10260
    %v11984 = vmul.f32 %v11910, %v10260
    %v11985 = vmul.f32 %v11912, %v10260
    %v11986 = vmul.f32 %v11755, %v10266
    %v11987 = vmul.f32 %v11757, %v10266
    %v11988 = vmul.f32 %v11916, %v10266
    %v11989 = vmul.f32 %v11918, %v10266
    %v11990 = vmul.f32 %v11761, %v10272
    %v11991 = vmul.f32 %v11763, %v10272
    %v11992 = vmul.f32 %v11922, %v10272
    %v11993 = vmul.f32 %v11924, %v10272
    %v11994 = vmul.f32 %v11767, %v10278
    %v11995 = vmul.f32 %v11769, %v10278
    %v11996 = vmul.f32 %v11928, %v10278
    %v11997 = vmul.f32 %v11930, %v10278
    %v11998 = vmul.f32 %v11773, %v10284
    %v11999 = vmul.f32 %v11775, %v10284
    %v12000 = vmul.f32 %v11934, %v10284
    %v12001 = vmul.f32 %v11936, %v10284
    %12002 = vmatprep.subr.mxu0 0.0
    %12003 = vmatpush1.msra.mxu0 %v223
    %12004 = vmatprep.subr.mxu0 0.0
    %12005 = vmatpush1.msra.mxu0 %v222
    %12006 = vmatprep.subr.mxu0 0.0
    %12007 = vmatpush1.msra.mxu0 %v221
    %12008 = vmatprep.subr.mxu0 0.0
    %12009 = vmatpush1.msra.mxu0 %v220
    %12010 = vmatprep.subr.mxu0 0.0
    %12011 = vmatpush1.msra.mxu0 %v219
    %12012 = vmatprep.subr.mxu0 0.0
    %12013 = vmatpush1.msra.mxu0 %v218
    %12014 = vmatprep.subr.mxu0 0.0
    %12015 = vmatpush1.msra.mxu0 %v217
    %12016 = vmatprep.subr.mxu0 0.0
    %12017 = vmatpush1.msra.mxu0 %v216
    %12018 = vmatprep.subr.mxu0 0.0
    %12019 = vmatpush1.msra.mxu0 %v215
    %12020 = vmatprep.subr.mxu0 0.0
    %12021 = vmatpush1.msra.mxu0 %v214
    %12022 = vmatprep.subr.mxu0 0.0
    %12023 = vmatpush1.msra.mxu0 %v213
    %12024 = vmatprep.subr.mxu0 0.0
    %12025 = vmatpush1.msra.mxu0 %v212
    %12026 = vmatprep.subr.mxu0 0.0
    %12027 = vmatpush1.msra.mxu0 %v211
    %12028 = vmatprep.subr.mxu0 0.0
    %12029 = vmatpush1.msra.mxu0 %v210
    %12030 = vmatprep.subr.mxu0 0.0
    %12031 = vmatpush1.msra.mxu0 %v209
    %12032 = vmatprep.subr.mxu0 0.0
    %12033 = vmatpush1.msra.mxu0 %v208
    %12034 = vmatprep.subr.mxu0 0.0
    %12035 = vmatpush2.msra.mxu0 %v239
    %12036 = vmatprep.subr.mxu0 0.0
    %12037 = vmatpush2.msra.mxu0 %v238
    %12038 = vmatprep.subr.mxu0 0.0
    %12039 = vmatpush2.msra.mxu0 %v237
    %12040 = vmatprep.subr.mxu0 0.0
    %12041 = vmatpush2.msra.mxu0 %v236
    %12042 = vmatprep.subr.mxu0 0.0
    %12043 = vmatpush2.msra.mxu0 %v235
    %12044 = vmatprep.subr.mxu0 0.0
    %12045 = vmatpush2.msra.mxu0 %v234
    %12046 = vmatprep.subr.mxu0 0.0
    %12047 = vmatpush2.msra.mxu0 %v233
    %12048 = vmatprep.subr.mxu0 0.0
    %12049 = vmatpush2.msra.mxu0 %v232
    %12050 = vmatprep.subr.mxu0 0.0
    %12051 = vmatpush2.msra.mxu0 %v231
    %12052 = vmatprep.subr.mxu0 0.0
    %12053 = vmatpush2.msra.mxu0 %v230
    %12054 = vmatprep.subr.mxu0 0.0
    %12055 = vmatpush2.msra.mxu0 %v229
    %12056 = vmatprep.subr.mxu0 0.0
    %12057 = vmatpush2.msra.mxu0 %v228
    %12058 = vmatprep.subr.mxu0 0.0
    %12059 = vmatpush2.msra.mxu0 %v227
    %12060 = vmatprep.subr.mxu0 0.0
    %12061 = vmatpush2.msra.mxu0 %v226
    %12062 = vmatprep.subr.mxu0 0.0
    %12063 = vmatpush2.msra.mxu0 %v225
    %12064 = vmatprep.subr.mxu0 0.0
    %12065 = vmatpush2.msra.mxu0 %v224
    %12066 = vmatprep.mubr.f32.mxu0 %v11939
    %12067 = vmatmul.mubr.f32.gmra.mxu0 %v11938
    %v12068 = vpop.f32.mrf.mxu0
    %v12069 = vadd.f32 0.0, %v12068
    %v12070 = vpop.f32.mrf.mxu0
    %12071 = vmatprep.mubr.f32.mxu0 %v11943
    %12072 = vmatmul.mubr.f32.gmra.mxu0 %v11942
    %v12073 = vpop.f32.mrf.mxu0
    %v12074 = vadd.f32 0.0, %v12073
    %v12075 = vpop.f32.mrf.mxu0
    %12076 = vmatprep.mubr.f32.mxu0 %v11947
    %12077 = vmatmul.mubr.f32.gmra.mxu0 %v11946
    %v12078 = vpop.f32.mrf.mxu0
    %v12079 = vadd.f32 0.0, %v12078
    %v12080 = vpop.f32.mrf.mxu0
    %12081 = vmatprep.mubr.f32.mxu0 %v11951
    %12082 = vmatmul.mubr.f32.gmra.mxu0 %v11950
    %v12083 = vpop.f32.mrf.mxu0
    %v12084 = vadd.f32 0.0, %v12083
    %v12085 = vpop.f32.mrf.mxu0
    %12086 = vmatprep.mubr.f32.mxu0 %v11955
    %12087 = vmatmul.mubr.f32.gmra.mxu0 %v11954
    %v12088 = vpop.f32.mrf.mxu0
    %v12089 = vadd.f32 0.0, %v12088
    %v12090 = vpop.f32.mrf.mxu0
    %12091 = vmatprep.mubr.f32.mxu0 %v11959
    %12092 = vmatmul.mubr.f32.gmra.mxu0 %v11958
    %v12093 = vpop.f32.mrf.mxu0
    %v12094 = vadd.f32 0.0, %v12093
    %v12095 = vpop.f32.mrf.mxu0
    %12096 = vmatprep.mubr.f32.mxu0 %v11963
    %12097 = vmatmul.mubr.f32.gmra.mxu0 %v11962
    %v12098 = vpop.f32.mrf.mxu0
    %v12099 = vadd.f32 0.0, %v12098
    %v12100 = vpop.f32.mrf.mxu0
    %12101 = vmatprep.mubr.f32.mxu0 %v11967
    %12102 = vmatmul.mubr.f32.gmra.mxu0 %v11966
    %v12103 = vpop.f32.mrf.mxu0
    %v12104 = vadd.f32 0.0, %v12103
    %v12105 = vpop.f32.mrf.mxu0
    %12106 = vmatprep.mubr.f32.mxu0 %v11971
    %12107 = vmatmul.mubr.f32.gmra.mxu0 %v11970
    %v12108 = vpop.f32.mrf.mxu0
    %v12109 = vadd.f32 0.0, %v12108
    %v12110 = vpop.f32.mrf.mxu0
    %12111 = vmatprep.mubr.f32.mxu0 %v11975
    %12112 = vmatmul.mubr.f32.gmra.mxu0 %v11974
    %v12113 = vpop.f32.mrf.mxu0
    %v12114 = vadd.f32 0.0, %v12113
    %v12115 = vpop.f32.mrf.mxu0
    %12116 = vmatprep.mubr.f32.mxu0 %v11979
    %12117 = vmatmul.mubr.f32.gmra.mxu0 %v11978
    %v12118 = vpop.f32.mrf.mxu0
    %v12119 = vadd.f32 0.0, %v12118
    %v12120 = vpop.f32.mrf.mxu0
    %12121 = vmatprep.mubr.f32.mxu0 %v11983
    %12122 = vmatmul.mubr.f32.gmra.mxu0 %v11982
    %v12123 = vpop.f32.mrf.mxu0
    %v12124 = vadd.f32 0.0, %v12123
    %v12125 = vpop.f32.mrf.mxu0
    %12126 = vmatprep.mubr.f32.mxu0 %v11987
    %12127 = vmatmul.mubr.f32.gmra.mxu0 %v11986
    %v12128 = vpop.f32.mrf.mxu0
    %v12129 = vadd.f32 0.0, %v12128
    %v12130 = vpop.f32.mrf.mxu0
    %12131 = vmatprep.mubr.f32.mxu0 %v11991
    %12132 = vmatmul.mubr.f32.gmra.mxu0 %v11990
    %v12133 = vpop.f32.mrf.mxu0
    %v12134 = vadd.f32 0.0, %v12133
    %v12135 = vpop.f32.mrf.mxu0
    %12136 = vmatprep.mubr.f32.mxu0 %v11995
    %12137 = vmatmul.mubr.f32.gmra.mxu0 %v11994
    %v12138 = vpop.f32.mrf.mxu0
    %v12139 = vadd.f32 0.0, %v12138
    %v12140 = vpop.f32.mrf.mxu0
    %12141 = vmatprep.mubr.f32.mxu0 %v11999
    %12142 = vmatmul.mubr.f32.gmra.mxu0 %v11998
    %v12143 = vpop.f32.mrf.mxu0
    %v12144 = vadd.f32 0.0, %v12143
    %v12145 = vpop.f32.mrf.mxu0
    %12146 = vdwg.mxu0
    %12147 = vmatprep.subr.mxu0 0.0
    %12148 = vmatpush1.msra.mxu0 %v255
    %12149 = vmatprep.subr.mxu0 0.0
    %12150 = vmatpush1.msra.mxu0 %v254
    %12151 = vmatprep.subr.mxu0 0.0
    %12152 = vmatpush1.msra.mxu0 %v253
    %12153 = vmatprep.subr.mxu0 0.0
    %12154 = vmatpush1.msra.mxu0 %v252
    %12155 = vmatprep.subr.mxu0 0.0
    %12156 = vmatpush1.msra.mxu0 %v251
    %12157 = vmatprep.subr.mxu0 0.0
    %12158 = vmatpush1.msra.mxu0 %v250
    %12159 = vmatprep.subr.mxu0 0.0
    %12160 = vmatpush1.msra.mxu0 %v249
    %12161 = vmatprep.subr.mxu0 0.0
    %12162 = vmatpush1.msra.mxu0 %v248
    %12163 = vmatprep.subr.mxu0 0.0
    %12164 = vmatpush1.msra.mxu0 %v247
    %12165 = vmatprep.subr.mxu0 0.0
    %12166 = vmatpush1.msra.mxu0 %v246
    %12167 = vmatprep.subr.mxu0 0.0
    %12168 = vmatpush1.msra.mxu0 %v245
    %12169 = vmatprep.subr.mxu0 0.0
    %12170 = vmatpush1.msra.mxu0 %v244
    %12171 = vmatprep.subr.mxu0 0.0
    %12172 = vmatpush1.msra.mxu0 %v243
    %12173 = vmatprep.subr.mxu0 0.0
    %12174 = vmatpush1.msra.mxu0 %v242
    %12175 = vmatprep.subr.mxu0 0.0
    %12176 = vmatpush1.msra.mxu0 %v241
    %12177 = vmatprep.subr.mxu0 0.0
    %12178 = vmatpush1.msra.mxu0 %v240
    %12179 = vmatprep.subr.mxu0 0.0
    %12180 = vmatpush2.msra.mxu0 %v271
    %12181 = vmatprep.subr.mxu0 0.0
    %12182 = vmatpush2.msra.mxu0 %v270
    %12183 = vmatprep.subr.mxu0 0.0
    %12184 = vmatpush2.msra.mxu0 %v269
    %12185 = vmatprep.subr.mxu0 0.0
    %12186 = vmatpush2.msra.mxu0 %v268
    %12187 = vmatprep.subr.mxu0 0.0
    %12188 = vmatpush2.msra.mxu0 %v267
    %12189 = vmatprep.subr.mxu0 0.0
    %12190 = vmatpush2.msra.mxu0 %v266
    %12191 = vmatprep.subr.mxu0 0.0
    %12192 = vmatpush2.msra.mxu0 %v265
    %12193 = vmatprep.subr.mxu0 0.0
    %12194 = vmatpush2.msra.mxu0 %v264
    %12195 = vmatprep.subr.mxu0 0.0
    %12196 = vmatpush2.msra.mxu0 %v263
    %12197 = vmatprep.subr.mxu0 0.0
    %12198 = vmatpush2.msra.mxu0 %v262
    %12199 = vmatprep.subr.mxu0 0.0
    %12200 = vmatpush2.msra.mxu0 %v261
    %12201 = vmatprep.subr.mxu0 0.0
    %12202 = vmatpush2.msra.mxu0 %v260
    %12203 = vmatprep.subr.mxu0 0.0
    %12204 = vmatpush2.msra.mxu0 %v259
    %12205 = vmatprep.subr.mxu0 0.0
    %12206 = vmatpush2.msra.mxu0 %v258
    %12207 = vmatprep.subr.mxu0 0.0
    %12208 = vmatpush2.msra.mxu0 %v257
    %12209 = vmatprep.subr.mxu0 0.0
    %12210 = vmatpush2.msra.mxu0 %v256
    %12211 = vmatprep.mubr.f32.mxu0 %v11941
    %12212 = vmatmul.mubr.f32.gmra.mxu0 %v11940
    %v12213 = vpop.f32.mrf.mxu0
    %v12214 = vadd.f32 %v12069, %v12213
    %v12215 = vpop.f32.mrf.mxu0
    %12216 = vmatprep.mubr.f32.mxu0 %v11945
    %12217 = vmatmul.mubr.f32.gmra.mxu0 %v11944
    %v12218 = vpop.f32.mrf.mxu0
    %v12219 = vadd.f32 %v12074, %v12218
    %v12220 = vpop.f32.mrf.mxu0
    %12221 = vmatprep.mubr.f32.mxu0 %v11949
    %12222 = vmatmul.mubr.f32.gmra.mxu0 %v11948
    %v12223 = vpop.f32.mrf.mxu0
    %v12224 = vadd.f32 %v12079, %v12223
    %v12225 = vpop.f32.mrf.mxu0
    %12226 = vmatprep.mubr.f32.mxu0 %v11953
    %12227 = vmatmul.mubr.f32.gmra.mxu0 %v11952
    %v12228 = vpop.f32.mrf.mxu0
    %v12229 = vadd.f32 %v12084, %v12228
    %v12230 = vpop.f32.mrf.mxu0
    %12231 = vmatprep.mubr.f32.mxu0 %v11957
    %12232 = vmatmul.mubr.f32.gmra.mxu0 %v11956
    %v12233 = vpop.f32.mrf.mxu0
    %v12234 = vadd.f32 %v12089, %v12233
    %v12235 = vpop.f32.mrf.mxu0
    %12236 = vmatprep.mubr.f32.mxu0 %v11961
    %12237 = vmatmul.mubr.f32.gmra.mxu0 %v11960
    %v12238 = vpop.f32.mrf.mxu0
    %v12239 = vadd.f32 %v12094, %v12238
    %v12240 = vpop.f32.mrf.mxu0
    %12241 = vmatprep.mubr.f32.mxu0 %v11965
    %12242 = vmatmul.mubr.f32.gmra.mxu0 %v11964
    %v12243 = vpop.f32.mrf.mxu0
    %v12244 = vadd.f32 %v12099, %v12243
    %v12245 = vpop.f32.mrf.mxu0
    %12246 = vmatprep.mubr.f32.mxu0 %v11969
    %12247 = vmatmul.mubr.f32.gmra.mxu0 %v11968
    %v12248 = vpop.f32.mrf.mxu0
    %v12249 = vadd.f32 %v12104, %v12248
    %v12250 = vpop.f32.mrf.mxu0
    %12251 = vmatprep.mubr.f32.mxu0 %v11973
    %12252 = vmatmul.mubr.f32.gmra.mxu0 %v11972
    %v12253 = vpop.f32.mrf.mxu0
    %v12254 = vadd.f32 %v12109, %v12253
    %v12255 = vpop.f32.mrf.mxu0
    %12256 = vmatprep.mubr.f32.mxu0 %v11977
    %12257 = vmatmul.mubr.f32.gmra.mxu0 %v11976
    %v12258 = vpop.f32.mrf.mxu0
    %v12259 = vadd.f32 %v12114, %v12258
    %v12260 = vpop.f32.mrf.mxu0
    %12261 = vmatprep.mubr.f32.mxu0 %v11981
    %12262 = vmatmul.mubr.f32.gmra.mxu0 %v11980
    %v12263 = vpop.f32.mrf.mxu0
    %v12264 = vadd.f32 %v12119, %v12263
    %v12265 = vpop.f32.mrf.mxu0
    %12266 = vmatprep.mubr.f32.mxu0 %v11985
    %12267 = vmatmul.mubr.f32.gmra.mxu0 %v11984
    %v12268 = vpop.f32.mrf.mxu0
    %v12269 = vadd.f32 %v12124, %v12268
    %v12270 = vpop.f32.mrf.mxu0
    %12271 = vmatprep.mubr.f32.mxu0 %v11989
    %12272 = vmatmul.mubr.f32.gmra.mxu0 %v11988
    %v12273 = vpop.f32.mrf.mxu0
    %v12274 = vadd.f32 %v12129, %v12273
    %v12275 = vpop.f32.mrf.mxu0
    %12276 = vmatprep.mubr.f32.mxu0 %v11993
    %12277 = vmatmul.mubr.f32.gmra.mxu0 %v11992
    %v12278 = vpop.f32.mrf.mxu0
    %v12279 = vadd.f32 %v12134, %v12278
    %v12280 = vpop.f32.mrf.mxu0
    %12281 = vmatprep.mubr.f32.mxu0 %v11997
    %12282 = vmatmul.mubr.f32.gmra.mxu0 %v11996
    %v12283 = vpop.f32.mrf.mxu0
    %v12284 = vadd.f32 %v12139, %v12283
    %v12285 = vpop.f32.mrf.mxu0
    %12286 = vmatprep.mubr.f32.mxu0 %v12001
    %12287 = vmatmul.mubr.f32.gmra.mxu0 %v12000
    %v12288 = vpop.f32.mrf.mxu0
    %v12289 = vadd.f32 %v12144, %v12288
    %v12290 = vpop.f32.mrf.mxu0
    %12291 = vdwg.mxu0
    %v12292 = vsel %vm6832, %v9626, %v12214
    %v12293 = vsel %vm6833, %v9627, %v12219
    %v12294 = vsel %vm6834, %v9628, %v12224
    %v12295 = vsel %vm6835, %v9629, %v12229
    %v12296 = vsel %vm6836, %v9630, %v12234
    %v12297 = vsel %vm6837, %v9631, %v12239
    %v12298 = vsel %vm6838, %v9632, %v12244
    %v12299 = vsel %vm6839, %v9633, %v12249
    %v12300 = vsel %vm6840, %v9634, %v12254
    %v12301 = vsel %vm6841, %v9635, %v12259
    %v12302 = vsel %vm6842, %v9636, %v12264
    %v12303 = vsel %vm6843, %v9637, %v12269
    %v12304 = vsel %vm6844, %v9638, %v12274
    %v12305 = vsel %vm6845, %v9639, %v12279
    %v12306 = vsel %vm6846, %v9640, %v12284
    %v12307 = vsel %vm6847, %v9641, %v12289
    %vm12308 = vcmp.ge.f32.partialorder %v12292, 0.0
    %vm12309 = vcmp.ge.f32.partialorder %v12293, 0.0
    %vm12310 = vcmp.ge.f32.partialorder %v12294, 0.0
    %vm12311 = vcmp.ge.f32.partialorder %v12295, 0.0
    %vm12312 = vcmp.ge.f32.partialorder %v12296, 0.0
    %vm12313 = vcmp.ge.f32.partialorder %v12297, 0.0
    %vm12314 = vcmp.ge.f32.partialorder %v12298, 0.0
    %vm12315 = vcmp.ge.f32.partialorder %v12299, 0.0
    %vm12316 = vcmp.ge.f32.partialorder %v12300, 0.0
    %vm12317 = vcmp.ge.f32.partialorder %v12301, 0.0
    %vm12318 = vcmp.ge.f32.partialorder %v12302, 0.0
    %vm12319 = vcmp.ge.f32.partialorder %v12303, 0.0
    %vm12320 = vcmp.ge.f32.partialorder %v12304, 0.0
    %vm12321 = vcmp.ge.f32.partialorder %v12305, 0.0
    %vm12322 = vcmp.ge.f32.partialorder %v12306, 0.0
    %vm12323 = vcmp.ge.f32.partialorder %v12307, 0.0
    %v12324 = vmul.f32 %v12292, 0.01
    %v12325 = vmul.f32 %v12293, 0.01
    %v12326 = vmul.f32 %v12294, 0.01
    %v12327 = vmul.f32 %v12295, 0.01
    %v12328 = vmul.f32 %v12296, 0.01
    %v12329 = vmul.f32 %v12297, 0.01
    %v12330 = vmul.f32 %v12298, 0.01
    %v12331 = vmul.f32 %v12299, 0.01
    %v12332 = vmul.f32 %v12300, 0.01
    %v12333 = vmul.f32 %v12301, 0.01
    %v12334 = vmul.f32 %v12302, 0.01
    %v12335 = vmul.f32 %v12303, 0.01
    %v12336 = vmul.f32 %v12304, 0.01
    %v12337 = vmul.f32 %v12305, 0.01
    %v12338 = vmul.f32 %v12306, 0.01
    %v12339 = vmul.f32 %v12307, 0.01
    %v12340 = vsel %vm12308, %v12292, %v12324
    %v12341 = vsel %vm12309, %v12293, %v12325
    %v12342 = vsel %vm12310, %v12294, %v12326
    %v12343 = vsel %vm12311, %v12295, %v12327
    %v12344 = vsel %vm12312, %v12296, %v12328
    %v12345 = vsel %vm12313, %v12297, %v12329
    %v12346 = vsel %vm12314, %v12298, %v12330
    %v12347 = vsel %vm12315, %v12299, %v12331
    %v12348 = vsel %vm12316, %v12300, %v12332
    %v12349 = vsel %vm12317, %v12301, %v12333
    %v12350 = vsel %vm12318, %v12302, %v12334
    %v12351 = vsel %vm12319, %v12303, %v12335
    %v12352 = vsel %vm12320, %v12304, %v12336
    %v12353 = vsel %vm12321, %v12305, %v12337
    %v12354 = vsel %vm12322, %v12306, %v12338
    %v12355 = vsel %vm12323, %v12307, %v12339
    %v12356 = vadd.f32 %v9642, %v12340
    %v12357 = vadd.f32 %v9643, %v12341
    %v12358 = vadd.f32 %v9644, %v12342
    %v12359 = vadd.f32 %v9645, %v12343
    %v12360 = vadd.f32 %v9646, %v12344
    %v12361 = vadd.f32 %v9647, %v12345
    %v12362 = vadd.f32 %v9648, %v12346
    %v12363 = vadd.f32 %v9649, %v12347
    %v12364 = vadd.f32 %v9650, %v12348
    %v12365 = vadd.f32 %v9651, %v12349
    %v12366 = vadd.f32 %v9652, %v12350
    %v12367 = vadd.f32 %v9653, %v12351
    %v12368 = vadd.f32 %v9654, %v12352
    %v12369 = vadd.f32 %v9655, %v12353
    %v12370 = vadd.f32 %v9656, %v12354
    %v12371 = vadd.f32 %v9657, %v12355
    %v12372 = vmul.f32 %v12356, 0.5
    %v12373 = vmul.f32 %v12357, 0.5
    %v12374 = vmul.f32 %v12358, 0.5
    %v12375 = vmul.f32 %v12359, 0.5
    %v12376 = vmul.f32 %v12360, 0.5
    %v12377 = vmul.f32 %v12361, 0.5
    %v12378 = vmul.f32 %v12362, 0.5
    %v12379 = vmul.f32 %v12363, 0.5
    %v12380 = vmul.f32 %v12364, 0.5
    %v12381 = vmul.f32 %v12365, 0.5
    %v12382 = vmul.f32 %v12366, 0.5
    %v12383 = vmul.f32 %v12367, 0.5
    %v12384 = vmul.f32 %v12368, 0.5
    %v12385 = vmul.f32 %v12369, 0.5
    %v12386 = vmul.f32 %v12370, 0.5
    %v12387 = vmul.f32 %v12371, 0.5
    %12388 = vmatprep.subr.mxu0 0.0
    %12389 = vmatpush1.msra.mxu0 %v12387
    %12390 = vmatprep.subr.mxu0 0.0
    %12391 = vmatpush1.msra.mxu0 %v12386
    %12392 = vmatprep.subr.mxu0 0.0
    %12393 = vmatpush1.msra.mxu0 %v12385
    %12394 = vmatprep.subr.mxu0 0.0
    %12395 = vmatpush1.msra.mxu0 %v12384
    %12396 = vmatprep.subr.mxu0 0.0
    %12397 = vmatpush1.msra.mxu0 %v12383
    %12398 = vmatprep.subr.mxu0 0.0
    %12399 = vmatpush1.msra.mxu0 %v12382
    %12400 = vmatprep.subr.mxu0 0.0
    %12401 = vmatpush1.msra.mxu0 %v12381
    %12402 = vmatprep.subr.mxu0 0.0
    %12403 = vmatpush1.msra.mxu0 %v12380
    %12404 = vmatprep.subr.mxu0 0.0
    %12405 = vmatpush1.msra.mxu0 %v12379
    %12406 = vmatprep.subr.mxu0 0.0
    %12407 = vmatpush1.msra.mxu0 %v12378
    %12408 = vmatprep.subr.mxu0 0.0
    %12409 = vmatpush1.msra.mxu0 %v12377
    %12410 = vmatprep.subr.mxu0 0.0
    %12411 = vmatpush1.msra.mxu0 %v12376
    %12412 = vmatprep.subr.mxu0 0.0
    %12413 = vmatpush1.msra.mxu0 %v12375
    %12414 = vmatprep.subr.mxu0 0.0
    %12415 = vmatpush1.msra.mxu0 %v12374
    %12416 = vmatprep.subr.mxu0 0.0
    %12417 = vmatpush1.msra.mxu0 %v12373
    %12418 = vmatprep.subr.mxu0 0.0
    %12419 = vmatpush1.msra.mxu0 %v12372
    %12420 = vmatprep.subr.mxu0 0.0
    %12421 = vmatpush2.msra.mxu0 0.0
    %12422 = vmatprep.subr.mxu0 0.0
    %12423 = vmatpush2.msra.mxu0 0.0
    %12424 = vmatprep.subr.mxu0 0.0
    %12425 = vmatpush2.msra.mxu0 0.0
    %12426 = vmatprep.subr.mxu0 0.0
    %12427 = vmatpush2.msra.mxu0 0.0
    %12428 = vmatprep.subr.mxu0 0.0
    %12429 = vmatpush2.msra.mxu0 0.0
    %12430 = vmatprep.subr.mxu0 0.0
    %12431 = vmatpush2.msra.mxu0 0.0
    %12432 = vmatprep.subr.mxu0 0.0
    %12433 = vmatpush2.msra.mxu0 0.0
    %12434 = vmatprep.subr.mxu0 0.0
    %12435 = vmatpush2.msra.mxu0 0.0
    %12436 = vmatprep.subr.mxu0 0.0
    %12437 = vmatpush2.msra.mxu0 0.0
    %12438 = vmatprep.subr.mxu0 0.0
    %12439 = vmatpush2.msra.mxu0 0.0
    %12440 = vmatprep.subr.mxu0 0.0
    %12441 = vmatpush2.msra.mxu0 0.0
    %12442 = vmatprep.subr.mxu0 0.0
    %12443 = vmatpush2.msra.mxu0 0.0
    %12444 = vmatprep.subr.mxu0 0.0
    %12445 = vmatpush2.msra.mxu0 0.0
    %12446 = vmatprep.subr.mxu0 0.0
    %12447 = vmatpush2.msra.mxu0 0.0
    %12448 = vmatprep.subr.mxu0 0.0
    %12449 = vmatpush2.msra.mxu0 0.0
    %12450 = vmatprep.subr.mxu0 0.0
    %12451 = vmatpush2.msra.mxu0 0.0
    %12452 = vmatprep.mubr.f32.mxu0 0.0
    %12453 = vmatmul.mubr.f32.gmra.mxu0 %v272
    %v12454 = vpop.f32.mrf.mxu0
    %v12455 = vadd.f32 0.0, %v12454
    %v12456 = vpop.f32.mrf.mxu0
    %12457 = vmatprep.mubr.f32.mxu0 0.0
    %12458 = vmatmul.mubr.f32.gmra.mxu0 %v273
    %v12459 = vpop.f32.mrf.mxu0
    %v12460 = vadd.f32 0.0, %v12459
    %v12461 = vpop.f32.mrf.mxu0
    %12462 = vdwg.mxu0
    %v12463 = vlaneseq
    %v12464 = vshrl.u32 %v12463, 7
    %v12465 = vsub.s32 0, %v12464
    %v12466 = vrot.slane %v290, %v12465
    %12467 = vmatprep.subr.mxu0 0.0
    %12468 = vmatpush1.msra.mxu0 %v289
    %12469 = vmatprep.subr.mxu0 0.0
    %12470 = vmatpush1.msra.mxu0 %v288
    %12471 = vmatprep.subr.mxu0 0.0
    %12472 = vmatpush1.msra.mxu0 %v287
    %12473 = vmatprep.subr.mxu0 0.0
    %12474 = vmatpush1.msra.mxu0 %v286
    %12475 = vmatprep.subr.mxu0 0.0
    %12476 = vmatpush1.msra.mxu0 %v285
    %12477 = vmatprep.subr.mxu0 0.0
    %12478 = vmatpush1.msra.mxu0 %v284
    %12479 = vmatprep.subr.mxu0 0.0
    %12480 = vmatpush1.msra.mxu0 %v283
    %12481 = vmatprep.subr.mxu0 0.0
    %12482 = vmatpush1.msra.mxu0 %v282
    %12483 = vmatprep.subr.mxu0 0.0
    %12484 = vmatpush1.msra.mxu0 %v281
    %12485 = vmatprep.subr.mxu0 0.0
    %12486 = vmatpush1.msra.mxu0 %v280
    %12487 = vmatprep.subr.mxu0 0.0
    %12488 = vmatpush1.msra.mxu0 %v279
    %12489 = vmatprep.subr.mxu0 0.0
    %12490 = vmatpush1.msra.mxu0 %v278
    %12491 = vmatprep.subr.mxu0 0.0
    %12492 = vmatpush1.msra.mxu0 %v277
    %12493 = vmatprep.subr.mxu0 0.0
    %12494 = vmatpush1.msra.mxu0 %v276
    %12495 = vmatprep.subr.mxu0 0.0
    %12496 = vmatpush1.msra.mxu0 %v275
    %12497 = vmatprep.subr.mxu0 0.0
    %12498 = vmatpush1.msra.mxu0 %v274
    %12499 = vmatprep.subr.mxu0 0.0
    %12500 = vmatpush2.msra.mxu0 0.0
    %12501 = vmatprep.subr.mxu0 0.0
    %12502 = vmatpush2.msra.mxu0 0.0
    %12503 = vmatprep.subr.mxu0 0.0
    %12504 = vmatpush2.msra.mxu0 0.0
    %12505 = vmatprep.subr.mxu0 0.0
    %12506 = vmatpush2.msra.mxu0 0.0
    %12507 = vmatprep.subr.mxu0 0.0
    %12508 = vmatpush2.msra.mxu0 0.0
    %12509 = vmatprep.subr.mxu0 0.0
    %12510 = vmatpush2.msra.mxu0 0.0
    %12511 = vmatprep.subr.mxu0 0.0
    %12512 = vmatpush2.msra.mxu0 0.0
    %12513 = vmatprep.subr.mxu0 0.0
    %12514 = vmatpush2.msra.mxu0 0.0
    %12515 = vmatprep.subr.mxu0 0.0
    %12516 = vmatpush2.msra.mxu0 0.0
    %12517 = vmatprep.subr.mxu0 0.0
    %12518 = vmatpush2.msra.mxu0 0.0
    %12519 = vmatprep.subr.mxu0 0.0
    %12520 = vmatpush2.msra.mxu0 0.0
    %12521 = vmatprep.subr.mxu0 0.0
    %12522 = vmatpush2.msra.mxu0 0.0
    %12523 = vmatprep.subr.mxu0 0.0
    %12524 = vmatpush2.msra.mxu0 0.0
    %12525 = vmatprep.subr.mxu0 0.0
    %12526 = vmatpush2.msra.mxu0 0.0
    %12527 = vmatprep.subr.mxu0 0.0
    %12528 = vmatpush2.msra.mxu0 0.0
    %12529 = vmatprep.subr.mxu0 0.0
    %12530 = vmatpush2.msra.mxu0 0.0
    %12531 = vmatprep.mubr.f32.mxu0 0.0
    %12532 = vmatmul.mubr.f32.gmra.mxu0 %v12455
    %v12533 = vpop.f32.mrf.mxu0
    %v12534 = vadd.f32 %v12466, %v12533
    %v12535 = vpop.f32.mrf.mxu0
    %12536 = vmatprep.mubr.f32.mxu0 0.0
    %12537 = vmatmul.mubr.f32.gmra.mxu0 %v12460
    %v12538 = vpop.f32.mrf.mxu0
    %v12539 = vadd.f32 %v12466, %v12538
    %v12540 = vpop.f32.mrf.mxu0
    %12541 = vdwg.mxu0
    %12542 = vst [vmem:[%s5] sm:$0xff] %v12534
    %12543 = vst [vmem:[%s5 + $0x8] sm:$0xff] %v12539
    // Predicated region
    $region30: #{stshn_forward.1} parent=1 // pred_check
      _
    $region31: #{stshn_forward.1} parent=1 // pred_check_branch
      %12545 = sbr.rel (0) target = $region33
    $region32: #{stshn_forward.1} parent=1 // pred_region
      _
    $region33: #{stshn_forward.1} parent=1 // pred_fallthru
      _
    // Predicated region
    $region34: #{stshn_forward.1} parent=1 // pred_check
      _
    $region35: #{stshn_forward.1} parent=1 // pred_check_branch
      %12547 = sbr.rel (0) target = $region37
    $region36: #{stshn_forward.1} parent=1 // pred_region
      _
    $region37: #{stshn_forward.1} parent=1 // pred_fallthru
      _
    %12548 = vsyncpa [#allocation3], 1
    %12549 = vsyncpa [#allocation5], 1

</llo_original>
